<compile_context>
chip_gen: v7x
topology: tpu7x:2x2x1
jax: 0.10.0
libtpu: 0.0.40
codegen_flags: <defaults>
</compile_context>

<pallas_src>
import functools

import jax
import jax.numpy as jnp
from jax import lax
from jax.experimental import pallas as pl
from jax.experimental.pallas import tpu as pltpu

LANE = 128


def _round_up(x, m):
    return (x + m - 1) // m * m


# ------------------------------------------------------------------ VMEM limit
_VMEM_LIMIT_CACHE = None


def _vmem_limit_bytes():
    """Generation-dependent VMEM budget (don't cap v5e/v6e at a v7x-sized 48 MiB)."""
    global _VMEM_LIMIT_CACHE
    if _VMEM_LIMIT_CACHE is None:
        cap = 128 * 1024 * 1024
        try:
            cap = int(getattr(pltpu.get_tpu_info(), "vmem_capacity_bytes", cap))
        except Exception:
            pass
        _VMEM_LIMIT_CACHE = (48 * 1024 * 1024 if cap <= 64 * 1024 * 1024
                             else 100 * 1024 * 1024)
    return _VMEM_LIMIT_CACHE


# ----------------------------------------- single-buffered constant operands
_BUFFERED_OK = None


def _supports_single_buffering():
    """Probe pl.Buffered(1) support once with a tiny kernel; fall back if not."""
    global _BUFFERED_OK
    if _BUFFERED_OK is not None:
        return _BUFFERED_OK
    try:
        def _k(x_ref, c_ref, o_ref):
            o_ref[...] = x_ref[...] + c_ref[...]

        x = jnp.zeros((8, LANE), jnp.float32)
        c = jnp.ones((8, LANE), jnp.float32)
        out = pl.pallas_call(
            _k,
            out_shape=jax.ShapeDtypeStruct((8, LANE), jnp.float32),
            grid=(1,),
            in_specs=[pl.BlockSpec((8, LANE), lambda i: (0, 0)),
                      pl.BlockSpec((8, LANE), lambda i: (0, 0),
                                   pipeline_mode=pl.Buffered(1))],
            out_specs=pl.BlockSpec((8, LANE), lambda i: (0, 0)),
        )(x, c)
        _BUFFERED_OK = bool(jnp.allclose(jax.block_until_ready(out), 1.0))
    except Exception:
        _BUFFERED_OK = False
    return _BUFFERED_OK


def _const_spec(block_shape, index_map):
    """BlockSpec for an operand whose index_map is constant across the grid."""
    if _supports_single_buffering():
        return pl.BlockSpec(block_shape, index_map,
                            pipeline_mode=pl.Buffered(1))
    return pl.BlockSpec(block_shape, index_map)


# --------------------------------------------------------------- kernel bodies
def _prologue(x, sc_ref, sh_ref, P, Hin, Win):
    """Deferred BatchNorm affine + LeakyReLU(0.2) applied to the previous
    layer's raw conv output; everything that is not a real pixel (padding
    ring / pitch garbage / padded channels) is forced back to zero."""
    XR = x.shape[0]
    r = lax.broadcasted_iota(jnp.int32, (XR, 1), 0)
    j = r % P
    valid = ((r >= P) & (r < (Hin + 1) * P)      # 1 <= padded-row <= Hin
             & (j >= 1) & (j <= Win))            # 1 <= padded-col <= Win
    v = x.astype(jnp.float32) * sc_ref[...] + sh_ref[...]
    v = jnp.where(v >= 0.0, v, 0.2 * v)
    return jnp.where(valid, v, 0.0).astype(jnp.bfloat16)


def _conv_kernel(*refs, kk, shifts, R, P, WO, Hin, Win, leaky,
                 with_prologue, with_stats):
    x_ref, w_ref, b_ref = refs[:3]
    pos = 3
    if with_prologue:
        sc_ref, sh_ref = refs[pos], refs[pos + 1]
        pos += 2
    o_ref = refs[pos]
    pos += 1
    if with_stats:
        sum_ref, sq_ref = refs[pos], refs[pos + 1]

    if with_prologue:
        xv = _prologue(x_ref[0], sc_ref, sh_ref, P, Hin, Win)
        tap = lambda s: xv[s:s + R, :]
    else:
        tap = lambda s: x_ref[0, s:s + R, :]

    # kk static row-shifted bf16 matmuls, f32 accumulation on the MXU.
    acc = jnp.dot(tap(shifts[0]), w_ref[0], preferred_element_type=jnp.float32)
    for t in range(1, kk):
        acc = acc + jnp.dot(tap(shifts[t]), w_ref[t],
                            preferred_element_type=jnp.float32)
    acc = acc + b_ref[...]                                   # f32 bias epilogue

    ro = lax.broadcasted_iota(jnp.int32, (R, 1), 0)
    col_ok = (ro % P) < WO                                   # valid output cols

    if with_stats:
        # Per-image partial BatchNorm stats (reduced over N in the wrapper).
        av = jnp.where(col_ok, acc, 0.0)
        sum_ref[0] = jnp.sum(av, axis=0, keepdims=True)
        sq_ref[0] = jnp.sum(av * av, axis=0, keepdims=True)

    if leaky:
        acc = jnp.where(acc >= 0.0, acc, 0.2 * acc)          # LeakyReLU(0.2)
    acc = jnp.where(col_ok, acc, 0.0)                        # zero pitch garbage
    o_ref[0] = acc.astype(o_ref.dtype)


def _final_kernel(*refs, shifts, R, P, Hin, Win, with_prologue):
    """Final Cout==1 conv: the 16 taps sit on the lane axis -> one
    (XR,CX)@(CX,128) matmul, then a shifted-lane sum on the VPU/XLU."""
    x_ref, w_ref, b_ref = refs[:3]
    pos = 3
    if with_prologue:
        sc_ref, sh_ref = refs[pos], refs[pos + 1]
        pos += 2
    o_ref = refs[pos]

    if with_prologue:
        xv = _prologue(x_ref[0], sc_ref, sh_ref, P, Hin, Win)
    else:
        xv = x_ref[0]
    y = jnp.dot(xv, w_ref[...], preferred_element_type=jnp.float32)  # (XR,128)

    lanes = lax.broadcasted_iota(jnp.int32, (R, LANE), 1)
    m = jnp.where(lanes == 0, y[shifts[0]:shifts[0] + R, :], 0.0)
    for t in range(1, len(shifts)):
        m = m + jnp.where(lanes == t, y[shifts[t]:shifts[t] + R, :], 0.0)
    res = jnp.sum(m, axis=1, keepdims=True)                  # (R, 1)
    o_ref[0] = (jnp.broadcast_to(res, (R, LANE)) + b_ref[...]).astype(o_ref.dtype)


# --------------------------------------------------------------- pallas_call
def conv_pallas(x2, w_taps, bias, scale, shift, shifts, R, P, WO, Hin, Win,
                out_dtype, *, leaky, with_stats):
    N, XR, CX = x2.shape
    kk, _, NP = w_taps.shape
    with_prologue = scale is not None

    in_specs = [pl.BlockSpec((1, XR, CX), lambda n: (n, 0, 0)),
                _const_spec((kk, CX, NP), lambda n: (0, 0, 0)),
                _const_spec((1, NP), lambda n: (0, 0))]
    inputs = [x2, w_taps, bias.reshape(1, NP)]
    if with_prologue:
        in_specs += [_const_spec((1, CX), lambda n: (0, 0)),
                     _const_spec((1, CX), lambda n: (0, 0))]
        inputs += [scale.reshape(1, CX), shift.reshape(1, CX)]

    if with_stats:
        out_shape = (jax.ShapeDtypeStruct((N, R, NP), out_dtype),
                     jax.ShapeDtypeStruct((N, 1, NP), jnp.float32),
                     jax.ShapeDtypeStruct((N, 1, NP), jnp.float32))
        out_specs = (pl.BlockSpec((1, R, NP), lambda n: (n, 0, 0)),
                     pl.BlockSpec((1, 1, NP), lambda n: (n, 0, 0)),
                     pl.BlockSpec((1, 1, NP), lambda n: (n, 0, 0)))
    else:
        out_shape = jax.ShapeDtypeStruct((N, R, NP), out_dtype)
        out_specs = pl.BlockSpec((1, R, NP), lambda n: (n, 0, 0))

    kern = functools.partial(_conv_kernel, kk=kk, shifts=tuple(shifts), R=R,
                             P=P, WO=WO, Hin=Hin, Win=Win, leaky=leaky,
                             with_prologue=with_prologue, with_stats=with_stats)
    return pl.pallas_call(
        kern, out_shape=out_shape,
        grid_spec=pltpu.PrefetchScalarGridSpec(
            num_scalar_prefetch=0, grid=(N,),
            in_specs=in_specs, out_specs=out_specs),
        compiler_params=pltpu.CompilerParams(
            dimension_semantics=("parallel",),
            vmem_limit_bytes=_vmem_limit_bytes()),
    )(*inputs)


def final_conv_pallas(x2, w1, bias, scale, shift, shifts, R, P, Hin, Win):
    N, XR, CX = x2.shape
    NPL = w1.shape[1]
    with_prologue = scale is not None
    in_specs = [pl.BlockSpec((1, XR, CX), lambda n: (n, 0, 0)),
                _const_spec((CX, NPL), lambda n: (0, 0)),
                _const_spec((1, NPL), lambda n: (0, 0))]
    bb = jnp.broadcast_to(bias.astype(jnp.float32).reshape(1, 1), (1, NPL))
    inputs = [x2, w1, bb]
    if with_prologue:
        in_specs += [_const_spec((1, CX), lambda n: (0, 0)),
                     _const_spec((1, CX), lambda n: (0, 0))]
        inputs += [scale.reshape(1, CX), shift.reshape(1, CX)]
    kern = functools.partial(_final_kernel, shifts=tuple(shifts), R=R, P=P,
                             Hin=Hin, Win=Win, with_prologue=with_prologue)
    return pl.pallas_call(
        kern, out_shape=jax.ShapeDtypeStruct((N, R, NPL), jnp.float32),
        grid_spec=pltpu.PrefetchScalarGridSpec(
            num_scalar_prefetch=0, grid=(N,),
            in_specs=in_specs,
            out_specs=pl.BlockSpec((1, R, NPL), lambda n: (n, 0, 0))),
        compiler_params=pltpu.CompilerParams(
            dimension_semantics=("parallel",),
            vmem_limit_bytes=_vmem_limit_bytes()),
    )(*inputs)


# ---------------------------------------------- layout / weight preparation
def _space_to_depth(a):
    """NHWC, pad 1 each side, fold 2x2 pixel blocks into channels
    (channel order (2*pi + pj)*C + c)."""
    N, H, W, C = a.shape
    ap = jnp.pad(a, ((0, 0), (1, 1), (1, 1), (0, 0)))
    Hp, Wp = H + 2, W + 2
    s = ap.reshape(N, Hp // 2, 2, Wp // 2, 2, C).transpose(0, 1, 3, 2, 4, 5)
    return s.reshape(N, Hp // 2, Wp // 2, 4 * C)


def _prep_weights_s2(w, cx, np_out):
    """(Cout,Cin,4,4) -> (4 taps, 4*Cin -> cx, Cout -> np_out); tap t = 2*qi+qj."""
    cout, cin = w.shape[0], w.shape[1]
    wr = jnp.transpose(w, (2, 3, 1, 0))                         # (di,dj,ci,co)
    wr = wr.reshape(2, 2, 2, 2, cin, cout).transpose(0, 2, 1, 3, 4, 5)
    wr = wr.reshape(4, 4 * cin, cout)
    wr = jnp.pad(wr, ((0, 0), (0, cx - 4 * cin), (0, np_out - cout)))
    return wr.astype(jnp.bfloat16)


def _prep_weights_s1(w, cx, np_out):
    """(Cout,Cin,4,4) -> (16 taps, Cin -> cx, Cout -> np_out); tap t = di*4+dj."""
    cout, cin = w.shape[0], w.shape[1]
    wt = jnp.transpose(w, (2, 3, 1, 0)).reshape(16, cin, cout)
    wt = jnp.pad(wt, ((0, 0), (0, cx - cin), (0, np_out - cout)))
    return wt.astype(jnp.bfloat16)


def _prep_weights_final(w, cx):
    """(1,Cin,4,4) -> (cx, 128): lane t = di*4+dj holds the tap-t weight column."""
    cin = w.shape[1]
    wt = w[0].reshape(cin, 16)
    wt = jnp.pad(wt, ((0, cx - cin), (0, LANE - 16)))
    return wt.astype(jnp.bfloat16)


def _materialize_nhwc(state):
    """Used only by stride-2 consumers (space-to-depth reshuffles the layout,
    so one fused XLA relayout remains); applies any deferred BN + LeakyReLU."""
    if state['kind'] == 'image':
        return state['a'].astype(jnp.bfloat16)
    y, P, H, W, C = state['y'], state['P'], state['H'], state['W'], state['C']
    N, _, NP = y.shape
    a = y.reshape(N, H, P, NP)[:, :, :W, :C]
    if state['pending'] is not None:
        sc, sh = state['pending']
        v = a.astype(jnp.float32) * sc[:C] + sh[:C]
        a = jnp.where(v >= 0.0, v, 0.2 * v)
    return a.astype(jnp.bfloat16)


# -------------------------------------------------------------- layer driver
def run_layer(state, p, sp, *, final, eps=1e-5):
    w, b = p['w'], p['b']
    stride, leaky = sp['stride'], sp['leaky']
    bn_params = (p['gamma'], p['beta']) if sp['bn'] else None
    cout = w.shape[0]
    NP = _round_up(cout, LANE)
    N = state['a'].shape[0] if state['kind'] == 'image' else state['y'].shape[0]

    if stride == 1 and state['kind'] == 'slab':
        # Direct consumption: reuse the previous raw slab (same pitch, garbage
        # already zeroed); only a zero-row pad in XLA.  Deferred BN+LeakyReLU
        # runs in the kernel prologue.
        y, P = state['y'], state['P']
        Hin, Win, CX = state['H'], state['W'], state['NP']
        assert P >= Win + 2
        XR = (Hin + 2) * P + 3
        head = P + 1
        x2 = jnp.pad(y, ((0, 0), (head, XR - head - y.shape[1]), (0, 0)))
        shifts = [di * P + dj for di in range(4) for dj in range(4)]
        HO, WO = Hin - 1, Win - 1
        R = HO * P
        if state['pending'] is not None:
            scale, shift = state['pending']
        else:
            scale = shift = None

        if final and cout == 1 and bn_params is None and not leaky:
            w1 = _prep_weights_final(w, CX)
            y_out = final_conv_pallas(x2, w1, b, scale, shift, shifts, R, P,
                                      Hin, Win)
            return dict(kind='slab', y=y_out, P=P, H=HO, W=WO, C=1, NP=LANE,
                        pending=None)
        wt = _prep_weights_s1(w, CX, NP)
    else:
        # Wrapper relayout path (first layer and every stride-2 layer).
        a = _materialize_nhwc(state)
        _, H, W, C = a.shape
        if stride == 2:
            assert H % 2 == 0 and W % 2 == 0
            xs = _space_to_depth(a)                    # (N, H/2+1, W/2+1, 4C)
            HX, Ws = H // 2 + 1, W // 2 + 1
            P = _round_up(Ws + 1, 8)                   # >= Ws and >= W/2+2
            kkh = kkw = 2
            CX = 4 * C
            wt = _prep_weights_s2(w, CX, NP)
            WO = W // 2
        else:
            xs = jnp.pad(a, ((0, 0), (1, 1), (1, 1), (0, 0)))
            HX, Ws = H + 2, W + 2
            P = _round_up(Ws, 8)
            kkh = kkw = 4
            CX = C
            wt = _prep_weights_s1(w, CX, NP)
            WO = W - 1
        xs = jnp.pad(xs, ((0, 0), (0, 0), (0, P - Ws), (0, 0)))
        x2 = xs.reshape(N, HX * P, CX)
        x2 = jnp.pad(x2, ((0, 0), (0, kkw - 1), (0, 0))).astype(jnp.bfloat16)
        shifts = [di * P + dj for di in range(kkh) for dj in range(kkw)]
        HO = HX - kkh + 1
        R = HO * P
        Hin = Win = 0
        scale = shift = None

    bp = jnp.pad(b, (0, NP - cout)).astype(jnp.float32)

    if bn_params is None:
        y_out = conv_pallas(x2, wt, bp, scale, shift, shifts, R, P, WO,
                            Hin, Win, jnp.bfloat16, leaky=leaky,
                            with_stats=False)
        pending = None
    else:
        assert leaky  # BN layers in this architecture are always LeakyReLU'd
        y_out, s_p, q_p = conv_pallas(x2, wt, bp, scale, shift, shifts, R, P,
                                      WO, Hin, Win, jnp.bfloat16, leaky=False,
                                      with_stats=True)
        m_valid = float(N * HO * WO)
        mean = jnp.sum(s_p, axis=(0, 1)) / m_valid
        var = jnp.maximum(jnp.sum(q_p, axis=(0, 1)) / m_valid - mean * mean,
                          0.0)                        # biased, clamped
        g = jnp.pad(bn_params[0], (0, NP - cout)).astype(jnp.float32)
        bt = jnp.pad(bn_params[1], (0, NP - cout)).astype(jnp.float32)
        bn_scale = g * lax.rsqrt(var + eps)
        bn_shift = bt - mean * bn_scale
        pending = (bn_scale, bn_shift)   # affine + LeakyReLU deferred to consumer

    return dict(kind='slab', y=y_out, P=P, H=HO, W=WO, C=cout, NP=NP,
                pending=pending)


# ------------------------------------------------------------ model assembly
def build_layer_specs(input_nc, ndf=64, n_layers=3):
    """Mirrors PatchDiscriminator.__init__ layer construction."""
    specs = [dict(cin=input_nc, cout=ndf, stride=2, bn=False, leaky=True),
             dict(cin=ndf, cout=ndf * 2, stride=2, bn=False, leaky=True)]
    nf_mult, nf_mult_prev = 2, 1
    for i in range(2, n_layers):
        nf_mult_prev = nf_mult
        nf_mult = min(2 ** i, 8)
        specs.append(dict(cin=ndf * nf_mult_prev, cout=ndf * nf_mult,
                          stride=2, bn=True, leaky=True))
    nf_mult_prev = nf_mult
    nf_mult = min(2 ** n_layers, 8)
    specs.append(dict(cin=ndf * nf_mult_prev, cout=ndf * nf_mult,
                      stride=1, bn=True, leaky=True))
    specs.append(dict(cin=ndf * nf_mult, cout=1, stride=1, bn=False,
                      leaky=False))
    return specs


def init_params(key, specs):
    params = []
    for sp in specs:
        key, kw, kb = jax.random.split(key, 3)
        p = dict(w=0.02 * jax.random.normal(kw, (sp['cout'], sp['cin'], 4, 4),
                                            jnp.float32),
                 b=0.01 * jax.random.normal(kb, (sp['cout'],), jnp.float32))
        if sp['bn']:
            # PyTorch BatchNorm2d default init: weight=1, bias=0
            p['gamma'] = jnp.ones((sp['cout'],), jnp.float32)
            p['beta'] = jnp.zeros((sp['cout'],), jnp.float32)
        params.append(p)
    return params


def patch_discriminator_forward(x, params, specs):
    a = jnp.transpose(x, (0, 2, 3, 1))                         # NCHW -> NHWC
    state = dict(kind='image', a=a)
    n = len(specs)
    for li, (sp, p) in enumerate(zip(specs, params)):
        state = run_layer(state, p, sp, final=(li == n - 1))
    y, P, HO, WO = state['y'], state['P'], state['H'], state['W']
    N = y.shape[0]
    out = y.reshape(N, HO, P, -1)[:, :, :WO, :state['C']]
    return jnp.transpose(out, (0, 3, 1, 2)).astype(jnp.float32)  # NHWC -> NCHW


# ------------------------------- pure-JAX f32 reference (correctness check)
def reference_forward(x, params, specs, eps=1e-5):
    for sp, p in zip(specs, params):
        x = lax.conv_general_dilated(
            x, p['w'], window_strides=(sp['stride'], sp['stride']),
            padding=((1, 1), (1, 1)),
            dimension_numbers=('NCHW', 'OIHW', 'NCHW'))
        x = x + p['b'].reshape(1, -1, 1, 1)
        if sp['bn']:
            mean = jnp.mean(x, axis=(0, 2, 3), keepdims=True)
            var = jnp.mean((x - mean) ** 2, axis=(0, 2, 3), keepdims=True)
            x = (x - mean) * lax.rsqrt(var + eps)
            x = x * p['gamma'].reshape(1, -1, 1, 1) + \
                p['beta'].reshape(1, -1, 1, 1)
        if sp['leaky']:
            x = jnp.where(x >= 0.0, x, 0.2 * x)
    return x


if __name__ == "__main__":
    key = jax.random.PRNGKey(0)
    k_in, k_par = jax.random.split(key)

    # Small, architecture-consistent sizes: input_nc=4, ndf=8, n_layers=3.
    # Spatial 32 -> 16 -> 8 -> 4 -> 3 -> 2 (PatchGAN output 2x2).
    input_nc, ndf, n_layers = 4, 8, 3
    x = jax.random.normal(k_in, (2, input_nc, 32, 32), jnp.float32)

    specs = build_layer_specs(input_nc, ndf, n_layers)
    params = init_params(k_par, specs)

    _supports_single_buffering()          # run the probe outside the jit trace

    fwd = jax.jit(functools.partial(patch_discriminator_forward, specs=specs))
    out = jax.block_until_ready(fwd(x, params))
    assert out.shape == (2, 1, 2, 2), out.shape

    ref = reference_forward(x, params, specs)
    # Tolerance accounts for bf16 MXU operands / bf16 inter-layer activations
    # (accumulation and all epilogues are f32).
    if not bool(jnp.allclose(out, ref, rtol=6e-2, atol=4e-2)):
        raise AssertionError(
            "mismatch vs reference, max abs diff = %g"
            % float(jnp.max(jnp.abs(out - ref))))

    print("KERNEL_OK")
</pallas_src>

<mosaic_0001>
module attributes {stable_mosaic.version = 11 : i64} {
  func.func @_k(%arg0: i32, %arg1: memref<8x128xf32, #tpu.memory_space<vmem>>, %arg2: memref<8x128xf32, #tpu.memory_space<vmem>>, %arg3: memref<8x128xf32, #tpu.memory_space<vmem>>) attributes {dimension_semantics = [#tpu.dimension_semantics<arbitrary>], iteration_bounds = array<i64: 1>, scalar_prefetch = 0 : i64, scratch_operands = 0 : i64, tpu.core_type = #tpu.core_type<tc>, window_params = [{pipeline_mode = #tpu.pipeline_mode<synchronous>, transform_indices = @transform_0, window_bounds = array<i64: 8, 128>}, {pipeline_mode = #tpu.pipeline_mode<synchronous>, transform_indices = @transform_1, window_bounds = array<i64: 8, 128>}, {pipeline_mode = #tpu.pipeline_mode<synchronous>, transform_indices = @transform_2, window_bounds = array<i64: 8, 128>}]} {
    %c0 = arith.constant 0 : index
    %c0_0 = arith.constant 0 : index
    %0 = vector.load %arg1[%c0, %c0_0] : memref<8x128xf32, #tpu.memory_space<vmem>>, vector<8x128xf32>
    %c0_1 = arith.constant 0 : index
    %c0_2 = arith.constant 0 : index
    %1 = vector.load %arg2[%c0_1, %c0_2] : memref<8x128xf32, #tpu.memory_space<vmem>>, vector<8x128xf32>
    %2 = arith.addf %0, %1 : vector<8x128xf32>
    %c0_3 = arith.constant 0 : index
    %c0_4 = arith.constant 0 : index
    %3 = vector.load %arg3[%c0_3, %c0_4] : memref<8x128xf32, #tpu.memory_space<vmem>>, vector<8x128xf32>
    tpu.vector_store %arg3[%c0_3, %c0_4], %2 {strides = array<i32>} : memref<8x128xf32, #tpu.memory_space<vmem>>, vector<8x128xf32>,
    return
  }
  func.func @transform_0(%arg0: i32) -> (i32, i32) {
    %c0_i32 = arith.constant 0 : i32
    %c0_i32_0 = arith.constant 0 : i32
    %c0_i32_1 = arith.constant 0 : i32
    return %c0_i32, %c0_i32_0 : i32, i32
  }
  func.func @transform_1(%arg0: i32) -> (i32, i32) {
    %c0_i32 = arith.constant 0 : i32
    %c0_i32_0 = arith.constant 0 : i32
    %c0_i32_1 = arith.constant 0 : i32
    return %c0_i32, %c0_i32_0 : i32, i32
  }
  func.func @transform_2(%arg0: i32) -> (i32, i32) {
    %c0_i32 = arith.constant 0 : i32
    %c0_i32_0 = arith.constant 0 : i32
    %c0_i32_1 = arith.constant 0 : i32
    return %c0_i32, %c0_i32_0 : i32, i32
  }
}

module attributes {stable_mosaic.version = 11 : i64} {
  func.func @_conv_kernel(%arg0: i32, %arg1: memref<1x409x16xbf16, #tpu.memory_space<vmem>>, %arg2: memref<4x16x128xbf16, #tpu.memory_space<vmem>>, %arg3: memref<1x128xf32, #tpu.memory_space<vmem>>, %arg4: memref<1x384x128xbf16, #tpu.memory_space<vmem>>) attributes {dimension_semantics = [#tpu.dimension_semantics<parallel>], iteration_bounds = array<i64: 2>, scalar_prefetch = 0 : i64, scratch_operands = 0 : i64, tpu.core_type = #tpu.core_type<tc>, window_params = [{transform_indices = @transform_0, window_bounds = array<i64: 1, 409, 16>}, {pipeline_mode = #tpu.pipeline_mode<synchronous>, transform_indices = @transform_1, window_bounds = array<i64: 4, 16, 128>}, {pipeline_mode = #tpu.pipeline_mode<synchronous>, transform_indices = @transform_2, window_bounds = array<i64: 1, 128>}, {transform_indices = @transform_3, window_bounds = array<i64: 1, 384, 128>}]} {
    %c0 = arith.constant 0 : index
    %c0_0 = arith.constant 0 : index
    %c0_1 = arith.constant 0 : index
    %0 = vector.load %arg1[%c0, %c0_0, %c0_1] : memref<1x409x16xbf16, #tpu.memory_space<vmem>>, vector<1x384x16xbf16>
    %1 = vector.shape_cast %0 : vector<1x384x16xbf16> to vector<384x16xbf16>
    %c0_2 = arith.constant 0 : index
    %c0_3 = arith.constant 0 : index
    %c0_4 = arith.constant 0 : index
    %2 = vector.load %arg2[%c0_2, %c0_3, %c0_4] : memref<4x16x128xbf16, #tpu.memory_space<vmem>>, vector<1x16x128xbf16>
    %3 = vector.shape_cast %2 : vector<1x16x128xbf16> to vector<16x128xbf16>
    %cst = arith.constant dense<0.000000e+00> : vector<384x128xf32>
    %4 = tpu.matmul %1, %3, %cst {dimension_numbers = #tpu.dot_dimension_numbers<[1], [0], [0], [1], [0, 0, 1, 1], [], []>} : vector<384x16xbf16>, vector<16x128xbf16>, vector<384x128xf32> -> vector<384x128xf32>
    %c0_5 = arith.constant 0 : index
    %c1 = arith.constant 1 : index
    %c0_6 = arith.constant 0 : index
    %5 = vector.load %arg1[%c0_5, %c1, %c0_6] : memref<1x409x16xbf16, #tpu.memory_space<vmem>>, vector<1x384x16xbf16>
    %6 = vector.shape_cast %5 : vector<1x384x16xbf16> to vector<384x16xbf16>
    %c1_7 = arith.constant 1 : index
    %c0_8 = arith.constant 0 : index
    %c0_9 = arith.constant 0 : index
    %7 = vector.load %arg2[%c1_7, %c0_8, %c0_9] : memref<4x16x128xbf16, #tpu.memory_space<vmem>>, vector<1x16x128xbf16>
    %8 = vector.shape_cast %7 : vector<1x16x128xbf16> to vector<16x128xbf16>
    %cst_10 = arith.constant dense<0.000000e+00> : vector<384x128xf32>
    %9 = tpu.matmul %6, %8, %cst_10 {dimension_numbers = #tpu.dot_dimension_numbers<[1], [0], [0], [1], [0, 0, 1, 1], [], []>} : vector<384x16xbf16>, vector<16x128xbf16>, vector<384x128xf32> -> vector<384x128xf32>
    %10 = arith.addf %4, %9 : vector<384x128xf32>
    %c0_11 = arith.constant 0 : index
    %c24 = arith.constant 24 : index
    %c0_12 = arith.constant 0 : index
    %11 = vector.load %arg1[%c0_11, %c24, %c0_12] : memref<1x409x16xbf16, #tpu.memory_space<vmem>>, vector<1x384x16xbf16>
    %12 = vector.shape_cast %11 : vector<1x384x16xbf16> to vector<384x16xbf16>
    %c2 = arith.constant 2 : index
    %c0_13 = arith.constant 0 : index
    %c0_14 = arith.constant 0 : index
    %13 = vector.load %arg2[%c2, %c0_13, %c0_14] : memref<4x16x128xbf16, #tpu.memory_space<vmem>>, vector<1x16x128xbf16>
    %14 = vector.shape_cast %13 : vector<1x16x128xbf16> to vector<16x128xbf16>
    %cst_15 = arith.constant dense<0.000000e+00> : vector<384x128xf32>
    %15 = tpu.matmul %12, %14, %cst_15 {dimension_numbers = #tpu.dot_dimension_numbers<[1], [0], [0], [1], [0, 0, 1, 1], [], []>} : vector<384x16xbf16>, vector<16x128xbf16>, vector<384x128xf32> -> vector<384x128xf32>
    %16 = arith.addf %10, %15 : vector<384x128xf32>
    %c0_16 = arith.constant 0 : index
    %c25 = arith.constant 25 : index
    %c0_17 = arith.constant 0 : index
    %17 = vector.load %arg1[%c0_16, %c25, %c0_17] : memref<1x409x16xbf16, #tpu.memory_space<vmem>>, vector<1x384x16xbf16>
    %18 = vector.shape_cast %17 : vector<1x384x16xbf16> to vector<384x16xbf16>
    %c3 = arith.constant 3 : index
    %c0_18 = arith.constant 0 : index
    %c0_19 = arith.constant 0 : index
    %19 = vector.load %arg2[%c3, %c0_18, %c0_19] : memref<4x16x128xbf16, #tpu.memory_space<vmem>>, vector<1x16x128xbf16>
    %20 = vector.shape_cast %19 : vector<1x16x128xbf16> to vector<16x128xbf16>
    %cst_20 = arith.constant dense<0.000000e+00> : vector<384x128xf32>
    %21 = tpu.matmul %18, %20, %cst_20 {dimension_numbers = #tpu.dot_dimension_numbers<[1], [0], [0], [1], [0, 0, 1, 1], [], []>} : vector<384x16xbf16>, vector<16x128xbf16>, vector<384x128xf32> -> vector<384x128xf32>
    %22 = arith.addf %16, %21 : vector<384x128xf32>
    %c0_21 = arith.constant 0 : index
    %c0_22 = arith.constant 0 : index
    %23 = vector.load %arg3[%c0_21, %c0_22] : memref<1x128xf32, #tpu.memory_space<vmem>>, vector<1x128xf32>
    %24 = vector.broadcast %23 : vector<1x128xf32> to vector<384x128xf32>
    %25 = arith.addf %22, %24 : vector<384x128xf32>
    %26 = tpu.iota {dimensions = array<i32: 0>} : vector<384x1xi32>
    %c24_i32 = arith.constant 24 : i32
    %c0_i32 = arith.constant 0 : i32
    %27 = arith.cmpi eq, %c24_i32, %c0_i32 : i32
    %c1_i32 = arith.constant 1 : i32
    %28 = arith.select %27, %c1_i32, %c24_i32 : i32
    %29 = vector.broadcast %28 : i32 to vector<384x1xi32>
    %30 = arith.remsi %26, %29 : vector<384x1xi32>
    %c0_i32_23 = arith.constant 0 : i32
    %31 = vector.broadcast %c0_i32_23 : i32 to vector<384x1xi32>
    %32 = arith.cmpi ne, %30, %31 : vector<384x1xi32>
    %c0_i32_24 = arith.constant 0 : i32
    %33 = vector.broadcast %c0_i32_24 : i32 to vector<384x1xi32>
    %34 = arith.cmpi slt, %30, %33 : vector<384x1xi32>
    %c0_i32_25 = arith.constant 0 : i32
    %35 = arith.cmpi slt, %28, %c0_i32_25 : i32
    %36 = vector.broadcast %35 : i1 to vector<384x1xi1>
    %37 = vector.broadcast %36 : vector<384x1xi1> to vector<384x1xi1>
    %38 = arith.xori %34, %37 : vector<384x1xi1>
    %39 = arith.andi %38, %32 : vector<384x1xi1>
    %40 = vector.broadcast %28 : i32 to vector<384x1xi32>
    %41 = arith.addi %30, %40 : vector<384x1xi32>
    %42 = arith.select %39, %41, %30 : vector<384x1xi1>, vector<384x1xi32>
    %c16_i32 = arith.constant 16 : i32
    %43 = vector.broadcast %c16_i32 : i32 to vector<384x1xi32>
    %44 = arith.cmpi slt, %42, %43 : vector<384x1xi32>
    %cst_26 = arith.constant 0.000000e+00 : f32
    %45 = vector.broadcast %cst_26 : f32 to vector<384x128xf32>
    %46 = arith.cmpf oge, %25, %45 : vector<384x128xf32>
    %cst_27 = arith.constant 2.000000e-01 : f32
    %47 = vector.broadcast %cst_27 : f32 to vector<384x128xf32>
    %48 = arith.mulf %47, %25 : vector<384x128xf32>
    %49 = arith.select %46, %25, %48 : vector<384x128xi1>, vector<384x128xf32>
    %cst_28 = arith.constant 0.000000e+00 : f32
    %50 = vector.shape_cast %44 : vector<384x1xi1> to vector<384x1xi1>
    %51 = vector.broadcast %50 : vector<384x1xi1> to vector<384x128xi1>
    %52 = vector.broadcast %cst_28 : f32 to vector<384x128xf32>
    %53 = arith.select %51, %49, %52 : vector<384x128xi1>, vector<384x128xf32>
    %54 = arith.truncf %53 : vector<384x128xf32> to vector<384x128xbf16>
    %c0_29 = arith.constant 0 : index
    %c0_30 = arith.constant 0 : index
    %c0_31 = arith.constant 0 : index
    %55 = vector.load %arg4[%c0_29, %c0_30, %c0_31] : memref<1x384x128xbf16, #tpu.memory_space<vmem>>, vector<1x384x128xbf16>
    %56 = vector.shape_cast %55 : vector<1x384x128xbf16> to vector<384x128xbf16>
    %57 = vector.shape_cast %54 : vector<384x128xbf16> to vector<1x384x128xbf16>
    tpu.vector_store %arg4[%c0_29, %c0_30, %c0_31], %57 {strides = array<i32>} : memref<1x384x128xbf16, #tpu.memory_space<vmem>>, vector<1x384x128xbf16>,
    return
  }
  func.func @transform_0(%arg0: i32) -> (i32, i32, i32) {
    %c0_i32 = arith.constant 0 : i32
    %c0_i32_0 = arith.constant 0 : i32
    %c0_i32_1 = arith.constant 0 : i32
    return %arg0, %c0_i32, %c0_i32_0 : i32, i32, i32
  }
  func.func @transform_1(%arg0: i32) -> (i32, i32, i32) {
    %c0_i32 = arith.constant 0 : i32
    %c0_i32_0 = arith.constant 0 : i32
    %c0_i32_1 = arith.constant 0 : i32
    %c0_i32_2 = arith.constant 0 : i32
    return %c0_i32, %c0_i32_0, %c0_i32_1 : i32, i32, i32
  }
  func.func @transform_2(%arg0: i32) -> (i32, i32) {
    %c0_i32 = arith.constant 0 : i32
    %c0_i32_0 = arith.constant 0 : i32
    %c0_i32_1 = arith.constant 0 : i32
    return %c0_i32, %c0_i32_0 : i32, i32
  }
  func.func @transform_3(%arg0: i32) -> (i32, i32, i32) {
    %c0_i32 = arith.constant 0 : i32
    %c0_i32_0 = arith.constant 0 : i32
    %c0_i32_1 = arith.constant 0 : i32
    return %arg0, %c0_i32, %c0_i32_0 : i32, i32, i32
  }
}

module attributes {stable_mosaic.version = 11 : i64} {
  func.func @_conv_kernel(%arg0: i32, %arg1: memref<1x145x32xbf16, #tpu.memory_space<vmem>>, %arg2: memref<4x32x128xbf16, #tpu.memory_space<vmem>>, %arg3: memref<1x128xf32, #tpu.memory_space<vmem>>, %arg4: memref<1x128x128xbf16, #tpu.memory_space<vmem>>) attributes {dimension_semantics = [#tpu.dimension_semantics<parallel>], iteration_bounds = array<i64: 2>, scalar_prefetch = 0 : i64, scratch_operands = 0 : i64, tpu.core_type = #tpu.core_type<tc>, window_params = [{transform_indices = @transform_0, window_bounds = array<i64: 1, 145, 32>}, {pipeline_mode = #tpu.pipeline_mode<synchronous>, transform_indices = @transform_1, window_bounds = array<i64: 4, 32, 128>}, {pipeline_mode = #tpu.pipeline_mode<synchronous>, transform_indices = @transform_2, window_bounds = array<i64: 1, 128>}, {transform_indices = @transform_3, window_bounds = array<i64: 1, 128, 128>}]} {
    %c0 = arith.constant 0 : index
    %c0_0 = arith.constant 0 : index
    %c0_1 = arith.constant 0 : index
    %0 = vector.load %arg1[%c0, %c0_0, %c0_1] : memref<1x145x32xbf16, #tpu.memory_space<vmem>>, vector<1x128x32xbf16>
    %1 = vector.shape_cast %0 : vector<1x128x32xbf16> to vector<128x32xbf16>
    %c0_2 = arith.constant 0 : index
    %c0_3 = arith.constant 0 : index
    %c0_4 = arith.constant 0 : index
    %2 = vector.load %arg2[%c0_2, %c0_3, %c0_4] : memref<4x32x128xbf16, #tpu.memory_space<vmem>>, vector<1x32x128xbf16>
    %3 = vector.shape_cast %2 : vector<1x32x128xbf16> to vector<32x128xbf16>
    %cst = arith.constant dense<0.000000e+00> : vector<128x128xf32>
    %4 = tpu.matmul %1, %3, %cst {dimension_numbers = #tpu.dot_dimension_numbers<[1], [0], [0], [1], [0, 0, 1, 1], [], []>} : vector<128x32xbf16>, vector<32x128xbf16>, vector<128x128xf32> -> vector<128x128xf32>
    %c0_5 = arith.constant 0 : index
    %c1 = arith.constant 1 : index
    %c0_6 = arith.constant 0 : index
    %5 = vector.load %arg1[%c0_5, %c1, %c0_6] : memref<1x145x32xbf16, #tpu.memory_space<vmem>>, vector<1x128x32xbf16>
    %6 = vector.shape_cast %5 : vector<1x128x32xbf16> to vector<128x32xbf16>
    %c1_7 = arith.constant 1 : index
    %c0_8 = arith.constant 0 : index
    %c0_9 = arith.constant 0 : index
    %7 = vector.load %arg2[%c1_7, %c0_8, %c0_9] : memref<4x32x128xbf16, #tpu.memory_space<vmem>>, vector<1x32x128xbf16>
    %8 = vector.shape_cast %7 : vector<1x32x128xbf16> to vector<32x128xbf16>
    %cst_10 = arith.constant dense<0.000000e+00> : vector<128x128xf32>
    %9 = tpu.matmul %6, %8, %cst_10 {dimension_numbers = #tpu.dot_dimension_numbers<[1], [0], [0], [1], [0, 0, 1, 1], [], []>} : vector<128x32xbf16>, vector<32x128xbf16>, vector<128x128xf32> -> vector<128x128xf32>
    %10 = arith.addf %4, %9 : vector<128x128xf32>
    %c0_11 = arith.constant 0 : index
    %c16 = arith.constant 16 : index
    %c0_12 = arith.constant 0 : index
    %11 = vector.load %arg1[%c0_11, %c16, %c0_12] : memref<1x145x32xbf16, #tpu.memory_space<vmem>>, vector<1x128x32xbf16>
    %12 = vector.shape_cast %11 : vector<1x128x32xbf16> to vector<128x32xbf16>
    %c2 = arith.constant 2 : index
    %c0_13 = arith.constant 0 : index
    %c0_14 = arith.constant 0 : index
    %13 = vector.load %arg2[%c2, %c0_13, %c0_14] : memref<4x32x128xbf16, #tpu.memory_space<vmem>>, vector<1x32x128xbf16>
    %14 = vector.shape_cast %13 : vector<1x32x128xbf16> to vector<32x128xbf16>
    %cst_15 = arith.constant dense<0.000000e+00> : vector<128x128xf32>
    %15 = tpu.matmul %12, %14, %cst_15 {dimension_numbers = #tpu.dot_dimension_numbers<[1], [0], [0], [1], [0, 0, 1, 1], [], []>} : vector<128x32xbf16>, vector<32x128xbf16>, vector<128x128xf32> -> vector<128x128xf32>
    %16 = arith.addf %10, %15 : vector<128x128xf32>
    %c0_16 = arith.constant 0 : index
    %c17 = arith.constant 17 : index
    %c0_17 = arith.constant 0 : index
    %17 = vector.load %arg1[%c0_16, %c17, %c0_17] : memref<1x145x32xbf16, #tpu.memory_space<vmem>>, vector<1x128x32xbf16>
    %18 = vector.shape_cast %17 : vector<1x128x32xbf16> to vector<128x32xbf16>
    %c3 = arith.constant 3 : index
    %c0_18 = arith.constant 0 : index
    %c0_19 = arith.constant 0 : index
    %19 = vector.load %arg2[%c3, %c0_18, %c0_19] : memref<4x32x128xbf16, #tpu.memory_space<vmem>>, vector<1x32x128xbf16>
    %20 = vector.shape_cast %19 : vector<1x32x128xbf16> to vector<32x128xbf16>
    %cst_20 = arith.constant dense<0.000000e+00> : vector<128x128xf32>
    %21 = tpu.matmul %18, %20, %cst_20 {dimension_numbers = #tpu.dot_dimension_numbers<[1], [0], [0], [1], [0, 0, 1, 1], [], []>} : vector<128x32xbf16>, vector<32x128xbf16>, vector<128x128xf32> -> vector<128x128xf32>
    %22 = arith.addf %16, %21 : vector<128x128xf32>
    %c0_21 = arith.constant 0 : index
    %c0_22 = arith.constant 0 : index
    %23 = vector.load %arg3[%c0_21, %c0_22] : memref<1x128xf32, #tpu.memory_space<vmem>>, vector<1x128xf32>
    %24 = vector.broadcast %23 : vector<1x128xf32> to vector<128x128xf32>
    %25 = arith.addf %22, %24 : vector<128x128xf32>
    %26 = tpu.iota {dimensions = array<i32: 0>} : vector<128x1xi32>
    %c16_i32 = arith.constant 16 : i32
    %c0_i32 = arith.constant 0 : i32
    %27 = arith.cmpi eq, %c16_i32, %c0_i32 : i32
    %c1_i32 = arith.constant 1 : i32
    %28 = arith.select %27, %c1_i32, %c16_i32 : i32
    %29 = vector.broadcast %28 : i32 to vector<128x1xi32>
    %30 = arith.remsi %26, %29 : vector<128x1xi32>
    %c0_i32_23 = arith.constant 0 : i32
    %31 = vector.broadcast %c0_i32_23 : i32 to vector<128x1xi32>
    %32 = arith.cmpi ne, %30, %31 : vector<128x1xi32>
    %c0_i32_24 = arith.constant 0 : i32
    %33 = vector.broadcast %c0_i32_24 : i32 to vector<128x1xi32>
    %34 = arith.cmpi slt, %30, %33 : vector<128x1xi32>
    %c0_i32_25 = arith.constant 0 : i32
    %35 = arith.cmpi slt, %28, %c0_i32_25 : i32
    %36 = vector.broadcast %35 : i1 to vector<128x1xi1>
    %37 = vector.broadcast %36 : vector<128x1xi1> to vector<128x1xi1>
    %38 = arith.xori %34, %37 : vector<128x1xi1>
    %39 = arith.andi %38, %32 : vector<128x1xi1>
    %40 = vector.broadcast %28 : i32 to vector<128x1xi32>
    %41 = arith.addi %30, %40 : vector<128x1xi32>
    %42 = arith.select %39, %41, %30 : vector<128x1xi1>, vector<128x1xi32>
    %c8_i32 = arith.constant 8 : i32
    %43 = vector.broadcast %c8_i32 : i32 to vector<128x1xi32>
    %44 = arith.cmpi slt, %42, %43 : vector<128x1xi32>
    %cst_26 = arith.constant 0.000000e+00 : f32
    %45 = vector.broadcast %cst_26 : f32 to vector<128x128xf32>
    %46 = arith.cmpf oge, %25, %45 : vector<128x128xf32>
    %cst_27 = arith.constant 2.000000e-01 : f32
    %47 = vector.broadcast %cst_27 : f32 to vector<128x128xf32>
    %48 = arith.mulf %47, %25 : vector<128x128xf32>
    %49 = arith.select %46, %25, %48 : vector<128x128xi1>, vector<128x128xf32>
    %cst_28 = arith.constant 0.000000e+00 : f32
    %50 = vector.shape_cast %44 : vector<128x1xi1> to vector<128x1xi1>
    %51 = vector.broadcast %50 : vector<128x1xi1> to vector<128x128xi1>
    %52 = vector.broadcast %cst_28 : f32 to vector<128x128xf32>
    %53 = arith.select %51, %49, %52 : vector<128x128xi1>, vector<128x128xf32>
    %54 = arith.truncf %53 : vector<128x128xf32> to vector<128x128xbf16>
    %c0_29 = arith.constant 0 : index
    %c0_30 = arith.constant 0 : index
    %c0_31 = arith.constant 0 : index
    %55 = vector.load %arg4[%c0_29, %c0_30, %c0_31] : memref<1x128x128xbf16, #tpu.memory_space<vmem>>, vector<1x128x128xbf16>
    %56 = vector.shape_cast %55 : vector<1x128x128xbf16> to vector<128x128xbf16>
    %57 = vector.shape_cast %54 : vector<128x128xbf16> to vector<1x128x128xbf16>
    tpu.vector_store %arg4[%c0_29, %c0_30, %c0_31], %57 {strides = array<i32>} : memref<1x128x128xbf16, #tpu.memory_space<vmem>>, vector<1x128x128xbf16>,
    return
  }
  func.func @transform_0(%arg0: i32) -> (i32, i32, i32) {
    %c0_i32 = arith.constant 0 : i32
    %c0_i32_0 = arith.constant 0 : i32
    %c0_i32_1 = arith.constant 0 : i32
    return %arg0, %c0_i32, %c0_i32_0 : i32, i32, i32
  }
  func.func @transform_1(%arg0: i32) -> (i32, i32, i32) {
    %c0_i32 = arith.constant 0 : i32
    %c0_i32_0 = arith.constant 0 : i32
    %c0_i32_1 = arith.constant 0 : i32
    %c0_i32_2 = arith.constant 0 : i32
    return %c0_i32, %c0_i32_0, %c0_i32_1 : i32, i32, i32
  }
  func.func @transform_2(%arg0: i32) -> (i32, i32) {
    %c0_i32 = arith.constant 0 : i32
    %c0_i32_0 = arith.constant 0 : i32
    %c0_i32_1 = arith.constant 0 : i32
    return %c0_i32, %c0_i32_0 : i32, i32
  }
  func.func @transform_3(%arg0: i32) -> (i32, i32, i32) {
    %c0_i32 = arith.constant 0 : i32
    %c0_i32_0 = arith.constant 0 : i32
    %c0_i32_1 = arith.constant 0 : i32
    return %arg0, %c0_i32, %c0_i32_0 : i32, i32, i32
  }
}

module attributes {stable_mosaic.version = 11 : i64} {
  func.func @_conv_kernel(%arg0: i32, %arg1: memref<1x41x64xbf16, #tpu.memory_space<vmem>>, %arg2: memref<4x64x128xbf16, #tpu.memory_space<vmem>>, %arg3: memref<1x128xf32, #tpu.memory_space<vmem>>, %arg4: memref<1x32x128xbf16, #tpu.memory_space<vmem>>, %arg5: memref<1x1x128xf32, #tpu.memory_space<vmem>>, %arg6: memref<1x1x128xf32, #tpu.memory_space<vmem>>) attributes {dimension_semantics = [#tpu.dimension_semantics<parallel>], iteration_bounds = array<i64: 2>, scalar_prefetch = 0 : i64, scratch_operands = 0 : i64, tpu.core_type = #tpu.core_type<tc>, window_params = [{transform_indices = @transform_0, window_bounds = array<i64: 1, 41, 64>}, {pipeline_mode = #tpu.pipeline_mode<synchronous>, transform_indices = @transform_1, window_bounds = array<i64: 4, 64, 128>}, {pipeline_mode = #tpu.pipeline_mode<synchronous>, transform_indices = @transform_2, window_bounds = array<i64: 1, 128>}, {transform_indices = @transform_3, window_bounds = array<i64: 1, 32, 128>}, {transform_indices = @transform_4, window_bounds = array<i64: 1, 1, 128>}, {transform_indices = @transform_5, window_bounds = array<i64: 1, 1, 128>}]} {
    %c0 = arith.constant 0 : index
    %c0_0 = arith.constant 0 : index
    %c0_1 = arith.constant 0 : index
    %0 = vector.load %arg1[%c0, %c0_0, %c0_1] : memref<1x41x64xbf16, #tpu.memory_space<vmem>>, vector<1x32x64xbf16>
    %1 = vector.shape_cast %0 : vector<1x32x64xbf16> to vector<32x64xbf16>
    %c0_2 = arith.constant 0 : index
    %c0_3 = arith.constant 0 : index
    %c0_4 = arith.constant 0 : index
    %2 = vector.load %arg2[%c0_2, %c0_3, %c0_4] : memref<4x64x128xbf16, #tpu.memory_space<vmem>>, vector<1x64x128xbf16>
    %3 = vector.shape_cast %2 : vector<1x64x128xbf16> to vector<64x128xbf16>
    %cst = arith.constant dense<0.000000e+00> : vector<32x128xf32>
    %4 = tpu.matmul %1, %3, %cst {dimension_numbers = #tpu.dot_dimension_numbers<[1], [0], [0], [1], [0, 0, 1, 1], [], []>} : vector<32x64xbf16>, vector<64x128xbf16>, vector<32x128xf32> -> vector<32x128xf32>
    %c0_5 = arith.constant 0 : index
    %c1 = arith.constant 1 : index
    %c0_6 = arith.constant 0 : index
    %5 = vector.load %arg1[%c0_5, %c1, %c0_6] : memref<1x41x64xbf16, #tpu.memory_space<vmem>>, vector<1x32x64xbf16>
    %6 = vector.shape_cast %5 : vector<1x32x64xbf16> to vector<32x64xbf16>
    %c1_7 = arith.constant 1 : index
    %c0_8 = arith.constant 0 : index
    %c0_9 = arith.constant 0 : index
    %7 = vector.load %arg2[%c1_7, %c0_8, %c0_9] : memref<4x64x128xbf16, #tpu.memory_space<vmem>>, vector<1x64x128xbf16>
    %8 = vector.shape_cast %7 : vector<1x64x128xbf16> to vector<64x128xbf16>
    %cst_10 = arith.constant dense<0.000000e+00> : vector<32x128xf32>
    %9 = tpu.matmul %6, %8, %cst_10 {dimension_numbers = #tpu.dot_dimension_numbers<[1], [0], [0], [1], [0, 0, 1, 1], [], []>} : vector<32x64xbf16>, vector<64x128xbf16>, vector<32x128xf32> -> vector<32x128xf32>
    %10 = arith.addf %4, %9 : vector<32x128xf32>
    %c0_11 = arith.constant 0 : index
    %c8 = arith.constant 8 : index
    %c0_12 = arith.constant 0 : index
    %11 = vector.load %arg1[%c0_11, %c8, %c0_12] : memref<1x41x64xbf16, #tpu.memory_space<vmem>>, vector<1x32x64xbf16>
    %12 = vector.shape_cast %11 : vector<1x32x64xbf16> to vector<32x64xbf16>
    %c2 = arith.constant 2 : index
    %c0_13 = arith.constant 0 : index
    %c0_14 = arith.constant 0 : index
    %13 = vector.load %arg2[%c2, %c0_13, %c0_14] : memref<4x64x128xbf16, #tpu.memory_space<vmem>>, vector<1x64x128xbf16>
    %14 = vector.shape_cast %13 : vector<1x64x128xbf16> to vector<64x128xbf16>
    %cst_15 = arith.constant dense<0.000000e+00> : vector<32x128xf32>
    %15 = tpu.matmul %12, %14, %cst_15 {dimension_numbers = #tpu.dot_dimension_numbers<[1], [0], [0], [1], [0, 0, 1, 1], [], []>} : vector<32x64xbf16>, vector<64x128xbf16>, vector<32x128xf32> -> vector<32x128xf32>
    %16 = arith.addf %10, %15 : vector<32x128xf32>
    %c0_16 = arith.constant 0 : index
    %c9 = arith.constant 9 : index
    %c0_17 = arith.constant 0 : index
    %17 = vector.load %arg1[%c0_16, %c9, %c0_17] : memref<1x41x64xbf16, #tpu.memory_space<vmem>>, vector<1x32x64xbf16>
    %18 = vector.shape_cast %17 : vector<1x32x64xbf16> to vector<32x64xbf16>
    %c3 = arith.constant 3 : index
    %c0_18 = arith.constant 0 : index
    %c0_19 = arith.constant 0 : index
    %19 = vector.load %arg2[%c3, %c0_18, %c0_19] : memref<4x64x128xbf16, #tpu.memory_space<vmem>>, vector<1x64x128xbf16>
    %20 = vector.shape_cast %19 : vector<1x64x128xbf16> to vector<64x128xbf16>
    %cst_20 = arith.constant dense<0.000000e+00> : vector<32x128xf32>
    %21 = tpu.matmul %18, %20, %cst_20 {dimension_numbers = #tpu.dot_dimension_numbers<[1], [0], [0], [1], [0, 0, 1, 1], [], []>} : vector<32x64xbf16>, vector<64x128xbf16>, vector<32x128xf32> -> vector<32x128xf32>
    %22 = arith.addf %16, %21 : vector<32x128xf32>
    %c0_21 = arith.constant 0 : index
    %c0_22 = arith.constant 0 : index
    %23 = vector.load %arg3[%c0_21, %c0_22] : memref<1x128xf32, #tpu.memory_space<vmem>>, vector<1x128xf32>
    %24 = vector.broadcast %23 : vector<1x128xf32> to vector<32x128xf32>
    %25 = arith.addf %22, %24 : vector<32x128xf32>
    %26 = tpu.iota {dimensions = array<i32: 0>} : vector<32x1xi32>
    %c8_i32 = arith.constant 8 : i32
    %c0_i32 = arith.constant 0 : i32
    %27 = arith.cmpi eq, %c8_i32, %c0_i32 : i32
    %c1_i32 = arith.constant 1 : i32
    %28 = arith.select %27, %c1_i32, %c8_i32 : i32
    %29 = vector.broadcast %28 : i32 to vector<32x1xi32>
    %30 = arith.remsi %26, %29 : vector<32x1xi32>
    %c0_i32_23 = arith.constant 0 : i32
    %31 = vector.broadcast %c0_i32_23 : i32 to vector<32x1xi32>
    %32 = arith.cmpi ne, %30, %31 : vector<32x1xi32>
    %c0_i32_24 = arith.constant 0 : i32
    %33 = vector.broadcast %c0_i32_24 : i32 to vector<32x1xi32>
    %34 = arith.cmpi slt, %30, %33 : vector<32x1xi32>
    %c0_i32_25 = arith.constant 0 : i32
    %35 = arith.cmpi slt, %28, %c0_i32_25 : i32
    %36 = vector.broadcast %35 : i1 to vector<32x1xi1>
    %37 = vector.broadcast %36 : vector<32x1xi1> to vector<32x1xi1>
    %38 = arith.xori %34, %37 : vector<32x1xi1>
    %39 = arith.andi %38, %32 : vector<32x1xi1>
    %40 = vector.broadcast %28 : i32 to vector<32x1xi32>
    %41 = arith.addi %30, %40 : vector<32x1xi32>
    %42 = arith.select %39, %41, %30 : vector<32x1xi1>, vector<32x1xi32>
    %c4_i32 = arith.constant 4 : i32
    %43 = vector.broadcast %c4_i32 : i32 to vector<32x1xi32>
    %44 = arith.cmpi slt, %42, %43 : vector<32x1xi32>
    %cst_26 = arith.constant 0.000000e+00 : f32
    %45 = vector.shape_cast %44 : vector<32x1xi1> to vector<32x1xi1>
    %46 = vector.broadcast %45 : vector<32x1xi1> to vector<32x128xi1>
    %47 = vector.broadcast %cst_26 : f32 to vector<32x128xf32>
    %48 = arith.select %46, %25, %47 : vector<32x128xi1>, vector<32x128xf32>
    %cst_27 = arith.constant dense<0.000000e+00> : vector<128xf32>
    %49 = vector.multi_reduction <add>, %48, %cst_27 [0] : vector<32x128xf32> to vector<128xf32>
    %50 = vector.shape_cast %49 : vector<128xf32> to vector<1x128xf32>
    %c0_28 = arith.constant 0 : index
    %c0_29 = arith.constant 0 : index
    %c0_30 = arith.constant 0 : index
    %51 = vector.load %arg5[%c0_28, %c0_29, %c0_30] : memref<1x1x128xf32, #tpu.memory_space<vmem>>, vector<1x1x128xf32>
    %52 = vector.shape_cast %51 : vector<1x1x128xf32> to vector<1x128xf32>
    %53 = vector.shape_cast %50 : vector<1x128xf32> to vector<1x1x128xf32>
    tpu.vector_store %arg5[%c0_28, %c0_29, %c0_30], %53 {strides = array<i32>} : memref<1x1x128xf32, #tpu.memory_space<vmem>>, vector<1x1x128xf32>,
    %54 = arith.mulf %48, %48 : vector<32x128xf32>
    %cst_31 = arith.constant dense<0.000000e+00> : vector<128xf32>
    %55 = vector.multi_reduction <add>, %54, %cst_31 [0] : vector<32x128xf32> to vector<128xf32>
    %56 = vector.shape_cast %55 : vector<128xf32> to vector<1x128xf32>
    %c0_32 = arith.constant 0 : index
    %c0_33 = arith.constant 0 : index
    %c0_34 = arith.constant 0 : index
    %57 = vector.load %arg6[%c0_32, %c0_33, %c0_34] : memref<1x1x128xf32, #tpu.memory_space<vmem>>, vector<1x1x128xf32>
    %58 = vector.shape_cast %57 : vector<1x1x128xf32> to vector<1x128xf32>
    %59 = vector.shape_cast %56 : vector<1x128xf32> to vector<1x1x128xf32>
    tpu.vector_store %arg6[%c0_32, %c0_33, %c0_34], %59 {strides = array<i32>} : memref<1x1x128xf32, #tpu.memory_space<vmem>>, vector<1x1x128xf32>,
    %cst_35 = arith.constant 0.000000e+00 : f32
    %60 = vector.shape_cast %44 : vector<32x1xi1> to vector<32x1xi1>
    %61 = vector.broadcast %60 : vector<32x1xi1> to vector<32x128xi1>
    %62 = vector.broadcast %cst_35 : f32 to vector<32x128xf32>
    %63 = arith.select %61, %25, %62 : vector<32x128xi1>, vector<32x128xf32>
    %64 = arith.truncf %63 : vector<32x128xf32> to vector<32x128xbf16>
    %c0_36 = arith.constant 0 : index
    %c0_37 = arith.constant 0 : index
    %c0_38 = arith.constant 0 : index
    %65 = vector.load %arg4[%c0_36, %c0_37, %c0_38] : memref<1x32x128xbf16, #tpu.memory_space<vmem>>, vector<1x32x128xbf16>
    %66 = vector.shape_cast %65 : vector<1x32x128xbf16> to vector<32x128xbf16>
    %67 = vector.shape_cast %64 : vector<32x128xbf16> to vector<1x32x128xbf16>
    tpu.vector_store %arg4[%c0_36, %c0_37, %c0_38], %67 {strides = array<i32>} : memref<1x32x128xbf16, #tpu.memory_space<vmem>>, vector<1x32x128xbf16>,
    return
  }
  func.func @transform_0(%arg0: i32) -> (i32, i32, i32) {
    %c0_i32 = arith.constant 0 : i32
    %c0_i32_0 = arith.constant 0 : i32
    %c0_i32_1 = arith.constant 0 : i32
    return %arg0, %c0_i32, %c0_i32_0 : i32, i32, i32
  }
  func.func @transform_1(%arg0: i32) -> (i32, i32, i32) {
    %c0_i32 = arith.constant 0 : i32
    %c0_i32_0 = arith.constant 0 : i32
    %c0_i32_1 = arith.constant 0 : i32
    %c0_i32_2 = arith.constant 0 : i32
    return %c0_i32, %c0_i32_0, %c0_i32_1 : i32, i32, i32
  }
  func.func @transform_2(%arg0: i32) -> (i32, i32) {
    %c0_i32 = arith.constant 0 : i32
    %c0_i32_0 = arith.constant 0 : i32
    %c0_i32_1 = arith.constant 0 : i32
    return %c0_i32, %c0_i32_0 : i32, i32
  }
  func.func @transform_3(%arg0: i32) -> (i32, i32, i32) {
    %c0_i32 = arith.constant 0 : i32
    %c0_i32_0 = arith.constant 0 : i32
    %c0_i32_1 = arith.constant 0 : i32
    return %arg0, %c0_i32, %c0_i32_0 : i32, i32, i32
  }
  func.func @transform_4(%arg0: i32) -> (i32, i32, i32) {
    %c0_i32 = arith.constant 0 : i32
    %c0_i32_0 = arith.constant 0 : i32
    %c0_i32_1 = arith.constant 0 : i32
    return %arg0, %c0_i32, %c0_i32_0 : i32, i32, i32
  }
  func.func @transform_5(%arg0: i32) -> (i32, i32, i32) {
    %c0_i32 = arith.constant 0 : i32
    %c0_i32_0 = arith.constant 0 : i32
    %c0_i32_1 = arith.constant 0 : i32
    return %arg0, %c0_i32, %c0_i32_0 : i32, i32, i32
  }
}

module attributes {stable_mosaic.version = 11 : i64} {
  func.func @_conv_kernel(%arg0: i32, %arg1: memref<1x51x128xbf16, #tpu.memory_space<vmem>>, %arg2: memref<16x128x128xbf16, #tpu.memory_space<vmem>>, %arg3: memref<1x128xf32, #tpu.memory_space<vmem>>, %arg4: memref<1x128xf32, #tpu.memory_space<vmem>>, %arg5: memref<1x128xf32, #tpu.memory_space<vmem>>, %arg6: memref<1x24x128xbf16, #tpu.memory_space<vmem>>, %arg7: memref<1x1x128xf32, #tpu.memory_space<vmem>>, %arg8: memref<1x1x128xf32, #tpu.memory_space<vmem>>) attributes {dimension_semantics = [#tpu.dimension_semantics<parallel>], iteration_bounds = array<i64: 2>, scalar_prefetch = 0 : i64, scratch_operands = 0 : i64, tpu.core_type = #tpu.core_type<tc>, window_params = [{transform_indices = @transform_0, window_bounds = array<i64: 1, 51, 128>}, {pipeline_mode = #tpu.pipeline_mode<synchronous>, transform_indices = @transform_1, window_bounds = array<i64: 16, 128, 128>}, {pipeline_mode = #tpu.pipeline_mode<synchronous>, transform_indices = @transform_2, window_bounds = array<i64: 1, 128>}, {pipeline_mode = #tpu.pipeline_mode<synchronous>, transform_indices = @transform_3, window_bounds = array<i64: 1, 128>}, {pipeline_mode = #tpu.pipeline_mode<synchronous>, transform_indices = @transform_4, window_bounds = array<i64: 1, 128>}, {transform_indices = @transform_5, window_bounds = array<i64: 1, 24, 128>}, {transform_indices = @transform_6, window_bounds = array<i64: 1, 1, 128>}, {transform_indices = @transform_7, window_bounds = array<i64: 1, 1, 128>}]} {
    %c0 = arith.constant 0 : index
    %c0_0 = arith.constant 0 : index
    %c0_1 = arith.constant 0 : index
    %0 = vector.load %arg1[%c0, %c0_0, %c0_1] : memref<1x51x128xbf16, #tpu.memory_space<vmem>>, vector<1x51x128xbf16>
    %1 = vector.shape_cast %0 : vector<1x51x128xbf16> to vector<51x128xbf16>
    %2 = tpu.iota {dimensions = array<i32: 0>} : vector<51x1xi32>
    %c8_i32 = arith.constant 8 : i32
    %c0_i32 = arith.constant 0 : i32
    %3 = arith.cmpi eq, %c8_i32, %c0_i32 : i32
    %c1_i32 = arith.constant 1 : i32
    %4 = arith.select %3, %c1_i32, %c8_i32 : i32
    %5 = vector.broadcast %4 : i32 to vector<51x1xi32>
    %6 = arith.remsi %2, %5 : vector<51x1xi32>
    %c0_i32_2 = arith.constant 0 : i32
    %7 = vector.broadcast %c0_i32_2 : i32 to vector<51x1xi32>
    %8 = arith.cmpi ne, %6, %7 : vector<51x1xi32>
    %c0_i32_3 = arith.constant 0 : i32
    %9 = vector.broadcast %c0_i32_3 : i32 to vector<51x1xi32>
    %10 = arith.cmpi slt, %6, %9 : vector<51x1xi32>
    %c0_i32_4 = arith.constant 0 : i32
    %11 = arith.cmpi slt, %4, %c0_i32_4 : i32
    %12 = vector.broadcast %11 : i1 to vector<51x1xi1>
    %13 = vector.broadcast %12 : vector<51x1xi1> to vector<51x1xi1>
    %14 = arith.xori %10, %13 : vector<51x1xi1>
    %15 = arith.andi %14, %8 : vector<51x1xi1>
    %16 = vector.broadcast %4 : i32 to vector<51x1xi32>
    %17 = arith.addi %6, %16 : vector<51x1xi32>
    %18 = arith.select %15, %17, %6 : vector<51x1xi1>, vector<51x1xi32>
    %c8_i32_5 = arith.constant 8 : i32
    %19 = vector.broadcast %c8_i32_5 : i32 to vector<51x1xi32>
    %20 = arith.cmpi sge, %2, %19 : vector<51x1xi32>
    %c40_i32 = arith.constant 40 : i32
    %21 = vector.broadcast %c40_i32 : i32 to vector<51x1xi32>
    %22 = arith.cmpi slt, %2, %21 : vector<51x1xi32>
    %23 = arith.andi %20, %22 : vector<51x1xi1>
    %c1_i32_6 = arith.constant 1 : i32
    %24 = vector.broadcast %c1_i32_6 : i32 to vector<51x1xi32>
    %25 = arith.cmpi sge, %18, %24 : vector<51x1xi32>
    %26 = arith.andi %23, %25 : vector<51x1xi1>
    %c4_i32 = arith.constant 4 : i32
    %27 = vector.broadcast %c4_i32 : i32 to vector<51x1xi32>
    %28 = arith.cmpi sle, %18, %27 : vector<51x1xi32>
    %29 = arith.andi %26, %28 : vector<51x1xi1>
    %30 = arith.extf %1 : vector<51x128xbf16> to vector<51x128xf32>
    %c0_7 = arith.constant 0 : index
    %c0_8 = arith.constant 0 : index
    %31 = vector.load %arg4[%c0_7, %c0_8] : memref<1x128xf32, #tpu.memory_space<vmem>>, vector<1x128xf32>
    %32 = vector.broadcast %31 : vector<1x128xf32> to vector<51x128xf32>
    %33 = arith.mulf %30, %32 : vector<51x128xf32>
    %c0_9 = arith.constant 0 : index
    %c0_10 = arith.constant 0 : index
    %34 = vector.load %arg5[%c0_9, %c0_10] : memref<1x128xf32, #tpu.memory_space<vmem>>, vector<1x128xf32>
    %35 = vector.broadcast %34 : vector<1x128xf32> to vector<51x128xf32>
    %36 = arith.addf %33, %35 : vector<51x128xf32>
    %cst = arith.constant 0.000000e+00 : f32
    %37 = vector.broadcast %cst : f32 to vector<51x128xf32>
    %38 = arith.cmpf oge, %36, %37 : vector<51x128xf32>
    %cst_11 = arith.constant 2.000000e-01 : f32
    %39 = vector.broadcast %cst_11 : f32 to vector<51x128xf32>
    %40 = arith.mulf %39, %36 : vector<51x128xf32>
    %41 = arith.select %38, %36, %40 : vector<51x128xi1>, vector<51x128xf32>
    %cst_12 = arith.constant 0.000000e+00 : f32
    %42 = vector.shape_cast %29 : vector<51x1xi1> to vector<51x1xi1>
    %43 = vector.broadcast %42 : vector<51x1xi1> to vector<51x128xi1>
    %44 = vector.broadcast %cst_12 : f32 to vector<51x128xf32>
    %45 = arith.select %43, %41, %44 : vector<51x128xi1>, vector<51x128xf32>
    %46 = arith.truncf %45 : vector<51x128xf32> to vector<51x128xbf16>
    %47 = vector.extract_strided_slice %46 {offsets = [0, 0], sizes = [24, 128], strides = [1, 1]} : vector<51x128xbf16> to vector<24x128xbf16>
    %c0_13 = arith.constant 0 : index
    %c0_14 = arith.constant 0 : index
    %c0_15 = arith.constant 0 : index
    %48 = vector.load %arg2[%c0_13, %c0_14, %c0_15] : memref<16x128x128xbf16, #tpu.memory_space<vmem>>, vector<1x128x128xbf16>
    %49 = vector.shape_cast %48 : vector<1x128x128xbf16> to vector<128x128xbf16>
    %cst_16 = arith.constant dense<0.000000e+00> : vector<24x128xf32>
    %50 = tpu.matmul %47, %49, %cst_16 {dimension_numbers = #tpu.dot_dimension_numbers<[1], [0], [0], [1], [0, 0, 1, 1], [], []>} : vector<24x128xbf16>, vector<128x128xbf16>, vector<24x128xf32> -> vector<24x128xf32>
    %51 = vector.extract_strided_slice %46 {offsets = [1, 0], sizes = [24, 128], strides = [1, 1]} : vector<51x128xbf16> to vector<24x128xbf16>
    %c1 = arith.constant 1 : index
    %c0_17 = arith.constant 0 : index
    %c0_18 = arith.constant 0 : index
    %52 = vector.load %arg2[%c1, %c0_17, %c0_18] : memref<16x128x128xbf16, #tpu.memory_space<vmem>>, vector<1x128x128xbf16>
    %53 = vector.shape_cast %52 : vector<1x128x128xbf16> to vector<128x128xbf16>
    %cst_19 = arith.constant dense<0.000000e+00> : vector<24x128xf32>
    %54 = tpu.matmul %51, %53, %cst_19 {dimension_numbers = #tpu.dot_dimension_numbers<[1], [0], [0], [1], [0, 0, 1, 1], [], []>} : vector<24x128xbf16>, vector<128x128xbf16>, vector<24x128xf32> -> vector<24x128xf32>
    %55 = arith.addf %50, %54 : vector<24x128xf32>
    %56 = vector.extract_strided_slice %46 {offsets = [2, 0], sizes = [24, 128], strides = [1, 1]} : vector<51x128xbf16> to vector<24x128xbf16>
    %c2 = arith.constant 2 : index
    %c0_20 = arith.constant 0 : index
    %c0_21 = arith.constant 0 : index
    %57 = vector.load %arg2[%c2, %c0_20, %c0_21] : memref<16x128x128xbf16, #tpu.memory_space<vmem>>, vector<1x128x128xbf16>
    %58 = vector.shape_cast %57 : vector<1x128x128xbf16> to vector<128x128xbf16>
    %cst_22 = arith.constant dense<0.000000e+00> : vector<24x128xf32>
    %59 = tpu.matmul %56, %58, %cst_22 {dimension_numbers = #tpu.dot_dimension_numbers<[1], [0], [0], [1], [0, 0, 1, 1], [], []>} : vector<24x128xbf16>, vector<128x128xbf16>, vector<24x128xf32> -> vector<24x128xf32>
    %60 = arith.addf %55, %59 : vector<24x128xf32>
    %61 = vector.extract_strided_slice %46 {offsets = [3, 0], sizes = [24, 128], strides = [1, 1]} : vector<51x128xbf16> to vector<24x128xbf16>
    %c3 = arith.constant 3 : index
    %c0_23 = arith.constant 0 : index
    %c0_24 = arith.constant 0 : index
    %62 = vector.load %arg2[%c3, %c0_23, %c0_24] : memref<16x128x128xbf16, #tpu.memory_space<vmem>>, vector<1x128x128xbf16>
    %63 = vector.shape_cast %62 : vector<1x128x128xbf16> to vector<128x128xbf16>
    %cst_25 = arith.constant dense<0.000000e+00> : vector<24x128xf32>
    %64 = tpu.matmul %61, %63, %cst_25 {dimension_numbers = #tpu.dot_dimension_numbers<[1], [0], [0], [1], [0, 0, 1, 1], [], []>} : vector<24x128xbf16>, vector<128x128xbf16>, vector<24x128xf32> -> vector<24x128xf32>
    %65 = arith.addf %60, %64 : vector<24x128xf32>
    %66 = vector.extract_strided_slice %46 {offsets = [8, 0], sizes = [24, 128], strides = [1, 1]} : vector<51x128xbf16> to vector<24x128xbf16>
    %c4 = arith.constant 4 : index
    %c0_26 = arith.constant 0 : index
    %c0_27 = arith.constant 0 : index
    %67 = vector.load %arg2[%c4, %c0_26, %c0_27] : memref<16x128x128xbf16, #tpu.memory_space<vmem>>, vector<1x128x128xbf16>
    %68 = vector.shape_cast %67 : vector<1x128x128xbf16> to vector<128x128xbf16>
    %cst_28 = arith.constant dense<0.000000e+00> : vector<24x128xf32>
    %69 = tpu.matmul %66, %68, %cst_28 {dimension_numbers = #tpu.dot_dimension_numbers<[1], [0], [0], [1], [0, 0, 1, 1], [], []>} : vector<24x128xbf16>, vector<128x128xbf16>, vector<24x128xf32> -> vector<24x128xf32>
    %70 = arith.addf %65, %69 : vector<24x128xf32>
    %71 = vector.extract_strided_slice %46 {offsets = [9, 0], sizes = [24, 128], strides = [1, 1]} : vector<51x128xbf16> to vector<24x128xbf16>
    %c5 = arith.constant 5 : index
    %c0_29 = arith.constant 0 : index
    %c0_30 = arith.constant 0 : index
    %72 = vector.load %arg2[%c5, %c0_29, %c0_30] : memref<16x128x128xbf16, #tpu.memory_space<vmem>>, vector<1x128x128xbf16>
    %73 = vector.shape_cast %72 : vector<1x128x128xbf16> to vector<128x128xbf16>
    %cst_31 = arith.constant dense<0.000000e+00> : vector<24x128xf32>
    %74 = tpu.matmul %71, %73, %cst_31 {dimension_numbers = #tpu.dot_dimension_numbers<[1], [0], [0], [1], [0, 0, 1, 1], [], []>} : vector<24x128xbf16>, vector<128x128xbf16>, vector<24x128xf32> -> vector<24x128xf32>
    %75 = arith.addf %70, %74 : vector<24x128xf32>
    %76 = vector.extract_strided_slice %46 {offsets = [10, 0], sizes = [24, 128], strides = [1, 1]} : vector<51x128xbf16> to vector<24x128xbf16>
    %c6 = arith.constant 6 : index
    %c0_32 = arith.constant 0 : index
    %c0_33 = arith.constant 0 : index
    %77 = vector.load %arg2[%c6, %c0_32, %c0_33] : memref<16x128x128xbf16, #tpu.memory_space<vmem>>, vector<1x128x128xbf16>
    %78 = vector.shape_cast %77 : vector<1x128x128xbf16> to vector<128x128xbf16>
    %cst_34 = arith.constant dense<0.000000e+00> : vector<24x128xf32>
    %79 = tpu.matmul %76, %78, %cst_34 {dimension_numbers = #tpu.dot_dimension_numbers<[1], [0], [0], [1], [0, 0, 1, 1], [], []>} : vector<24x128xbf16>, vector<128x128xbf16>, vector<24x128xf32> -> vector<24x128xf32>
    %80 = arith.addf %75, %79 : vector<24x128xf32>
    %81 = vector.extract_strided_slice %46 {offsets = [11, 0], sizes = [24, 128], strides = [1, 1]} : vector<51x128xbf16> to vector<24x128xbf16>
    %c7 = arith.constant 7 : index
    %c0_35 = arith.constant 0 : index
    %c0_36 = arith.constant 0 : index
    %82 = vector.load %arg2[%c7, %c0_35, %c0_36] : memref<16x128x128xbf16, #tpu.memory_space<vmem>>, vector<1x128x128xbf16>
    %83 = vector.shape_cast %82 : vector<1x128x128xbf16> to vector<128x128xbf16>
    %cst_37 = arith.constant dense<0.000000e+00> : vector<24x128xf32>
    %84 = tpu.matmul %81, %83, %cst_37 {dimension_numbers = #tpu.dot_dimension_numbers<[1], [0], [0], [1], [0, 0, 1, 1], [], []>} : vector<24x128xbf16>, vector<128x128xbf16>, vector<24x128xf32> -> vector<24x128xf32>
    %85 = arith.addf %80, %84 : vector<24x128xf32>
    %86 = vector.extract_strided_slice %46 {offsets = [16, 0], sizes = [24, 128], strides = [1, 1]} : vector<51x128xbf16> to vector<24x128xbf16>
    %c8 = arith.constant 8 : index
    %c0_38 = arith.constant 0 : index
    %c0_39 = arith.constant 0 : index
    %87 = vector.load %arg2[%c8, %c0_38, %c0_39] : memref<16x128x128xbf16, #tpu.memory_space<vmem>>, vector<1x128x128xbf16>
    %88 = vector.shape_cast %87 : vector<1x128x128xbf16> to vector<128x128xbf16>
    %cst_40 = arith.constant dense<0.000000e+00> : vector<24x128xf32>
    %89 = tpu.matmul %86, %88, %cst_40 {dimension_numbers = #tpu.dot_dimension_numbers<[1], [0], [0], [1], [0, 0, 1, 1], [], []>} : vector<24x128xbf16>, vector<128x128xbf16>, vector<24x128xf32> -> vector<24x128xf32>
    %90 = arith.addf %85, %89 : vector<24x128xf32>
    %91 = vector.extract_strided_slice %46 {offsets = [17, 0], sizes = [24, 128], strides = [1, 1]} : vector<51x128xbf16> to vector<24x128xbf16>
    %c9 = arith.constant 9 : index
    %c0_41 = arith.constant 0 : index
    %c0_42 = arith.constant 0 : index
    %92 = vector.load %arg2[%c9, %c0_41, %c0_42] : memref<16x128x128xbf16, #tpu.memory_space<vmem>>, vector<1x128x128xbf16>
    %93 = vector.shape_cast %92 : vector<1x128x128xbf16> to vector<128x128xbf16>
    %cst_43 = arith.constant dense<0.000000e+00> : vector<24x128xf32>
    %94 = tpu.matmul %91, %93, %cst_43 {dimension_numbers = #tpu.dot_dimension_numbers<[1], [0], [0], [1], [0, 0, 1, 1], [], []>} : vector<24x128xbf16>, vector<128x128xbf16>, vector<24x128xf32> -> vector<24x128xf32>
    %95 = arith.addf %90, %94 : vector<24x128xf32>
    %96 = vector.extract_strided_slice %46 {offsets = [18, 0], sizes = [24, 128], strides = [1, 1]} : vector<51x128xbf16> to vector<24x128xbf16>
    %c10 = arith.constant 10 : index
    %c0_44 = arith.constant 0 : index
    %c0_45 = arith.constant 0 : index
    %97 = vector.load %arg2[%c10, %c0_44, %c0_45] : memref<16x128x128xbf16, #tpu.memory_space<vmem>>, vector<1x128x128xbf16>
    %98 = vector.shape_cast %97 : vector<1x128x128xbf16> to vector<128x128xbf16>
    %cst_46 = arith.constant dense<0.000000e+00> : vector<24x128xf32>
    %99 = tpu.matmul %96, %98, %cst_46 {dimension_numbers = #tpu.dot_dimension_numbers<[1], [0], [0], [1], [0, 0, 1, 1], [], []>} : vector<24x128xbf16>, vector<128x128xbf16>, vector<24x128xf32> -> vector<24x128xf32>
    %100 = arith.addf %95, %99 : vector<24x128xf32>
    %101 = vector.extract_strided_slice %46 {offsets = [19, 0], sizes = [24, 128], strides = [1, 1]} : vector<51x128xbf16> to vector<24x128xbf16>
    %c11 = arith.constant 11 : index
    %c0_47 = arith.constant 0 : index
    %c0_48 = arith.constant 0 : index
    %102 = vector.load %arg2[%c11, %c0_47, %c0_48] : memref<16x128x128xbf16, #tpu.memory_space<vmem>>, vector<1x128x128xbf16>
    %103 = vector.shape_cast %102 : vector<1x128x128xbf16> to vector<128x128xbf16>
    %cst_49 = arith.constant dense<0.000000e+00> : vector<24x128xf32>
    %104 = tpu.matmul %101, %103, %cst_49 {dimension_numbers = #tpu.dot_dimension_numbers<[1], [0], [0], [1], [0, 0, 1, 1], [], []>} : vector<24x128xbf16>, vector<128x128xbf16>, vector<24x128xf32> -> vector<24x128xf32>
    %105 = arith.addf %100, %104 : vector<24x128xf32>
    %106 = vector.extract_strided_slice %46 {offsets = [24, 0], sizes = [24, 128], strides = [1, 1]} : vector<51x128xbf16> to vector<24x128xbf16>
    %c12 = arith.constant 12 : index
    %c0_50 = arith.constant 0 : index
    %c0_51 = arith.constant 0 : index
    %107 = vector.load %arg2[%c12, %c0_50, %c0_51] : memref<16x128x128xbf16, #tpu.memory_space<vmem>>, vector<1x128x128xbf16>
    %108 = vector.shape_cast %107 : vector<1x128x128xbf16> to vector<128x128xbf16>
    %cst_52 = arith.constant dense<0.000000e+00> : vector<24x128xf32>
    %109 = tpu.matmul %106, %108, %cst_52 {dimension_numbers = #tpu.dot_dimension_numbers<[1], [0], [0], [1], [0, 0, 1, 1], [], []>} : vector<24x128xbf16>, vector<128x128xbf16>, vector<24x128xf32> -> vector<24x128xf32>
    %110 = arith.addf %105, %109 : vector<24x128xf32>
    %111 = vector.extract_strided_slice %46 {offsets = [25, 0], sizes = [24, 128], strides = [1, 1]} : vector<51x128xbf16> to vector<24x128xbf16>
    %c13 = arith.constant 13 : index
    %c0_53 = arith.constant 0 : index
    %c0_54 = arith.constant 0 : index
    %112 = vector.load %arg2[%c13, %c0_53, %c0_54] : memref<16x128x128xbf16, #tpu.memory_space<vmem>>, vector<1x128x128xbf16>
    %113 = vector.shape_cast %112 : vector<1x128x128xbf16> to vector<128x128xbf16>
    %cst_55 = arith.constant dense<0.000000e+00> : vector<24x128xf32>
    %114 = tpu.matmul %111, %113, %cst_55 {dimension_numbers = #tpu.dot_dimension_numbers<[1], [0], [0], [1], [0, 0, 1, 1], [], []>} : vector<24x128xbf16>, vector<128x128xbf16>, vector<24x128xf32> -> vector<24x128xf32>
    %115 = arith.addf %110, %114 : vector<24x128xf32>
    %116 = vector.extract_strided_slice %46 {offsets = [26, 0], sizes = [24, 128], strides = [1, 1]} : vector<51x128xbf16> to vector<24x128xbf16>
    %c14 = arith.constant 14 : index
    %c0_56 = arith.constant 0 : index
    %c0_57 = arith.constant 0 : index
    %117 = vector.load %arg2[%c14, %c0_56, %c0_57] : memref<16x128x128xbf16, #tpu.memory_space<vmem>>, vector<1x128x128xbf16>
    %118 = vector.shape_cast %117 : vector<1x128x128xbf16> to vector<128x128xbf16>
    %cst_58 = arith.constant dense<0.000000e+00> : vector<24x128xf32>
    %119 = tpu.matmul %116, %118, %cst_58 {dimension_numbers = #tpu.dot_dimension_numbers<[1], [0], [0], [1], [0, 0, 1, 1], [], []>} : vector<24x128xbf16>, vector<128x128xbf16>, vector<24x128xf32> -> vector<24x128xf32>
    %120 = arith.addf %115, %119 : vector<24x128xf32>
    %121 = vector.extract_strided_slice %46 {offsets = [27, 0], sizes = [24, 128], strides = [1, 1]} : vector<51x128xbf16> to vector<24x128xbf16>
    %c15 = arith.constant 15 : index
    %c0_59 = arith.constant 0 : index
    %c0_60 = arith.constant 0 : index
    %122 = vector.load %arg2[%c15, %c0_59, %c0_60] : memref<16x128x128xbf16, #tpu.memory_space<vmem>>, vector<1x128x128xbf16>
    %123 = vector.shape_cast %122 : vector<1x128x128xbf16> to vector<128x128xbf16>
    %cst_61 = arith.constant dense<0.000000e+00> : vector<24x128xf32>
    %124 = tpu.matmul %121, %123, %cst_61 {dimension_numbers = #tpu.dot_dimension_numbers<[1], [0], [0], [1], [0, 0, 1, 1], [], []>} : vector<24x128xbf16>, vector<128x128xbf16>, vector<24x128xf32> -> vector<24x128xf32>
    %125 = arith.addf %120, %124 : vector<24x128xf32>
    %c0_62 = arith.constant 0 : index
    %c0_63 = arith.constant 0 : index
    %126 = vector.load %arg3[%c0_62, %c0_63] : memref<1x128xf32, #tpu.memory_space<vmem>>, vector<1x128xf32>
    %127 = vector.broadcast %126 : vector<1x128xf32> to vector<24x128xf32>
    %128 = arith.addf %125, %127 : vector<24x128xf32>
    %129 = tpu.iota {dimensions = array<i32: 0>} : vector<24x1xi32>
    %c8_i32_64 = arith.constant 8 : i32
    %c0_i32_65 = arith.constant 0 : i32
    %130 = arith.cmpi eq, %c8_i32_64, %c0_i32_65 : i32
    %c1_i32_66 = arith.constant 1 : i32
    %131 = arith.select %130, %c1_i32_66, %c8_i32_64 : i32
    %132 = vector.broadcast %131 : i32 to vector<24x1xi32>
    %133 = arith.remsi %129, %132 : vector<24x1xi32>
    %c0_i32_67 = arith.constant 0 : i32
    %134 = vector.broadcast %c0_i32_67 : i32 to vector<24x1xi32>
    %135 = arith.cmpi ne, %133, %134 : vector<24x1xi32>
    %c0_i32_68 = arith.constant 0 : i32
    %136 = vector.broadcast %c0_i32_68 : i32 to vector<24x1xi32>
    %137 = arith.cmpi slt, %133, %136 : vector<24x1xi32>
    %c0_i32_69 = arith.constant 0 : i32
    %138 = arith.cmpi slt, %131, %c0_i32_69 : i32
    %139 = vector.broadcast %138 : i1 to vector<24x1xi1>
    %140 = vector.broadcast %139 : vector<24x1xi1> to vector<24x1xi1>
    %141 = arith.xori %137, %140 : vector<24x1xi1>
    %142 = arith.andi %141, %135 : vector<24x1xi1>
    %143 = vector.broadcast %131 : i32 to vector<24x1xi32>
    %144 = arith.addi %133, %143 : vector<24x1xi32>
    %145 = arith.select %142, %144, %133 : vector<24x1xi1>, vector<24x1xi32>
    %c3_i32 = arith.constant 3 : i32
    %146 = vector.broadcast %c3_i32 : i32 to vector<24x1xi32>
    %147 = arith.cmpi slt, %145, %146 : vector<24x1xi32>
    %cst_70 = arith.constant 0.000000e+00 : f32
    %148 = vector.shape_cast %147 : vector<24x1xi1> to vector<24x1xi1>
    %149 = vector.broadcast %148 : vector<24x1xi1> to vector<24x128xi1>
    %150 = vector.broadcast %cst_70 : f32 to vector<24x128xf32>
    %151 = arith.select %149, %128, %150 : vector<24x128xi1>, vector<24x128xf32>
    %cst_71 = arith.constant dense<0.000000e+00> : vector<128xf32>
    %152 = vector.multi_reduction <add>, %151, %cst_71 [0] : vector<24x128xf32> to vector<128xf32>
    %153 = vector.shape_cast %152 : vector<128xf32> to vector<1x128xf32>
    %c0_72 = arith.constant 0 : index
    %c0_73 = arith.constant 0 : index
    %c0_74 = arith.constant 0 : index
    %154 = vector.load %arg7[%c0_72, %c0_73, %c0_74] : memref<1x1x128xf32, #tpu.memory_space<vmem>>, vector<1x1x128xf32>
    %155 = vector.shape_cast %154 : vector<1x1x128xf32> to vector<1x128xf32>
    %156 = vector.shape_cast %153 : vector<1x128xf32> to vector<1x1x128xf32>
    tpu.vector_store %arg7[%c0_72, %c0_73, %c0_74], %156 {strides = array<i32>} : memref<1x1x128xf32, #tpu.memory_space<vmem>>, vector<1x1x128xf32>,
    %157 = arith.mulf %151, %151 : vector<24x128xf32>
    %cst_75 = arith.constant dense<0.000000e+00> : vector<128xf32>
    %158 = vector.multi_reduction <add>, %157, %cst_75 [0] : vector<24x128xf32> to vector<128xf32>
    %159 = vector.shape_cast %158 : vector<128xf32> to vector<1x128xf32>
    %c0_76 = arith.constant 0 : index
    %c0_77 = arith.constant 0 : index
    %c0_78 = arith.constant 0 : index
    %160 = vector.load %arg8[%c0_76, %c0_77, %c0_78] : memref<1x1x128xf32, #tpu.memory_space<vmem>>, vector<1x1x128xf32>
    %161 = vector.shape_cast %160 : vector<1x1x128xf32> to vector<1x128xf32>
    %162 = vector.shape_cast %159 : vector<1x128xf32> to vector<1x1x128xf32>
    tpu.vector_store %arg8[%c0_76, %c0_77, %c0_78], %162 {strides = array<i32>} : memref<1x1x128xf32, #tpu.memory_space<vmem>>, vector<1x1x128xf32>,
    %cst_79 = arith.constant 0.000000e+00 : f32
    %163 = vector.shape_cast %147 : vector<24x1xi1> to vector<24x1xi1>
    %164 = vector.broadcast %163 : vector<24x1xi1> to vector<24x128xi1>
    %165 = vector.broadcast %cst_79 : f32 to vector<24x128xf32>
    %166 = arith.select %164, %128, %165 : vector<24x128xi1>, vector<24x128xf32>
    %167 = arith.truncf %166 : vector<24x128xf32> to vector<24x128xbf16>
    %c0_80 = arith.constant 0 : index
    %c0_81 = arith.constant 0 : index
    %c0_82 = arith.constant 0 : index
    %168 = vector.load %arg6[%c0_80, %c0_81, %c0_82] : memref<1x24x128xbf16, #tpu.memory_space<vmem>>, vector<1x24x128xbf16>
    %169 = vector.shape_cast %168 : vector<1x24x128xbf16> to vector<24x128xbf16>
    %170 = vector.shape_cast %167 : vector<24x128xbf16> to vector<1x24x128xbf16>
    tpu.vector_store %arg6[%c0_80, %c0_81, %c0_82], %170 {strides = array<i32>} : memref<1x24x128xbf16, #tpu.memory_space<vmem>>, vector<1x24x128xbf16>,
    return
  }
  func.func @transform_0(%arg0: i32) -> (i32, i32, i32) {
    %c0_i32 = arith.constant 0 : i32
    %c0_i32_0 = arith.constant 0 : i32
    %c0_i32_1 = arith.constant 0 : i32
    return %arg0, %c0_i32, %c0_i32_0 : i32, i32, i32
  }
  func.func @transform_1(%arg0: i32) -> (i32, i32, i32) {
    %c0_i32 = arith.constant 0 : i32
    %c0_i32_0 = arith.constant 0 : i32
    %c0_i32_1 = arith.constant 0 : i32
    %c0_i32_2 = arith.constant 0 : i32
    return %c0_i32, %c0_i32_0, %c0_i32_1 : i32, i32, i32
  }
  func.func @transform_2(%arg0: i32) -> (i32, i32) {
    %c0_i32 = arith.constant 0 : i32
    %c0_i32_0 = arith.constant 0 : i32
    %c0_i32_1 = arith.constant 0 : i32
    return %c0_i32, %c0_i32_0 : i32, i32
  }
  func.func @transform_3(%arg0: i32) -> (i32, i32) {
    %c0_i32 = arith.constant 0 : i32
    %c0_i32_0 = arith.constant 0 : i32
    %c0_i32_1 = arith.constant 0 : i32
    return %c0_i32, %c0_i32_0 : i32, i32
  }
  func.func @transform_4(%arg0: i32) -> (i32, i32) {
    %c0_i32 = arith.constant 0 : i32
    %c0_i32_0 = arith.constant 0 : i32
    %c0_i32_1 = arith.constant 0 : i32
    return %c0_i32, %c0_i32_0 : i32, i32
  }
  func.func @transform_5(%arg0: i32) -> (i32, i32, i32) {
    %c0_i32 = arith.constant 0 : i32
    %c0_i32_0 = arith.constant 0 : i32
    %c0_i32_1 = arith.constant 0 : i32
    return %arg0, %c0_i32, %c0_i32_0 : i32, i32, i32
  }
  func.func @transform_6(%arg0: i32) -> (i32, i32, i32) {
    %c0_i32 = arith.constant 0 : i32
    %c0_i32_0 = arith.constant 0 : i32
    %c0_i32_1 = arith.constant 0 : i32
    return %arg0, %c0_i32, %c0_i32_0 : i32, i32, i32
  }
  func.func @transform_7(%arg0: i32) -> (i32, i32, i32) {
    %c0_i32 = arith.constant 0 : i32
    %c0_i32_0 = arith.constant 0 : i32
    %c0_i32_1 = arith.constant 0 : i32
    return %arg0, %c0_i32, %c0_i32_0 : i32, i32, i32
  }
}

module attributes {stable_mosaic.version = 11 : i64} {
  func.func @_final_kernel(%arg0: i32, %arg1: memref<1x43x128xbf16, #tpu.memory_space<vmem>>, %arg2: memref<128x128xbf16, #tpu.memory_space<vmem>>, %arg3: memref<1x128xf32, #tpu.memory_space<vmem>>, %arg4: memref<1x128xf32, #tpu.memory_space<vmem>>, %arg5: memref<1x128xf32, #tpu.memory_space<vmem>>, %arg6: memref<1x16x128xf32, #tpu.memory_space<vmem>>) attributes {dimension_semantics = [#tpu.dimension_semantics<parallel>], iteration_bounds = array<i64: 2>, scalar_prefetch = 0 : i64, scratch_operands = 0 : i64, tpu.core_type = #tpu.core_type<tc>, window_params = [{transform_indices = @transform_0, window_bounds = array<i64: 1, 43, 128>}, {pipeline_mode = #tpu.pipeline_mode<synchronous>, transform_indices = @transform_1, window_bounds = array<i64: 128, 128>}, {pipeline_mode = #tpu.pipeline_mode<synchronous>, transform_indices = @transform_2, window_bounds = array<i64: 1, 128>}, {pipeline_mode = #tpu.pipeline_mode<synchronous>, transform_indices = @transform_3, window_bounds = array<i64: 1, 128>}, {pipeline_mode = #tpu.pipeline_mode<synchronous>, transform_indices = @transform_4, window_bounds = array<i64: 1, 128>}, {transform_indices = @transform_5, window_bounds = array<i64: 1, 16, 128>}]} {
    %c0 = arith.constant 0 : index
    %c0_0 = arith.constant 0 : index
    %c0_1 = arith.constant 0 : index
    %0 = vector.load %arg1[%c0, %c0_0, %c0_1] : memref<1x43x128xbf16, #tpu.memory_space<vmem>>, vector<1x43x128xbf16>
    %1 = vector.shape_cast %0 : vector<1x43x128xbf16> to vector<43x128xbf16>
    %2 = tpu.iota {dimensions = array<i32: 0>} : vector<43x1xi32>
    %c8_i32 = arith.constant 8 : i32
    %c0_i32 = arith.constant 0 : i32
    %3 = arith.cmpi eq, %c8_i32, %c0_i32 : i32
    %c1_i32 = arith.constant 1 : i32
    %4 = arith.select %3, %c1_i32, %c8_i32 : i32
    %5 = vector.broadcast %4 : i32 to vector<43x1xi32>
    %6 = arith.remsi %2, %5 : vector<43x1xi32>
    %c0_i32_2 = arith.constant 0 : i32
    %7 = vector.broadcast %c0_i32_2 : i32 to vector<43x1xi32>
    %8 = arith.cmpi ne, %6, %7 : vector<43x1xi32>
    %c0_i32_3 = arith.constant 0 : i32
    %9 = vector.broadcast %c0_i32_3 : i32 to vector<43x1xi32>
    %10 = arith.cmpi slt, %6, %9 : vector<43x1xi32>
    %c0_i32_4 = arith.constant 0 : i32
    %11 = arith.cmpi slt, %4, %c0_i32_4 : i32
    %12 = vector.broadcast %11 : i1 to vector<43x1xi1>
    %13 = vector.broadcast %12 : vector<43x1xi1> to vector<43x1xi1>
    %14 = arith.xori %10, %13 : vector<43x1xi1>
    %15 = arith.andi %14, %8 : vector<43x1xi1>
    %16 = vector.broadcast %4 : i32 to vector<43x1xi32>
    %17 = arith.addi %6, %16 : vector<43x1xi32>
    %18 = arith.select %15, %17, %6 : vector<43x1xi1>, vector<43x1xi32>
    %c8_i32_5 = arith.constant 8 : i32
    %19 = vector.broadcast %c8_i32_5 : i32 to vector<43x1xi32>
    %20 = arith.cmpi sge, %2, %19 : vector<43x1xi32>
    %c32_i32 = arith.constant 32 : i32
    %21 = vector.broadcast %c32_i32 : i32 to vector<43x1xi32>
    %22 = arith.cmpi slt, %2, %21 : vector<43x1xi32>
    %23 = arith.andi %20, %22 : vector<43x1xi1>
    %c1_i32_6 = arith.constant 1 : i32
    %24 = vector.broadcast %c1_i32_6 : i32 to vector<43x1xi32>
    %25 = arith.cmpi sge, %18, %24 : vector<43x1xi32>
    %26 = arith.andi %23, %25 : vector<43x1xi1>
    %c3_i32 = arith.constant 3 : i32
    %27 = vector.broadcast %c3_i32 : i32 to vector<43x1xi32>
    %28 = arith.cmpi sle, %18, %27 : vector<43x1xi32>
    %29 = arith.andi %26, %28 : vector<43x1xi1>
    %30 = arith.extf %1 : vector<43x128xbf16> to vector<43x128xf32>
    %c0_7 = arith.constant 0 : index
    %c0_8 = arith.constant 0 : index
    %31 = vector.load %arg4[%c0_7, %c0_8] : memref<1x128xf32, #tpu.memory_space<vmem>>, vector<1x128xf32>
    %32 = vector.broadcast %31 : vector<1x128xf32> to vector<43x128xf32>
    %33 = arith.mulf %30, %32 : vector<43x128xf32>
    %c0_9 = arith.constant 0 : index
    %c0_10 = arith.constant 0 : index
    %34 = vector.load %arg5[%c0_9, %c0_10] : memref<1x128xf32, #tpu.memory_space<vmem>>, vector<1x128xf32>
    %35 = vector.broadcast %34 : vector<1x128xf32> to vector<43x128xf32>
    %36 = arith.addf %33, %35 : vector<43x128xf32>
    %cst = arith.constant 0.000000e+00 : f32
    %37 = vector.broadcast %cst : f32 to vector<43x128xf32>
    %38 = arith.cmpf oge, %36, %37 : vector<43x128xf32>
    %cst_11 = arith.constant 2.000000e-01 : f32
    %39 = vector.broadcast %cst_11 : f32 to vector<43x128xf32>
    %40 = arith.mulf %39, %36 : vector<43x128xf32>
    %41 = arith.select %38, %36, %40 : vector<43x128xi1>, vector<43x128xf32>
    %cst_12 = arith.constant 0.000000e+00 : f32
    %42 = vector.shape_cast %29 : vector<43x1xi1> to vector<43x1xi1>
    %43 = vector.broadcast %42 : vector<43x1xi1> to vector<43x128xi1>
    %44 = vector.broadcast %cst_12 : f32 to vector<43x128xf32>
    %45 = arith.select %43, %41, %44 : vector<43x128xi1>, vector<43x128xf32>
    %46 = arith.truncf %45 : vector<43x128xf32> to vector<43x128xbf16>
    %c0_13 = arith.constant 0 : index
    %c0_14 = arith.constant 0 : index
    %47 = vector.load %arg2[%c0_13, %c0_14] : memref<128x128xbf16, #tpu.memory_space<vmem>>, vector<128x128xbf16>
    %cst_15 = arith.constant dense<0.000000e+00> : vector<43x128xf32>
    %48 = tpu.matmul %46, %47, %cst_15 {dimension_numbers = #tpu.dot_dimension_numbers<[1], [0], [0], [1], [0, 0, 1, 1], [], []>} : vector<43x128xbf16>, vector<128x128xbf16>, vector<43x128xf32> -> vector<43x128xf32>
    %49 = tpu.iota {dimensions = array<i32: 1>} : vector<16x128xi32>
    %c0_i32_16 = arith.constant 0 : i32
    %50 = vector.broadcast %c0_i32_16 : i32 to vector<16x128xi32>
    %51 = arith.cmpi eq, %49, %50 : vector<16x128xi32>
    %52 = vector.extract_strided_slice %48 {offsets = [0, 0], sizes = [16, 128], strides = [1, 1]} : vector<43x128xf32> to vector<16x128xf32>
    %cst_17 = arith.constant 0.000000e+00 : f32
    %53 = vector.broadcast %cst_17 : f32 to vector<16x128xf32>
    %54 = arith.select %51, %52, %53 : vector<16x128xi1>, vector<16x128xf32>
    %c1_i32_18 = arith.constant 1 : i32
    %55 = vector.broadcast %c1_i32_18 : i32 to vector<16x128xi32>
    %56 = arith.cmpi eq, %49, %55 : vector<16x128xi32>
    %57 = vector.extract_strided_slice %48 {offsets = [1, 0], sizes = [16, 128], strides = [1, 1]} : vector<43x128xf32> to vector<16x128xf32>
    %cst_19 = arith.constant 0.000000e+00 : f32
    %58 = vector.broadcast %cst_19 : f32 to vector<16x128xf32>
    %59 = arith.select %56, %57, %58 : vector<16x128xi1>, vector<16x128xf32>
    %60 = arith.addf %54, %59 : vector<16x128xf32>
    %c2_i32 = arith.constant 2 : i32
    %61 = vector.broadcast %c2_i32 : i32 to vector<16x128xi32>
    %62 = arith.cmpi eq, %49, %61 : vector<16x128xi32>
    %63 = vector.extract_strided_slice %48 {offsets = [2, 0], sizes = [16, 128], strides = [1, 1]} : vector<43x128xf32> to vector<16x128xf32>
    %cst_20 = arith.constant 0.000000e+00 : f32
    %64 = vector.broadcast %cst_20 : f32 to vector<16x128xf32>
    %65 = arith.select %62, %63, %64 : vector<16x128xi1>, vector<16x128xf32>
    %66 = arith.addf %60, %65 : vector<16x128xf32>
    %c3_i32_21 = arith.constant 3 : i32
    %67 = vector.broadcast %c3_i32_21 : i32 to vector<16x128xi32>
    %68 = arith.cmpi eq, %49, %67 : vector<16x128xi32>
    %69 = vector.extract_strided_slice %48 {offsets = [3, 0], sizes = [16, 128], strides = [1, 1]} : vector<43x128xf32> to vector<16x128xf32>
    %cst_22 = arith.constant 0.000000e+00 : f32
    %70 = vector.broadcast %cst_22 : f32 to vector<16x128xf32>
    %71 = arith.select %68, %69, %70 : vector<16x128xi1>, vector<16x128xf32>
    %72 = arith.addf %66, %71 : vector<16x128xf32>
    %c4_i32 = arith.constant 4 : i32
    %73 = vector.broadcast %c4_i32 : i32 to vector<16x128xi32>
    %74 = arith.cmpi eq, %49, %73 : vector<16x128xi32>
    %75 = vector.extract_strided_slice %48 {offsets = [8, 0], sizes = [16, 128], strides = [1, 1]} : vector<43x128xf32> to vector<16x128xf32>
    %cst_23 = arith.constant 0.000000e+00 : f32
    %76 = vector.broadcast %cst_23 : f32 to vector<16x128xf32>
    %77 = arith.select %74, %75, %76 : vector<16x128xi1>, vector<16x128xf32>
    %78 = arith.addf %72, %77 : vector<16x128xf32>
    %c5_i32 = arith.constant 5 : i32
    %79 = vector.broadcast %c5_i32 : i32 to vector<16x128xi32>
    %80 = arith.cmpi eq, %49, %79 : vector<16x128xi32>
    %81 = vector.extract_strided_slice %48 {offsets = [9, 0], sizes = [16, 128], strides = [1, 1]} : vector<43x128xf32> to vector<16x128xf32>
    %cst_24 = arith.constant 0.000000e+00 : f32
    %82 = vector.broadcast %cst_24 : f32 to vector<16x128xf32>
    %83 = arith.select %80, %81, %82 : vector<16x128xi1>, vector<16x128xf32>
    %84 = arith.addf %78, %83 : vector<16x128xf32>
    %c6_i32 = arith.constant 6 : i32
    %85 = vector.broadcast %c6_i32 : i32 to vector<16x128xi32>
    %86 = arith.cmpi eq, %49, %85 : vector<16x128xi32>
    %87 = vector.extract_strided_slice %48 {offsets = [10, 0], sizes = [16, 128], strides = [1, 1]} : vector<43x128xf32> to vector<16x128xf32>
    %cst_25 = arith.constant 0.000000e+00 : f32
    %88 = vector.broadcast %cst_25 : f32 to vector<16x128xf32>
    %89 = arith.select %86, %87, %88 : vector<16x128xi1>, vector<16x128xf32>
    %90 = arith.addf %84, %89 : vector<16x128xf32>
    %c7_i32 = arith.constant 7 : i32
    %91 = vector.broadcast %c7_i32 : i32 to vector<16x128xi32>
    %92 = arith.cmpi eq, %49, %91 : vector<16x128xi32>
    %93 = vector.extract_strided_slice %48 {offsets = [11, 0], sizes = [16, 128], strides = [1, 1]} : vector<43x128xf32> to vector<16x128xf32>
    %cst_26 = arith.constant 0.000000e+00 : f32
    %94 = vector.broadcast %cst_26 : f32 to vector<16x128xf32>
    %95 = arith.select %92, %93, %94 : vector<16x128xi1>, vector<16x128xf32>
    %96 = arith.addf %90, %95 : vector<16x128xf32>
    %c8_i32_27 = arith.constant 8 : i32
    %97 = vector.broadcast %c8_i32_27 : i32 to vector<16x128xi32>
    %98 = arith.cmpi eq, %49, %97 : vector<16x128xi32>
    %99 = vector.extract_strided_slice %48 {offsets = [16, 0], sizes = [16, 128], strides = [1, 1]} : vector<43x128xf32> to vector<16x128xf32>
    %cst_28 = arith.constant 0.000000e+00 : f32
    %100 = vector.broadcast %cst_28 : f32 to vector<16x128xf32>
    %101 = arith.select %98, %99, %100 : vector<16x128xi1>, vector<16x128xf32>
    %102 = arith.addf %96, %101 : vector<16x128xf32>
    %c9_i32 = arith.constant 9 : i32
    %103 = vector.broadcast %c9_i32 : i32 to vector<16x128xi32>
    %104 = arith.cmpi eq, %49, %103 : vector<16x128xi32>
    %105 = vector.extract_strided_slice %48 {offsets = [17, 0], sizes = [16, 128], strides = [1, 1]} : vector<43x128xf32> to vector<16x128xf32>
    %cst_29 = arith.constant 0.000000e+00 : f32
    %106 = vector.broadcast %cst_29 : f32 to vector<16x128xf32>
    %107 = arith.select %104, %105, %106 : vector<16x128xi1>, vector<16x128xf32>
    %108 = arith.addf %102, %107 : vector<16x128xf32>
    %c10_i32 = arith.constant 10 : i32
    %109 = vector.broadcast %c10_i32 : i32 to vector<16x128xi32>
    %110 = arith.cmpi eq, %49, %109 : vector<16x128xi32>
    %111 = vector.extract_strided_slice %48 {offsets = [18, 0], sizes = [16, 128], strides = [1, 1]} : vector<43x128xf32> to vector<16x128xf32>
    %cst_30 = arith.constant 0.000000e+00 : f32
    %112 = vector.broadcast %cst_30 : f32 to vector<16x128xf32>
    %113 = arith.select %110, %111, %112 : vector<16x128xi1>, vector<16x128xf32>
    %114 = arith.addf %108, %113 : vector<16x128xf32>
    %c11_i32 = arith.constant 11 : i32
    %115 = vector.broadcast %c11_i32 : i32 to vector<16x128xi32>
    %116 = arith.cmpi eq, %49, %115 : vector<16x128xi32>
    %117 = vector.extract_strided_slice %48 {offsets = [19, 0], sizes = [16, 128], strides = [1, 1]} : vector<43x128xf32> to vector<16x128xf32>
    %cst_31 = arith.constant 0.000000e+00 : f32
    %118 = vector.broadcast %cst_31 : f32 to vector<16x128xf32>
    %119 = arith.select %116, %117, %118 : vector<16x128xi1>, vector<16x128xf32>
    %120 = arith.addf %114, %119 : vector<16x128xf32>
    %c12_i32 = arith.constant 12 : i32
    %121 = vector.broadcast %c12_i32 : i32 to vector<16x128xi32>
    %122 = arith.cmpi eq, %49, %121 : vector<16x128xi32>
    %123 = vector.extract_strided_slice %48 {offsets = [24, 0], sizes = [16, 128], strides = [1, 1]} : vector<43x128xf32> to vector<16x128xf32>
    %cst_32 = arith.constant 0.000000e+00 : f32
    %124 = vector.broadcast %cst_32 : f32 to vector<16x128xf32>
    %125 = arith.select %122, %123, %124 : vector<16x128xi1>, vector<16x128xf32>
    %126 = arith.addf %120, %125 : vector<16x128xf32>
    %c13_i32 = arith.constant 13 : i32
    %127 = vector.broadcast %c13_i32 : i32 to vector<16x128xi32>
    %128 = arith.cmpi eq, %49, %127 : vector<16x128xi32>
    %129 = vector.extract_strided_slice %48 {offsets = [25, 0], sizes = [16, 128], strides = [1, 1]} : vector<43x128xf32> to vector<16x128xf32>
    %cst_33 = arith.constant 0.000000e+00 : f32
    %130 = vector.broadcast %cst_33 : f32 to vector<16x128xf32>
    %131 = arith.select %128, %129, %130 : vector<16x128xi1>, vector<16x128xf32>
    %132 = arith.addf %126, %131 : vector<16x128xf32>
    %c14_i32 = arith.constant 14 : i32
    %133 = vector.broadcast %c14_i32 : i32 to vector<16x128xi32>
    %134 = arith.cmpi eq, %49, %133 : vector<16x128xi32>
    %135 = vector.extract_strided_slice %48 {offsets = [26, 0], sizes = [16, 128], strides = [1, 1]} : vector<43x128xf32> to vector<16x128xf32>
    %cst_34 = arith.constant 0.000000e+00 : f32
    %136 = vector.broadcast %cst_34 : f32 to vector<16x128xf32>
    %137 = arith.select %134, %135, %136 : vector<16x128xi1>, vector<16x128xf32>
    %138 = arith.addf %132, %137 : vector<16x128xf32>
    %c15_i32 = arith.constant 15 : i32
    %139 = vector.broadcast %c15_i32 : i32 to vector<16x128xi32>
    %140 = arith.cmpi eq, %49, %139 : vector<16x128xi32>
    %141 = vector.extract_strided_slice %48 {offsets = [27, 0], sizes = [16, 128], strides = [1, 1]} : vector<43x128xf32> to vector<16x128xf32>
    %cst_35 = arith.constant 0.000000e+00 : f32
    %142 = vector.broadcast %cst_35 : f32 to vector<16x128xf32>
    %143 = arith.select %140, %141, %142 : vector<16x128xi1>, vector<16x128xf32>
    %144 = arith.addf %138, %143 : vector<16x128xf32>
    %cst_36 = arith.constant dense<0.000000e+00> : vector<16xf32>
    %145 = vector.multi_reduction <add>, %144, %cst_36 [1] : vector<16x128xf32> to vector<16xf32>
    %146 = vector.shape_cast %145 : vector<16xf32> to vector<16x1xf32>
    %147 = vector.shape_cast %146 : vector<16x1xf32> to vector<16x1xf32>
    %148 = vector.broadcast %147 : vector<16x1xf32> to vector<16x128xf32>
    %c0_37 = arith.constant 0 : index
    %c0_38 = arith.constant 0 : index
    %149 = vector.load %arg3[%c0_37, %c0_38] : memref<1x128xf32, #tpu.memory_space<vmem>>, vector<1x128xf32>
    %150 = vector.broadcast %149 : vector<1x128xf32> to vector<16x128xf32>
    %151 = arith.addf %148, %150 : vector<16x128xf32>
    %c0_39 = arith.constant 0 : index
    %c0_40 = arith.constant 0 : index
    %c0_41 = arith.constant 0 : index
    %152 = vector.load %arg6[%c0_39, %c0_40, %c0_41] : memref<1x16x128xf32, #tpu.memory_space<vmem>>, vector<1x16x128xf32>
    %153 = vector.shape_cast %152 : vector<1x16x128xf32> to vector<16x128xf32>
    %154 = vector.shape_cast %151 : vector<16x128xf32> to vector<1x16x128xf32>
    tpu.vector_store %arg6[%c0_39, %c0_40, %c0_41], %154 {strides = array<i32>} : memref<1x16x128xf32, #tpu.memory_space<vmem>>, vector<1x16x128xf32>,
    return
  }
  func.func @transform_0(%arg0: i32) -> (i32, i32, i32) {
    %c0_i32 = arith.constant 0 : i32
    %c0_i32_0 = arith.constant 0 : i32
    %c0_i32_1 = arith.constant 0 : i32
    return %arg0, %c0_i32, %c0_i32_0 : i32, i32, i32
  }
  func.func @transform_1(%arg0: i32) -> (i32, i32) {
    %c0_i32 = arith.constant 0 : i32
    %c0_i32_0 = arith.constant 0 : i32
    %c0_i32_1 = arith.constant 0 : i32
    return %c0_i32, %c0_i32_0 : i32, i32
  }
  func.func @transform_2(%arg0: i32) -> (i32, i32) {
    %c0_i32 = arith.constant 0 : i32
    %c0_i32_0 = arith.constant 0 : i32
    %c0_i32_1 = arith.constant 0 : i32
    return %c0_i32, %c0_i32_0 : i32, i32
  }
  func.func @transform_3(%arg0: i32) -> (i32, i32) {
    %c0_i32 = arith.constant 0 : i32
    %c0_i32_0 = arith.constant 0 : i32
    %c0_i32_1 = arith.constant 0 : i32
    return %c0_i32, %c0_i32_0 : i32, i32
  }
  func.func @transform_4(%arg0: i32) -> (i32, i32) {
    %c0_i32 = arith.constant 0 : i32
    %c0_i32_0 = arith.constant 0 : i32
    %c0_i32_1 = arith.constant 0 : i32
    return %c0_i32, %c0_i32_0 : i32, i32
  }
  func.func @transform_5(%arg0: i32) -> (i32, i32, i32) {
    %c0_i32 = arith.constant 0 : i32
    %c0_i32_0 = arith.constant 0 : i32
    %c0_i32_1 = arith.constant 0 : i32
    return %arg0, %c0_i32, %c0_i32_0 : i32, i32, i32
  }
}

</mosaic_0001>

<llo_original>
// kernel: tpu_custom_call.1
$region0: #{tpu_custom_call.1}
  #allocation0 [shape = 'u32[]', space=smem, size = 0x4, offset = 0x4, fixed_abs, tag = 'smem constant byte address 0x4 - core index']
  #allocation1 [shape = 'u32[144,128]{1,0:T(1,128)}', space=vmem, size = 0x12000, scoped, tag = 'internal scratch']
  %s0 = inlined_call_operand.hbm [shape: f32[8,128], index: 0, kind: input, shape index: {}]
  %s1 = inlined_call_operand.hbm [shape: f32[8,128], index: 1, kind: input, shape index: {}]
  %s2 = inlined_call_operand.hbm [shape: f32[8,128], index: 2, kind: output, shape index: {}]
  %s3 = sld [smem:[#allocation0]]
  $region26: #{tpu_custom_call.1} parent=0
    _
  %s5 = ssub.s32 1, %s3
  %s6 = scalar_select 0, %s5, %s3
  $region1: #{tpu_custom_call.1} parent=0
    #allocation2 [shape = 'u8[4096]{0}', space=vmem, size = 0x1000, scoped, tag = 'input window, operand 0, single buffered']
    #allocation3 [shape = 's32[1]{0}', space=sflag, size = 0x4, scoped, tag = 'scoped memory for tpu_custom_call.1']
    #allocation4 [shape = 's32[1]{0}', space=sflag, size = 0x4, scoped, tag = 'scoped memory for tpu_custom_call.1']
    #allocation5 [shape = 'u8[4096]{0}', space=vmem, size = 0x1000, scoped, tag = 'input window, operand 1, single buffered']
    #allocation6 [shape = 's32[1]{0}', space=sflag, size = 0x4, scoped, tag = 'scoped memory for tpu_custom_call.1']
    #allocation7 [shape = 'u8[4096]{0}', space=vmem, size = 0x1000, scoped, tag = 'output window, operand 0, single buffered']
    %7 = vsyncpa [#allocation3], 0
    %8 = vsyncpa [#allocation6], 0
    %9 = vsyncpa [#allocation4], 0
    // Predicated region
    $region2: #{tpu_custom_call.1} parent=1 // pred_check
      _
    $region3: #{tpu_custom_call.1} parent=1 // pred_check_branch
      %11 = sbr.rel (0) target = $region5
    $region4: #{tpu_custom_call.1} parent=1 // pred_region
      %s13 = ssub.s32 128, 128
      %14 = vsyncadd [#allocation3], %s13
      %s16 = sshll.u32 [#allocation2], 4
      %s17 = int_to_ptr.vmem [resolvable:$true] %s16
      %19 = dma.hbm_to_vmem [thread:$0]  %s0, 128, %s17, [#allocation3]
    $region5: #{tpu_custom_call.1} parent=1 // pred_fallthru
      _
    // Predicated region
    $region6: #{tpu_custom_call.1} parent=1 // pred_check
      _
    $region7: #{tpu_custom_call.1} parent=1 // pred_check_branch
      %21 = sbr.rel (0) target = $region9
    $region8: #{tpu_custom_call.1} parent=1 // pred_region
      %s23 = ssub.s32 128, 128
      %24 = vsyncadd [#allocation6], %s23
      %s26 = sshll.u32 [#allocation5], 4
      %s27 = int_to_ptr.vmem [resolvable:$true] %s26
      %29 = dma.hbm_to_vmem [thread:$0]  %s1, 128, %s27, [#allocation6]
    $region9: #{tpu_custom_call.1} parent=1 // pred_fallthru
      _
    // Predicated region
    $region10: #{tpu_custom_call.1} parent=1 // pred_check
      _
    $region11: #{tpu_custom_call.1} parent=1 // pred_check_branch
      %31 = sbr.rel (0) target = $region13
    $region12: #{tpu_custom_call.1} parent=1 // pred_region
      %32 = dma.done [#allocation3], 128
    $region13: #{tpu_custom_call.1} parent=1 // pred_fallthru
      _
    // Predicated region
    $region14: #{tpu_custom_call.1} parent=1 // pred_check
      _
    $region15: #{tpu_custom_call.1} parent=1 // pred_check_branch
      %34 = sbr.rel (0) target = $region17
    $region16: #{tpu_custom_call.1} parent=1 // pred_region
      %35 = dma.done [#allocation6], 128
    $region17: #{tpu_custom_call.1} parent=1 // pred_fallthru
      _
    %v36 = vld [vmem:[#allocation2] sm:$0xff]
    %v37 = vld [vmem:[#allocation5] sm:$0xff]
    %v38 = vadd.f32 %v36, %v37
    %39 = vst [vmem:[#allocation7] sm:$0xff] %v38
    // Predicated region
    $region18: #{tpu_custom_call.1} parent=1 // pred_check
      _
    $region19: #{tpu_custom_call.1} parent=1 // pred_check_branch
      %41 = sbr.rel (0) target = $region21
    $region20: #{tpu_custom_call.1} parent=1 // pred_region
      %s43 = ssub.s32 128, 128
      %44 = vsyncadd [#allocation4], %s43
      %s46 = sshll.u32 [#allocation7], 4
      %s47 = int_to_ptr.vmem [resolvable:$true] %s46
      %49 = dma.vmem_to_hbm [thread:$0]  %s47, 128, %s2, [#allocation4]
    $region21: #{tpu_custom_call.1} parent=1 // pred_fallthru
      _
    // Predicated region
    $region22: #{tpu_custom_call.1} parent=1 // pred_check
      _
    $region23: #{tpu_custom_call.1} parent=1 // pred_check_branch
      %51 = sbr.rel (0) target = $region25
    $region24: #{tpu_custom_call.1} parent=1 // pred_region
      %52 = dma.done [#allocation4], 128
    $region25: #{tpu_custom_call.1} parent=1 // pred_fallthru
      _
    %53 = vsyncpa [#allocation3], 1
    %54 = vsyncpa [#allocation6], 1
    %55 = vsyncpa [#allocation4], 1

// kernel: patch_discriminator_forward.5
$region0: #{patch_discriminator_forward.5}
  #allocation0 [shape = 'u32[]', space=smem, size = 0x4, offset = 0x4, fixed_abs, tag = 'smem constant byte address 0x4 - core index']
  #allocation1 [shape = 'u32[144,128]{1,0:T(1,128)}', space=vmem, size = 0x12000, scoped, tag = 'internal scratch']
  %s0 = inlined_call_operand.hbm [shape: bf16[2,409,16], index: 0, kind: input, shape index: {}]
  %s1 = inlined_call_operand.hbm [shape: bf16[4,16,128], index: 1, kind: input, shape index: {}]
  %s2 = inlined_call_operand.hbm [shape: f32[1,128], index: 2, kind: input, shape index: {}]
  %s3 = inlined_call_operand.hbm [shape: bf16[2,384,128], index: 3, kind: output, shape index: {}]
  %s4 = sld [smem:[#allocation0]]
  $region57: #{patch_discriminator_forward.5} parent=0
    _
  %s6 = ssub.s32 1, %s4
  %s7 = scalar_select 0, %s6, %s4
  $region1: #{patch_discriminator_forward.5} parent=0
    #allocation2 [shape = 'u8[212992]{0}', space=vmem, size = 0x34000, scoped, tag = 'input window, operand 0']
    #allocation3 [shape = 's32[2]{0}', space=sflag, size = 0x8, scoped, tag = 'scoped memory for patch_discriminator_forward.5']
    #allocation4 [shape = 's32[2]{0}', space=sflag, size = 0x8, scoped, tag = 'scoped memory for patch_discriminator_forward.5']
    #allocation5 [shape = 'u8[16384]{0}', space=vmem, size = 0x4000, scoped, tag = 'input window, operand 1, single buffered']
    #allocation6 [shape = 's32[1]{0}', space=sflag, size = 0x4, scoped, tag = 'scoped memory for patch_discriminator_forward.5']
    #allocation7 [shape = 'u8[512]{0}', space=vmem, size = 0x400, scoped, tag = 'input window, operand 2, single buffered']
    #allocation8 [shape = 'u8[196608]{0}', space=vmem, size = 0x30000, scoped, tag = 'output window, operand 0']
    %8 = vsyncpa [#allocation3], 0
    %s9 = scalar_lea.sflag [#allocation3], 1
    %10 = vsyncpa %s9, 0
    %11 = vsyncpa [#allocation6], 0
    %12 = vsyncpa [#allocation4], 0
    %s13 = scalar_lea.sflag [#allocation4], 1
    %14 = vsyncpa %s13, 0
    loop: start=0, step=1, limit=4
    $region2: #{patch_discriminator_forward.5} parent=1 // loop_pre_header
      _
    $region3: #{patch_discriminator_forward.5} parent=1 // loop_header
      %s16 = sphi 0, %s20
      %p17 = scmp.ge.s32.totalorder %s16, 4
      %s26 = sphi 0, %s28
      %s29 = sphi 0, %s26
      %s30 = sphi 0, %s29
      %s46 = sphi 0, %s30
      %s50 = sphi 0, %s50
      %s52 = sphi 0, %s50
      %s53 = sphi 0, %s52
      %s67 = sphi 0, %s53
      %s71 = sphi 0, %s71
      %s73 = sphi 0, %s71
      %s74 = sphi 0, %s73
      %s88 = sphi 0, %s74
      %s94 = sphi 0, %s96
      %s97 = sphi 0, %s94
      %s98 = sphi 0, %s97
      %s114 = sphi 0, %s98
    $region4: #{patch_discriminator_forward.5} parent=1 // loop_header_branch
      %19 = sbr.rel (%p17) target = $region8
    $region5: #{patch_discriminator_forward.5} parent=1 // loop_body
      %s21 = ssub.s32 %s16, 1
      %s22 = ssub.s32 %s16, 2
      %s23 = sadd.s32 %s16, 1
      %s24 = ssub.s32 %s16, %s23
      %p25 = scmp.eq.s32.totalorder %s24, 0
      %s27 = sadd.s32 %s26, 1
      %s28 = scalar_select %p25, %s26, %s27
      %p31 = pneg %p25
      %p32 = scmp.eq.s32.totalorder %s16, 1
      %p33 = por %p31, %p32
      %p34 = scmp.ne.s32.totalorder %s26, %s29
      %p35 = scmp.eq.s32.totalorder %s16, 0
      %p36 = por %p34, %p35
      %p37 = scmp.ne.s32.totalorder %s26, %s29
      %p38 = scmp.eq.s32.totalorder %s21, 1
      %p39 = por %p37, %p38
      %p40 = scmp.ne.s32.totalorder %s29, %s30
      %p41 = scmp.eq.s32.totalorder %s21, 0
      %p42 = por %p40, %p41
      %p43 = scmp.ne.s32.totalorder %s29, %s30
      %p44 = scmp.eq.s32.totalorder %s22, 1
      %p45 = por %p43, %p44
      %p47 = scmp.ne.s32.totalorder %s30, %s46
      %p48 = scmp.eq.s32.totalorder %s22, 0
      %p49 = por %p47, %p48
      %s51 = sadd.s32 %s50, 1
      %p54 = scmp.eq.s32.totalorder %s16, 1
      %p55 = scmp.ne.s32.totalorder %s50, %s52
      %p56 = scmp.eq.s32.totalorder %s16, 0
      %p57 = por %p55, %p56
      %p58 = scmp.ne.s32.totalorder %s50, %s52
      %p59 = scmp.eq.s32.totalorder %s21, 1
      %p60 = por %p58, %p59
      %p61 = scmp.ne.s32.totalorder %s52, %s53
      %p62 = scmp.eq.s32.totalorder %s21, 0
      %p63 = por %p61, %p62
      %p64 = scmp.ne.s32.totalorder %s52, %s53
      %p65 = scmp.eq.s32.totalorder %s22, 1
      %p66 = por %p64, %p65
      %p68 = scmp.ne.s32.totalorder %s53, %s67
      %p69 = scmp.eq.s32.totalorder %s22, 0
      %p70 = por %p68, %p69
      %s72 = sadd.s32 %s71, 1
      %p75 = scmp.eq.s32.totalorder %s16, 1
      %p76 = scmp.ne.s32.totalorder %s71, %s73
      %p77 = scmp.eq.s32.totalorder %s16, 0
      %p78 = por %p76, %p77
      %p79 = scmp.ne.s32.totalorder %s71, %s73
      %p80 = scmp.eq.s32.totalorder %s21, 1
      %p81 = por %p79, %p80
      %p82 = scmp.ne.s32.totalorder %s73, %s74
      %p83 = scmp.eq.s32.totalorder %s21, 0
      %p84 = por %p82, %p83
      %p85 = scmp.ne.s32.totalorder %s73, %s74
      %p86 = scmp.eq.s32.totalorder %s22, 1
      %p87 = por %p85, %p86
      %p89 = scmp.ne.s32.totalorder %s74, %s88
      %p90 = scmp.eq.s32.totalorder %s22, 0
      %p91 = por %p89, %p90
      %s92 = ssub.s32 %s16, %s23
      %p93 = scmp.eq.s32.totalorder %s92, 0
      %s95 = sadd.s32 %s94, 1
      %s96 = scalar_select %p93, %s94, %s95
      %p99 = pneg %p93
      %p100 = scmp.eq.s32.totalorder %s16, 1
      %p101 = por %p99, %p100
      %p102 = scmp.ne.s32.totalorder %s94, %s97
      %p103 = scmp.eq.s32.totalorder %s16, 0
      %p104 = por %p102, %p103
      %p105 = scmp.ne.s32.totalorder %s94, %s97
      %p106 = scmp.eq.s32.totalorder %s21, 1
      %p107 = por %p105, %p106
      %p108 = scmp.ne.s32.totalorder %s97, %s98
      %p109 = scmp.eq.s32.totalorder %s21, 0
      %p110 = por %p108, %p109
      %p111 = scmp.ne.s32.totalorder %s97, %s98
      %p112 = scmp.eq.s32.totalorder %s22, 1
      %p113 = por %p111, %p112
      %p115 = scmp.ne.s32.totalorder %s98, %s114
      %p116 = scmp.eq.s32.totalorder %s22, 0
      %p117 = por %p115, %p116
      %p118 = scmp.le.s32.totalorder 1, %s16
      %p119 = scmp.lt.s32.totalorder %s16, 3
      %p120 = pnand %p118, %p119
      %p121 = pneg %p120
      // Predicated region
      $region9: #{patch_discriminator_forward.5} parent=5 // pred_check
        _
      $region10: #{patch_discriminator_forward.5} parent=5 // pred_check_branch
        %123 = sbr.rel (%p120) target = $region12
      $region11: #{patch_discriminator_forward.5} parent=5 // pred_region
        %s124 = ssub.s32 %s16, 1
        // Predicated region
        $region13: #{patch_discriminator_forward.5} parent=11 // pred_check
          %p125 = pneg %p63
        $region14: #{patch_discriminator_forward.5} parent=11 // pred_check_branch
          %127 = sbr.rel (%p125) target = $region16
        $region15: #{patch_discriminator_forward.5} parent=11 // pred_region
          %s129 = ssub.s32 512, 512
          %130 = vsyncadd [#allocation6], %s129
          %s131 = sshll.u32 [#allocation5], 4
          %s132 = int_to_ptr.vmem [resolvable:$true] %s131
          %137 = dma.hbm_to_vmem [thread:$0]  %s1, 512, %s132, [#allocation6], 64, 64, 4
        $region16: #{patch_discriminator_forward.5} parent=11 // pred_fallthru
          _
        // Predicated region
        $region17: #{patch_discriminator_forward.5} parent=11 // pred_check
          %p138 = pneg %p84
        $region18: #{patch_discriminator_forward.5} parent=11 // pred_check_branch
          %140 = sbr.rel (%p138) target = $region20
        $region19: #{patch_discriminator_forward.5} parent=11 // pred_region
          %s142 = ssub.s32 16, 16
          %143 = vsyncadd [#allocation6], %s142
          %s145 = sshll.u32 [#allocation7], 4
          %s146 = int_to_ptr.vmem [resolvable:$true] %s145
          %148 = dma.hbm_to_vmem [thread:$0]  %s2, 16, %s146, [#allocation6]
        $region20: #{patch_discriminator_forward.5} parent=11 // pred_fallthru
          _
      $region12: #{patch_discriminator_forward.5} parent=5 // pred_fallthru
        _
      %p149 = scmp.lt.s32.totalorder %s16, 2
      // Predicated region
      $region21: #{patch_discriminator_forward.5} parent=5 // pred_check
        %p150 = pneg %p149
      $region22: #{patch_discriminator_forward.5} parent=5 // pred_check_branch
        %152 = sbr.rel (%p150) target = $region24
      $region23: #{patch_discriminator_forward.5} parent=5 // pred_region
        // Predicated region
        $region25: #{patch_discriminator_forward.5} parent=23 // pred_check
          %p153 = pneg %p36
        $region26: #{patch_discriminator_forward.5} parent=23 // pred_check_branch
          %155 = sbr.rel (%p153) target = $region28
        $region27: #{patch_discriminator_forward.5} parent=23 // pred_region
          %s156 = sand.u32 %s26, 1
          %s157 = scalar_lea.sflag [#allocation3], %s156
          %s158 = sand.u32 %s26, 1
          %s159 = smul.addr %s158, 208
          %s160 = scalar_lea.vmem [#allocation2], %s159
          %s162 = ssub.s32 3328, 3328
          %163 = vsyncadd %s157, %s162
          %s164 = smul.addr %s16, 52
          %s165 = smul.addr %s164, 64
          %s166 = scalar_lea.hbm %s0, %s165
          %s167 = sshll.u32 %s160, 4
          %s168 = int_to_ptr.vmem [resolvable:$true] %s167
          %173 = dma.hbm_to_vmem [thread:$0]  %s166, 3328, %s168, %s157, 64, 64, 4
        $region28: #{patch_discriminator_forward.5} parent=23 // pred_fallthru
          _
      $region24: #{patch_discriminator_forward.5} parent=5 // pred_fallthru
        _
      %p174 = scmp.le.s32.totalorder 1, %s16
      %p175 = scmp.lt.s32.totalorder %s16, 3
      %p176 = pnand %p174, %p175
      %p177 = pneg %p176
      // Predicated region
      $region29: #{patch_discriminator_forward.5} parent=5 // pred_check
        _
      $region30: #{patch_discriminator_forward.5} parent=5 // pred_check_branch
        %179 = sbr.rel (%p176) target = $region32
      $region31: #{patch_discriminator_forward.5} parent=5 // pred_region
        %s180 = ssub.s32 %s16, 1
        %s181 = sand.u32 %s29, 1
        %s182 = scalar_lea.sflag [#allocation3], %s181
        %s183 = sand.u32 %s29, 1
        %s184 = smul.addr %s183, 208
        %s185 = scalar_lea.vmem [#allocation2], %s184
        // Predicated region
        $region33: #{patch_discriminator_forward.5} parent=31 // pred_check
          %p186 = pneg %p42
        $region34: #{patch_discriminator_forward.5} parent=31 // pred_check_branch
          %188 = sbr.rel (%p186) target = $region36
        $region35: #{patch_discriminator_forward.5} parent=31 // pred_region
          %189 = dma.done %s182, 3328
        $region36: #{patch_discriminator_forward.5} parent=31 // pred_fallthru
          _
        // Predicated region
        $region37: #{patch_discriminator_forward.5} parent=31 // pred_check
          %p190 = pneg %p63
        $region38: #{patch_discriminator_forward.5} parent=31 // pred_check_branch
          %192 = sbr.rel (%p190) target = $region40
        $region39: #{patch_discriminator_forward.5} parent=31 // pred_region
          %193 = dma.done [#allocation6], 512
        $region40: #{patch_discriminator_forward.5} parent=31 // pred_fallthru
          _
        // Predicated region
        $region41: #{patch_discriminator_forward.5} parent=31 // pred_check
          %p194 = pneg %p84
        $region42: #{patch_discriminator_forward.5} parent=31 // pred_check_branch
          %196 = sbr.rel (%p194) target = $region44
        $region43: #{patch_discriminator_forward.5} parent=31 // pred_region
          %197 = dma.done [#allocation6], 16
        $region44: #{patch_discriminator_forward.5} parent=31 // pred_fallthru
          _
        %s198 = sand.u32 %s29, 1
        %s199 = scalar_lea.sflag [#allocation3], %s198
        %s200 = sand.u32 %s29, 1
        %s201 = smul.addr %s200, 208
        %s202 = scalar_lea.vmem [#allocation2], %s201
        %p203 = pneg %p42
        %p204 = pneg %p39
        %p205 = pneg %p63
        %p206 = pneg %p60
        %p207 = pneg %p84
        %p208 = pneg %p81
        %p209 = pneg %p110
        %p210 = pneg %p107
        %s211 = sand.u32 %s97, 1
        %s212 = scalar_lea.sflag [#allocation4], %s211
        %s213 = sand.u32 %s97, 1
        %s214 = smul.addr %s213, 192
        %s215 = scalar_lea.vmem [#allocation8], %s214
        %v217 = vld [vmem:[%s185] sm:$0xf]
        %v218 = vld [vmem:[%s185 + $0x4] sm:$0xf]
        %v219 = vld [vmem:[%s185 + $0x8] sm:$0xf]
        %v220 = vld [vmem:[%s185 + $0xc] sm:$0xf]
        %v221 = vld [vmem:[%s185 + $0x10] sm:$0xf]
        %v222 = vld [vmem:[%s185 + $0x14] sm:$0xf]
        %v223 = vld [vmem:[%s185 + $0x18] sm:$0xf]
        %v224 = vld [vmem:[%s185 + $0x1c] sm:$0xf]
        %v225 = vld [vmem:[%s185 + $0x20] sm:$0xf]
        %v226 = vld [vmem:[%s185 + $0x24] sm:$0xf]
        %v227 = vld [vmem:[%s185 + $0x28] sm:$0xf]
        %v228 = vld [vmem:[%s185 + $0x2c] sm:$0xf]
        %v229 = vld [vmem:[%s185 + $0x30] sm:$0xf]
        %v230 = vld [vmem:[%s185 + $0x34] sm:$0xf]
        %v231 = vld [vmem:[%s185 + $0x38] sm:$0xf]
        %v232 = vld [vmem:[%s185 + $0x3c] sm:$0xf]
        %v233 = vld [vmem:[%s185 + $0x40] sm:$0xf]
        %v234 = vld [vmem:[%s185 + $0x44] sm:$0xf]
        %v235 = vld [vmem:[%s185 + $0x48] sm:$0xf]
        %v236 = vld [vmem:[%s185 + $0x4c] sm:$0xf]
        %v237 = vld [vmem:[%s185 + $0x50] sm:$0xf]
        %v238 = vld [vmem:[%s185 + $0x54] sm:$0xf]
        %v239 = vld [vmem:[%s185 + $0x58] sm:$0xf]
        %v240 = vld [vmem:[%s185 + $0x5c] sm:$0xf]
        %v241 = vld [vmem:[%s185 + $0x60] sm:$0xf]
        %v242 = vld [vmem:[%s185 + $0x64] sm:$0xf]
        %v243 = vld [vmem:[%s185 + $0x68] sm:$0xf]
        %v244 = vld [vmem:[%s185 + $0x6c] sm:$0xf]
        %v245 = vld [vmem:[%s185 + $0x70] sm:$0xf]
        %v246 = vld [vmem:[%s185 + $0x74] sm:$0xf]
        %v247 = vld [vmem:[%s185 + $0x78] sm:$0xf]
        %v248 = vld [vmem:[%s185 + $0x7c] sm:$0xf]
        %v249 = vld [vmem:[%s185 + $0x80] sm:$0xf]
        %v250 = vld [vmem:[%s185 + $0x84] sm:$0xf]
        %v251 = vld [vmem:[%s185 + $0x88] sm:$0xf]
        %v252 = vld [vmem:[%s185 + $0x8c] sm:$0xf]
        %v253 = vld [vmem:[%s185 + $0x90] sm:$0xf]
        %v254 = vld [vmem:[%s185 + $0x94] sm:$0xf]
        %v255 = vld [vmem:[%s185 + $0x98] sm:$0xf]
        %v256 = vld [vmem:[%s185 + $0x9c] sm:$0xf]
        %v257 = vld [vmem:[%s185 + $0xa0] sm:$0xf]
        %v258 = vld [vmem:[%s185 + $0xa4] sm:$0xf]
        %v259 = vld [vmem:[%s185 + $0xa8] sm:$0xf]
        %v260 = vld [vmem:[%s185 + $0xac] sm:$0xf]
        %v261 = vld [vmem:[%s185 + $0xb0] sm:$0xf]
        %v262 = vld [vmem:[%s185 + $0xb4] sm:$0xf]
        %v263 = vld [vmem:[%s185 + $0xb8] sm:$0xf]
        %v264 = vld [vmem:[%s185 + $0xbc] sm:$0xf]
        %v265 = vld [vmem:[#allocation5] sm:$0xf]
        %v266 = vld [vmem:[#allocation5 + $0x4] sm:$0xf]
        %v267 = vld [vmem:[%s185 + $0xc0] sm:$0x1]
        %s268 = scalar_lea.vmem [#allocation5], 8
        %v269 = vld [vmem:[%s268] sm:$0xf]
        %v270 = vld [vmem:[%s268 + $0x4] sm:$0xf]
        %v320 = vunpack.c.l.b16 %v217
        %v321 = vunpack.c.l.b16 %v218
        %v322 = vunpack.c.l.b16 %v219
        %v323 = vunpack.c.l.b16 %v220
        %v324 = vunpack.c.l.b16 %v221
        %v325 = vunpack.c.l.b16 %v222
        %v326 = vunpack.c.l.b16 %v223
        %v327 = vunpack.c.l.b16 %v224
        %v328 = vunpack.c.l.b16 %v225
        %v329 = vunpack.c.l.b16 %v226
        %v330 = vunpack.c.l.b16 %v227
        %v331 = vunpack.c.l.b16 %v228
        %v332 = vunpack.c.l.b16 %v229
        %v333 = vunpack.c.l.b16 %v230
        %v334 = vunpack.c.l.b16 %v231
        %v335 = vunpack.c.l.b16 %v232
        %v336 = vunpack.c.l.b16 %v233
        %v337 = vunpack.c.l.b16 %v234
        %v338 = vunpack.c.l.b16 %v235
        %v339 = vunpack.c.l.b16 %v236
        %v340 = vunpack.c.l.b16 %v237
        %v341 = vunpack.c.l.b16 %v238
        %v342 = vunpack.c.l.b16 %v239
        %v343 = vunpack.c.l.b16 %v240
        %v344 = vunpack.c.l.b16 %v241
        %v345 = vunpack.c.l.b16 %v242
        %v346 = vunpack.c.l.b16 %v243
        %v347 = vunpack.c.l.b16 %v244
        %v348 = vunpack.c.l.b16 %v245
        %v349 = vunpack.c.l.b16 %v246
        %v350 = vunpack.c.l.b16 %v247
        %v351 = vunpack.c.l.b16 %v248
        %v352 = vunpack.c.l.b16 %v249
        %v353 = vunpack.c.l.b16 %v250
        %v354 = vunpack.c.l.b16 %v251
        %v355 = vunpack.c.l.b16 %v252
        %v356 = vunpack.c.l.b16 %v253
        %v357 = vunpack.c.l.b16 %v254
        %v358 = vunpack.c.l.b16 %v255
        %v359 = vunpack.c.l.b16 %v256
        %v360 = vunpack.c.l.b16 %v257
        %v361 = vunpack.c.l.b16 %v258
        %v362 = vunpack.c.l.b16 %v259
        %v363 = vunpack.c.l.b16 %v260
        %v364 = vunpack.c.l.b16 %v261
        %v365 = vunpack.c.l.b16 %v262
        %v366 = vunpack.c.l.b16 %v263
        %v367 = vunpack.c.l.b16 %v264
        %v368 = vunpack.c.l.b16 %v267
        %v369 = vpack.c.b16 %v321, %v320
        %v370 = vpack.c.b16 %v323, %v322
        %v371 = vpack.c.b16 %v325, %v324
        %v372 = vpack.c.b16 %v327, %v326
        %v373 = vpack.c.b16 %v329, %v328
        %v374 = vpack.c.b16 %v331, %v330
        %v375 = vpack.c.b16 %v333, %v332
        %v376 = vpack.c.b16 %v335, %v334
        %v377 = vpack.c.b16 %v337, %v336
        %v378 = vpack.c.b16 %v339, %v338
        %v379 = vpack.c.b16 %v341, %v340
        %v380 = vpack.c.b16 %v343, %v342
        %v381 = vpack.c.b16 %v345, %v344
        %v382 = vpack.c.b16 %v347, %v346
        %v383 = vpack.c.b16 %v349, %v348
        %v384 = vpack.c.b16 %v351, %v350
        %v385 = vpack.c.b16 %v353, %v352
        %v386 = vpack.c.b16 %v355, %v354
        %v387 = vpack.c.b16 %v357, %v356
        %v388 = vpack.c.b16 %v359, %v358
        %v389 = vpack.c.b16 %v361, %v360
        %v390 = vpack.c.b16 %v363, %v362
        %v391 = vpack.c.b16 %v365, %v364
        %v392 = vpack.c.b16 %v367, %v366
        %v393 = vpack.c.b16 %v368, %v368
        %vm394 = vsmask.f32 7424
        %v396 = vshrl.u32 %v369, 16
        %v398 = vshll.u32 %v369, 16
        %v400 = vrot.slane %v398, 1
        %v401 = vor.u32 %v396, %v400
        %v403 = vshll.u32 %v370, 16
        %v405 = vrot.slane %v403, 1
        %v406 = vsel %vm394, %v401, %v405
        %v407 = vshrl.u32 %v370, 16
        %v409 = vor.u32 %v407, %v405
        %v411 = vshll.u32 %v371, 16
        %v413 = vrot.slane %v411, 1
        %v414 = vsel %vm394, %v409, %v413
        %v415 = vshrl.u32 %v371, 16
        %v417 = vor.u32 %v415, %v413
        %v419 = vshll.u32 %v372, 16
        %v421 = vrot.slane %v419, 1
        %v422 = vsel %vm394, %v417, %v421
        %v423 = vshrl.u32 %v372, 16
        %v425 = vor.u32 %v423, %v421
        %v427 = vshll.u32 %v373, 16
        %v429 = vrot.slane %v427, 1
        %v430 = vsel %vm394, %v425, %v429
        %v431 = vshrl.u32 %v373, 16
        %v433 = vor.u32 %v431, %v429
        %v435 = vshll.u32 %v374, 16
        %v437 = vrot.slane %v435, 1
        %v438 = vsel %vm394, %v433, %v437
        %v439 = vshrl.u32 %v374, 16
        %v441 = vor.u32 %v439, %v437
        %v443 = vshll.u32 %v375, 16
        %v445 = vrot.slane %v443, 1
        %v446 = vsel %vm394, %v441, %v445
        %v447 = vshrl.u32 %v375, 16
        %v449 = vor.u32 %v447, %v445
        %v451 = vshll.u32 %v376, 16
        %v453 = vrot.slane %v451, 1
        %v454 = vsel %vm394, %v449, %v453
        %v455 = vshrl.u32 %v376, 16
        %v457 = vor.u32 %v455, %v453
        %v459 = vshll.u32 %v377, 16
        %v461 = vrot.slane %v459, 1
        %v462 = vsel %vm394, %v457, %v461
        %v463 = vshrl.u32 %v377, 16
        %v465 = vor.u32 %v463, %v461
        %v467 = vshll.u32 %v378, 16
        %v469 = vrot.slane %v467, 1
        %v470 = vsel %vm394, %v465, %v469
        %v471 = vshrl.u32 %v378, 16
        %v473 = vor.u32 %v471, %v469
        %v475 = vshll.u32 %v379, 16
        %v477 = vrot.slane %v475, 1
        %v478 = vsel %vm394, %v473, %v477
        %v479 = vshrl.u32 %v379, 16
        %v481 = vor.u32 %v479, %v477
        %v483 = vshll.u32 %v380, 16
        %v485 = vrot.slane %v483, 1
        %v486 = vsel %vm394, %v481, %v485
        %v487 = vshrl.u32 %v380, 16
        %v489 = vor.u32 %v487, %v485
        %v491 = vshll.u32 %v381, 16
        %v493 = vrot.slane %v491, 1
        %v494 = vsel %vm394, %v489, %v493
        %v495 = vshrl.u32 %v381, 16
        %v497 = vor.u32 %v495, %v493
        %v499 = vshll.u32 %v382, 16
        %v501 = vrot.slane %v499, 1
        %v502 = vsel %vm394, %v497, %v501
        %v503 = vshrl.u32 %v382, 16
        %v505 = vor.u32 %v503, %v501
        %v507 = vshll.u32 %v383, 16
        %v509 = vrot.slane %v507, 1
        %v510 = vsel %vm394, %v505, %v509
        %v511 = vshrl.u32 %v383, 16
        %v513 = vor.u32 %v511, %v509
        %v515 = vshll.u32 %v384, 16
        %v517 = vrot.slane %v515, 1
        %v518 = vsel %vm394, %v513, %v517
        %v519 = vshrl.u32 %v384, 16
        %v521 = vor.u32 %v519, %v517
        %v523 = vshll.u32 %v385, 16
        %v525 = vrot.slane %v523, 1
        %v526 = vsel %vm394, %v521, %v525
        %v527 = vshrl.u32 %v385, 16
        %v529 = vor.u32 %v527, %v525
        %v531 = vshll.u32 %v386, 16
        %v533 = vrot.slane %v531, 1
        %v534 = vsel %vm394, %v529, %v533
        %v535 = vshrl.u32 %v386, 16
        %v537 = vor.u32 %v535, %v533
        %v539 = vshll.u32 %v387, 16
        %v541 = vrot.slane %v539, 1
        %v542 = vsel %vm394, %v537, %v541
        %v543 = vshrl.u32 %v387, 16
        %v545 = vor.u32 %v543, %v541
        %v547 = vshll.u32 %v388, 16
        %v549 = vrot.slane %v547, 1
        %v550 = vsel %vm394, %v545, %v549
        %v551 = vshrl.u32 %v388, 16
        %v553 = vor.u32 %v551, %v549
        %v555 = vshll.u32 %v389, 16
        %v557 = vrot.slane %v555, 1
        %v558 = vsel %vm394, %v553, %v557
        %v559 = vshrl.u32 %v389, 16
        %v561 = vor.u32 %v559, %v557
        %v563 = vshll.u32 %v390, 16
        %v565 = vrot.slane %v563, 1
        %v566 = vsel %vm394, %v561, %v565
        %v567 = vshrl.u32 %v390, 16
        %v569 = vor.u32 %v567, %v565
        %v571 = vshll.u32 %v391, 16
        %v573 = vrot.slane %v571, 1
        %v574 = vsel %vm394, %v569, %v573
        %v575 = vshrl.u32 %v391, 16
        %v577 = vor.u32 %v575, %v573
        %v579 = vshll.u32 %v392, 16
        %v581 = vrot.slane %v579, 1
        %v582 = vsel %vm394, %v577, %v581
        %v583 = vshrl.u32 %v392, 16
        %v585 = vor.u32 %v583, %v581
        %v587 = vshll.u32 %v393, 16
        %v589 = vrot.slane %v587, 1
        %v590 = vsel %vm394, %v585, %v589
        %v593 = vunpack.c.l.b16 %v269
        %v594 = vunpack.c.l.b16 %v270
        %v595 = vpack.c.b16 %v594, %v593
        %vm597 = vcmask 130048
        %v599 = vsel %vm597, %v406, 0
        %v602 = vsel %vm597, %v414, 0
        %v605 = vsel %vm597, %v422, 0
        %v608 = vsel %vm597, %v430, 0
        %v611 = vsel %vm597, %v438, 0
        %v614 = vsel %vm597, %v446, 0
        %v617 = vsel %vm597, %v454, 0
        %v620 = vsel %vm597, %v462, 0
        %v623 = vsel %vm597, %v470, 0
        %v626 = vsel %vm597, %v478, 0
        %v629 = vsel %vm597, %v486, 0
        %v632 = vsel %vm597, %v494, 0
        %v635 = vsel %vm597, %v502, 0
        %v638 = vsel %vm597, %v510, 0
        %v641 = vsel %vm597, %v518, 0
        %v644 = vsel %vm597, %v526, 0
        %v647 = vsel %vm597, %v534, 0
        %v650 = vsel %vm597, %v542, 0
        %v653 = vsel %vm597, %v550, 0
        %v656 = vsel %vm597, %v558, 0
        %v659 = vsel %vm597, %v566, 0
        %v662 = vsel %vm597, %v574, 0
        %v665 = vsel %vm597, %v582, 0
        %v668 = vsel %vm597, %v590, 0
        %670 = vmatprep.subr.bf16.mxu0 0
        %671 = vmatpush1.bf16.msra.mxu0 %v595
        %672 = vmatprep.subr.bf16.mxu0 0
        %673 = vmatpush1.bf16.msra.mxu0 0
        %674 = vmatprep.subr.bf16.mxu0 0
        %675 = vmatpush1.bf16.msra.mxu0 0
        %676 = vmatprep.subr.bf16.mxu0 0
        %677 = vmatpush1.bf16.msra.mxu0 0
        %678 = vmatprep.subr.bf16.mxu0 0
        %679 = vmatpush1.bf16.msra.mxu0 0
        %680 = vmatprep.subr.bf16.mxu0 0
        %681 = vmatpush1.bf16.msra.mxu0 0
        %682 = vmatprep.subr.bf16.mxu0 0
        %683 = vmatpush1.bf16.msra.mxu0 0
        %684 = vmatprep.subr.bf16.mxu0 0
        %685 = vmatpush1.bf16.msra.mxu0 0
        %686 = vmatprep.subr.bf16.mxu0 0
        %687 = vmatpush1.bf16.msra.mxu0 0
        %688 = vmatprep.subr.bf16.mxu0 0
        %689 = vmatpush1.bf16.msra.mxu0 0
        %690 = vmatprep.subr.bf16.mxu0 0
        %691 = vmatpush1.bf16.msra.mxu0 0
        %692 = vmatprep.subr.bf16.mxu0 0
        %693 = vmatpush1.bf16.msra.mxu0 0
        %694 = vmatprep.subr.bf16.mxu0 0
        %695 = vmatpush1.bf16.msra.mxu0 0
        %696 = vmatprep.subr.bf16.mxu0 0
        %697 = vmatpush1.bf16.msra.mxu0 0
        %698 = vmatprep.subr.bf16.mxu0 0
        %699 = vmatpush1.bf16.msra.mxu0 0
        %700 = vmatprep.subr.bf16.mxu0 0
        %701 = vmatpush1.bf16.msra.mxu0 0
        %702 = vmatprep.mubr.bf16.mxu0 0
        %703 = vmatmul.mubr.bf16.gmra.mrb[0].mxu0 %v599
        %v704 = vpop.f32.mrb[0].mxu0
        %v705 = vadd.f32 0.0, %v704
        %v706 = vpop.f32.mrb[0].mxu0
        %v707 = vpop.f32.mrb[0].mxu0
        %v708 = vadd.f32 0.0, %v707
        %v709 = vpop.f32.mrb[0].mxu0
        %710 = vmatprep.mubr.bf16.mxu0 0
        %711 = vmatmul.mubr.bf16.gmra.mrb[0].mxu0 %v602
        %v712 = vpop.f32.mrb[0].mxu0
        %v713 = vadd.f32 0.0, %v712
        %v714 = vpop.f32.mrb[0].mxu0
        %v715 = vpop.f32.mrb[0].mxu0
        %v716 = vadd.f32 0.0, %v715
        %v717 = vpop.f32.mrb[0].mxu0
        %718 = vmatprep.mubr.bf16.mxu0 0
        %719 = vmatmul.mubr.bf16.gmra.mrb[0].mxu0 %v605
        %v720 = vpop.f32.mrb[0].mxu0
        %v721 = vadd.f32 0.0, %v720
        %v722 = vpop.f32.mrb[0].mxu0
        %v723 = vpop.f32.mrb[0].mxu0
        %v724 = vadd.f32 0.0, %v723
        %v725 = vpop.f32.mrb[0].mxu0
        %726 = vmatprep.mubr.bf16.mxu0 0
        %727 = vmatmul.mubr.bf16.gmra.mrb[0].mxu0 %v608
        %v728 = vpop.f32.mrb[0].mxu0
        %v729 = vadd.f32 0.0, %v728
        %v730 = vpop.f32.mrb[0].mxu0
        %v731 = vpop.f32.mrb[0].mxu0
        %v732 = vadd.f32 0.0, %v731
        %v733 = vpop.f32.mrb[0].mxu0
        %734 = vmatprep.mubr.bf16.mxu0 0
        %735 = vmatmul.mubr.bf16.gmra.mrb[0].mxu0 %v611
        %v736 = vpop.f32.mrb[0].mxu0
        %v737 = vadd.f32 0.0, %v736
        %v738 = vpop.f32.mrb[0].mxu0
        %v739 = vpop.f32.mrb[0].mxu0
        %v740 = vadd.f32 0.0, %v739
        %v741 = vpop.f32.mrb[0].mxu0
        %742 = vmatprep.mubr.bf16.mxu0 0
        %743 = vmatmul.mubr.bf16.gmra.mrb[0].mxu0 %v614
        %v744 = vpop.f32.mrb[0].mxu0
        %v745 = vadd.f32 0.0, %v744
        %v746 = vpop.f32.mrb[0].mxu0
        %v747 = vpop.f32.mrb[0].mxu0
        %v748 = vadd.f32 0.0, %v747
        %v749 = vpop.f32.mrb[0].mxu0
        %750 = vmatprep.mubr.bf16.mxu0 0
        %751 = vmatmul.mubr.bf16.gmra.mrb[0].mxu0 %v617
        %v752 = vpop.f32.mrb[0].mxu0
        %v753 = vadd.f32 0.0, %v752
        %v754 = vpop.f32.mrb[0].mxu0
        %v755 = vpop.f32.mrb[0].mxu0
        %v756 = vadd.f32 0.0, %v755
        %v757 = vpop.f32.mrb[0].mxu0
        %758 = vmatprep.mubr.bf16.mxu0 0
        %759 = vmatmul.mubr.bf16.gmra.mrb[0].mxu0 %v620
        %v760 = vpop.f32.mrb[0].mxu0
        %v761 = vadd.f32 0.0, %v760
        %v762 = vpop.f32.mrb[0].mxu0
        %v763 = vpop.f32.mrb[0].mxu0
        %v764 = vadd.f32 0.0, %v763
        %v765 = vpop.f32.mrb[0].mxu0
        %766 = vmatprep.mubr.bf16.mxu0 0
        %767 = vmatmul.mubr.bf16.gmra.mrb[0].mxu0 %v623
        %v768 = vpop.f32.mrb[0].mxu0
        %v769 = vadd.f32 0.0, %v768
        %v770 = vpop.f32.mrb[0].mxu0
        %v771 = vpop.f32.mrb[0].mxu0
        %v772 = vadd.f32 0.0, %v771
        %v773 = vpop.f32.mrb[0].mxu0
        %774 = vmatprep.mubr.bf16.mxu0 0
        %775 = vmatmul.mubr.bf16.gmra.mrb[0].mxu0 %v626
        %v776 = vpop.f32.mrb[0].mxu0
        %v777 = vadd.f32 0.0, %v776
        %v778 = vpop.f32.mrb[0].mxu0
        %v779 = vpop.f32.mrb[0].mxu0
        %v780 = vadd.f32 0.0, %v779
        %v781 = vpop.f32.mrb[0].mxu0
        %782 = vmatprep.mubr.bf16.mxu0 0
        %783 = vmatmul.mubr.bf16.gmra.mrb[0].mxu0 %v629
        %v784 = vpop.f32.mrb[0].mxu0
        %v785 = vadd.f32 0.0, %v784
        %v786 = vpop.f32.mrb[0].mxu0
        %v787 = vpop.f32.mrb[0].mxu0
        %v788 = vadd.f32 0.0, %v787
        %v789 = vpop.f32.mrb[0].mxu0
        %790 = vmatprep.mubr.bf16.mxu0 0
        %791 = vmatmul.mubr.bf16.gmra.mrb[0].mxu0 %v632
        %v792 = vpop.f32.mrb[0].mxu0
        %v793 = vadd.f32 0.0, %v792
        %v794 = vpop.f32.mrb[0].mxu0
        %v795 = vpop.f32.mrb[0].mxu0
        %v796 = vadd.f32 0.0, %v795
        %v797 = vpop.f32.mrb[0].mxu0
        %798 = vmatprep.mubr.bf16.mxu0 0
        %799 = vmatmul.mubr.bf16.gmra.mrb[0].mxu0 %v635
        %v800 = vpop.f32.mrb[0].mxu0
        %v801 = vadd.f32 0.0, %v800
        %v802 = vpop.f32.mrb[0].mxu0
        %v803 = vpop.f32.mrb[0].mxu0
        %v804 = vadd.f32 0.0, %v803
        %v805 = vpop.f32.mrb[0].mxu0
        %806 = vmatprep.mubr.bf16.mxu0 0
        %807 = vmatmul.mubr.bf16.gmra.mrb[0].mxu0 %v638
        %v808 = vpop.f32.mrb[0].mxu0
        %v809 = vadd.f32 0.0, %v808
        %v810 = vpop.f32.mrb[0].mxu0
        %v811 = vpop.f32.mrb[0].mxu0
        %v812 = vadd.f32 0.0, %v811
        %v813 = vpop.f32.mrb[0].mxu0
        %814 = vmatprep.mubr.bf16.mxu0 0
        %815 = vmatmul.mubr.bf16.gmra.mrb[0].mxu0 %v641
        %v816 = vpop.f32.mrb[0].mxu0
        %v817 = vadd.f32 0.0, %v816
        %v818 = vpop.f32.mrb[0].mxu0
        %v819 = vpop.f32.mrb[0].mxu0
        %v820 = vadd.f32 0.0, %v819
        %v821 = vpop.f32.mrb[0].mxu0
        %822 = vmatprep.mubr.bf16.mxu0 0
        %823 = vmatmul.mubr.bf16.gmra.mrb[0].mxu0 %v644
        %v824 = vpop.f32.mrb[0].mxu0
        %v825 = vadd.f32 0.0, %v824
        %v826 = vpop.f32.mrb[0].mxu0
        %v827 = vpop.f32.mrb[0].mxu0
        %v828 = vadd.f32 0.0, %v827
        %v829 = vpop.f32.mrb[0].mxu0
        %830 = vmatprep.mubr.bf16.mxu0 0
        %831 = vmatmul.mubr.bf16.gmra.mrb[0].mxu0 %v647
        %v832 = vpop.f32.mrb[0].mxu0
        %v833 = vadd.f32 0.0, %v832
        %v834 = vpop.f32.mrb[0].mxu0
        %v835 = vpop.f32.mrb[0].mxu0
        %v836 = vadd.f32 0.0, %v835
        %v837 = vpop.f32.mrb[0].mxu0
        %838 = vmatprep.mubr.bf16.mxu0 0
        %839 = vmatmul.mubr.bf16.gmra.mrb[0].mxu0 %v650
        %v840 = vpop.f32.mrb[0].mxu0
        %v841 = vadd.f32 0.0, %v840
        %v842 = vpop.f32.mrb[0].mxu0
        %v843 = vpop.f32.mrb[0].mxu0
        %v844 = vadd.f32 0.0, %v843
        %v845 = vpop.f32.mrb[0].mxu0
        %846 = vmatprep.mubr.bf16.mxu0 0
        %847 = vmatmul.mubr.bf16.gmra.mrb[0].mxu0 %v653
        %v848 = vpop.f32.mrb[0].mxu0
        %v849 = vadd.f32 0.0, %v848
        %v850 = vpop.f32.mrb[0].mxu0
        %v851 = vpop.f32.mrb[0].mxu0
        %v852 = vadd.f32 0.0, %v851
        %v853 = vpop.f32.mrb[0].mxu0
        %854 = vmatprep.mubr.bf16.mxu0 0
        %855 = vmatmul.mubr.bf16.gmra.mrb[0].mxu0 %v656
        %v856 = vpop.f32.mrb[0].mxu0
        %v857 = vadd.f32 0.0, %v856
        %v858 = vpop.f32.mrb[0].mxu0
        %v859 = vpop.f32.mrb[0].mxu0
        %v860 = vadd.f32 0.0, %v859
        %v861 = vpop.f32.mrb[0].mxu0
        %862 = vmatprep.mubr.bf16.mxu0 0
        %863 = vmatmul.mubr.bf16.gmra.mrb[0].mxu0 %v659
        %v864 = vpop.f32.mrb[0].mxu0
        %v865 = vadd.f32 0.0, %v864
        %v866 = vpop.f32.mrb[0].mxu0
        %v867 = vpop.f32.mrb[0].mxu0
        %v868 = vadd.f32 0.0, %v867
        %v869 = vpop.f32.mrb[0].mxu0
        %870 = vmatprep.mubr.bf16.mxu0 0
        %871 = vmatmul.mubr.bf16.gmra.mrb[0].mxu0 %v662
        %v872 = vpop.f32.mrb[0].mxu0
        %v873 = vadd.f32 0.0, %v872
        %v874 = vpop.f32.mrb[0].mxu0
        %v875 = vpop.f32.mrb[0].mxu0
        %v876 = vadd.f32 0.0, %v875
        %v877 = vpop.f32.mrb[0].mxu0
        %878 = vmatprep.mubr.bf16.mxu0 0
        %879 = vmatmul.mubr.bf16.gmra.mrb[0].mxu0 %v665
        %v880 = vpop.f32.mrb[0].mxu0
        %v881 = vadd.f32 0.0, %v880
        %v882 = vpop.f32.mrb[0].mxu0
        %v883 = vpop.f32.mrb[0].mxu0
        %v884 = vadd.f32 0.0, %v883
        %v885 = vpop.f32.mrb[0].mxu0
        %886 = vmatprep.mubr.bf16.mxu0 0
        %887 = vmatmul.mubr.bf16.gmra.mrb[0].mxu0 %v668
        %v888 = vpop.f32.mrb[0].mxu0
        %v889 = vadd.f32 0.0, %v888
        %v890 = vpop.f32.mrb[0].mxu0
        %v891 = vpop.f32.mrb[0].mxu0
        %v892 = vadd.f32 0.0, %v891
        %v893 = vpop.f32.mrb[0].mxu0
        %894 = vdwg.mxu0
        %v897 = vunpack.c.l.b16 %v265
        %v898 = vunpack.c.l.b16 %v266
        %v899 = vpack.c.b16 %v898, %v897
        %v901 = vsel %vm597, %v369, 0
        %v903 = vsel %vm597, %v370, 0
        %v905 = vsel %vm597, %v371, 0
        %v907 = vsel %vm597, %v372, 0
        %v909 = vsel %vm597, %v373, 0
        %v911 = vsel %vm597, %v374, 0
        %v913 = vsel %vm597, %v375, 0
        %v915 = vsel %vm597, %v376, 0
        %v917 = vsel %vm597, %v377, 0
        %v919 = vsel %vm597, %v378, 0
        %v921 = vsel %vm597, %v379, 0
        %v923 = vsel %vm597, %v380, 0
        %v925 = vsel %vm597, %v381, 0
        %v927 = vsel %vm597, %v382, 0
        %v929 = vsel %vm597, %v383, 0
        %v931 = vsel %vm597, %v384, 0
        %v933 = vsel %vm597, %v385, 0
        %v935 = vsel %vm597, %v386, 0
        %v937 = vsel %vm597, %v387, 0
        %v939 = vsel %vm597, %v388, 0
        %v941 = vsel %vm597, %v389, 0
        %v943 = vsel %vm597, %v390, 0
        %v945 = vsel %vm597, %v391, 0
        %v947 = vsel %vm597, %v392, 0
        %949 = vmatprep.subr.bf16.mxu0 0
        %950 = vmatpush1.bf16.msra.mxu0 %v899
        %951 = vmatprep.subr.bf16.mxu0 0
        %952 = vmatpush1.bf16.msra.mxu0 0
        %953 = vmatprep.subr.bf16.mxu0 0
        %954 = vmatpush1.bf16.msra.mxu0 0
        %955 = vmatprep.subr.bf16.mxu0 0
        %956 = vmatpush1.bf16.msra.mxu0 0
        %957 = vmatprep.subr.bf16.mxu0 0
        %958 = vmatpush1.bf16.msra.mxu0 0
        %959 = vmatprep.subr.bf16.mxu0 0
        %960 = vmatpush1.bf16.msra.mxu0 0
        %961 = vmatprep.subr.bf16.mxu0 0
        %962 = vmatpush1.bf16.msra.mxu0 0
        %963 = vmatprep.subr.bf16.mxu0 0
        %964 = vmatpush1.bf16.msra.mxu0 0
        %965 = vmatprep.subr.bf16.mxu0 0
        %966 = vmatpush1.bf16.msra.mxu0 0
        %967 = vmatprep.subr.bf16.mxu0 0
        %968 = vmatpush1.bf16.msra.mxu0 0
        %969 = vmatprep.subr.bf16.mxu0 0
        %970 = vmatpush1.bf16.msra.mxu0 0
        %971 = vmatprep.subr.bf16.mxu0 0
        %972 = vmatpush1.bf16.msra.mxu0 0
        %973 = vmatprep.subr.bf16.mxu0 0
        %974 = vmatpush1.bf16.msra.mxu0 0
        %975 = vmatprep.subr.bf16.mxu0 0
        %976 = vmatpush1.bf16.msra.mxu0 0
        %977 = vmatprep.subr.bf16.mxu0 0
        %978 = vmatpush1.bf16.msra.mxu0 0
        %979 = vmatprep.subr.bf16.mxu0 0
        %980 = vmatpush1.bf16.msra.mxu0 0
        %981 = vmatprep.mubr.bf16.mxu0 0
        %982 = vmatmul.mubr.bf16.gmra.mrb[0].mxu0 %v901
        %v983 = vpop.f32.mrb[0].mxu0
        %v984 = vadd.f32 %v705, %v983
        %v985 = vpop.f32.mrb[0].mxu0
        %v986 = vpop.f32.mrb[0].mxu0
        %v987 = vadd.f32 %v708, %v986
        %v988 = vpop.f32.mrb[0].mxu0
        %989 = vmatprep.mubr.bf16.mxu0 0
        %990 = vmatmul.mubr.bf16.gmra.mrb[0].mxu0 %v903
        %v991 = vpop.f32.mrb[0].mxu0
        %v992 = vadd.f32 %v713, %v991
        %v993 = vpop.f32.mrb[0].mxu0
        %v994 = vpop.f32.mrb[0].mxu0
        %v995 = vadd.f32 %v716, %v994
        %v996 = vpop.f32.mrb[0].mxu0
        %997 = vmatprep.mubr.bf16.mxu0 0
        %998 = vmatmul.mubr.bf16.gmra.mrb[0].mxu0 %v905
        %v999 = vpop.f32.mrb[0].mxu0
        %v1000 = vadd.f32 %v721, %v999
        %v1001 = vpop.f32.mrb[0].mxu0
        %v1002 = vpop.f32.mrb[0].mxu0
        %v1003 = vadd.f32 %v724, %v1002
        %v1004 = vpop.f32.mrb[0].mxu0
        %1005 = vmatprep.mubr.bf16.mxu0 0
        %1006 = vmatmul.mubr.bf16.gmra.mrb[0].mxu0 %v907
        %v1007 = vpop.f32.mrb[0].mxu0
        %v1008 = vadd.f32 %v729, %v1007
        %v1009 = vpop.f32.mrb[0].mxu0
        %v1010 = vpop.f32.mrb[0].mxu0
        %v1011 = vadd.f32 %v732, %v1010
        %v1012 = vpop.f32.mrb[0].mxu0
        %1013 = vmatprep.mubr.bf16.mxu0 0
        %1014 = vmatmul.mubr.bf16.gmra.mrb[0].mxu0 %v909
        %v1015 = vpop.f32.mrb[0].mxu0
        %v1016 = vadd.f32 %v737, %v1015
        %v1017 = vpop.f32.mrb[0].mxu0
        %v1018 = vpop.f32.mrb[0].mxu0
        %v1019 = vadd.f32 %v740, %v1018
        %v1020 = vpop.f32.mrb[0].mxu0
        %1021 = vmatprep.mubr.bf16.mxu0 0
        %1022 = vmatmul.mubr.bf16.gmra.mrb[0].mxu0 %v911
        %v1023 = vpop.f32.mrb[0].mxu0
        %v1024 = vadd.f32 %v745, %v1023
        %v1025 = vpop.f32.mrb[0].mxu0
        %v1026 = vpop.f32.mrb[0].mxu0
        %v1027 = vadd.f32 %v748, %v1026
        %v1028 = vpop.f32.mrb[0].mxu0
        %1029 = vmatprep.mubr.bf16.mxu0 0
        %1030 = vmatmul.mubr.bf16.gmra.mrb[0].mxu0 %v913
        %v1031 = vpop.f32.mrb[0].mxu0
        %v1032 = vadd.f32 %v753, %v1031
        %v1033 = vpop.f32.mrb[0].mxu0
        %v1034 = vpop.f32.mrb[0].mxu0
        %v1035 = vadd.f32 %v756, %v1034
        %v1036 = vpop.f32.mrb[0].mxu0
        %1037 = vmatprep.mubr.bf16.mxu0 0
        %1038 = vmatmul.mubr.bf16.gmra.mrb[0].mxu0 %v915
        %v1039 = vpop.f32.mrb[0].mxu0
        %v1040 = vadd.f32 %v761, %v1039
        %v1041 = vpop.f32.mrb[0].mxu0
        %v1042 = vpop.f32.mrb[0].mxu0
        %v1043 = vadd.f32 %v764, %v1042
        %v1044 = vpop.f32.mrb[0].mxu0
        %1045 = vmatprep.mubr.bf16.mxu0 0
        %1046 = vmatmul.mubr.bf16.gmra.mrb[0].mxu0 %v917
        %v1047 = vpop.f32.mrb[0].mxu0
        %v1048 = vadd.f32 %v769, %v1047
        %v1049 = vpop.f32.mrb[0].mxu0
        %v1050 = vpop.f32.mrb[0].mxu0
        %v1051 = vadd.f32 %v772, %v1050
        %v1052 = vpop.f32.mrb[0].mxu0
        %1053 = vmatprep.mubr.bf16.mxu0 0
        %1054 = vmatmul.mubr.bf16.gmra.mrb[0].mxu0 %v919
        %v1055 = vpop.f32.mrb[0].mxu0
        %v1056 = vadd.f32 %v777, %v1055
        %v1057 = vpop.f32.mrb[0].mxu0
        %v1058 = vpop.f32.mrb[0].mxu0
        %v1059 = vadd.f32 %v780, %v1058
        %v1060 = vpop.f32.mrb[0].mxu0
        %1061 = vmatprep.mubr.bf16.mxu0 0
        %1062 = vmatmul.mubr.bf16.gmra.mrb[0].mxu0 %v921
        %v1063 = vpop.f32.mrb[0].mxu0
        %v1064 = vadd.f32 %v785, %v1063
        %v1065 = vpop.f32.mrb[0].mxu0
        %v1066 = vpop.f32.mrb[0].mxu0
        %v1067 = vadd.f32 %v788, %v1066
        %v1068 = vpop.f32.mrb[0].mxu0
        %1069 = vmatprep.mubr.bf16.mxu0 0
        %1070 = vmatmul.mubr.bf16.gmra.mrb[0].mxu0 %v923
        %v1071 = vpop.f32.mrb[0].mxu0
        %v1072 = vadd.f32 %v793, %v1071
        %v1073 = vpop.f32.mrb[0].mxu0
        %v1074 = vpop.f32.mrb[0].mxu0
        %v1075 = vadd.f32 %v796, %v1074
        %v1076 = vpop.f32.mrb[0].mxu0
        %1077 = vmatprep.mubr.bf16.mxu0 0
        %1078 = vmatmul.mubr.bf16.gmra.mrb[0].mxu0 %v925
        %v1079 = vpop.f32.mrb[0].mxu0
        %v1080 = vadd.f32 %v801, %v1079
        %v1081 = vpop.f32.mrb[0].mxu0
        %v1082 = vpop.f32.mrb[0].mxu0
        %v1083 = vadd.f32 %v804, %v1082
        %v1084 = vpop.f32.mrb[0].mxu0
        %1085 = vmatprep.mubr.bf16.mxu0 0
        %1086 = vmatmul.mubr.bf16.gmra.mrb[0].mxu0 %v927
        %v1087 = vpop.f32.mrb[0].mxu0
        %v1088 = vadd.f32 %v809, %v1087
        %v1089 = vpop.f32.mrb[0].mxu0
        %v1090 = vpop.f32.mrb[0].mxu0
        %v1091 = vadd.f32 %v812, %v1090
        %v1092 = vpop.f32.mrb[0].mxu0
        %1093 = vmatprep.mubr.bf16.mxu0 0
        %1094 = vmatmul.mubr.bf16.gmra.mrb[0].mxu0 %v929
        %v1095 = vpop.f32.mrb[0].mxu0
        %v1096 = vadd.f32 %v817, %v1095
        %v1097 = vpop.f32.mrb[0].mxu0
        %v1098 = vpop.f32.mrb[0].mxu0
        %v1099 = vadd.f32 %v820, %v1098
        %v1100 = vpop.f32.mrb[0].mxu0
        %1101 = vmatprep.mubr.bf16.mxu0 0
        %1102 = vmatmul.mubr.bf16.gmra.mrb[0].mxu0 %v931
        %v1103 = vpop.f32.mrb[0].mxu0
        %v1104 = vadd.f32 %v825, %v1103
        %v1105 = vpop.f32.mrb[0].mxu0
        %v1106 = vpop.f32.mrb[0].mxu0
        %v1107 = vadd.f32 %v828, %v1106
        %v1108 = vpop.f32.mrb[0].mxu0
        %1109 = vmatprep.mubr.bf16.mxu0 0
        %1110 = vmatmul.mubr.bf16.gmra.mrb[0].mxu0 %v933
        %v1111 = vpop.f32.mrb[0].mxu0
        %v1112 = vadd.f32 %v833, %v1111
        %v1113 = vpop.f32.mrb[0].mxu0
        %v1114 = vpop.f32.mrb[0].mxu0
        %v1115 = vadd.f32 %v836, %v1114
        %v1116 = vpop.f32.mrb[0].mxu0
        %1117 = vmatprep.mubr.bf16.mxu0 0
        %1118 = vmatmul.mubr.bf16.gmra.mrb[0].mxu0 %v935
        %v1119 = vpop.f32.mrb[0].mxu0
        %v1120 = vadd.f32 %v841, %v1119
        %v1121 = vpop.f32.mrb[0].mxu0
        %v1122 = vpop.f32.mrb[0].mxu0
        %v1123 = vadd.f32 %v844, %v1122
        %v1124 = vpop.f32.mrb[0].mxu0
        %1125 = vmatprep.mubr.bf16.mxu0 0
        %1126 = vmatmul.mubr.bf16.gmra.mrb[0].mxu0 %v937
        %v1127 = vpop.f32.mrb[0].mxu0
        %v1128 = vadd.f32 %v849, %v1127
        %v1129 = vpop.f32.mrb[0].mxu0
        %v1130 = vpop.f32.mrb[0].mxu0
        %v1131 = vadd.f32 %v852, %v1130
        %v1132 = vpop.f32.mrb[0].mxu0
        %1133 = vmatprep.mubr.bf16.mxu0 0
        %1134 = vmatmul.mubr.bf16.gmra.mrb[0].mxu0 %v939
        %v1135 = vpop.f32.mrb[0].mxu0
        %v1136 = vadd.f32 %v857, %v1135
        %v1137 = vpop.f32.mrb[0].mxu0
        %v1138 = vpop.f32.mrb[0].mxu0
        %v1139 = vadd.f32 %v860, %v1138
        %v1140 = vpop.f32.mrb[0].mxu0
        %1141 = vmatprep.mubr.bf16.mxu0 0
        %1142 = vmatmul.mubr.bf16.gmra.mrb[0].mxu0 %v941
        %v1143 = vpop.f32.mrb[0].mxu0
        %v1144 = vadd.f32 %v865, %v1143
        %v1145 = vpop.f32.mrb[0].mxu0
        %v1146 = vpop.f32.mrb[0].mxu0
        %v1147 = vadd.f32 %v868, %v1146
        %v1148 = vpop.f32.mrb[0].mxu0
        %1149 = vmatprep.mubr.bf16.mxu0 0
        %1150 = vmatmul.mubr.bf16.gmra.mrb[0].mxu0 %v943
        %v1151 = vpop.f32.mrb[0].mxu0
        %v1152 = vadd.f32 %v873, %v1151
        %v1153 = vpop.f32.mrb[0].mxu0
        %v1154 = vpop.f32.mrb[0].mxu0
        %v1155 = vadd.f32 %v876, %v1154
        %v1156 = vpop.f32.mrb[0].mxu0
        %1157 = vmatprep.mubr.bf16.mxu0 0
        %1158 = vmatmul.mubr.bf16.gmra.mrb[0].mxu0 %v945
        %v1159 = vpop.f32.mrb[0].mxu0
        %v1160 = vadd.f32 %v881, %v1159
        %v1161 = vpop.f32.mrb[0].mxu0
        %v1162 = vpop.f32.mrb[0].mxu0
        %v1163 = vadd.f32 %v884, %v1162
        %v1164 = vpop.f32.mrb[0].mxu0
        %1165 = vmatprep.mubr.bf16.mxu0 0
        %1166 = vmatmul.mubr.bf16.gmra.mrb[0].mxu0 %v947
        %v1167 = vpop.f32.mrb[0].mxu0
        %v1168 = vadd.f32 %v889, %v1167
        %v1169 = vpop.f32.mrb[0].mxu0
        %v1170 = vpop.f32.mrb[0].mxu0
        %v1171 = vadd.f32 %v892, %v1170
        %v1172 = vpop.f32.mrb[0].mxu0
        %1173 = vdwg.mxu0
        %v1174 = vld [vmem:[%s185 + $0xc] sm:$0xf]
        %v1175 = vld [vmem:[%s185 + $0x10] sm:$0xf]
        %v1176 = vld [vmem:[%s185 + $0x14] sm:$0xf]
        %v1177 = vld [vmem:[%s185 + $0x18] sm:$0xf]
        %v1178 = vld [vmem:[%s185 + $0x1c] sm:$0xf]
        %v1179 = vld [vmem:[%s185 + $0x20] sm:$0xf]
        %v1180 = vld [vmem:[%s185 + $0x24] sm:$0xf]
        %v1181 = vld [vmem:[%s185 + $0x28] sm:$0xf]
        %v1182 = vld [vmem:[%s185 + $0x2c] sm:$0xf]
        %v1183 = vld [vmem:[%s185 + $0x30] sm:$0xf]
        %v1184 = vld [vmem:[%s185 + $0x34] sm:$0xf]
        %v1185 = vld [vmem:[%s185 + $0x38] sm:$0xf]
        %v1186 = vld [vmem:[%s185 + $0x3c] sm:$0xf]
        %v1187 = vld [vmem:[%s185 + $0x40] sm:$0xf]
        %v1188 = vld [vmem:[%s185 + $0x44] sm:$0xf]
        %v1189 = vld [vmem:[%s185 + $0x48] sm:$0xf]
        %v1190 = vld [vmem:[%s185 + $0x4c] sm:$0xf]
        %v1191 = vld [vmem:[%s185 + $0x50] sm:$0xf]
        %v1192 = vld [vmem:[%s185 + $0x54] sm:$0xf]
        %v1193 = vld [vmem:[%s185 + $0x58] sm:$0xf]
        %v1194 = vld [vmem:[%s185 + $0x5c] sm:$0xf]
        %v1195 = vld [vmem:[%s185 + $0x60] sm:$0xf]
        %v1196 = vld [vmem:[%s185 + $0x64] sm:$0xf]
        %v1197 = vld [vmem:[%s185 + $0x68] sm:$0xf]
        %v1198 = vld [vmem:[%s185 + $0x6c] sm:$0xf]
        %v1199 = vld [vmem:[%s185 + $0x70] sm:$0xf]
        %v1200 = vld [vmem:[%s185 + $0x74] sm:$0xf]
        %v1201 = vld [vmem:[%s185 + $0x78] sm:$0xf]
        %v1202 = vld [vmem:[%s185 + $0x7c] sm:$0xf]
        %v1203 = vld [vmem:[%s185 + $0x80] sm:$0xf]
        %v1204 = vld [vmem:[%s185 + $0x84] sm:$0xf]
        %v1205 = vld [vmem:[%s185 + $0x88] sm:$0xf]
        %v1206 = vld [vmem:[%s185 + $0x8c] sm:$0xf]
        %v1207 = vld [vmem:[%s185 + $0x90] sm:$0xf]
        %v1208 = vld [vmem:[%s185 + $0x94] sm:$0xf]
        %v1209 = vld [vmem:[%s185 + $0x98] sm:$0xf]
        %v1210 = vld [vmem:[%s185 + $0x9c] sm:$0xf]
        %v1211 = vld [vmem:[%s185 + $0xa0] sm:$0xf]
        %v1212 = vld [vmem:[%s185 + $0xa4] sm:$0xf]
        %v1213 = vld [vmem:[%s185 + $0xa8] sm:$0xf]
        %v1214 = vld [vmem:[%s185 + $0xac] sm:$0xf]
        %v1215 = vld [vmem:[%s185 + $0xb0] sm:$0xf]
        %v1216 = vld [vmem:[%s185 + $0xb4] sm:$0xf]
        %v1217 = vld [vmem:[%s185 + $0xb8] sm:$0xf]
        %v1218 = vld [vmem:[%s185 + $0xbc] sm:$0xf]
        %v1219 = vld [vmem:[%s185 + $0xc0] sm:$0xf]
        %v1220 = vld [vmem:[%s185 + $0xc4] sm:$0xf]
        %v1221 = vld [vmem:[%s185 + $0xc8] sm:$0xf]
        %s1222 = scalar_lea.vmem [#allocation5], 16
        %v1223 = vld [vmem:[%s1222] sm:$0xf]
        %v1224 = vld [vmem:[%s1222 + $0x4] sm:$0xf]
        %v1273 = vunpack.c.l.b16 %v1174
        %v1274 = vunpack.c.l.b16 %v1175
        %v1275 = vunpack.c.l.b16 %v1176
        %v1276 = vunpack.c.l.b16 %v1177
        %v1277 = vunpack.c.l.b16 %v1178
        %v1278 = vunpack.c.l.b16 %v1179
        %v1279 = vunpack.c.l.b16 %v1180
        %v1280 = vunpack.c.l.b16 %v1181
        %v1281 = vunpack.c.l.b16 %v1182
        %v1282 = vunpack.c.l.b16 %v1183
        %v1283 = vunpack.c.l.b16 %v1184
        %v1284 = vunpack.c.l.b16 %v1185
        %v1285 = vunpack.c.l.b16 %v1186
        %v1286 = vunpack.c.l.b16 %v1187
        %v1287 = vunpack.c.l.b16 %v1188
        %v1288 = vunpack.c.l.b16 %v1189
        %v1289 = vunpack.c.l.b16 %v1190
        %v1290 = vunpack.c.l.b16 %v1191
        %v1291 = vunpack.c.l.b16 %v1192
        %v1292 = vunpack.c.l.b16 %v1193
        %v1293 = vunpack.c.l.b16 %v1194
        %v1294 = vunpack.c.l.b16 %v1195
        %v1295 = vunpack.c.l.b16 %v1196
        %v1296 = vunpack.c.l.b16 %v1197
        %v1297 = vunpack.c.l.b16 %v1198
        %v1298 = vunpack.c.l.b16 %v1199
        %v1299 = vunpack.c.l.b16 %v1200
        %v1300 = vunpack.c.l.b16 %v1201
        %v1301 = vunpack.c.l.b16 %v1202
        %v1302 = vunpack.c.l.b16 %v1203
        %v1303 = vunpack.c.l.b16 %v1204
        %v1304 = vunpack.c.l.b16 %v1205
        %v1305 = vunpack.c.l.b16 %v1206
        %v1306 = vunpack.c.l.b16 %v1207
        %v1307 = vunpack.c.l.b16 %v1208
        %v1308 = vunpack.c.l.b16 %v1209
        %v1309 = vunpack.c.l.b16 %v1210
        %v1310 = vunpack.c.l.b16 %v1211
        %v1311 = vunpack.c.l.b16 %v1212
        %v1312 = vunpack.c.l.b16 %v1213
        %v1313 = vunpack.c.l.b16 %v1214
        %v1314 = vunpack.c.l.b16 %v1215
        %v1315 = vunpack.c.l.b16 %v1216
        %v1316 = vunpack.c.l.b16 %v1217
        %v1317 = vunpack.c.l.b16 %v1218
        %v1318 = vunpack.c.l.b16 %v1219
        %v1319 = vunpack.c.l.b16 %v1220
        %v1320 = vunpack.c.l.b16 %v1221
        %v1321 = vpack.c.b16 %v1274, %v1273
        %v1322 = vpack.c.b16 %v1276, %v1275
        %v1323 = vpack.c.b16 %v1278, %v1277
        %v1324 = vpack.c.b16 %v1280, %v1279
        %v1325 = vpack.c.b16 %v1282, %v1281
        %v1326 = vpack.c.b16 %v1284, %v1283
        %v1327 = vpack.c.b16 %v1286, %v1285
        %v1328 = vpack.c.b16 %v1288, %v1287
        %v1329 = vpack.c.b16 %v1290, %v1289
        %v1330 = vpack.c.b16 %v1292, %v1291
        %v1331 = vpack.c.b16 %v1294, %v1293
        %v1332 = vpack.c.b16 %v1296, %v1295
        %v1333 = vpack.c.b16 %v1298, %v1297
        %v1334 = vpack.c.b16 %v1300, %v1299
        %v1335 = vpack.c.b16 %v1302, %v1301
        %v1336 = vpack.c.b16 %v1304, %v1303
        %v1337 = vpack.c.b16 %v1306, %v1305
        %v1338 = vpack.c.b16 %v1308, %v1307
        %v1339 = vpack.c.b16 %v1310, %v1309
        %v1340 = vpack.c.b16 %v1312, %v1311
        %v1341 = vpack.c.b16 %v1314, %v1313
        %v1342 = vpack.c.b16 %v1316, %v1315
        %v1343 = vpack.c.b16 %v1318, %v1317
        %v1344 = vpack.c.b16 %v1320, %v1319
        %v1347 = vunpack.c.l.b16 %v1223
        %v1348 = vunpack.c.l.b16 %v1224
        %v1349 = vpack.c.b16 %v1348, %v1347
        %v1352 = vsel %vm597, %v1321, 0
        %v1355 = vsel %vm597, %v1322, 0
        %v1358 = vsel %vm597, %v1323, 0
        %v1361 = vsel %vm597, %v1324, 0
        %v1364 = vsel %vm597, %v1325, 0
        %v1367 = vsel %vm597, %v1326, 0
        %v1370 = vsel %vm597, %v1327, 0
        %v1373 = vsel %vm597, %v1328, 0
        %v1376 = vsel %vm597, %v1329, 0
        %v1379 = vsel %vm597, %v1330, 0
        %v1382 = vsel %vm597, %v1331, 0
        %v1385 = vsel %vm597, %v1332, 0
        %v1388 = vsel %vm597, %v1333, 0
        %v1391 = vsel %vm597, %v1334, 0
        %v1394 = vsel %vm597, %v1335, 0
        %v1397 = vsel %vm597, %v1336, 0
        %v1400 = vsel %vm597, %v1337, 0
        %v1403 = vsel %vm597, %v1338, 0
        %v1406 = vsel %vm597, %v1339, 0
        %v1409 = vsel %vm597, %v1340, 0
        %v1412 = vsel %vm597, %v1341, 0
        %v1415 = vsel %vm597, %v1342, 0
        %v1418 = vsel %vm597, %v1343, 0
        %v1421 = vsel %vm597, %v1344, 0
        %1423 = vmatprep.subr.bf16.mxu0 0
        %1424 = vmatpush1.bf16.msra.mxu0 %v1349
        %1425 = vmatprep.subr.bf16.mxu0 0
        %1426 = vmatpush1.bf16.msra.mxu0 0
        %1427 = vmatprep.subr.bf16.mxu0 0
        %1428 = vmatpush1.bf16.msra.mxu0 0
        %1429 = vmatprep.subr.bf16.mxu0 0
        %1430 = vmatpush1.bf16.msra.mxu0 0
        %1431 = vmatprep.subr.bf16.mxu0 0
        %1432 = vmatpush1.bf16.msra.mxu0 0
        %1433 = vmatprep.subr.bf16.mxu0 0
        %1434 = vmatpush1.bf16.msra.mxu0 0
        %1435 = vmatprep.subr.bf16.mxu0 0
        %1436 = vmatpush1.bf16.msra.mxu0 0
        %1437 = vmatprep.subr.bf16.mxu0 0
        %1438 = vmatpush1.bf16.msra.mxu0 0
        %1439 = vmatprep.subr.bf16.mxu0 0
        %1440 = vmatpush1.bf16.msra.mxu0 0
        %1441 = vmatprep.subr.bf16.mxu0 0
        %1442 = vmatpush1.bf16.msra.mxu0 0
        %1443 = vmatprep.subr.bf16.mxu0 0
        %1444 = vmatpush1.bf16.msra.mxu0 0
        %1445 = vmatprep.subr.bf16.mxu0 0
        %1446 = vmatpush1.bf16.msra.mxu0 0
        %1447 = vmatprep.subr.bf16.mxu0 0
        %1448 = vmatpush1.bf16.msra.mxu0 0
        %1449 = vmatprep.subr.bf16.mxu0 0
        %1450 = vmatpush1.bf16.msra.mxu0 0
        %1451 = vmatprep.subr.bf16.mxu0 0
        %1452 = vmatpush1.bf16.msra.mxu0 0
        %1453 = vmatprep.subr.bf16.mxu0 0
        %1454 = vmatpush1.bf16.msra.mxu0 0
        %1455 = vmatprep.mubr.bf16.mxu0 0
        %1456 = vmatmul.mubr.bf16.gmra.mrb[0].mxu0 %v1352
        %v1457 = vpop.f32.mrb[0].mxu0
        %v1458 = vadd.f32 0.0, %v1457
        %v1459 = vpop.f32.mrb[0].mxu0
        %v1460 = vpop.f32.mrb[0].mxu0
        %v1461 = vadd.f32 0.0, %v1460
        %v1462 = vpop.f32.mrb[0].mxu0
        %1463 = vmatprep.mubr.bf16.mxu0 0
        %1464 = vmatmul.mubr.bf16.gmra.mrb[0].mxu0 %v1355
        %v1465 = vpop.f32.mrb[0].mxu0
        %v1466 = vadd.f32 0.0, %v1465
        %v1467 = vpop.f32.mrb[0].mxu0
        %v1468 = vpop.f32.mrb[0].mxu0
        %v1469 = vadd.f32 0.0, %v1468
        %v1470 = vpop.f32.mrb[0].mxu0
        %1471 = vmatprep.mubr.bf16.mxu0 0
        %1472 = vmatmul.mubr.bf16.gmra.mrb[0].mxu0 %v1358
        %v1473 = vpop.f32.mrb[0].mxu0
        %v1474 = vadd.f32 0.0, %v1473
        %v1475 = vpop.f32.mrb[0].mxu0
        %v1476 = vpop.f32.mrb[0].mxu0
        %v1477 = vadd.f32 0.0, %v1476
        %v1478 = vpop.f32.mrb[0].mxu0
        %1479 = vmatprep.mubr.bf16.mxu0 0
        %1480 = vmatmul.mubr.bf16.gmra.mrb[0].mxu0 %v1361
        %v1481 = vpop.f32.mrb[0].mxu0
        %v1482 = vadd.f32 0.0, %v1481
        %v1483 = vpop.f32.mrb[0].mxu0
        %v1484 = vpop.f32.mrb[0].mxu0
        %v1485 = vadd.f32 0.0, %v1484
        %v1486 = vpop.f32.mrb[0].mxu0
        %1487 = vmatprep.mubr.bf16.mxu0 0
        %1488 = vmatmul.mubr.bf16.gmra.mrb[0].mxu0 %v1364
        %v1489 = vpop.f32.mrb[0].mxu0
        %v1490 = vadd.f32 0.0, %v1489
        %v1491 = vpop.f32.mrb[0].mxu0
        %v1492 = vpop.f32.mrb[0].mxu0
        %v1493 = vadd.f32 0.0, %v1492
        %v1494 = vpop.f32.mrb[0].mxu0
        %1495 = vmatprep.mubr.bf16.mxu0 0
        %1496 = vmatmul.mubr.bf16.gmra.mrb[0].mxu0 %v1367
        %v1497 = vpop.f32.mrb[0].mxu0
        %v1498 = vadd.f32 0.0, %v1497
        %v1499 = vpop.f32.mrb[0].mxu0
        %v1500 = vpop.f32.mrb[0].mxu0
        %v1501 = vadd.f32 0.0, %v1500
        %v1502 = vpop.f32.mrb[0].mxu0
        %1503 = vmatprep.mubr.bf16.mxu0 0
        %1504 = vmatmul.mubr.bf16.gmra.mrb[0].mxu0 %v1370
        %v1505 = vpop.f32.mrb[0].mxu0
        %v1506 = vadd.f32 0.0, %v1505
        %v1507 = vpop.f32.mrb[0].mxu0
        %v1508 = vpop.f32.mrb[0].mxu0
        %v1509 = vadd.f32 0.0, %v1508
        %v1510 = vpop.f32.mrb[0].mxu0
        %1511 = vmatprep.mubr.bf16.mxu0 0
        %1512 = vmatmul.mubr.bf16.gmra.mrb[0].mxu0 %v1373
        %v1513 = vpop.f32.mrb[0].mxu0
        %v1514 = vadd.f32 0.0, %v1513
        %v1515 = vpop.f32.mrb[0].mxu0
        %v1516 = vpop.f32.mrb[0].mxu0
        %v1517 = vadd.f32 0.0, %v1516
        %v1518 = vpop.f32.mrb[0].mxu0
        %1519 = vmatprep.mubr.bf16.mxu0 0
        %1520 = vmatmul.mubr.bf16.gmra.mrb[0].mxu0 %v1376
        %v1521 = vpop.f32.mrb[0].mxu0
        %v1522 = vadd.f32 0.0, %v1521
        %v1523 = vpop.f32.mrb[0].mxu0
        %v1524 = vpop.f32.mrb[0].mxu0
        %v1525 = vadd.f32 0.0, %v1524
        %v1526 = vpop.f32.mrb[0].mxu0
        %1527 = vmatprep.mubr.bf16.mxu0 0
        %1528 = vmatmul.mubr.bf16.gmra.mrb[0].mxu0 %v1379
        %v1529 = vpop.f32.mrb[0].mxu0
        %v1530 = vadd.f32 0.0, %v1529
        %v1531 = vpop.f32.mrb[0].mxu0
        %v1532 = vpop.f32.mrb[0].mxu0
        %v1533 = vadd.f32 0.0, %v1532
        %v1534 = vpop.f32.mrb[0].mxu0
        %1535 = vmatprep.mubr.bf16.mxu0 0
        %1536 = vmatmul.mubr.bf16.gmra.mrb[0].mxu0 %v1382
        %v1537 = vpop.f32.mrb[0].mxu0
        %v1538 = vadd.f32 0.0, %v1537
        %v1539 = vpop.f32.mrb[0].mxu0
        %v1540 = vpop.f32.mrb[0].mxu0
        %v1541 = vadd.f32 0.0, %v1540
        %v1542 = vpop.f32.mrb[0].mxu0
        %1543 = vmatprep.mubr.bf16.mxu0 0
        %1544 = vmatmul.mubr.bf16.gmra.mrb[0].mxu0 %v1385
        %v1545 = vpop.f32.mrb[0].mxu0
        %v1546 = vadd.f32 0.0, %v1545
        %v1547 = vpop.f32.mrb[0].mxu0
        %v1548 = vpop.f32.mrb[0].mxu0
        %v1549 = vadd.f32 0.0, %v1548
        %v1550 = vpop.f32.mrb[0].mxu0
        %1551 = vmatprep.mubr.bf16.mxu0 0
        %1552 = vmatmul.mubr.bf16.gmra.mrb[0].mxu0 %v1388
        %v1553 = vpop.f32.mrb[0].mxu0
        %v1554 = vadd.f32 0.0, %v1553
        %v1555 = vpop.f32.mrb[0].mxu0
        %v1556 = vpop.f32.mrb[0].mxu0
        %v1557 = vadd.f32 0.0, %v1556
        %v1558 = vpop.f32.mrb[0].mxu0
        %1559 = vmatprep.mubr.bf16.mxu0 0
        %1560 = vmatmul.mubr.bf16.gmra.mrb[0].mxu0 %v1391
        %v1561 = vpop.f32.mrb[0].mxu0
        %v1562 = vadd.f32 0.0, %v1561
        %v1563 = vpop.f32.mrb[0].mxu0
        %v1564 = vpop.f32.mrb[0].mxu0
        %v1565 = vadd.f32 0.0, %v1564
        %v1566 = vpop.f32.mrb[0].mxu0
        %1567 = vmatprep.mubr.bf16.mxu0 0
        %1568 = vmatmul.mubr.bf16.gmra.mrb[0].mxu0 %v1394
        %v1569 = vpop.f32.mrb[0].mxu0
        %v1570 = vadd.f32 0.0, %v1569
        %v1571 = vpop.f32.mrb[0].mxu0
        %v1572 = vpop.f32.mrb[0].mxu0
        %v1573 = vadd.f32 0.0, %v1572
        %v1574 = vpop.f32.mrb[0].mxu0
        %1575 = vmatprep.mubr.bf16.mxu0 0
        %1576 = vmatmul.mubr.bf16.gmra.mrb[0].mxu0 %v1397
        %v1577 = vpop.f32.mrb[0].mxu0
        %v1578 = vadd.f32 0.0, %v1577
        %v1579 = vpop.f32.mrb[0].mxu0
        %v1580 = vpop.f32.mrb[0].mxu0
        %v1581 = vadd.f32 0.0, %v1580
        %v1582 = vpop.f32.mrb[0].mxu0
        %1583 = vmatprep.mubr.bf16.mxu0 0
        %1584 = vmatmul.mubr.bf16.gmra.mrb[0].mxu0 %v1400
        %v1585 = vpop.f32.mrb[0].mxu0
        %v1586 = vadd.f32 0.0, %v1585
        %v1587 = vpop.f32.mrb[0].mxu0
        %v1588 = vpop.f32.mrb[0].mxu0
        %v1589 = vadd.f32 0.0, %v1588
        %v1590 = vpop.f32.mrb[0].mxu0
        %1591 = vmatprep.mubr.bf16.mxu0 0
        %1592 = vmatmul.mubr.bf16.gmra.mrb[0].mxu0 %v1403
        %v1593 = vpop.f32.mrb[0].mxu0
        %v1594 = vadd.f32 0.0, %v1593
        %v1595 = vpop.f32.mrb[0].mxu0
        %v1596 = vpop.f32.mrb[0].mxu0
        %v1597 = vadd.f32 0.0, %v1596
        %v1598 = vpop.f32.mrb[0].mxu0
        %1599 = vmatprep.mubr.bf16.mxu0 0
        %1600 = vmatmul.mubr.bf16.gmra.mrb[0].mxu0 %v1406
        %v1601 = vpop.f32.mrb[0].mxu0
        %v1602 = vadd.f32 0.0, %v1601
        %v1603 = vpop.f32.mrb[0].mxu0
        %v1604 = vpop.f32.mrb[0].mxu0
        %v1605 = vadd.f32 0.0, %v1604
        %v1606 = vpop.f32.mrb[0].mxu0
        %1607 = vmatprep.mubr.bf16.mxu0 0
        %1608 = vmatmul.mubr.bf16.gmra.mrb[0].mxu0 %v1409
        %v1609 = vpop.f32.mrb[0].mxu0
        %v1610 = vadd.f32 0.0, %v1609
        %v1611 = vpop.f32.mrb[0].mxu0
        %v1612 = vpop.f32.mrb[0].mxu0
        %v1613 = vadd.f32 0.0, %v1612
        %v1614 = vpop.f32.mrb[0].mxu0
        %1615 = vmatprep.mubr.bf16.mxu0 0
        %1616 = vmatmul.mubr.bf16.gmra.mrb[0].mxu0 %v1412
        %v1617 = vpop.f32.mrb[0].mxu0
        %v1618 = vadd.f32 0.0, %v1617
        %v1619 = vpop.f32.mrb[0].mxu0
        %v1620 = vpop.f32.mrb[0].mxu0
        %v1621 = vadd.f32 0.0, %v1620
        %v1622 = vpop.f32.mrb[0].mxu0
        %1623 = vmatprep.mubr.bf16.mxu0 0
        %1624 = vmatmul.mubr.bf16.gmra.mrb[0].mxu0 %v1415
        %v1625 = vpop.f32.mrb[0].mxu0
        %v1626 = vadd.f32 0.0, %v1625
        %v1627 = vpop.f32.mrb[0].mxu0
        %v1628 = vpop.f32.mrb[0].mxu0
        %v1629 = vadd.f32 0.0, %v1628
        %v1630 = vpop.f32.mrb[0].mxu0
        %1631 = vmatprep.mubr.bf16.mxu0 0
        %1632 = vmatmul.mubr.bf16.gmra.mrb[0].mxu0 %v1418
        %v1633 = vpop.f32.mrb[0].mxu0
        %v1634 = vadd.f32 0.0, %v1633
        %v1635 = vpop.f32.mrb[0].mxu0
        %v1636 = vpop.f32.mrb[0].mxu0
        %v1637 = vadd.f32 0.0, %v1636
        %v1638 = vpop.f32.mrb[0].mxu0
        %1639 = vmatprep.mubr.bf16.mxu0 0
        %1640 = vmatmul.mubr.bf16.gmra.mrb[0].mxu0 %v1421
        %v1641 = vpop.f32.mrb[0].mxu0
        %v1642 = vadd.f32 0.0, %v1641
        %v1643 = vpop.f32.mrb[0].mxu0
        %v1644 = vpop.f32.mrb[0].mxu0
        %v1645 = vadd.f32 0.0, %v1644
        %v1646 = vpop.f32.mrb[0].mxu0
        %1647 = vdwg.mxu0
        %v1648 = vadd.f32 %v984, %v1458
        %v1649 = vadd.f32 %v987, %v1461
        %v1650 = vadd.f32 %v992, %v1466
        %v1651 = vadd.f32 %v995, %v1469
        %v1652 = vadd.f32 %v1000, %v1474
        %v1653 = vadd.f32 %v1003, %v1477
        %v1654 = vadd.f32 %v1008, %v1482
        %v1655 = vadd.f32 %v1011, %v1485
        %v1656 = vadd.f32 %v1016, %v1490
        %v1657 = vadd.f32 %v1019, %v1493
        %v1658 = vadd.f32 %v1024, %v1498
        %v1659 = vadd.f32 %v1027, %v1501
        %v1660 = vadd.f32 %v1032, %v1506
        %v1661 = vadd.f32 %v1035, %v1509
        %v1662 = vadd.f32 %v1040, %v1514
        %v1663 = vadd.f32 %v1043, %v1517
        %v1664 = vadd.f32 %v1048, %v1522
        %v1665 = vadd.f32 %v1051, %v1525
        %v1666 = vadd.f32 %v1056, %v1530
        %v1667 = vadd.f32 %v1059, %v1533
        %v1668 = vadd.f32 %v1064, %v1538
        %v1669 = vadd.f32 %v1067, %v1541
        %v1670 = vadd.f32 %v1072, %v1546
        %v1671 = vadd.f32 %v1075, %v1549
        %v1672 = vadd.f32 %v1080, %v1554
        %v1673 = vadd.f32 %v1083, %v1557
        %v1674 = vadd.f32 %v1088, %v1562
        %v1675 = vadd.f32 %v1091, %v1565
        %v1676 = vadd.f32 %v1096, %v1570
        %v1677 = vadd.f32 %v1099, %v1573
        %v1678 = vadd.f32 %v1104, %v1578
        %v1679 = vadd.f32 %v1107, %v1581
        %v1680 = vadd.f32 %v1112, %v1586
        %v1681 = vadd.f32 %v1115, %v1589
        %v1682 = vadd.f32 %v1120, %v1594
        %v1683 = vadd.f32 %v1123, %v1597
        %v1684 = vadd.f32 %v1128, %v1602
        %v1685 = vadd.f32 %v1131, %v1605
        %v1686 = vadd.f32 %v1136, %v1610
        %v1687 = vadd.f32 %v1139, %v1613
        %v1688 = vadd.f32 %v1144, %v1618
        %v1689 = vadd.f32 %v1147, %v1621
        %v1690 = vadd.f32 %v1152, %v1626
        %v1691 = vadd.f32 %v1155, %v1629
        %v1692 = vadd.f32 %v1160, %v1634
        %v1693 = vadd.f32 %v1163, %v1637
        %v1694 = vadd.f32 %v1168, %v1642
        %v1695 = vadd.f32 %v1171, %v1645
        %v1696 = vld [vmem:[%s185 + $0xc] sm:$0xf]
        %v1697 = vld [vmem:[%s185 + $0x10] sm:$0xf]
        %v1698 = vld [vmem:[%s185 + $0x14] sm:$0xf]
        %v1699 = vld [vmem:[%s185 + $0x18] sm:$0xf]
        %v1700 = vld [vmem:[%s185 + $0x1c] sm:$0xf]
        %v1701 = vld [vmem:[%s185 + $0x20] sm:$0xf]
        %v1702 = vld [vmem:[%s185 + $0x24] sm:$0xf]
        %v1703 = vld [vmem:[%s185 + $0x28] sm:$0xf]
        %v1704 = vld [vmem:[%s185 + $0x2c] sm:$0xf]
        %v1705 = vld [vmem:[%s185 + $0x30] sm:$0xf]
        %v1706 = vld [vmem:[%s185 + $0x34] sm:$0xf]
        %v1707 = vld [vmem:[%s185 + $0x38] sm:$0xf]
        %v1708 = vld [vmem:[%s185 + $0x3c] sm:$0xf]
        %v1709 = vld [vmem:[%s185 + $0x40] sm:$0xf]
        %v1710 = vld [vmem:[%s185 + $0x44] sm:$0xf]
        %v1711 = vld [vmem:[%s185 + $0x48] sm:$0xf]
        %v1712 = vld [vmem:[%s185 + $0x4c] sm:$0xf]
        %v1713 = vld [vmem:[%s185 + $0x50] sm:$0xf]
        %v1714 = vld [vmem:[%s185 + $0x54] sm:$0xf]
        %v1715 = vld [vmem:[%s185 + $0x58] sm:$0xf]
        %v1716 = vld [vmem:[%s185 + $0x5c] sm:$0xf]
        %v1717 = vld [vmem:[%s185 + $0x60] sm:$0xf]
        %v1718 = vld [vmem:[%s185 + $0x64] sm:$0xf]
        %v1719 = vld [vmem:[%s185 + $0x68] sm:$0xf]
        %v1720 = vld [vmem:[%s185 + $0x6c] sm:$0xf]
        %v1721 = vld [vmem:[%s185 + $0x70] sm:$0xf]
        %v1722 = vld [vmem:[%s185 + $0x74] sm:$0xf]
        %v1723 = vld [vmem:[%s185 + $0x78] sm:$0xf]
        %v1724 = vld [vmem:[%s185 + $0x7c] sm:$0xf]
        %v1725 = vld [vmem:[%s185 + $0x80] sm:$0xf]
        %v1726 = vld [vmem:[%s185 + $0x84] sm:$0xf]
        %v1727 = vld [vmem:[%s185 + $0x88] sm:$0xf]
        %v1728 = vld [vmem:[%s185 + $0x8c] sm:$0xf]
        %v1729 = vld [vmem:[%s185 + $0x90] sm:$0xf]
        %v1730 = vld [vmem:[%s185 + $0x94] sm:$0xf]
        %v1731 = vld [vmem:[%s185 + $0x98] sm:$0xf]
        %v1732 = vld [vmem:[%s185 + $0x9c] sm:$0xf]
        %v1733 = vld [vmem:[%s185 + $0xa0] sm:$0xf]
        %v1734 = vld [vmem:[%s185 + $0xa4] sm:$0xf]
        %v1735 = vld [vmem:[%s185 + $0xa8] sm:$0xf]
        %v1736 = vld [vmem:[%s185 + $0xac] sm:$0xf]
        %v1737 = vld [vmem:[%s185 + $0xb0] sm:$0xf]
        %v1738 = vld [vmem:[%s185 + $0xb4] sm:$0xf]
        %v1739 = vld [vmem:[%s185 + $0xb8] sm:$0xf]
        %v1740 = vld [vmem:[%s185 + $0xbc] sm:$0xf]
        %v1741 = vld [vmem:[%s185 + $0xc0] sm:$0xf]
        %v1742 = vld [vmem:[%s185 + $0xc4] sm:$0xf]
        %v1743 = vld [vmem:[%s185 + $0xc8] sm:$0xf]
        %v1744 = vld [vmem:[%s185 + $0xcc] sm:$0x1]
        %s1745 = scalar_lea.vmem [#allocation5], 24
        %v1746 = vld [vmem:[%s1745] sm:$0xf]
        %v1747 = vld [vmem:[%s1745 + $0x4] sm:$0xf]
        %v1797 = vunpack.c.l.b16 %v1696
        %v1798 = vunpack.c.l.b16 %v1697
        %v1799 = vunpack.c.l.b16 %v1698
        %v1800 = vunpack.c.l.b16 %v1699
        %v1801 = vunpack.c.l.b16 %v1700
        %v1802 = vunpack.c.l.b16 %v1701
        %v1803 = vunpack.c.l.b16 %v1702
        %v1804 = vunpack.c.l.b16 %v1703
        %v1805 = vunpack.c.l.b16 %v1704
        %v1806 = vunpack.c.l.b16 %v1705
        %v1807 = vunpack.c.l.b16 %v1706
        %v1808 = vunpack.c.l.b16 %v1707
        %v1809 = vunpack.c.l.b16 %v1708
        %v1810 = vunpack.c.l.b16 %v1709
        %v1811 = vunpack.c.l.b16 %v1710
        %v1812 = vunpack.c.l.b16 %v1711
        %v1813 = vunpack.c.l.b16 %v1712
        %v1814 = vunpack.c.l.b16 %v1713
        %v1815 = vunpack.c.l.b16 %v1714
        %v1816 = vunpack.c.l.b16 %v1715
        %v1817 = vunpack.c.l.b16 %v1716
        %v1818 = vunpack.c.l.b16 %v1717
        %v1819 = vunpack.c.l.b16 %v1718
        %v1820 = vunpack.c.l.b16 %v1719
        %v1821 = vunpack.c.l.b16 %v1720
        %v1822 = vunpack.c.l.b16 %v1721
        %v1823 = vunpack.c.l.b16 %v1722
        %v1824 = vunpack.c.l.b16 %v1723
        %v1825 = vunpack.c.l.b16 %v1724
        %v1826 = vunpack.c.l.b16 %v1725
        %v1827 = vunpack.c.l.b16 %v1726
        %v1828 = vunpack.c.l.b16 %v1727
        %v1829 = vunpack.c.l.b16 %v1728
        %v1830 = vunpack.c.l.b16 %v1729
        %v1831 = vunpack.c.l.b16 %v1730
        %v1832 = vunpack.c.l.b16 %v1731
        %v1833 = vunpack.c.l.b16 %v1732
        %v1834 = vunpack.c.l.b16 %v1733
        %v1835 = vunpack.c.l.b16 %v1734
        %v1836 = vunpack.c.l.b16 %v1735
        %v1837 = vunpack.c.l.b16 %v1736
        %v1838 = vunpack.c.l.b16 %v1737
        %v1839 = vunpack.c.l.b16 %v1738
        %v1840 = vunpack.c.l.b16 %v1739
        %v1841 = vunpack.c.l.b16 %v1740
        %v1842 = vunpack.c.l.b16 %v1741
        %v1843 = vunpack.c.l.b16 %v1742
        %v1844 = vunpack.c.l.b16 %v1743
        %v1845 = vunpack.c.l.b16 %v1744
        %v1846 = vpack.c.b16 %v1798, %v1797
        %v1847 = vpack.c.b16 %v1800, %v1799
        %v1848 = vpack.c.b16 %v1802, %v1801
        %v1849 = vpack.c.b16 %v1804, %v1803
        %v1850 = vpack.c.b16 %v1806, %v1805
        %v1851 = vpack.c.b16 %v1808, %v1807
        %v1852 = vpack.c.b16 %v1810, %v1809
        %v1853 = vpack.c.b16 %v1812, %v1811
        %v1854 = vpack.c.b16 %v1814, %v1813
        %v1855 = vpack.c.b16 %v1816, %v1815
        %v1856 = vpack.c.b16 %v1818, %v1817
        %v1857 = vpack.c.b16 %v1820, %v1819
        %v1858 = vpack.c.b16 %v1822, %v1821
        %v1859 = vpack.c.b16 %v1824, %v1823
        %v1860 = vpack.c.b16 %v1826, %v1825
        %v1861 = vpack.c.b16 %v1828, %v1827
        %v1862 = vpack.c.b16 %v1830, %v1829
        %v1863 = vpack.c.b16 %v1832, %v1831
        %v1864 = vpack.c.b16 %v1834, %v1833
        %v1865 = vpack.c.b16 %v1836, %v1835
        %v1866 = vpack.c.b16 %v1838, %v1837
        %v1867 = vpack.c.b16 %v1840, %v1839
        %v1868 = vpack.c.b16 %v1842, %v1841
        %v1869 = vpack.c.b16 %v1844, %v1843
        %v1870 = vpack.c.b16 %v1845, %v1845
        %v1872 = vshrl.u32 %v1846, 16
        %v1874 = vshll.u32 %v1846, 16
        %v1876 = vrot.slane %v1874, 1
        %v1877 = vor.u32 %v1872, %v1876
        %v1879 = vshll.u32 %v1847, 16
        %v1881 = vrot.slane %v1879, 1
        %v1882 = vsel %vm394, %v1877, %v1881
        %v1883 = vshrl.u32 %v1847, 16
        %v1885 = vor.u32 %v1883, %v1881
        %v1887 = vshll.u32 %v1848, 16
        %v1889 = vrot.slane %v1887, 1
        %v1890 = vsel %vm394, %v1885, %v1889
        %v1891 = vshrl.u32 %v1848, 16
        %v1893 = vor.u32 %v1891, %v1889
        %v1895 = vshll.u32 %v1849, 16
        %v1897 = vrot.slane %v1895, 1
        %v1898 = vsel %vm394, %v1893, %v1897
        %v1899 = vshrl.u32 %v1849, 16
        %v1901 = vor.u32 %v1899, %v1897
        %v1903 = vshll.u32 %v1850, 16
        %v1905 = vrot.slane %v1903, 1
        %v1906 = vsel %vm394, %v1901, %v1905
        %v1907 = vshrl.u32 %v1850, 16
        %v1909 = vor.u32 %v1907, %v1905
        %v1911 = vshll.u32 %v1851, 16
        %v1913 = vrot.slane %v1911, 1
        %v1914 = vsel %vm394, %v1909, %v1913
        %v1915 = vshrl.u32 %v1851, 16
        %v1917 = vor.u32 %v1915, %v1913
        %v1919 = vshll.u32 %v1852, 16
        %v1921 = vrot.slane %v1919, 1
        %v1922 = vsel %vm394, %v1917, %v1921
        %v1923 = vshrl.u32 %v1852, 16
        %v1925 = vor.u32 %v1923, %v1921
        %v1927 = vshll.u32 %v1853, 16
        %v1929 = vrot.slane %v1927, 1
        %v1930 = vsel %vm394, %v1925, %v1929
        %v1931 = vshrl.u32 %v1853, 16
        %v1933 = vor.u32 %v1931, %v1929
        %v1935 = vshll.u32 %v1854, 16
        %v1937 = vrot.slane %v1935, 1
        %v1938 = vsel %vm394, %v1933, %v1937
        %v1939 = vshrl.u32 %v1854, 16
        %v1941 = vor.u32 %v1939, %v1937
        %v1943 = vshll.u32 %v1855, 16
        %v1945 = vrot.slane %v1943, 1
        %v1946 = vsel %vm394, %v1941, %v1945
        %v1947 = vshrl.u32 %v1855, 16
        %v1949 = vor.u32 %v1947, %v1945
        %v1951 = vshll.u32 %v1856, 16
        %v1953 = vrot.slane %v1951, 1
        %v1954 = vsel %vm394, %v1949, %v1953
        %v1955 = vshrl.u32 %v1856, 16
        %v1957 = vor.u32 %v1955, %v1953
        %v1959 = vshll.u32 %v1857, 16
        %v1961 = vrot.slane %v1959, 1
        %v1962 = vsel %vm394, %v1957, %v1961
        %v1963 = vshrl.u32 %v1857, 16
        %v1965 = vor.u32 %v1963, %v1961
        %v1967 = vshll.u32 %v1858, 16
        %v1969 = vrot.slane %v1967, 1
        %v1970 = vsel %vm394, %v1965, %v1969
        %v1971 = vshrl.u32 %v1858, 16
        %v1973 = vor.u32 %v1971, %v1969
        %v1975 = vshll.u32 %v1859, 16
        %v1977 = vrot.slane %v1975, 1
        %v1978 = vsel %vm394, %v1973, %v1977
        %v1979 = vshrl.u32 %v1859, 16
        %v1981 = vor.u32 %v1979, %v1977
        %v1983 = vshll.u32 %v1860, 16
        %v1985 = vrot.slane %v1983, 1
        %v1986 = vsel %vm394, %v1981, %v1985
        %v1987 = vshrl.u32 %v1860, 16
        %v1989 = vor.u32 %v1987, %v1985
        %v1991 = vshll.u32 %v1861, 16
        %v1993 = vrot.slane %v1991, 1
        %v1994 = vsel %vm394, %v1989, %v1993
        %v1995 = vshrl.u32 %v1861, 16
        %v1997 = vor.u32 %v1995, %v1993
        %v1999 = vshll.u32 %v1862, 16
        %v2001 = vrot.slane %v1999, 1
        %v2002 = vsel %vm394, %v1997, %v2001
        %v2003 = vshrl.u32 %v1862, 16
        %v2005 = vor.u32 %v2003, %v2001
        %v2007 = vshll.u32 %v1863, 16
        %v2009 = vrot.slane %v2007, 1
        %v2010 = vsel %vm394, %v2005, %v2009
        %v2011 = vshrl.u32 %v1863, 16
        %v2013 = vor.u32 %v2011, %v2009
        %v2015 = vshll.u32 %v1864, 16
        %v2017 = vrot.slane %v2015, 1
        %v2018 = vsel %vm394, %v2013, %v2017
        %v2019 = vshrl.u32 %v1864, 16
        %v2021 = vor.u32 %v2019, %v2017
        %v2023 = vshll.u32 %v1865, 16
        %v2025 = vrot.slane %v2023, 1
        %v2026 = vsel %vm394, %v2021, %v2025
        %v2027 = vshrl.u32 %v1865, 16
        %v2029 = vor.u32 %v2027, %v2025
        %v2031 = vshll.u32 %v1866, 16
        %v2033 = vrot.slane %v2031, 1
        %v2034 = vsel %vm394, %v2029, %v2033
        %v2035 = vshrl.u32 %v1866, 16
        %v2037 = vor.u32 %v2035, %v2033
        %v2039 = vshll.u32 %v1867, 16
        %v2041 = vrot.slane %v2039, 1
        %v2042 = vsel %vm394, %v2037, %v2041
        %v2043 = vshrl.u32 %v1867, 16
        %v2045 = vor.u32 %v2043, %v2041
        %v2047 = vshll.u32 %v1868, 16
        %v2049 = vrot.slane %v2047, 1
        %v2050 = vsel %vm394, %v2045, %v2049
        %v2051 = vshrl.u32 %v1868, 16
        %v2053 = vor.u32 %v2051, %v2049
        %v2055 = vshll.u32 %v1869, 16
        %v2057 = vrot.slane %v2055, 1
        %v2058 = vsel %vm394, %v2053, %v2057
        %v2059 = vshrl.u32 %v1869, 16
        %v2061 = vor.u32 %v2059, %v2057
        %v2063 = vshll.u32 %v1870, 16
        %v2065 = vrot.slane %v2063, 1
        %v2066 = vsel %vm394, %v2061, %v2065
        %v2069 = vunpack.c.l.b16 %v1746
        %v2070 = vunpack.c.l.b16 %v1747
        %v2071 = vpack.c.b16 %v2070, %v2069
        %v2074 = vsel %vm597, %v1882, 0
        %v2077 = vsel %vm597, %v1890, 0
        %v2080 = vsel %vm597, %v1898, 0
        %v2083 = vsel %vm597, %v1906, 0
        %v2086 = vsel %vm597, %v1914, 0
        %v2089 = vsel %vm597, %v1922, 0
        %v2092 = vsel %vm597, %v1930, 0
        %v2095 = vsel %vm597, %v1938, 0
        %v2098 = vsel %vm597, %v1946, 0
        %v2101 = vsel %vm597, %v1954, 0
        %v2104 = vsel %vm597, %v1962, 0
        %v2107 = vsel %vm597, %v1970, 0
        %v2110 = vsel %vm597, %v1978, 0
        %v2113 = vsel %vm597, %v1986, 0
        %v2116 = vsel %vm597, %v1994, 0
        %v2119 = vsel %vm597, %v2002, 0
        %v2122 = vsel %vm597, %v2010, 0
        %v2125 = vsel %vm597, %v2018, 0
        %v2128 = vsel %vm597, %v2026, 0
        %v2131 = vsel %vm597, %v2034, 0
        %v2134 = vsel %vm597, %v2042, 0
        %v2137 = vsel %vm597, %v2050, 0
        %v2140 = vsel %vm597, %v2058, 0
        %v2143 = vsel %vm597, %v2066, 0
        %2145 = vmatprep.subr.bf16.mxu0 0
        %2146 = vmatpush1.bf16.msra.mxu0 %v2071
        %2147 = vmatprep.subr.bf16.mxu0 0
        %2148 = vmatpush1.bf16.msra.mxu0 0
        %2149 = vmatprep.subr.bf16.mxu0 0
        %2150 = vmatpush1.bf16.msra.mxu0 0
        %2151 = vmatprep.subr.bf16.mxu0 0
        %2152 = vmatpush1.bf16.msra.mxu0 0
        %2153 = vmatprep.subr.bf16.mxu0 0
        %2154 = vmatpush1.bf16.msra.mxu0 0
        %2155 = vmatprep.subr.bf16.mxu0 0
        %2156 = vmatpush1.bf16.msra.mxu0 0
        %2157 = vmatprep.subr.bf16.mxu0 0
        %2158 = vmatpush1.bf16.msra.mxu0 0
        %2159 = vmatprep.subr.bf16.mxu0 0
        %2160 = vmatpush1.bf16.msra.mxu0 0
        %2161 = vmatprep.subr.bf16.mxu0 0
        %2162 = vmatpush1.bf16.msra.mxu0 0
        %2163 = vmatprep.subr.bf16.mxu0 0
        %2164 = vmatpush1.bf16.msra.mxu0 0
        %2165 = vmatprep.subr.bf16.mxu0 0
        %2166 = vmatpush1.bf16.msra.mxu0 0
        %2167 = vmatprep.subr.bf16.mxu0 0
        %2168 = vmatpush1.bf16.msra.mxu0 0
        %2169 = vmatprep.subr.bf16.mxu0 0
        %2170 = vmatpush1.bf16.msra.mxu0 0
        %2171 = vmatprep.subr.bf16.mxu0 0
        %2172 = vmatpush1.bf16.msra.mxu0 0
        %2173 = vmatprep.subr.bf16.mxu0 0
        %2174 = vmatpush1.bf16.msra.mxu0 0
        %2175 = vmatprep.subr.bf16.mxu0 0
        %2176 = vmatpush1.bf16.msra.mxu0 0
        %2177 = vmatprep.mubr.bf16.mxu0 0
        %2178 = vmatmul.mubr.bf16.gmra.mrb[0].mxu0 %v2074
        %v2179 = vpop.f32.mrb[0].mxu0
        %v2180 = vadd.f32 0.0, %v2179
        %v2181 = vpop.f32.mrb[0].mxu0
        %v2182 = vpop.f32.mrb[0].mxu0
        %v2183 = vadd.f32 0.0, %v2182
        %v2184 = vpop.f32.mrb[0].mxu0
        %2185 = vmatprep.mubr.bf16.mxu0 0
        %2186 = vmatmul.mubr.bf16.gmra.mrb[0].mxu0 %v2077
        %v2187 = vpop.f32.mrb[0].mxu0
        %v2188 = vadd.f32 0.0, %v2187
        %v2189 = vpop.f32.mrb[0].mxu0
        %v2190 = vpop.f32.mrb[0].mxu0
        %v2191 = vadd.f32 0.0, %v2190
        %v2192 = vpop.f32.mrb[0].mxu0
        %2193 = vmatprep.mubr.bf16.mxu0 0
        %2194 = vmatmul.mubr.bf16.gmra.mrb[0].mxu0 %v2080
        %v2195 = vpop.f32.mrb[0].mxu0
        %v2196 = vadd.f32 0.0, %v2195
        %v2197 = vpop.f32.mrb[0].mxu0
        %v2198 = vpop.f32.mrb[0].mxu0
        %v2199 = vadd.f32 0.0, %v2198
        %v2200 = vpop.f32.mrb[0].mxu0
        %2201 = vmatprep.mubr.bf16.mxu0 0
        %2202 = vmatmul.mubr.bf16.gmra.mrb[0].mxu0 %v2083
        %v2203 = vpop.f32.mrb[0].mxu0
        %v2204 = vadd.f32 0.0, %v2203
        %v2205 = vpop.f32.mrb[0].mxu0
        %v2206 = vpop.f32.mrb[0].mxu0
        %v2207 = vadd.f32 0.0, %v2206
        %v2208 = vpop.f32.mrb[0].mxu0
        %2209 = vmatprep.mubr.bf16.mxu0 0
        %2210 = vmatmul.mubr.bf16.gmra.mrb[0].mxu0 %v2086
        %v2211 = vpop.f32.mrb[0].mxu0
        %v2212 = vadd.f32 0.0, %v2211
        %v2213 = vpop.f32.mrb[0].mxu0
        %v2214 = vpop.f32.mrb[0].mxu0
        %v2215 = vadd.f32 0.0, %v2214
        %v2216 = vpop.f32.mrb[0].mxu0
        %2217 = vmatprep.mubr.bf16.mxu0 0
        %2218 = vmatmul.mubr.bf16.gmra.mrb[0].mxu0 %v2089
        %v2219 = vpop.f32.mrb[0].mxu0
        %v2220 = vadd.f32 0.0, %v2219
        %v2221 = vpop.f32.mrb[0].mxu0
        %v2222 = vpop.f32.mrb[0].mxu0
        %v2223 = vadd.f32 0.0, %v2222
        %v2224 = vpop.f32.mrb[0].mxu0
        %2225 = vmatprep.mubr.bf16.mxu0 0
        %2226 = vmatmul.mubr.bf16.gmra.mrb[0].mxu0 %v2092
        %v2227 = vpop.f32.mrb[0].mxu0
        %v2228 = vadd.f32 0.0, %v2227
        %v2229 = vpop.f32.mrb[0].mxu0
        %v2230 = vpop.f32.mrb[0].mxu0
        %v2231 = vadd.f32 0.0, %v2230
        %v2232 = vpop.f32.mrb[0].mxu0
        %2233 = vmatprep.mubr.bf16.mxu0 0
        %2234 = vmatmul.mubr.bf16.gmra.mrb[0].mxu0 %v2095
        %v2235 = vpop.f32.mrb[0].mxu0
        %v2236 = vadd.f32 0.0, %v2235
        %v2237 = vpop.f32.mrb[0].mxu0
        %v2238 = vpop.f32.mrb[0].mxu0
        %v2239 = vadd.f32 0.0, %v2238
        %v2240 = vpop.f32.mrb[0].mxu0
        %2241 = vmatprep.mubr.bf16.mxu0 0
        %2242 = vmatmul.mubr.bf16.gmra.mrb[0].mxu0 %v2098
        %v2243 = vpop.f32.mrb[0].mxu0
        %v2244 = vadd.f32 0.0, %v2243
        %v2245 = vpop.f32.mrb[0].mxu0
        %v2246 = vpop.f32.mrb[0].mxu0
        %v2247 = vadd.f32 0.0, %v2246
        %v2248 = vpop.f32.mrb[0].mxu0
        %2249 = vmatprep.mubr.bf16.mxu0 0
        %2250 = vmatmul.mubr.bf16.gmra.mrb[0].mxu0 %v2101
        %v2251 = vpop.f32.mrb[0].mxu0
        %v2252 = vadd.f32 0.0, %v2251
        %v2253 = vpop.f32.mrb[0].mxu0
        %v2254 = vpop.f32.mrb[0].mxu0
        %v2255 = vadd.f32 0.0, %v2254
        %v2256 = vpop.f32.mrb[0].mxu0
        %2257 = vmatprep.mubr.bf16.mxu0 0
        %2258 = vmatmul.mubr.bf16.gmra.mrb[0].mxu0 %v2104
        %v2259 = vpop.f32.mrb[0].mxu0
        %v2260 = vadd.f32 0.0, %v2259
        %v2261 = vpop.f32.mrb[0].mxu0
        %v2262 = vpop.f32.mrb[0].mxu0
        %v2263 = vadd.f32 0.0, %v2262
        %v2264 = vpop.f32.mrb[0].mxu0
        %2265 = vmatprep.mubr.bf16.mxu0 0
        %2266 = vmatmul.mubr.bf16.gmra.mrb[0].mxu0 %v2107
        %v2267 = vpop.f32.mrb[0].mxu0
        %v2268 = vadd.f32 0.0, %v2267
        %v2269 = vpop.f32.mrb[0].mxu0
        %v2270 = vpop.f32.mrb[0].mxu0
        %v2271 = vadd.f32 0.0, %v2270
        %v2272 = vpop.f32.mrb[0].mxu0
        %2273 = vmatprep.mubr.bf16.mxu0 0
        %2274 = vmatmul.mubr.bf16.gmra.mrb[0].mxu0 %v2110
        %v2275 = vpop.f32.mrb[0].mxu0
        %v2276 = vadd.f32 0.0, %v2275
        %v2277 = vpop.f32.mrb[0].mxu0
        %v2278 = vpop.f32.mrb[0].mxu0
        %v2279 = vadd.f32 0.0, %v2278
        %v2280 = vpop.f32.mrb[0].mxu0
        %2281 = vmatprep.mubr.bf16.mxu0 0
        %2282 = vmatmul.mubr.bf16.gmra.mrb[0].mxu0 %v2113
        %v2283 = vpop.f32.mrb[0].mxu0
        %v2284 = vadd.f32 0.0, %v2283
        %v2285 = vpop.f32.mrb[0].mxu0
        %v2286 = vpop.f32.mrb[0].mxu0
        %v2287 = vadd.f32 0.0, %v2286
        %v2288 = vpop.f32.mrb[0].mxu0
        %2289 = vmatprep.mubr.bf16.mxu0 0
        %2290 = vmatmul.mubr.bf16.gmra.mrb[0].mxu0 %v2116
        %v2291 = vpop.f32.mrb[0].mxu0
        %v2292 = vadd.f32 0.0, %v2291
        %v2293 = vpop.f32.mrb[0].mxu0
        %v2294 = vpop.f32.mrb[0].mxu0
        %v2295 = vadd.f32 0.0, %v2294
        %v2296 = vpop.f32.mrb[0].mxu0
        %2297 = vmatprep.mubr.bf16.mxu0 0
        %2298 = vmatmul.mubr.bf16.gmra.mrb[0].mxu0 %v2119
        %v2299 = vpop.f32.mrb[0].mxu0
        %v2300 = vadd.f32 0.0, %v2299
        %v2301 = vpop.f32.mrb[0].mxu0
        %v2302 = vpop.f32.mrb[0].mxu0
        %v2303 = vadd.f32 0.0, %v2302
        %v2304 = vpop.f32.mrb[0].mxu0
        %2305 = vmatprep.mubr.bf16.mxu0 0
        %2306 = vmatmul.mubr.bf16.gmra.mrb[0].mxu0 %v2122
        %v2307 = vpop.f32.mrb[0].mxu0
        %v2308 = vadd.f32 0.0, %v2307
        %v2309 = vpop.f32.mrb[0].mxu0
        %v2310 = vpop.f32.mrb[0].mxu0
        %v2311 = vadd.f32 0.0, %v2310
        %v2312 = vpop.f32.mrb[0].mxu0
        %2313 = vmatprep.mubr.bf16.mxu0 0
        %2314 = vmatmul.mubr.bf16.gmra.mrb[0].mxu0 %v2125
        %v2315 = vpop.f32.mrb[0].mxu0
        %v2316 = vadd.f32 0.0, %v2315
        %v2317 = vpop.f32.mrb[0].mxu0
        %v2318 = vpop.f32.mrb[0].mxu0
        %v2319 = vadd.f32 0.0, %v2318
        %v2320 = vpop.f32.mrb[0].mxu0
        %2321 = vmatprep.mubr.bf16.mxu0 0
        %2322 = vmatmul.mubr.bf16.gmra.mrb[0].mxu0 %v2128
        %v2323 = vpop.f32.mrb[0].mxu0
        %v2324 = vadd.f32 0.0, %v2323
        %v2325 = vpop.f32.mrb[0].mxu0
        %v2326 = vpop.f32.mrb[0].mxu0
        %v2327 = vadd.f32 0.0, %v2326
        %v2328 = vpop.f32.mrb[0].mxu0
        %2329 = vmatprep.mubr.bf16.mxu0 0
        %2330 = vmatmul.mubr.bf16.gmra.mrb[0].mxu0 %v2131
        %v2331 = vpop.f32.mrb[0].mxu0
        %v2332 = vadd.f32 0.0, %v2331
        %v2333 = vpop.f32.mrb[0].mxu0
        %v2334 = vpop.f32.mrb[0].mxu0
        %v2335 = vadd.f32 0.0, %v2334
        %v2336 = vpop.f32.mrb[0].mxu0
        %2337 = vmatprep.mubr.bf16.mxu0 0
        %2338 = vmatmul.mubr.bf16.gmra.mrb[0].mxu0 %v2134
        %v2339 = vpop.f32.mrb[0].mxu0
        %v2340 = vadd.f32 0.0, %v2339
        %v2341 = vpop.f32.mrb[0].mxu0
        %v2342 = vpop.f32.mrb[0].mxu0
        %v2343 = vadd.f32 0.0, %v2342
        %v2344 = vpop.f32.mrb[0].mxu0
        %2345 = vmatprep.mubr.bf16.mxu0 0
        %2346 = vmatmul.mubr.bf16.gmra.mrb[0].mxu0 %v2137
        %v2347 = vpop.f32.mrb[0].mxu0
        %v2348 = vadd.f32 0.0, %v2347
        %v2349 = vpop.f32.mrb[0].mxu0
        %v2350 = vpop.f32.mrb[0].mxu0
        %v2351 = vadd.f32 0.0, %v2350
        %v2352 = vpop.f32.mrb[0].mxu0
        %2353 = vmatprep.mubr.bf16.mxu0 0
        %2354 = vmatmul.mubr.bf16.gmra.mrb[0].mxu0 %v2140
        %v2355 = vpop.f32.mrb[0].mxu0
        %v2356 = vadd.f32 0.0, %v2355
        %v2357 = vpop.f32.mrb[0].mxu0
        %v2358 = vpop.f32.mrb[0].mxu0
        %v2359 = vadd.f32 0.0, %v2358
        %v2360 = vpop.f32.mrb[0].mxu0
        %2361 = vmatprep.mubr.bf16.mxu0 0
        %2362 = vmatmul.mubr.bf16.gmra.mrb[0].mxu0 %v2143
        %v2363 = vpop.f32.mrb[0].mxu0
        %v2364 = vadd.f32 0.0, %v2363
        %v2365 = vpop.f32.mrb[0].mxu0
        %v2366 = vpop.f32.mrb[0].mxu0
        %v2367 = vadd.f32 0.0, %v2366
        %v2368 = vpop.f32.mrb[0].mxu0
        %2369 = vdwg.mxu0
        %v2370 = vadd.f32 %v1648, %v2180
        %v2371 = vadd.f32 %v1649, %v2183
        %v2372 = vadd.f32 %v1650, %v2188
        %v2373 = vadd.f32 %v1651, %v2191
        %v2374 = vadd.f32 %v1652, %v2196
        %v2375 = vadd.f32 %v1653, %v2199
        %v2376 = vadd.f32 %v1654, %v2204
        %v2377 = vadd.f32 %v1655, %v2207
        %v2378 = vadd.f32 %v1656, %v2212
        %v2379 = vadd.f32 %v1657, %v2215
        %v2380 = vadd.f32 %v1658, %v2220
        %v2381 = vadd.f32 %v1659, %v2223
        %v2382 = vadd.f32 %v1660, %v2228
        %v2383 = vadd.f32 %v1661, %v2231
        %v2384 = vadd.f32 %v1662, %v2236
        %v2385 = vadd.f32 %v1663, %v2239
        %v2386 = vadd.f32 %v1664, %v2244
        %v2387 = vadd.f32 %v1665, %v2247
        %v2388 = vadd.f32 %v1666, %v2252
        %v2389 = vadd.f32 %v1667, %v2255
        %v2390 = vadd.f32 %v1668, %v2260
        %v2391 = vadd.f32 %v1669, %v2263
        %v2392 = vadd.f32 %v1670, %v2268
        %v2393 = vadd.f32 %v1671, %v2271
        %v2394 = vadd.f32 %v1672, %v2276
        %v2395 = vadd.f32 %v1673, %v2279
        %v2396 = vadd.f32 %v1674, %v2284
        %v2397 = vadd.f32 %v1675, %v2287
        %v2398 = vadd.f32 %v1676, %v2292
        %v2399 = vadd.f32 %v1677, %v2295
        %v2400 = vadd.f32 %v1678, %v2300
        %v2401 = vadd.f32 %v1679, %v2303
        %v2402 = vadd.f32 %v1680, %v2308
        %v2403 = vadd.f32 %v1681, %v2311
        %v2404 = vadd.f32 %v1682, %v2316
        %v2405 = vadd.f32 %v1683, %v2319
        %v2406 = vadd.f32 %v1684, %v2324
        %v2407 = vadd.f32 %v1685, %v2327
        %v2408 = vadd.f32 %v1686, %v2332
        %v2409 = vadd.f32 %v1687, %v2335
        %v2410 = vadd.f32 %v1688, %v2340
        %v2411 = vadd.f32 %v1689, %v2343
        %v2412 = vadd.f32 %v1690, %v2348
        %v2413 = vadd.f32 %v1691, %v2351
        %v2414 = vadd.f32 %v1692, %v2356
        %v2415 = vadd.f32 %v1693, %v2359
        %v2416 = vadd.f32 %v1694, %v2364
        %v2417 = vadd.f32 %v1695, %v2367
        %v2418 = vld [vmem:[#allocation7] sm:$0x1]
        %v2420 = vlaneseq
        %v2421 = vshrl.u32 %v2420, 7
        %v2422 = vsub.s32 0, %v2421
        %v2423 = vrot.slane %v2418, %v2422
        %v2425 = vadd.f32 %v2370, %v2423
        %v2426 = vadd.f32 %v2371, %v2423
        %v2427 = vadd.f32 %v2372, %v2423
        %v2428 = vadd.f32 %v2373, %v2423
        %v2429 = vadd.f32 %v2374, %v2423
        %v2430 = vadd.f32 %v2375, %v2423
        %v2431 = vadd.f32 %v2376, %v2423
        %v2432 = vadd.f32 %v2377, %v2423
        %v2433 = vadd.f32 %v2378, %v2423
        %v2434 = vadd.f32 %v2379, %v2423
        %v2435 = vadd.f32 %v2380, %v2423
        %v2436 = vadd.f32 %v2381, %v2423
        %v2437 = vadd.f32 %v2382, %v2423
        %v2438 = vadd.f32 %v2383, %v2423
        %v2439 = vadd.f32 %v2384, %v2423
        %v2440 = vadd.f32 %v2385, %v2423
        %v2441 = vadd.f32 %v2386, %v2423
        %v2442 = vadd.f32 %v2387, %v2423
        %v2443 = vadd.f32 %v2388, %v2423
        %v2444 = vadd.f32 %v2389, %v2423
        %v2445 = vadd.f32 %v2390, %v2423
        %v2446 = vadd.f32 %v2391, %v2423
        %v2447 = vadd.f32 %v2392, %v2423
        %v2448 = vadd.f32 %v2393, %v2423
        %v2449 = vadd.f32 %v2394, %v2423
        %v2450 = vadd.f32 %v2395, %v2423
        %v2451 = vadd.f32 %v2396, %v2423
        %v2452 = vadd.f32 %v2397, %v2423
        %v2453 = vadd.f32 %v2398, %v2423
        %v2454 = vadd.f32 %v2399, %v2423
        %v2455 = vadd.f32 %v2400, %v2423
        %v2456 = vadd.f32 %v2401, %v2423
        %v2457 = vadd.f32 %v2402, %v2423
        %v2458 = vadd.f32 %v2403, %v2423
        %v2459 = vadd.f32 %v2404, %v2423
        %v2460 = vadd.f32 %v2405, %v2423
        %v2461 = vadd.f32 %v2406, %v2423
        %v2462 = vadd.f32 %v2407, %v2423
        %v2463 = vadd.f32 %v2408, %v2423
        %v2464 = vadd.f32 %v2409, %v2423
        %v2465 = vadd.f32 %v2410, %v2423
        %v2466 = vadd.f32 %v2411, %v2423
        %v2467 = vadd.f32 %v2412, %v2423
        %v2468 = vadd.f32 %v2413, %v2423
        %v2469 = vadd.f32 %v2414, %v2423
        %v2470 = vadd.f32 %v2415, %v2423
        %v2471 = vadd.f32 %v2416, %v2423
        %v2472 = vadd.f32 %v2417, %v2423
        %v2473 = vlaneseq
        %v2474 = vshrl.u32 %v2473, 7
        %v2475 = vadd.s32 %v2474, 8
        %v2476 = vadd.s32 %v2474, 16
        %v2477 = vadd.s32 %v2474, 24
        %v2478 = vadd.s32 %v2474, 32
        %v2479 = vadd.s32 %v2474, 40
        %v2480 = vadd.s32 %v2474, 48
        %v2481 = vadd.s32 %v2474, 56
        %v2482 = vadd.s32 %v2474, 64
        %v2483 = vadd.s32 %v2474, 72
        %v2484 = vadd.s32 %v2474, 80
        %v2485 = vadd.s32 %v2474, 88
        %v2486 = vadd.s32 %v2474, 96
        %v2487 = vadd.s32 %v2474, 104
        %v2488 = vadd.s32 %v2474, 112
        %v2489 = vadd.s32 %v2474, 120
        %v2490 = vadd.s32 %v2474, 128
        %v2491 = vadd.s32 %v2474, 136
        %v2492 = vadd.s32 %v2474, 144
        %v2493 = vadd.s32 %v2474, 152
        %v2494 = vadd.s32 %v2474, 160
        %v2495 = vadd.s32 %v2474, 168
        %v2496 = vadd.s32 %v2474, 176
        %v2497 = vadd.s32 %v2474, 184
        %v2498 = vadd.s32 %v2474, 192
        %v2499 = vadd.s32 %v2474, 200
        %v2500 = vadd.s32 %v2474, 208
        %v2501 = vadd.s32 %v2474, 216
        %v2502 = vadd.s32 %v2474, 224
        %v2503 = vadd.s32 %v2474, 232
        %v2504 = vadd.s32 %v2474, 240
        %v2505 = vadd.s32 %v2474, 248
        %v2506 = vadd.s32 %v2474, 256
        %v2507 = vadd.s32 %v2474, 264
        %v2508 = vadd.s32 %v2474, 272
        %v2509 = vadd.s32 %v2474, 280
        %v2510 = vadd.s32 %v2474, 288
        %v2511 = vadd.s32 %v2474, 296
        %v2512 = vadd.s32 %v2474, 304
        %v2513 = vadd.s32 %v2474, 312
        %v2514 = vadd.s32 %v2474, 320
        %v2515 = vadd.s32 %v2474, 328
        %v2516 = vadd.s32 %v2474, 336
        %v2517 = vadd.s32 %v2474, 344
        %v2518 = vadd.s32 %v2474, 352
        %v2519 = vadd.s32 %v2474, 360
        %v2520 = vadd.s32 %v2474, 368
        %v2521 = vadd.s32 %v2474, 376
        %vm2522 = vcmp.lt.s32.totalorder %v2474, 0
        %v2523 = vsub.s32 0, %v2474
        %v2524 = vsel %vm2522, %v2523, %v2474
        %v2525 = vmul.u32.u64.compose %v2524, 2863311531
        %v2526 = vextract.low.u32 %v2525
        %v2527 = vextract.high.u32 %v2525
        %v2528 = vshrl.u32 %v2527, 4
        %v2529 = vmul.u32 %v2528, 24
        %v2530 = vsub.s32 %v2524, %v2529
        %v2531 = vsub.s32 0, %v2530
        %v2532 = vsel %vm2522, %v2531, %v2530
        %vm2533 = vcmp.lt.s32.totalorder %v2475, 0
        %v2534 = vsub.s32 0, %v2475
        %v2535 = vsel %vm2533, %v2534, %v2475
        %v2536 = vmul.u32.u64.compose %v2535, 2863311531
        %v2537 = vextract.low.u32 %v2536
        %v2538 = vextract.high.u32 %v2536
        %v2539 = vshrl.u32 %v2538, 4
        %v2540 = vmul.u32 %v2539, 24
        %v2541 = vsub.s32 %v2535, %v2540
        %v2542 = vsub.s32 0, %v2541
        %v2543 = vsel %vm2533, %v2542, %v2541
        %vm2544 = vcmp.lt.s32.totalorder %v2476, 0
        %v2545 = vsub.s32 0, %v2476
        %v2546 = vsel %vm2544, %v2545, %v2476
        %v2547 = vmul.u32.u64.compose %v2546, 2863311531
        %v2548 = vextract.low.u32 %v2547
        %v2549 = vextract.high.u32 %v2547
        %v2550 = vshrl.u32 %v2549, 4
        %v2551 = vmul.u32 %v2550, 24
        %v2552 = vsub.s32 %v2546, %v2551
        %v2553 = vsub.s32 0, %v2552
        %v2554 = vsel %vm2544, %v2553, %v2552
        %vm2555 = vcmp.lt.s32.totalorder %v2477, 0
        %v2556 = vsub.s32 0, %v2477
        %v2557 = vsel %vm2555, %v2556, %v2477
        %v2558 = vmul.u32.u64.compose %v2557, 2863311531
        %v2559 = vextract.low.u32 %v2558
        %v2560 = vextract.high.u32 %v2558
        %v2561 = vshrl.u32 %v2560, 4
        %v2562 = vmul.u32 %v2561, 24
        %v2563 = vsub.s32 %v2557, %v2562
        %v2564 = vsub.s32 0, %v2563
        %v2565 = vsel %vm2555, %v2564, %v2563
        %vm2566 = vcmp.lt.s32.totalorder %v2478, 0
        %v2567 = vsub.s32 0, %v2478
        %v2568 = vsel %vm2566, %v2567, %v2478
        %v2569 = vmul.u32.u64.compose %v2568, 2863311531
        %v2570 = vextract.low.u32 %v2569
        %v2571 = vextract.high.u32 %v2569
        %v2572 = vshrl.u32 %v2571, 4
        %v2573 = vmul.u32 %v2572, 24
        %v2574 = vsub.s32 %v2568, %v2573
        %v2575 = vsub.s32 0, %v2574
        %v2576 = vsel %vm2566, %v2575, %v2574
        %vm2577 = vcmp.lt.s32.totalorder %v2479, 0
        %v2578 = vsub.s32 0, %v2479
        %v2579 = vsel %vm2577, %v2578, %v2479
        %v2580 = vmul.u32.u64.compose %v2579, 2863311531
        %v2581 = vextract.low.u32 %v2580
        %v2582 = vextract.high.u32 %v2580
        %v2583 = vshrl.u32 %v2582, 4
        %v2584 = vmul.u32 %v2583, 24
        %v2585 = vsub.s32 %v2579, %v2584
        %v2586 = vsub.s32 0, %v2585
        %v2587 = vsel %vm2577, %v2586, %v2585
        %vm2588 = vcmp.lt.s32.totalorder %v2480, 0
        %v2589 = vsub.s32 0, %v2480
        %v2590 = vsel %vm2588, %v2589, %v2480
        %v2591 = vmul.u32.u64.compose %v2590, 2863311531
        %v2592 = vextract.low.u32 %v2591
        %v2593 = vextract.high.u32 %v2591
        %v2594 = vshrl.u32 %v2593, 4
        %v2595 = vmul.u32 %v2594, 24
        %v2596 = vsub.s32 %v2590, %v2595
        %v2597 = vsub.s32 0, %v2596
        %v2598 = vsel %vm2588, %v2597, %v2596
        %vm2599 = vcmp.lt.s32.totalorder %v2481, 0
        %v2600 = vsub.s32 0, %v2481
        %v2601 = vsel %vm2599, %v2600, %v2481
        %v2602 = vmul.u32.u64.compose %v2601, 2863311531
        %v2603 = vextract.low.u32 %v2602
        %v2604 = vextract.high.u32 %v2602
        %v2605 = vshrl.u32 %v2604, 4
        %v2606 = vmul.u32 %v2605, 24
        %v2607 = vsub.s32 %v2601, %v2606
        %v2608 = vsub.s32 0, %v2607
        %v2609 = vsel %vm2599, %v2608, %v2607
        %vm2610 = vcmp.lt.s32.totalorder %v2482, 0
        %v2611 = vsub.s32 0, %v2482
        %v2612 = vsel %vm2610, %v2611, %v2482
        %v2613 = vmul.u32.u64.compose %v2612, 2863311531
        %v2614 = vextract.low.u32 %v2613
        %v2615 = vextract.high.u32 %v2613
        %v2616 = vshrl.u32 %v2615, 4
        %v2617 = vmul.u32 %v2616, 24
        %v2618 = vsub.s32 %v2612, %v2617
        %v2619 = vsub.s32 0, %v2618
        %v2620 = vsel %vm2610, %v2619, %v2618
        %vm2621 = vcmp.lt.s32.totalorder %v2483, 0
        %v2622 = vsub.s32 0, %v2483
        %v2623 = vsel %vm2621, %v2622, %v2483
        %v2624 = vmul.u32.u64.compose %v2623, 2863311531
        %v2625 = vextract.low.u32 %v2624
        %v2626 = vextract.high.u32 %v2624
        %v2627 = vshrl.u32 %v2626, 4
        %v2628 = vmul.u32 %v2627, 24
        %v2629 = vsub.s32 %v2623, %v2628
        %v2630 = vsub.s32 0, %v2629
        %v2631 = vsel %vm2621, %v2630, %v2629
        %vm2632 = vcmp.lt.s32.totalorder %v2484, 0
        %v2633 = vsub.s32 0, %v2484
        %v2634 = vsel %vm2632, %v2633, %v2484
        %v2635 = vmul.u32.u64.compose %v2634, 2863311531
        %v2636 = vextract.low.u32 %v2635
        %v2637 = vextract.high.u32 %v2635
        %v2638 = vshrl.u32 %v2637, 4
        %v2639 = vmul.u32 %v2638, 24
        %v2640 = vsub.s32 %v2634, %v2639
        %v2641 = vsub.s32 0, %v2640
        %v2642 = vsel %vm2632, %v2641, %v2640
        %vm2643 = vcmp.lt.s32.totalorder %v2485, 0
        %v2644 = vsub.s32 0, %v2485
        %v2645 = vsel %vm2643, %v2644, %v2485
        %v2646 = vmul.u32.u64.compose %v2645, 2863311531
        %v2647 = vextract.low.u32 %v2646
        %v2648 = vextract.high.u32 %v2646
        %v2649 = vshrl.u32 %v2648, 4
        %v2650 = vmul.u32 %v2649, 24
        %v2651 = vsub.s32 %v2645, %v2650
        %v2652 = vsub.s32 0, %v2651
        %v2653 = vsel %vm2643, %v2652, %v2651
        %vm2654 = vcmp.lt.s32.totalorder %v2486, 0
        %v2655 = vsub.s32 0, %v2486
        %v2656 = vsel %vm2654, %v2655, %v2486
        %v2657 = vmul.u32.u64.compose %v2656, 2863311531
        %v2658 = vextract.low.u32 %v2657
        %v2659 = vextract.high.u32 %v2657
        %v2660 = vshrl.u32 %v2659, 4
        %v2661 = vmul.u32 %v2660, 24
        %v2662 = vsub.s32 %v2656, %v2661
        %v2663 = vsub.s32 0, %v2662
        %v2664 = vsel %vm2654, %v2663, %v2662
        %vm2665 = vcmp.lt.s32.totalorder %v2487, 0
        %v2666 = vsub.s32 0, %v2487
        %v2667 = vsel %vm2665, %v2666, %v2487
        %v2668 = vmul.u32.u64.compose %v2667, 2863311531
        %v2669 = vextract.low.u32 %v2668
        %v2670 = vextract.high.u32 %v2668
        %v2671 = vshrl.u32 %v2670, 4
        %v2672 = vmul.u32 %v2671, 24
        %v2673 = vsub.s32 %v2667, %v2672
        %v2674 = vsub.s32 0, %v2673
        %v2675 = vsel %vm2665, %v2674, %v2673
        %vm2676 = vcmp.lt.s32.totalorder %v2488, 0
        %v2677 = vsub.s32 0, %v2488
        %v2678 = vsel %vm2676, %v2677, %v2488
        %v2679 = vmul.u32.u64.compose %v2678, 2863311531
        %v2680 = vextract.low.u32 %v2679
        %v2681 = vextract.high.u32 %v2679
        %v2682 = vshrl.u32 %v2681, 4
        %v2683 = vmul.u32 %v2682, 24
        %v2684 = vsub.s32 %v2678, %v2683
        %v2685 = vsub.s32 0, %v2684
        %v2686 = vsel %vm2676, %v2685, %v2684
        %vm2687 = vcmp.lt.s32.totalorder %v2489, 0
        %v2688 = vsub.s32 0, %v2489
        %v2689 = vsel %vm2687, %v2688, %v2489
        %v2690 = vmul.u32.u64.compose %v2689, 2863311531
        %v2691 = vextract.low.u32 %v2690
        %v2692 = vextract.high.u32 %v2690
        %v2693 = vshrl.u32 %v2692, 4
        %v2694 = vmul.u32 %v2693, 24
        %v2695 = vsub.s32 %v2689, %v2694
        %v2696 = vsub.s32 0, %v2695
        %v2697 = vsel %vm2687, %v2696, %v2695
        %vm2698 = vcmp.lt.s32.totalorder %v2490, 0
        %v2699 = vsub.s32 0, %v2490
        %v2700 = vsel %vm2698, %v2699, %v2490
        %v2701 = vmul.u32.u64.compose %v2700, 2863311531
        %v2702 = vextract.low.u32 %v2701
        %v2703 = vextract.high.u32 %v2701
        %v2704 = vshrl.u32 %v2703, 4
        %v2705 = vmul.u32 %v2704, 24
        %v2706 = vsub.s32 %v2700, %v2705
        %v2707 = vsub.s32 0, %v2706
        %v2708 = vsel %vm2698, %v2707, %v2706
        %vm2709 = vcmp.lt.s32.totalorder %v2491, 0
        %v2710 = vsub.s32 0, %v2491
        %v2711 = vsel %vm2709, %v2710, %v2491
        %v2712 = vmul.u32.u64.compose %v2711, 2863311531
        %v2713 = vextract.low.u32 %v2712
        %v2714 = vextract.high.u32 %v2712
        %v2715 = vshrl.u32 %v2714, 4
        %v2716 = vmul.u32 %v2715, 24
        %v2717 = vsub.s32 %v2711, %v2716
        %v2718 = vsub.s32 0, %v2717
        %v2719 = vsel %vm2709, %v2718, %v2717
        %vm2720 = vcmp.lt.s32.totalorder %v2492, 0
        %v2721 = vsub.s32 0, %v2492
        %v2722 = vsel %vm2720, %v2721, %v2492
        %v2723 = vmul.u32.u64.compose %v2722, 2863311531
        %v2724 = vextract.low.u32 %v2723
        %v2725 = vextract.high.u32 %v2723
        %v2726 = vshrl.u32 %v2725, 4
        %v2727 = vmul.u32 %v2726, 24
        %v2728 = vsub.s32 %v2722, %v2727
        %v2729 = vsub.s32 0, %v2728
        %v2730 = vsel %vm2720, %v2729, %v2728
        %vm2731 = vcmp.lt.s32.totalorder %v2493, 0
        %v2732 = vsub.s32 0, %v2493
        %v2733 = vsel %vm2731, %v2732, %v2493
        %v2734 = vmul.u32.u64.compose %v2733, 2863311531
        %v2735 = vextract.low.u32 %v2734
        %v2736 = vextract.high.u32 %v2734
        %v2737 = vshrl.u32 %v2736, 4
        %v2738 = vmul.u32 %v2737, 24
        %v2739 = vsub.s32 %v2733, %v2738
        %v2740 = vsub.s32 0, %v2739
        %v2741 = vsel %vm2731, %v2740, %v2739
        %vm2742 = vcmp.lt.s32.totalorder %v2494, 0
        %v2743 = vsub.s32 0, %v2494
        %v2744 = vsel %vm2742, %v2743, %v2494
        %v2745 = vmul.u32.u64.compose %v2744, 2863311531
        %v2746 = vextract.low.u32 %v2745
        %v2747 = vextract.high.u32 %v2745
        %v2748 = vshrl.u32 %v2747, 4
        %v2749 = vmul.u32 %v2748, 24
        %v2750 = vsub.s32 %v2744, %v2749
        %v2751 = vsub.s32 0, %v2750
        %v2752 = vsel %vm2742, %v2751, %v2750
        %vm2753 = vcmp.lt.s32.totalorder %v2495, 0
        %v2754 = vsub.s32 0, %v2495
        %v2755 = vsel %vm2753, %v2754, %v2495
        %v2756 = vmul.u32.u64.compose %v2755, 2863311531
        %v2757 = vextract.low.u32 %v2756
        %v2758 = vextract.high.u32 %v2756
        %v2759 = vshrl.u32 %v2758, 4
        %v2760 = vmul.u32 %v2759, 24
        %v2761 = vsub.s32 %v2755, %v2760
        %v2762 = vsub.s32 0, %v2761
        %v2763 = vsel %vm2753, %v2762, %v2761
        %vm2764 = vcmp.lt.s32.totalorder %v2496, 0
        %v2765 = vsub.s32 0, %v2496
        %v2766 = vsel %vm2764, %v2765, %v2496
        %v2767 = vmul.u32.u64.compose %v2766, 2863311531
        %v2768 = vextract.low.u32 %v2767
        %v2769 = vextract.high.u32 %v2767
        %v2770 = vshrl.u32 %v2769, 4
        %v2771 = vmul.u32 %v2770, 24
        %v2772 = vsub.s32 %v2766, %v2771
        %v2773 = vsub.s32 0, %v2772
        %v2774 = vsel %vm2764, %v2773, %v2772
        %vm2775 = vcmp.lt.s32.totalorder %v2497, 0
        %v2776 = vsub.s32 0, %v2497
        %v2777 = vsel %vm2775, %v2776, %v2497
        %v2778 = vmul.u32.u64.compose %v2777, 2863311531
        %v2779 = vextract.low.u32 %v2778
        %v2780 = vextract.high.u32 %v2778
        %v2781 = vshrl.u32 %v2780, 4
        %v2782 = vmul.u32 %v2781, 24
        %v2783 = vsub.s32 %v2777, %v2782
        %v2784 = vsub.s32 0, %v2783
        %v2785 = vsel %vm2775, %v2784, %v2783
        %vm2786 = vcmp.lt.s32.totalorder %v2498, 0
        %v2787 = vsub.s32 0, %v2498
        %v2788 = vsel %vm2786, %v2787, %v2498
        %v2789 = vmul.u32.u64.compose %v2788, 2863311531
        %v2790 = vextract.low.u32 %v2789
        %v2791 = vextract.high.u32 %v2789
        %v2792 = vshrl.u32 %v2791, 4
        %v2793 = vmul.u32 %v2792, 24
        %v2794 = vsub.s32 %v2788, %v2793
        %v2795 = vsub.s32 0, %v2794
        %v2796 = vsel %vm2786, %v2795, %v2794
        %vm2797 = vcmp.lt.s32.totalorder %v2499, 0
        %v2798 = vsub.s32 0, %v2499
        %v2799 = vsel %vm2797, %v2798, %v2499
        %v2800 = vmul.u32.u64.compose %v2799, 2863311531
        %v2801 = vextract.low.u32 %v2800
        %v2802 = vextract.high.u32 %v2800
        %v2803 = vshrl.u32 %v2802, 4
        %v2804 = vmul.u32 %v2803, 24
        %v2805 = vsub.s32 %v2799, %v2804
        %v2806 = vsub.s32 0, %v2805
        %v2807 = vsel %vm2797, %v2806, %v2805
        %vm2808 = vcmp.lt.s32.totalorder %v2500, 0
        %v2809 = vsub.s32 0, %v2500
        %v2810 = vsel %vm2808, %v2809, %v2500
        %v2811 = vmul.u32.u64.compose %v2810, 2863311531
        %v2812 = vextract.low.u32 %v2811
        %v2813 = vextract.high.u32 %v2811
        %v2814 = vshrl.u32 %v2813, 4
        %v2815 = vmul.u32 %v2814, 24
        %v2816 = vsub.s32 %v2810, %v2815
        %v2817 = vsub.s32 0, %v2816
        %v2818 = vsel %vm2808, %v2817, %v2816
        %vm2819 = vcmp.lt.s32.totalorder %v2501, 0
        %v2820 = vsub.s32 0, %v2501
        %v2821 = vsel %vm2819, %v2820, %v2501
        %v2822 = vmul.u32.u64.compose %v2821, 2863311531
        %v2823 = vextract.low.u32 %v2822
        %v2824 = vextract.high.u32 %v2822
        %v2825 = vshrl.u32 %v2824, 4
        %v2826 = vmul.u32 %v2825, 24
        %v2827 = vsub.s32 %v2821, %v2826
        %v2828 = vsub.s32 0, %v2827
        %v2829 = vsel %vm2819, %v2828, %v2827
        %vm2830 = vcmp.lt.s32.totalorder %v2502, 0
        %v2831 = vsub.s32 0, %v2502
        %v2832 = vsel %vm2830, %v2831, %v2502
        %v2833 = vmul.u32.u64.compose %v2832, 2863311531
        %v2834 = vextract.low.u32 %v2833
        %v2835 = vextract.high.u32 %v2833
        %v2836 = vshrl.u32 %v2835, 4
        %v2837 = vmul.u32 %v2836, 24
        %v2838 = vsub.s32 %v2832, %v2837
        %v2839 = vsub.s32 0, %v2838
        %v2840 = vsel %vm2830, %v2839, %v2838
        %vm2841 = vcmp.lt.s32.totalorder %v2503, 0
        %v2842 = vsub.s32 0, %v2503
        %v2843 = vsel %vm2841, %v2842, %v2503
        %v2844 = vmul.u32.u64.compose %v2843, 2863311531
        %v2845 = vextract.low.u32 %v2844
        %v2846 = vextract.high.u32 %v2844
        %v2847 = vshrl.u32 %v2846, 4
        %v2848 = vmul.u32 %v2847, 24
        %v2849 = vsub.s32 %v2843, %v2848
        %v2850 = vsub.s32 0, %v2849
        %v2851 = vsel %vm2841, %v2850, %v2849
        %vm2852 = vcmp.lt.s32.totalorder %v2504, 0
        %v2853 = vsub.s32 0, %v2504
        %v2854 = vsel %vm2852, %v2853, %v2504
        %v2855 = vmul.u32.u64.compose %v2854, 2863311531
        %v2856 = vextract.low.u32 %v2855
        %v2857 = vextract.high.u32 %v2855
        %v2858 = vshrl.u32 %v2857, 4
        %v2859 = vmul.u32 %v2858, 24
        %v2860 = vsub.s32 %v2854, %v2859
        %v2861 = vsub.s32 0, %v2860
        %v2862 = vsel %vm2852, %v2861, %v2860
        %vm2863 = vcmp.lt.s32.totalorder %v2505, 0
        %v2864 = vsub.s32 0, %v2505
        %v2865 = vsel %vm2863, %v2864, %v2505
        %v2866 = vmul.u32.u64.compose %v2865, 2863311531
        %v2867 = vextract.low.u32 %v2866
        %v2868 = vextract.high.u32 %v2866
        %v2869 = vshrl.u32 %v2868, 4
        %v2870 = vmul.u32 %v2869, 24
        %v2871 = vsub.s32 %v2865, %v2870
        %v2872 = vsub.s32 0, %v2871
        %v2873 = vsel %vm2863, %v2872, %v2871
        %vm2874 = vcmp.lt.s32.totalorder %v2506, 0
        %v2875 = vsub.s32 0, %v2506
        %v2876 = vsel %vm2874, %v2875, %v2506
        %v2877 = vmul.u32.u64.compose %v2876, 2863311531
        %v2878 = vextract.low.u32 %v2877
        %v2879 = vextract.high.u32 %v2877
        %v2880 = vshrl.u32 %v2879, 4
        %v2881 = vmul.u32 %v2880, 24
        %v2882 = vsub.s32 %v2876, %v2881
        %v2883 = vsub.s32 0, %v2882
        %v2884 = vsel %vm2874, %v2883, %v2882
        %vm2885 = vcmp.lt.s32.totalorder %v2507, 0
        %v2886 = vsub.s32 0, %v2507
        %v2887 = vsel %vm2885, %v2886, %v2507
        %v2888 = vmul.u32.u64.compose %v2887, 2863311531
        %v2889 = vextract.low.u32 %v2888
        %v2890 = vextract.high.u32 %v2888
        %v2891 = vshrl.u32 %v2890, 4
        %v2892 = vmul.u32 %v2891, 24
        %v2893 = vsub.s32 %v2887, %v2892
        %v2894 = vsub.s32 0, %v2893
        %v2895 = vsel %vm2885, %v2894, %v2893
        %vm2896 = vcmp.lt.s32.totalorder %v2508, 0
        %v2897 = vsub.s32 0, %v2508
        %v2898 = vsel %vm2896, %v2897, %v2508
        %v2899 = vmul.u32.u64.compose %v2898, 2863311531
        %v2900 = vextract.low.u32 %v2899
        %v2901 = vextract.high.u32 %v2899
        %v2902 = vshrl.u32 %v2901, 4
        %v2903 = vmul.u32 %v2902, 24
        %v2904 = vsub.s32 %v2898, %v2903
        %v2905 = vsub.s32 0, %v2904
        %v2906 = vsel %vm2896, %v2905, %v2904
        %vm2907 = vcmp.lt.s32.totalorder %v2509, 0
        %v2908 = vsub.s32 0, %v2509
        %v2909 = vsel %vm2907, %v2908, %v2509
        %v2910 = vmul.u32.u64.compose %v2909, 2863311531
        %v2911 = vextract.low.u32 %v2910
        %v2912 = vextract.high.u32 %v2910
        %v2913 = vshrl.u32 %v2912, 4
        %v2914 = vmul.u32 %v2913, 24
        %v2915 = vsub.s32 %v2909, %v2914
        %v2916 = vsub.s32 0, %v2915
        %v2917 = vsel %vm2907, %v2916, %v2915
        %vm2918 = vcmp.lt.s32.totalorder %v2510, 0
        %v2919 = vsub.s32 0, %v2510
        %v2920 = vsel %vm2918, %v2919, %v2510
        %v2921 = vmul.u32.u64.compose %v2920, 2863311531
        %v2922 = vextract.low.u32 %v2921
        %v2923 = vextract.high.u32 %v2921
        %v2924 = vshrl.u32 %v2923, 4
        %v2925 = vmul.u32 %v2924, 24
        %v2926 = vsub.s32 %v2920, %v2925
        %v2927 = vsub.s32 0, %v2926
        %v2928 = vsel %vm2918, %v2927, %v2926
        %vm2929 = vcmp.lt.s32.totalorder %v2511, 0
        %v2930 = vsub.s32 0, %v2511
        %v2931 = vsel %vm2929, %v2930, %v2511
        %v2932 = vmul.u32.u64.compose %v2931, 2863311531
        %v2933 = vextract.low.u32 %v2932
        %v2934 = vextract.high.u32 %v2932
        %v2935 = vshrl.u32 %v2934, 4
        %v2936 = vmul.u32 %v2935, 24
        %v2937 = vsub.s32 %v2931, %v2936
        %v2938 = vsub.s32 0, %v2937
        %v2939 = vsel %vm2929, %v2938, %v2937
        %vm2940 = vcmp.lt.s32.totalorder %v2512, 0
        %v2941 = vsub.s32 0, %v2512
        %v2942 = vsel %vm2940, %v2941, %v2512
        %v2943 = vmul.u32.u64.compose %v2942, 2863311531
        %v2944 = vextract.low.u32 %v2943
        %v2945 = vextract.high.u32 %v2943
        %v2946 = vshrl.u32 %v2945, 4
        %v2947 = vmul.u32 %v2946, 24
        %v2948 = vsub.s32 %v2942, %v2947
        %v2949 = vsub.s32 0, %v2948
        %v2950 = vsel %vm2940, %v2949, %v2948
        %vm2951 = vcmp.lt.s32.totalorder %v2513, 0
        %v2952 = vsub.s32 0, %v2513
        %v2953 = vsel %vm2951, %v2952, %v2513
        %v2954 = vmul.u32.u64.compose %v2953, 2863311531
        %v2955 = vextract.low.u32 %v2954
        %v2956 = vextract.high.u32 %v2954
        %v2957 = vshrl.u32 %v2956, 4
        %v2958 = vmul.u32 %v2957, 24
        %v2959 = vsub.s32 %v2953, %v2958
        %v2960 = vsub.s32 0, %v2959
        %v2961 = vsel %vm2951, %v2960, %v2959
        %vm2962 = vcmp.lt.s32.totalorder %v2514, 0
        %v2963 = vsub.s32 0, %v2514
        %v2964 = vsel %vm2962, %v2963, %v2514
        %v2965 = vmul.u32.u64.compose %v2964, 2863311531
        %v2966 = vextract.low.u32 %v2965
        %v2967 = vextract.high.u32 %v2965
        %v2968 = vshrl.u32 %v2967, 4
        %v2969 = vmul.u32 %v2968, 24
        %v2970 = vsub.s32 %v2964, %v2969
        %v2971 = vsub.s32 0, %v2970
        %v2972 = vsel %vm2962, %v2971, %v2970
        %vm2973 = vcmp.lt.s32.totalorder %v2515, 0
        %v2974 = vsub.s32 0, %v2515
        %v2975 = vsel %vm2973, %v2974, %v2515
        %v2976 = vmul.u32.u64.compose %v2975, 2863311531
        %v2977 = vextract.low.u32 %v2976
        %v2978 = vextract.high.u32 %v2976
        %v2979 = vshrl.u32 %v2978, 4
        %v2980 = vmul.u32 %v2979, 24
        %v2981 = vsub.s32 %v2975, %v2980
        %v2982 = vsub.s32 0, %v2981
        %v2983 = vsel %vm2973, %v2982, %v2981
        %vm2984 = vcmp.lt.s32.totalorder %v2516, 0
        %v2985 = vsub.s32 0, %v2516
        %v2986 = vsel %vm2984, %v2985, %v2516
        %v2987 = vmul.u32.u64.compose %v2986, 2863311531
        %v2988 = vextract.low.u32 %v2987
        %v2989 = vextract.high.u32 %v2987
        %v2990 = vshrl.u32 %v2989, 4
        %v2991 = vmul.u32 %v2990, 24
        %v2992 = vsub.s32 %v2986, %v2991
        %v2993 = vsub.s32 0, %v2992
        %v2994 = vsel %vm2984, %v2993, %v2992
        %vm2995 = vcmp.lt.s32.totalorder %v2517, 0
        %v2996 = vsub.s32 0, %v2517
        %v2997 = vsel %vm2995, %v2996, %v2517
        %v2998 = vmul.u32.u64.compose %v2997, 2863311531
        %v2999 = vextract.low.u32 %v2998
        %v3000 = vextract.high.u32 %v2998
        %v3001 = vshrl.u32 %v3000, 4
        %v3002 = vmul.u32 %v3001, 24
        %v3003 = vsub.s32 %v2997, %v3002
        %v3004 = vsub.s32 0, %v3003
        %v3005 = vsel %vm2995, %v3004, %v3003
        %vm3006 = vcmp.lt.s32.totalorder %v2518, 0
        %v3007 = vsub.s32 0, %v2518
        %v3008 = vsel %vm3006, %v3007, %v2518
        %v3009 = vmul.u32.u64.compose %v3008, 2863311531
        %v3010 = vextract.low.u32 %v3009
        %v3011 = vextract.high.u32 %v3009
        %v3012 = vshrl.u32 %v3011, 4
        %v3013 = vmul.u32 %v3012, 24
        %v3014 = vsub.s32 %v3008, %v3013
        %v3015 = vsub.s32 0, %v3014
        %v3016 = vsel %vm3006, %v3015, %v3014
        %vm3017 = vcmp.lt.s32.totalorder %v2519, 0
        %v3018 = vsub.s32 0, %v2519
        %v3019 = vsel %vm3017, %v3018, %v2519
        %v3020 = vmul.u32.u64.compose %v3019, 2863311531
        %v3021 = vextract.low.u32 %v3020
        %v3022 = vextract.high.u32 %v3020
        %v3023 = vshrl.u32 %v3022, 4
        %v3024 = vmul.u32 %v3023, 24
        %v3025 = vsub.s32 %v3019, %v3024
        %v3026 = vsub.s32 0, %v3025
        %v3027 = vsel %vm3017, %v3026, %v3025
        %vm3028 = vcmp.lt.s32.totalorder %v2520, 0
        %v3029 = vsub.s32 0, %v2520
        %v3030 = vsel %vm3028, %v3029, %v2520
        %v3031 = vmul.u32.u64.compose %v3030, 2863311531
        %v3032 = vextract.low.u32 %v3031
        %v3033 = vextract.high.u32 %v3031
        %v3034 = vshrl.u32 %v3033, 4
        %v3035 = vmul.u32 %v3034, 24
        %v3036 = vsub.s32 %v3030, %v3035
        %v3037 = vsub.s32 0, %v3036
        %v3038 = vsel %vm3028, %v3037, %v3036
        %vm3039 = vcmp.lt.s32.totalorder %v2521, 0
        %v3040 = vsub.s32 0, %v2521
        %v3041 = vsel %vm3039, %v3040, %v2521
        %v3042 = vmul.u32.u64.compose %v3041, 2863311531
        %v3043 = vextract.low.u32 %v3042
        %v3044 = vextract.high.u32 %v3042
        %v3045 = vshrl.u32 %v3044, 4
        %v3046 = vmul.u32 %v3045, 24
        %v3047 = vsub.s32 %v3041, %v3046
        %v3048 = vsub.s32 0, %v3047
        %v3049 = vsel %vm3039, %v3048, %v3047
        %vm3050 = vcmp.ne.s32.totalorder %v2532, 0
        %vm3051 = vcmp.ne.s32.totalorder %v2543, 0
        %vm3052 = vcmp.ne.s32.totalorder %v2554, 0
        %vm3053 = vcmp.ne.s32.totalorder %v2565, 0
        %vm3054 = vcmp.ne.s32.totalorder %v2576, 0
        %vm3055 = vcmp.ne.s32.totalorder %v2587, 0
        %vm3056 = vcmp.ne.s32.totalorder %v2598, 0
        %vm3057 = vcmp.ne.s32.totalorder %v2609, 0
        %vm3058 = vcmp.ne.s32.totalorder %v2620, 0
        %vm3059 = vcmp.ne.s32.totalorder %v2631, 0
        %vm3060 = vcmp.ne.s32.totalorder %v2642, 0
        %vm3061 = vcmp.ne.s32.totalorder %v2653, 0
        %vm3062 = vcmp.ne.s32.totalorder %v2664, 0
        %vm3063 = vcmp.ne.s32.totalorder %v2675, 0
        %vm3064 = vcmp.ne.s32.totalorder %v2686, 0
        %vm3065 = vcmp.ne.s32.totalorder %v2697, 0
        %vm3066 = vcmp.ne.s32.totalorder %v2708, 0
        %vm3067 = vcmp.ne.s32.totalorder %v2719, 0
        %vm3068 = vcmp.ne.s32.totalorder %v2730, 0
        %vm3069 = vcmp.ne.s32.totalorder %v2741, 0
        %vm3070 = vcmp.ne.s32.totalorder %v2752, 0
        %vm3071 = vcmp.ne.s32.totalorder %v2763, 0
        %vm3072 = vcmp.ne.s32.totalorder %v2774, 0
        %vm3073 = vcmp.ne.s32.totalorder %v2785, 0
        %vm3074 = vcmp.ne.s32.totalorder %v2796, 0
        %vm3075 = vcmp.ne.s32.totalorder %v2807, 0
        %vm3076 = vcmp.ne.s32.totalorder %v2818, 0
        %vm3077 = vcmp.ne.s32.totalorder %v2829, 0
        %vm3078 = vcmp.ne.s32.totalorder %v2840, 0
        %vm3079 = vcmp.ne.s32.totalorder %v2851, 0
        %vm3080 = vcmp.ne.s32.totalorder %v2862, 0
        %vm3081 = vcmp.ne.s32.totalorder %v2873, 0
        %vm3082 = vcmp.ne.s32.totalorder %v2884, 0
        %vm3083 = vcmp.ne.s32.totalorder %v2895, 0
        %vm3084 = vcmp.ne.s32.totalorder %v2906, 0
        %vm3085 = vcmp.ne.s32.totalorder %v2917, 0
        %vm3086 = vcmp.ne.s32.totalorder %v2928, 0
        %vm3087 = vcmp.ne.s32.totalorder %v2939, 0
        %vm3088 = vcmp.ne.s32.totalorder %v2950, 0
        %vm3089 = vcmp.ne.s32.totalorder %v2961, 0
        %vm3090 = vcmp.ne.s32.totalorder %v2972, 0
        %vm3091 = vcmp.ne.s32.totalorder %v2983, 0
        %vm3092 = vcmp.ne.s32.totalorder %v2994, 0
        %vm3093 = vcmp.ne.s32.totalorder %v3005, 0
        %vm3094 = vcmp.ne.s32.totalorder %v3016, 0
        %vm3095 = vcmp.ne.s32.totalorder %v3027, 0
        %vm3096 = vcmp.ne.s32.totalorder %v3038, 0
        %vm3097 = vcmp.ne.s32.totalorder %v3049, 0
        %vm3098 = vcmp.lt.s32.totalorder %v2532, 0
        %vm3099 = vcmp.lt.s32.totalorder %v2543, 0
        %vm3100 = vcmp.lt.s32.totalorder %v2554, 0
        %vm3101 = vcmp.lt.s32.totalorder %v2565, 0
        %vm3102 = vcmp.lt.s32.totalorder %v2576, 0
        %vm3103 = vcmp.lt.s32.totalorder %v2587, 0
        %vm3104 = vcmp.lt.s32.totalorder %v2598, 0
        %vm3105 = vcmp.lt.s32.totalorder %v2609, 0
        %vm3106 = vcmp.lt.s32.totalorder %v2620, 0
        %vm3107 = vcmp.lt.s32.totalorder %v2631, 0
        %vm3108 = vcmp.lt.s32.totalorder %v2642, 0
        %vm3109 = vcmp.lt.s32.totalorder %v2653, 0
        %vm3110 = vcmp.lt.s32.totalorder %v2664, 0
        %vm3111 = vcmp.lt.s32.totalorder %v2675, 0
        %vm3112 = vcmp.lt.s32.totalorder %v2686, 0
        %vm3113 = vcmp.lt.s32.totalorder %v2697, 0
        %vm3114 = vcmp.lt.s32.totalorder %v2708, 0
        %vm3115 = vcmp.lt.s32.totalorder %v2719, 0
        %vm3116 = vcmp.lt.s32.totalorder %v2730, 0
        %vm3117 = vcmp.lt.s32.totalorder %v2741, 0
        %vm3118 = vcmp.lt.s32.totalorder %v2752, 0
        %vm3119 = vcmp.lt.s32.totalorder %v2763, 0
        %vm3120 = vcmp.lt.s32.totalorder %v2774, 0
        %vm3121 = vcmp.lt.s32.totalorder %v2785, 0
        %vm3122 = vcmp.lt.s32.totalorder %v2796, 0
        %vm3123 = vcmp.lt.s32.totalorder %v2807, 0
        %vm3124 = vcmp.lt.s32.totalorder %v2818, 0
        %vm3125 = vcmp.lt.s32.totalorder %v2829, 0
        %vm3126 = vcmp.lt.s32.totalorder %v2840, 0
        %vm3127 = vcmp.lt.s32.totalorder %v2851, 0
        %vm3128 = vcmp.lt.s32.totalorder %v2862, 0
        %vm3129 = vcmp.lt.s32.totalorder %v2873, 0
        %vm3130 = vcmp.lt.s32.totalorder %v2884, 0
        %vm3131 = vcmp.lt.s32.totalorder %v2895, 0
        %vm3132 = vcmp.lt.s32.totalorder %v2906, 0
        %vm3133 = vcmp.lt.s32.totalorder %v2917, 0
        %vm3134 = vcmp.lt.s32.totalorder %v2928, 0
        %vm3135 = vcmp.lt.s32.totalorder %v2939, 0
        %vm3136 = vcmp.lt.s32.totalorder %v2950, 0
        %vm3137 = vcmp.lt.s32.totalorder %v2961, 0
        %vm3138 = vcmp.lt.s32.totalorder %v2972, 0
        %vm3139 = vcmp.lt.s32.totalorder %v2983, 0
        %vm3140 = vcmp.lt.s32.totalorder %v2994, 0
        %vm3141 = vcmp.lt.s32.totalorder %v3005, 0
        %vm3142 = vcmp.lt.s32.totalorder %v3016, 0
        %vm3143 = vcmp.lt.s32.totalorder %v3027, 0
        %vm3144 = vcmp.lt.s32.totalorder %v3038, 0
        %vm3145 = vcmp.lt.s32.totalorder %v3049, 0
        %vm3146 = vmand %vm3098, %vm3050
        %vm3147 = vmand %vm3099, %vm3051
        %vm3148 = vmand %vm3100, %vm3052
        %vm3149 = vmand %vm3101, %vm3053
        %vm3150 = vmand %vm3102, %vm3054
        %vm3151 = vmand %vm3103, %vm3055
        %vm3152 = vmand %vm3104, %vm3056
        %vm3153 = vmand %vm3105, %vm3057
        %vm3154 = vmand %vm3106, %vm3058
        %vm3155 = vmand %vm3107, %vm3059
        %vm3156 = vmand %vm3108, %vm3060
        %vm3157 = vmand %vm3109, %vm3061
        %vm3158 = vmand %vm3110, %vm3062
        %vm3159 = vmand %vm3111, %vm3063
        %vm3160 = vmand %vm3112, %vm3064
        %vm3161 = vmand %vm3113, %vm3065
        %vm3162 = vmand %vm3114, %vm3066
        %vm3163 = vmand %vm3115, %vm3067
        %vm3164 = vmand %vm3116, %vm3068
        %vm3165 = vmand %vm3117, %vm3069
        %vm3166 = vmand %vm3118, %vm3070
        %vm3167 = vmand %vm3119, %vm3071
        %vm3168 = vmand %vm3120, %vm3072
        %vm3169 = vmand %vm3121, %vm3073
        %vm3170 = vmand %vm3122, %vm3074
        %vm3171 = vmand %vm3123, %vm3075
        %vm3172 = vmand %vm3124, %vm3076
        %vm3173 = vmand %vm3125, %vm3077
        %vm3174 = vmand %vm3126, %vm3078
        %vm3175 = vmand %vm3127, %vm3079
        %vm3176 = vmand %vm3128, %vm3080
        %vm3177 = vmand %vm3129, %vm3081
        %vm3178 = vmand %vm3130, %vm3082
        %vm3179 = vmand %vm3131, %vm3083
        %vm3180 = vmand %vm3132, %vm3084
        %vm3181 = vmand %vm3133, %vm3085
        %vm3182 = vmand %vm3134, %vm3086
        %vm3183 = vmand %vm3135, %vm3087
        %vm3184 = vmand %vm3136, %vm3088
        %vm3185 = vmand %vm3137, %vm3089
        %vm3186 = vmand %vm3138, %vm3090
        %vm3187 = vmand %vm3139, %vm3091
        %vm3188 = vmand %vm3140, %vm3092
        %vm3189 = vmand %vm3141, %vm3093
        %vm3190 = vmand %vm3142, %vm3094
        %vm3191 = vmand %vm3143, %vm3095
        %vm3192 = vmand %vm3144, %vm3096
        %vm3193 = vmand %vm3145, %vm3097
        %v3194 = vadd.s32 %v2532, 24
        %v3195 = vadd.s32 %v2543, 24
        %v3196 = vadd.s32 %v2554, 24
        %v3197 = vadd.s32 %v2565, 24
        %v3198 = vadd.s32 %v2576, 24
        %v3199 = vadd.s32 %v2587, 24
        %v3200 = vadd.s32 %v2598, 24
        %v3201 = vadd.s32 %v2609, 24
        %v3202 = vadd.s32 %v2620, 24
        %v3203 = vadd.s32 %v2631, 24
        %v3204 = vadd.s32 %v2642, 24
        %v3205 = vadd.s32 %v2653, 24
        %v3206 = vadd.s32 %v2664, 24
        %v3207 = vadd.s32 %v2675, 24
        %v3208 = vadd.s32 %v2686, 24
        %v3209 = vadd.s32 %v2697, 24
        %v3210 = vadd.s32 %v2708, 24
        %v3211 = vadd.s32 %v2719, 24
        %v3212 = vadd.s32 %v2730, 24
        %v3213 = vadd.s32 %v2741, 24
        %v3214 = vadd.s32 %v2752, 24
        %v3215 = vadd.s32 %v2763, 24
        %v3216 = vadd.s32 %v2774, 24
        %v3217 = vadd.s32 %v2785, 24
        %v3218 = vadd.s32 %v2796, 24
        %v3219 = vadd.s32 %v2807, 24
        %v3220 = vadd.s32 %v2818, 24
        %v3221 = vadd.s32 %v2829, 24
        %v3222 = vadd.s32 %v2840, 24
        %v3223 = vadd.s32 %v2851, 24
        %v3224 = vadd.s32 %v2862, 24
        %v3225 = vadd.s32 %v2873, 24
        %v3226 = vadd.s32 %v2884, 24
        %v3227 = vadd.s32 %v2895, 24
        %v3228 = vadd.s32 %v2906, 24
        %v3229 = vadd.s32 %v2917, 24
        %v3230 = vadd.s32 %v2928, 24
        %v3231 = vadd.s32 %v2939, 24
        %v3232 = vadd.s32 %v2950, 24
        %v3233 = vadd.s32 %v2961, 24
        %v3234 = vadd.s32 %v2972, 24
        %v3235 = vadd.s32 %v2983, 24
        %v3236 = vadd.s32 %v2994, 24
        %v3237 = vadd.s32 %v3005, 24
        %v3238 = vadd.s32 %v3016, 24
        %v3239 = vadd.s32 %v3027, 24
        %v3240 = vadd.s32 %v3038, 24
        %v3241 = vadd.s32 %v3049, 24
        %v3242 = vsel %vm3146, %v3194, %v2532
        %v3243 = vsel %vm3147, %v3195, %v2543
        %v3244 = vsel %vm3148, %v3196, %v2554
        %v3245 = vsel %vm3149, %v3197, %v2565
        %v3246 = vsel %vm3150, %v3198, %v2576
        %v3247 = vsel %vm3151, %v3199, %v2587
        %v3248 = vsel %vm3152, %v3200, %v2598
        %v3249 = vsel %vm3153, %v3201, %v2609
        %v3250 = vsel %vm3154, %v3202, %v2620
        %v3251 = vsel %vm3155, %v3203, %v2631
        %v3252 = vsel %vm3156, %v3204, %v2642
        %v3253 = vsel %vm3157, %v3205, %v2653
        %v3254 = vsel %vm3158, %v3206, %v2664
        %v3255 = vsel %vm3159, %v3207, %v2675
        %v3256 = vsel %vm3160, %v3208, %v2686
        %v3257 = vsel %vm3161, %v3209, %v2697
        %v3258 = vsel %vm3162, %v3210, %v2708
        %v3259 = vsel %vm3163, %v3211, %v2719
        %v3260 = vsel %vm3164, %v3212, %v2730
        %v3261 = vsel %vm3165, %v3213, %v2741
        %v3262 = vsel %vm3166, %v3214, %v2752
        %v3263 = vsel %vm3167, %v3215, %v2763
        %v3264 = vsel %vm3168, %v3216, %v2774
        %v3265 = vsel %vm3169, %v3217, %v2785
        %v3266 = vsel %vm3170, %v3218, %v2796
        %v3267 = vsel %vm3171, %v3219, %v2807
        %v3268 = vsel %vm3172, %v3220, %v2818
        %v3269 = vsel %vm3173, %v3221, %v2829
        %v3270 = vsel %vm3174, %v3222, %v2840
        %v3271 = vsel %vm3175, %v3223, %v2851
        %v3272 = vsel %vm3176, %v3224, %v2862
        %v3273 = vsel %vm3177, %v3225, %v2873
        %v3274 = vsel %vm3178, %v3226, %v2884
        %v3275 = vsel %vm3179, %v3227, %v2895
        %v3276 = vsel %vm3180, %v3228, %v2906
        %v3277 = vsel %vm3181, %v3229, %v2917
        %v3278 = vsel %vm3182, %v3230, %v2928
        %v3279 = vsel %vm3183, %v3231, %v2939
        %v3280 = vsel %vm3184, %v3232, %v2950
        %v3281 = vsel %vm3185, %v3233, %v2961
        %v3282 = vsel %vm3186, %v3234, %v2972
        %v3283 = vsel %vm3187, %v3235, %v2983
        %v3284 = vsel %vm3188, %v3236, %v2994
        %v3285 = vsel %vm3189, %v3237, %v3005
        %v3286 = vsel %vm3190, %v3238, %v3016
        %v3287 = vsel %vm3191, %v3239, %v3027
        %v3288 = vsel %vm3192, %v3240, %v3038
        %v3289 = vsel %vm3193, %v3241, %v3049
        %vm3290 = vcmp.lt.s32.totalorder %v3242, 16
        %vm3291 = vcmp.lt.s32.totalorder %v3243, 16
        %vm3292 = vcmp.lt.s32.totalorder %v3244, 16
        %vm3293 = vcmp.lt.s32.totalorder %v3245, 16
        %vm3294 = vcmp.lt.s32.totalorder %v3246, 16
        %vm3295 = vcmp.lt.s32.totalorder %v3247, 16
        %vm3296 = vcmp.lt.s32.totalorder %v3248, 16
        %vm3297 = vcmp.lt.s32.totalorder %v3249, 16
        %vm3298 = vcmp.lt.s32.totalorder %v3250, 16
        %vm3299 = vcmp.lt.s32.totalorder %v3251, 16
        %vm3300 = vcmp.lt.s32.totalorder %v3252, 16
        %vm3301 = vcmp.lt.s32.totalorder %v3253, 16
        %vm3302 = vcmp.lt.s32.totalorder %v3254, 16
        %vm3303 = vcmp.lt.s32.totalorder %v3255, 16
        %vm3304 = vcmp.lt.s32.totalorder %v3256, 16
        %vm3305 = vcmp.lt.s32.totalorder %v3257, 16
        %vm3306 = vcmp.lt.s32.totalorder %v3258, 16
        %vm3307 = vcmp.lt.s32.totalorder %v3259, 16
        %vm3308 = vcmp.lt.s32.totalorder %v3260, 16
        %vm3309 = vcmp.lt.s32.totalorder %v3261, 16
        %vm3310 = vcmp.lt.s32.totalorder %v3262, 16
        %vm3311 = vcmp.lt.s32.totalorder %v3263, 16
        %vm3312 = vcmp.lt.s32.totalorder %v3264, 16
        %vm3313 = vcmp.lt.s32.totalorder %v3265, 16
        %vm3314 = vcmp.lt.s32.totalorder %v3266, 16
        %vm3315 = vcmp.lt.s32.totalorder %v3267, 16
        %vm3316 = vcmp.lt.s32.totalorder %v3268, 16
        %vm3317 = vcmp.lt.s32.totalorder %v3269, 16
        %vm3318 = vcmp.lt.s32.totalorder %v3270, 16
        %vm3319 = vcmp.lt.s32.totalorder %v3271, 16
        %vm3320 = vcmp.lt.s32.totalorder %v3272, 16
        %vm3321 = vcmp.lt.s32.totalorder %v3273, 16
        %vm3322 = vcmp.lt.s32.totalorder %v3274, 16
        %vm3323 = vcmp.lt.s32.totalorder %v3275, 16
        %vm3324 = vcmp.lt.s32.totalorder %v3276, 16
        %vm3325 = vcmp.lt.s32.totalorder %v3277, 16
        %vm3326 = vcmp.lt.s32.totalorder %v3278, 16
        %vm3327 = vcmp.lt.s32.totalorder %v3279, 16
        %vm3328 = vcmp.lt.s32.totalorder %v3280, 16
        %vm3329 = vcmp.lt.s32.totalorder %v3281, 16
        %vm3330 = vcmp.lt.s32.totalorder %v3282, 16
        %vm3331 = vcmp.lt.s32.totalorder %v3283, 16
        %vm3332 = vcmp.lt.s32.totalorder %v3284, 16
        %vm3333 = vcmp.lt.s32.totalorder %v3285, 16
        %vm3334 = vcmp.lt.s32.totalorder %v3286, 16
        %vm3335 = vcmp.lt.s32.totalorder %v3287, 16
        %vm3336 = vcmp.lt.s32.totalorder %v3288, 16
        %vm3337 = vcmp.lt.s32.totalorder %v3289, 16
        %vm3338 = vcmp.ge.f32.partialorder %v2425, 0.0
        %vm3339 = vcmp.ge.f32.partialorder %v2426, 0.0
        %vm3340 = vcmp.ge.f32.partialorder %v2427, 0.0
        %vm3341 = vcmp.ge.f32.partialorder %v2428, 0.0
        %vm3342 = vcmp.ge.f32.partialorder %v2429, 0.0
        %vm3343 = vcmp.ge.f32.partialorder %v2430, 0.0
        %vm3344 = vcmp.ge.f32.partialorder %v2431, 0.0
        %vm3345 = vcmp.ge.f32.partialorder %v2432, 0.0
        %vm3346 = vcmp.ge.f32.partialorder %v2433, 0.0
        %vm3347 = vcmp.ge.f32.partialorder %v2434, 0.0
        %vm3348 = vcmp.ge.f32.partialorder %v2435, 0.0
        %vm3349 = vcmp.ge.f32.partialorder %v2436, 0.0
        %vm3350 = vcmp.ge.f32.partialorder %v2437, 0.0
        %vm3351 = vcmp.ge.f32.partialorder %v2438, 0.0
        %vm3352 = vcmp.ge.f32.partialorder %v2439, 0.0
        %vm3353 = vcmp.ge.f32.partialorder %v2440, 0.0
        %vm3354 = vcmp.ge.f32.partialorder %v2441, 0.0
        %vm3355 = vcmp.ge.f32.partialorder %v2442, 0.0
        %vm3356 = vcmp.ge.f32.partialorder %v2443, 0.0
        %vm3357 = vcmp.ge.f32.partialorder %v2444, 0.0
        %vm3358 = vcmp.ge.f32.partialorder %v2445, 0.0
        %vm3359 = vcmp.ge.f32.partialorder %v2446, 0.0
        %vm3360 = vcmp.ge.f32.partialorder %v2447, 0.0
        %vm3361 = vcmp.ge.f32.partialorder %v2448, 0.0
        %vm3362 = vcmp.ge.f32.partialorder %v2449, 0.0
        %vm3363 = vcmp.ge.f32.partialorder %v2450, 0.0
        %vm3364 = vcmp.ge.f32.partialorder %v2451, 0.0
        %vm3365 = vcmp.ge.f32.partialorder %v2452, 0.0
        %vm3366 = vcmp.ge.f32.partialorder %v2453, 0.0
        %vm3367 = vcmp.ge.f32.partialorder %v2454, 0.0
        %vm3368 = vcmp.ge.f32.partialorder %v2455, 0.0
        %vm3369 = vcmp.ge.f32.partialorder %v2456, 0.0
        %vm3370 = vcmp.ge.f32.partialorder %v2457, 0.0
        %vm3371 = vcmp.ge.f32.partialorder %v2458, 0.0
        %vm3372 = vcmp.ge.f32.partialorder %v2459, 0.0
        %vm3373 = vcmp.ge.f32.partialorder %v2460, 0.0
        %vm3374 = vcmp.ge.f32.partialorder %v2461, 0.0
        %vm3375 = vcmp.ge.f32.partialorder %v2462, 0.0
        %vm3376 = vcmp.ge.f32.partialorder %v2463, 0.0
        %vm3377 = vcmp.ge.f32.partialorder %v2464, 0.0
        %vm3378 = vcmp.ge.f32.partialorder %v2465, 0.0
        %vm3379 = vcmp.ge.f32.partialorder %v2466, 0.0
        %vm3380 = vcmp.ge.f32.partialorder %v2467, 0.0
        %vm3381 = vcmp.ge.f32.partialorder %v2468, 0.0
        %vm3382 = vcmp.ge.f32.partialorder %v2469, 0.0
        %vm3383 = vcmp.ge.f32.partialorder %v2470, 0.0
        %vm3384 = vcmp.ge.f32.partialorder %v2471, 0.0
        %vm3385 = vcmp.ge.f32.partialorder %v2472, 0.0
        %v3386 = vmul.f32 %v2425, 0.2
        %v3387 = vmul.f32 %v2426, 0.2
        %v3388 = vmul.f32 %v2427, 0.2
        %v3389 = vmul.f32 %v2428, 0.2
        %v3390 = vmul.f32 %v2429, 0.2
        %v3391 = vmul.f32 %v2430, 0.2
        %v3392 = vmul.f32 %v2431, 0.2
        %v3393 = vmul.f32 %v2432, 0.2
        %v3394 = vmul.f32 %v2433, 0.2
        %v3395 = vmul.f32 %v2434, 0.2
        %v3396 = vmul.f32 %v2435, 0.2
        %v3397 = vmul.f32 %v2436, 0.2
        %v3398 = vmul.f32 %v2437, 0.2
        %v3399 = vmul.f32 %v2438, 0.2
        %v3400 = vmul.f32 %v2439, 0.2
        %v3401 = vmul.f32 %v2440, 0.2
        %v3402 = vmul.f32 %v2441, 0.2
        %v3403 = vmul.f32 %v2442, 0.2
        %v3404 = vmul.f32 %v2443, 0.2
        %v3405 = vmul.f32 %v2444, 0.2
        %v3406 = vmul.f32 %v2445, 0.2
        %v3407 = vmul.f32 %v2446, 0.2
        %v3408 = vmul.f32 %v2447, 0.2
        %v3409 = vmul.f32 %v2448, 0.2
        %v3410 = vmul.f32 %v2449, 0.2
        %v3411 = vmul.f32 %v2450, 0.2
        %v3412 = vmul.f32 %v2451, 0.2
        %v3413 = vmul.f32 %v2452, 0.2
        %v3414 = vmul.f32 %v2453, 0.2
        %v3415 = vmul.f32 %v2454, 0.2
        %v3416 = vmul.f32 %v2455, 0.2
        %v3417 = vmul.f32 %v2456, 0.2
        %v3418 = vmul.f32 %v2457, 0.2
        %v3419 = vmul.f32 %v2458, 0.2
        %v3420 = vmul.f32 %v2459, 0.2
        %v3421 = vmul.f32 %v2460, 0.2
        %v3422 = vmul.f32 %v2461, 0.2
        %v3423 = vmul.f32 %v2462, 0.2
        %v3424 = vmul.f32 %v2463, 0.2
        %v3425 = vmul.f32 %v2464, 0.2
        %v3426 = vmul.f32 %v2465, 0.2
        %v3427 = vmul.f32 %v2466, 0.2
        %v3428 = vmul.f32 %v2467, 0.2
        %v3429 = vmul.f32 %v2468, 0.2
        %v3430 = vmul.f32 %v2469, 0.2
        %v3431 = vmul.f32 %v2470, 0.2
        %v3432 = vmul.f32 %v2471, 0.2
        %v3433 = vmul.f32 %v2472, 0.2
        %v3434 = vsel %vm3338, %v2425, %v3386
        %v3435 = vsel %vm3339, %v2426, %v3387
        %v3436 = vsel %vm3340, %v2427, %v3388
        %v3437 = vsel %vm3341, %v2428, %v3389
        %v3438 = vsel %vm3342, %v2429, %v3390
        %v3439 = vsel %vm3343, %v2430, %v3391
        %v3440 = vsel %vm3344, %v2431, %v3392
        %v3441 = vsel %vm3345, %v2432, %v3393
        %v3442 = vsel %vm3346, %v2433, %v3394
        %v3443 = vsel %vm3347, %v2434, %v3395
        %v3444 = vsel %vm3348, %v2435, %v3396
        %v3445 = vsel %vm3349, %v2436, %v3397
        %v3446 = vsel %vm3350, %v2437, %v3398
        %v3447 = vsel %vm3351, %v2438, %v3399
        %v3448 = vsel %vm3352, %v2439, %v3400
        %v3449 = vsel %vm3353, %v2440, %v3401
        %v3450 = vsel %vm3354, %v2441, %v3402
        %v3451 = vsel %vm3355, %v2442, %v3403
        %v3452 = vsel %vm3356, %v2443, %v3404
        %v3453 = vsel %vm3357, %v2444, %v3405
        %v3454 = vsel %vm3358, %v2445, %v3406
        %v3455 = vsel %vm3359, %v2446, %v3407
        %v3456 = vsel %vm3360, %v2447, %v3408
        %v3457 = vsel %vm3361, %v2448, %v3409
        %v3458 = vsel %vm3362, %v2449, %v3410
        %v3459 = vsel %vm3363, %v2450, %v3411
        %v3460 = vsel %vm3364, %v2451, %v3412
        %v3461 = vsel %vm3365, %v2452, %v3413
        %v3462 = vsel %vm3366, %v2453, %v3414
        %v3463 = vsel %vm3367, %v2454, %v3415
        %v3464 = vsel %vm3368, %v2455, %v3416
        %v3465 = vsel %vm3369, %v2456, %v3417
        %v3466 = vsel %vm3370, %v2457, %v3418
        %v3467 = vsel %vm3371, %v2458, %v3419
        %v3468 = vsel %vm3372, %v2459, %v3420
        %v3469 = vsel %vm3373, %v2460, %v3421
        %v3470 = vsel %vm3374, %v2461, %v3422
        %v3471 = vsel %vm3375, %v2462, %v3423
        %v3472 = vsel %vm3376, %v2463, %v3424
        %v3473 = vsel %vm3377, %v2464, %v3425
        %v3474 = vsel %vm3378, %v2465, %v3426
        %v3475 = vsel %vm3379, %v2466, %v3427
        %v3476 = vsel %vm3380, %v2467, %v3428
        %v3477 = vsel %vm3381, %v2468, %v3429
        %v3478 = vsel %vm3382, %v2469, %v3430
        %v3479 = vsel %vm3383, %v2470, %v3431
        %v3480 = vsel %vm3384, %v2471, %v3432
        %v3481 = vsel %vm3385, %v2472, %v3433
        %v3482 = vsel %vm3290, 1, 0
        %v3483 = vsel %vm3291, 1, 0
        %v3484 = vsel %vm3292, 1, 0
        %v3485 = vsel %vm3293, 1, 0
        %v3486 = vsel %vm3294, 1, 0
        %v3487 = vsel %vm3295, 1, 0
        %v3488 = vsel %vm3296, 1, 0
        %v3489 = vsel %vm3297, 1, 0
        %v3490 = vsel %vm3298, 1, 0
        %v3491 = vsel %vm3299, 1, 0
        %v3492 = vsel %vm3300, 1, 0
        %v3493 = vsel %vm3301, 1, 0
        %v3494 = vsel %vm3302, 1, 0
        %v3495 = vsel %vm3303, 1, 0
        %v3496 = vsel %vm3304, 1, 0
        %v3497 = vsel %vm3305, 1, 0
        %v3498 = vsel %vm3306, 1, 0
        %v3499 = vsel %vm3307, 1, 0
        %v3500 = vsel %vm3308, 1, 0
        %v3501 = vsel %vm3309, 1, 0
        %v3502 = vsel %vm3310, 1, 0
        %v3503 = vsel %vm3311, 1, 0
        %v3504 = vsel %vm3312, 1, 0
        %v3505 = vsel %vm3313, 1, 0
        %v3506 = vsel %vm3314, 1, 0
        %v3507 = vsel %vm3315, 1, 0
        %v3508 = vsel %vm3316, 1, 0
        %v3509 = vsel %vm3317, 1, 0
        %v3510 = vsel %vm3318, 1, 0
        %v3511 = vsel %vm3319, 1, 0
        %v3512 = vsel %vm3320, 1, 0
        %v3513 = vsel %vm3321, 1, 0
        %v3514 = vsel %vm3322, 1, 0
        %v3515 = vsel %vm3323, 1, 0
        %v3516 = vsel %vm3324, 1, 0
        %v3517 = vsel %vm3325, 1, 0
        %v3518 = vsel %vm3326, 1, 0
        %v3519 = vsel %vm3327, 1, 0
        %v3520 = vsel %vm3328, 1, 0
        %v3521 = vsel %vm3329, 1, 0
        %v3522 = vsel %vm3330, 1, 0
        %v3523 = vsel %vm3331, 1, 0
        %v3524 = vsel %vm3332, 1, 0
        %v3525 = vsel %vm3333, 1, 0
        %v3526 = vsel %vm3334, 1, 0
        %v3527 = vsel %vm3335, 1, 0
        %v3528 = vsel %vm3336, 1, 0
        %v3529 = vsel %vm3337, 1, 0
        %vm3530 = vcmp.eq.s32.totalorder %v3482, 1
        %vm3531 = vcmp.eq.s32.totalorder %v3483, 1
        %vm3532 = vcmp.eq.s32.totalorder %v3484, 1
        %vm3533 = vcmp.eq.s32.totalorder %v3485, 1
        %vm3534 = vcmp.eq.s32.totalorder %v3486, 1
        %vm3535 = vcmp.eq.s32.totalorder %v3487, 1
        %vm3536 = vcmp.eq.s32.totalorder %v3488, 1
        %vm3537 = vcmp.eq.s32.totalorder %v3489, 1
        %vm3538 = vcmp.eq.s32.totalorder %v3490, 1
        %vm3539 = vcmp.eq.s32.totalorder %v3491, 1
        %vm3540 = vcmp.eq.s32.totalorder %v3492, 1
        %vm3541 = vcmp.eq.s32.totalorder %v3493, 1
        %vm3542 = vcmp.eq.s32.totalorder %v3494, 1
        %vm3543 = vcmp.eq.s32.totalorder %v3495, 1
        %vm3544 = vcmp.eq.s32.totalorder %v3496, 1
        %vm3545 = vcmp.eq.s32.totalorder %v3497, 1
        %vm3546 = vcmp.eq.s32.totalorder %v3498, 1
        %vm3547 = vcmp.eq.s32.totalorder %v3499, 1
        %vm3548 = vcmp.eq.s32.totalorder %v3500, 1
        %vm3549 = vcmp.eq.s32.totalorder %v3501, 1
        %vm3550 = vcmp.eq.s32.totalorder %v3502, 1
        %vm3551 = vcmp.eq.s32.totalorder %v3503, 1
        %vm3552 = vcmp.eq.s32.totalorder %v3504, 1
        %vm3553 = vcmp.eq.s32.totalorder %v3505, 1
        %vm3554 = vcmp.eq.s32.totalorder %v3506, 1
        %vm3555 = vcmp.eq.s32.totalorder %v3507, 1
        %vm3556 = vcmp.eq.s32.totalorder %v3508, 1
        %vm3557 = vcmp.eq.s32.totalorder %v3509, 1
        %vm3558 = vcmp.eq.s32.totalorder %v3510, 1
        %vm3559 = vcmp.eq.s32.totalorder %v3511, 1
        %vm3560 = vcmp.eq.s32.totalorder %v3512, 1
        %vm3561 = vcmp.eq.s32.totalorder %v3513, 1
        %vm3562 = vcmp.eq.s32.totalorder %v3514, 1
        %vm3563 = vcmp.eq.s32.totalorder %v3515, 1
        %vm3564 = vcmp.eq.s32.totalorder %v3516, 1
        %vm3565 = vcmp.eq.s32.totalorder %v3517, 1
        %vm3566 = vcmp.eq.s32.totalorder %v3518, 1
        %vm3567 = vcmp.eq.s32.totalorder %v3519, 1
        %vm3568 = vcmp.eq.s32.totalorder %v3520, 1
        %vm3569 = vcmp.eq.s32.totalorder %v3521, 1
        %vm3570 = vcmp.eq.s32.totalorder %v3522, 1
        %vm3571 = vcmp.eq.s32.totalorder %v3523, 1
        %vm3572 = vcmp.eq.s32.totalorder %v3524, 1
        %vm3573 = vcmp.eq.s32.totalorder %v3525, 1
        %vm3574 = vcmp.eq.s32.totalorder %v3526, 1
        %vm3575 = vcmp.eq.s32.totalorder %v3527, 1
        %vm3576 = vcmp.eq.s32.totalorder %v3528, 1
        %vm3577 = vcmp.eq.s32.totalorder %v3529, 1
        %v3578 = vsel %vm3530, %v3434, 0.0
        %v3579 = vsel %vm3531, %v3435, 0.0
        %v3580 = vsel %vm3532, %v3436, 0.0
        %v3581 = vsel %vm3533, %v3437, 0.0
        %v3582 = vsel %vm3534, %v3438, 0.0
        %v3583 = vsel %vm3535, %v3439, 0.0
        %v3584 = vsel %vm3536, %v3440, 0.0
        %v3585 = vsel %vm3537, %v3441, 0.0
        %v3586 = vsel %vm3538, %v3442, 0.0
        %v3587 = vsel %vm3539, %v3443, 0.0
        %v3588 = vsel %vm3540, %v3444, 0.0
        %v3589 = vsel %vm3541, %v3445, 0.0
        %v3590 = vsel %vm3542, %v3446, 0.0
        %v3591 = vsel %vm3543, %v3447, 0.0
        %v3592 = vsel %vm3544, %v3448, 0.0
        %v3593 = vsel %vm3545, %v3449, 0.0
        %v3594 = vsel %vm3546, %v3450, 0.0
        %v3595 = vsel %vm3547, %v3451, 0.0
        %v3596 = vsel %vm3548, %v3452, 0.0
        %v3597 = vsel %vm3549, %v3453, 0.0
        %v3598 = vsel %vm3550, %v3454, 0.0
        %v3599 = vsel %vm3551, %v3455, 0.0
        %v3600 = vsel %vm3552, %v3456, 0.0
        %v3601 = vsel %vm3553, %v3457, 0.0
        %v3602 = vsel %vm3554, %v3458, 0.0
        %v3603 = vsel %vm3555, %v3459, 0.0
        %v3604 = vsel %vm3556, %v3460, 0.0
        %v3605 = vsel %vm3557, %v3461, 0.0
        %v3606 = vsel %vm3558, %v3462, 0.0
        %v3607 = vsel %vm3559, %v3463, 0.0
        %v3608 = vsel %vm3560, %v3464, 0.0
        %v3609 = vsel %vm3561, %v3465, 0.0
        %v3610 = vsel %vm3562, %v3466, 0.0
        %v3611 = vsel %vm3563, %v3467, 0.0
        %v3612 = vsel %vm3564, %v3468, 0.0
        %v3613 = vsel %vm3565, %v3469, 0.0
        %v3614 = vsel %vm3566, %v3470, 0.0
        %v3615 = vsel %vm3567, %v3471, 0.0
        %v3616 = vsel %vm3568, %v3472, 0.0
        %v3617 = vsel %vm3569, %v3473, 0.0
        %v3618 = vsel %vm3570, %v3474, 0.0
        %v3619 = vsel %vm3571, %v3475, 0.0
        %v3620 = vsel %vm3572, %v3476, 0.0
        %v3621 = vsel %vm3573, %v3477, 0.0
        %v3622 = vsel %vm3574, %v3478, 0.0
        %v3623 = vsel %vm3575, %v3479, 0.0
        %v3624 = vsel %vm3576, %v3480, 0.0
        %v3625 = vsel %vm3577, %v3481, 0.0
        %v3626 = vpack.c.bf16 %v3579, %v3578
        %v3627 = vpack.c.bf16 %v3581, %v3580
        %v3628 = vpack.c.bf16 %v3583, %v3582
        %v3629 = vpack.c.bf16 %v3585, %v3584
        %v3630 = vpack.c.bf16 %v3587, %v3586
        %v3631 = vpack.c.bf16 %v3589, %v3588
        %v3632 = vpack.c.bf16 %v3591, %v3590
        %v3633 = vpack.c.bf16 %v3593, %v3592
        %v3634 = vpack.c.bf16 %v3595, %v3594
        %v3635 = vpack.c.bf16 %v3597, %v3596
        %v3636 = vpack.c.bf16 %v3599, %v3598
        %v3637 = vpack.c.bf16 %v3601, %v3600
        %v3638 = vpack.c.bf16 %v3603, %v3602
        %v3639 = vpack.c.bf16 %v3605, %v3604
        %v3640 = vpack.c.bf16 %v3607, %v3606
        %v3641 = vpack.c.bf16 %v3609, %v3608
        %v3642 = vpack.c.bf16 %v3611, %v3610
        %v3643 = vpack.c.bf16 %v3613, %v3612
        %v3644 = vpack.c.bf16 %v3615, %v3614
        %v3645 = vpack.c.bf16 %v3617, %v3616
        %v3646 = vpack.c.bf16 %v3619, %v3618
        %v3647 = vpack.c.bf16 %v3621, %v3620
        %v3648 = vpack.c.bf16 %v3623, %v3622
        %v3649 = vpack.c.bf16 %v3625, %v3624
        %v3674 = vunpack.c.l.b16 %v3626
        %v3675 = vunpack.c.h.b16 %v3626
        %v3676 = vunpack.c.l.b16 %v3627
        %v3677 = vunpack.c.h.b16 %v3627
        %v3678 = vunpack.c.l.b16 %v3628
        %v3679 = vunpack.c.h.b16 %v3628
        %v3680 = vunpack.c.l.b16 %v3629
        %v3681 = vunpack.c.h.b16 %v3629
        %v3682 = vunpack.c.l.b16 %v3630
        %v3683 = vunpack.c.h.b16 %v3630
        %v3684 = vunpack.c.l.b16 %v3631
        %v3685 = vunpack.c.h.b16 %v3631
        %v3686 = vunpack.c.l.b16 %v3632
        %v3687 = vunpack.c.h.b16 %v3632
        %v3688 = vunpack.c.l.b16 %v3633
        %v3689 = vunpack.c.h.b16 %v3633
        %v3690 = vunpack.c.l.b16 %v3634
        %v3691 = vunpack.c.h.b16 %v3634
        %v3692 = vunpack.c.l.b16 %v3635
        %v3693 = vunpack.c.h.b16 %v3635
        %v3694 = vunpack.c.l.b16 %v3636
        %v3695 = vunpack.c.h.b16 %v3636
        %v3696 = vunpack.c.l.b16 %v3637
        %v3697 = vunpack.c.h.b16 %v3637
        %v3698 = vunpack.c.l.b16 %v3638
        %v3699 = vunpack.c.h.b16 %v3638
        %v3700 = vunpack.c.l.b16 %v3639
        %v3701 = vunpack.c.h.b16 %v3639
        %v3702 = vunpack.c.l.b16 %v3640
        %v3703 = vunpack.c.h.b16 %v3640
        %v3704 = vunpack.c.l.b16 %v3641
        %v3705 = vunpack.c.h.b16 %v3641
        %v3706 = vunpack.c.l.b16 %v3642
        %v3707 = vunpack.c.h.b16 %v3642
        %v3708 = vunpack.c.l.b16 %v3643
        %v3709 = vunpack.c.h.b16 %v3643
        %v3710 = vunpack.c.l.b16 %v3644
        %v3711 = vunpack.c.h.b16 %v3644
        %v3712 = vunpack.c.l.b16 %v3645
        %v3713 = vunpack.c.h.b16 %v3645
        %v3714 = vunpack.c.l.b16 %v3646
        %v3715 = vunpack.c.h.b16 %v3646
        %v3716 = vunpack.c.l.b16 %v3647
        %v3717 = vunpack.c.h.b16 %v3647
        %v3718 = vunpack.c.l.b16 %v3648
        %v3719 = vunpack.c.h.b16 %v3648
        %v3720 = vunpack.c.l.b16 %v3649
        %v3721 = vunpack.c.h.b16 %v3649
        %v3722 = vpack.c.b16 %v3674, %v3674
        %v3723 = vpack.c.b16 %v3675, %v3675
        %v3724 = vpack.c.b16 %v3676, %v3676
        %v3725 = vpack.c.b16 %v3677, %v3677
        %v3726 = vpack.c.b16 %v3678, %v3678
        %v3727 = vpack.c.b16 %v3679, %v3679
        %v3728 = vpack.c.b16 %v3680, %v3680
        %v3729 = vpack.c.b16 %v3681, %v3681
        %v3730 = vpack.c.b16 %v3682, %v3682
        %v3731 = vpack.c.b16 %v3683, %v3683
        %v3732 = vpack.c.b16 %v3684, %v3684
        %v3733 = vpack.c.b16 %v3685, %v3685
        %v3734 = vpack.c.b16 %v3686, %v3686
        %v3735 = vpack.c.b16 %v3687, %v3687
        %v3736 = vpack.c.b16 %v3688, %v3688
        %v3737 = vpack.c.b16 %v3689, %v3689
        %v3738 = vpack.c.b16 %v3690, %v3690
        %v3739 = vpack.c.b16 %v3691, %v3691
        %v3740 = vpack.c.b16 %v3692, %v3692
        %v3741 = vpack.c.b16 %v3693, %v3693
        %v3742 = vpack.c.b16 %v3694, %v3694
        %v3743 = vpack.c.b16 %v3695, %v3695
        %v3744 = vpack.c.b16 %v3696, %v3696
        %v3745 = vpack.c.b16 %v3697, %v3697
        %v3746 = vpack.c.b16 %v3698, %v3698
        %v3747 = vpack.c.b16 %v3699, %v3699
        %v3748 = vpack.c.b16 %v3700, %v3700
        %v3749 = vpack.c.b16 %v3701, %v3701
        %v3750 = vpack.c.b16 %v3702, %v3702
        %v3751 = vpack.c.b16 %v3703, %v3703
        %v3752 = vpack.c.b16 %v3704, %v3704
        %v3753 = vpack.c.b16 %v3705, %v3705
        %v3754 = vpack.c.b16 %v3706, %v3706
        %v3755 = vpack.c.b16 %v3707, %v3707
        %v3756 = vpack.c.b16 %v3708, %v3708
        %v3757 = vpack.c.b16 %v3709, %v3709
        %v3758 = vpack.c.b16 %v3710, %v3710
        %v3759 = vpack.c.b16 %v3711, %v3711
        %v3760 = vpack.c.b16 %v3712, %v3712
        %v3761 = vpack.c.b16 %v3713, %v3713
        %v3762 = vpack.c.b16 %v3714, %v3714
        %v3763 = vpack.c.b16 %v3715, %v3715
        %v3764 = vpack.c.b16 %v3716, %v3716
        %v3765 = vpack.c.b16 %v3717, %v3717
        %v3766 = vpack.c.b16 %v3718, %v3718
        %v3767 = vpack.c.b16 %v3719, %v3719
        %v3768 = vpack.c.b16 %v3720, %v3720
        %v3769 = vpack.c.b16 %v3721, %v3721
        %3818 = vst [vmem:[%s215] sm:$0xf] %v3722
        %3819 = vst [vmem:[%s215 + $0x4] sm:$0xf] %v3723
        %3820 = vst [vmem:[%s215 + $0x8] sm:$0xf] %v3724
        %3821 = vst [vmem:[%s215 + $0xc] sm:$0xf] %v3725
        %3822 = vst [vmem:[%s215 + $0x10] sm:$0xf] %v3726
        %3823 = vst [vmem:[%s215 + $0x14] sm:$0xf] %v3727
        %3824 = vst [vmem:[%s215 + $0x18] sm:$0xf] %v3728
        %3825 = vst [vmem:[%s215 + $0x1c] sm:$0xf] %v3729
        %3826 = vst [vmem:[%s215 + $0x20] sm:$0xf] %v3730
        %3827 = vst [vmem:[%s215 + $0x24] sm:$0xf] %v3731
        %3828 = vst [vmem:[%s215 + $0x28] sm:$0xf] %v3732
        %3829 = vst [vmem:[%s215 + $0x2c] sm:$0xf] %v3733
        %3830 = vst [vmem:[%s215 + $0x30] sm:$0xf] %v3734
        %3831 = vst [vmem:[%s215 + $0x34] sm:$0xf] %v3735
        %3832 = vst [vmem:[%s215 + $0x38] sm:$0xf] %v3736
        %3833 = vst [vmem:[%s215 + $0x3c] sm:$0xf] %v3737
        %3834 = vst [vmem:[%s215 + $0x40] sm:$0xf] %v3738
        %3835 = vst [vmem:[%s215 + $0x44] sm:$0xf] %v3739
        %3836 = vst [vmem:[%s215 + $0x48] sm:$0xf] %v3740
        %3837 = vst [vmem:[%s215 + $0x4c] sm:$0xf] %v3741
        %3838 = vst [vmem:[%s215 + $0x50] sm:$0xf] %v3742
        %3839 = vst [vmem:[%s215 + $0x54] sm:$0xf] %v3743
        %3840 = vst [vmem:[%s215 + $0x58] sm:$0xf] %v3744
        %3841 = vst [vmem:[%s215 + $0x5c] sm:$0xf] %v3745
        %3842 = vst [vmem:[%s215 + $0x60] sm:$0xf] %v3746
        %3843 = vst [vmem:[%s215 + $0x64] sm:$0xf] %v3747
        %3844 = vst [vmem:[%s215 + $0x68] sm:$0xf] %v3748
        %3845 = vst [vmem:[%s215 + $0x6c] sm:$0xf] %v3749
        %3846 = vst [vmem:[%s215 + $0x70] sm:$0xf] %v3750
        %3847 = vst [vmem:[%s215 + $0x74] sm:$0xf] %v3751
        %3848 = vst [vmem:[%s215 + $0x78] sm:$0xf] %v3752
        %3849 = vst [vmem:[%s215 + $0x7c] sm:$0xf] %v3753
        %3850 = vst [vmem:[%s215 + $0x80] sm:$0xf] %v3754
        %3851 = vst [vmem:[%s215 + $0x84] sm:$0xf] %v3755
        %3852 = vst [vmem:[%s215 + $0x88] sm:$0xf] %v3756
        %3853 = vst [vmem:[%s215 + $0x8c] sm:$0xf] %v3757
        %3854 = vst [vmem:[%s215 + $0x90] sm:$0xf] %v3758
        %3855 = vst [vmem:[%s215 + $0x94] sm:$0xf] %v3759
        %3856 = vst [vmem:[%s215 + $0x98] sm:$0xf] %v3760
        %3857 = vst [vmem:[%s215 + $0x9c] sm:$0xf] %v3761
        %3858 = vst [vmem:[%s215 + $0xa0] sm:$0xf] %v3762
        %3859 = vst [vmem:[%s215 + $0xa4] sm:$0xf] %v3763
        %3860 = vst [vmem:[%s215 + $0xa8] sm:$0xf] %v3764
        %3861 = vst [vmem:[%s215 + $0xac] sm:$0xf] %v3765
        %3862 = vst [vmem:[%s215 + $0xb0] sm:$0xf] %v3766
        %3863 = vst [vmem:[%s215 + $0xb4] sm:$0xf] %v3767
        %3864 = vst [vmem:[%s215 + $0xb8] sm:$0xf] %v3768
        %3865 = vst [vmem:[%s215 + $0xbc] sm:$0xf] %v3769
        %s3866 = sand.u32 %s97, 1
        %s3867 = scalar_lea.sflag [#allocation4], %s3866
        %s3868 = sand.u32 %s97, 1
        %s3869 = smul.addr %s3868, 192
        %s3870 = scalar_lea.vmem [#allocation8], %s3869
        // Predicated region
        $region45: #{patch_discriminator_forward.5} parent=31 // pred_check
          %p3871 = pneg %p107
        $region46: #{patch_discriminator_forward.5} parent=31 // pred_check_branch
          %3873 = sbr.rel (%p3871) target = $region48
        $region47: #{patch_discriminator_forward.5} parent=31 // pred_region
          %s3875 = ssub.s32 3072, 3072
          %3876 = vsyncadd %s3867, %s3875
          %s3877 = smul.addr %s21, 48
          %s3878 = smul.addr %s3877, 64
          %s3879 = scalar_lea.hbm %s3, %s3878
          %s3880 = sshll.u32 %s3870, 4
          %s3881 = int_to_ptr.vmem [resolvable:$true] %s3880
          %3886 = dma.vmem_to_hbm [thread:$0]  %s3881, 3072, %s3879, %s3867, 64, 64, 4
        $region48: #{patch_discriminator_forward.5} parent=31 // pred_fallthru
          _
      $region32: #{patch_discriminator_forward.5} parent=5 // pred_fallthru
        _
      %p3887 = scmp.le.s32.totalorder 2, %s16
      // Predicated region
      $region49: #{patch_discriminator_forward.5} parent=5 // pred_check
        %p3888 = pneg %p3887
      $region50: #{patch_discriminator_forward.5} parent=5 // pred_check_branch
        %3890 = sbr.rel (%p3888) target = $region52
      $region51: #{patch_discriminator_forward.5} parent=5 // pred_region
        %s3891 = ssub.s32 %s16, 2
        // Predicated region
        $region53: #{patch_discriminator_forward.5} parent=51 // pred_check
          %p3892 = pneg %p113
        $region54: #{patch_discriminator_forward.5} parent=51 // pred_check_branch
          %3894 = sbr.rel (%p3892) target = $region56
        $region55: #{patch_discriminator_forward.5} parent=51 // pred_region
          %s3895 = sand.u32 %s98, 1
          %s3896 = scalar_lea.sflag [#allocation4], %s3895
          %s3897 = sand.u32 %s98, 1
          %s3898 = smul.addr %s3897, 192
          %s3899 = scalar_lea.vmem [#allocation8], %s3898
          %3900 = dma.done %s3896, 3072
        $region56: #{patch_discriminator_forward.5} parent=51 // pred_fallthru
          _
      $region52: #{patch_discriminator_forward.5} parent=5 // pred_fallthru
        _
    $region6: #{patch_discriminator_forward.5} parent=1 // loop_footer
      %s20 = sadd.s32 1, %s16
    $region7: #{patch_discriminator_forward.5} parent=1 // loop_footer_branch
      %15 = sbr.rel target = $region3
    $region8: #{patch_discriminator_forward.5} parent=1 // loop_exit
      _
    %3901 = vsyncpa [#allocation3], 1
    %s3902 = scalar_lea.sflag [#allocation3], 1
    %3903 = vsyncpa %s3902, 1
    %3904 = vsyncpa [#allocation6], 1
    %3905 = vsyncpa [#allocation4], 1
    %s3906 = scalar_lea.sflag [#allocation4], 1
    %3907 = vsyncpa %s3906, 1

// kernel: patch_discriminator_forward.6
$region0: #{patch_discriminator_forward.6}
  #allocation0 [shape = 'u32[]', space=smem, size = 0x4, offset = 0x4, fixed_abs, tag = 'smem constant byte address 0x4 - core index']
  #allocation1 [shape = 'u32[144,128]{1,0:T(1,128)}', space=vmem, size = 0x12000, scoped, tag = 'internal scratch']
  %s0 = inlined_call_operand.hbm [shape: bf16[2,145,32], index: 0, kind: input, shape index: {}]
  %s1 = inlined_call_operand.hbm [shape: bf16[4,32,128], index: 1, kind: input, shape index: {}]
  %s2 = inlined_call_operand.hbm [shape: f32[1,128], index: 2, kind: input, shape index: {}]
  %s3 = inlined_call_operand.hbm [shape: bf16[2,128,128], index: 3, kind: output, shape index: {}]
  %s4 = sld [smem:[#allocation0]]
  $region57: #{patch_discriminator_forward.6} parent=0
    _
  %s6 = ssub.s32 1, %s4
  %s7 = scalar_select 0, %s6, %s4
  $region1: #{patch_discriminator_forward.6} parent=0
    #allocation2 [shape = 'u8[77824]{0}', space=vmem, size = 0x13000, scoped, tag = 'input window, operand 0']
    #allocation3 [shape = 's32[2]{0}', space=sflag, size = 0x8, scoped, tag = 'scoped memory for patch_discriminator_forward.6']
    #allocation4 [shape = 's32[2]{0}', space=sflag, size = 0x8, scoped, tag = 'scoped memory for patch_discriminator_forward.6']
    #allocation5 [shape = 'u8[32768]{0}', space=vmem, size = 0x8000, scoped, tag = 'input window, operand 1, single buffered']
    #allocation6 [shape = 's32[1]{0}', space=sflag, size = 0x4, scoped, tag = 'scoped memory for patch_discriminator_forward.6']
    #allocation7 [shape = 'u8[512]{0}', space=vmem, size = 0x400, scoped, tag = 'input window, operand 2, single buffered']
    #allocation8 [shape = 'u8[65536]{0}', space=vmem, size = 0x10000, scoped, tag = 'output window, operand 0']
    %8 = vsyncpa [#allocation3], 0
    %s9 = scalar_lea.sflag [#allocation3], 1
    %10 = vsyncpa %s9, 0
    %11 = vsyncpa [#allocation6], 0
    %12 = vsyncpa [#allocation4], 0
    %s13 = scalar_lea.sflag [#allocation4], 1
    %14 = vsyncpa %s13, 0
    loop: start=0, step=1, limit=4
    $region2: #{patch_discriminator_forward.6} parent=1 // loop_pre_header
      _
    $region3: #{patch_discriminator_forward.6} parent=1 // loop_header
      %s16 = sphi 0, %s20
      %p17 = scmp.ge.s32.totalorder %s16, 4
      %s26 = sphi 0, %s28
      %s29 = sphi 0, %s26
      %s30 = sphi 0, %s29
      %s46 = sphi 0, %s30
      %s50 = sphi 0, %s50
      %s52 = sphi 0, %s50
      %s53 = sphi 0, %s52
      %s67 = sphi 0, %s53
      %s71 = sphi 0, %s71
      %s73 = sphi 0, %s71
      %s74 = sphi 0, %s73
      %s88 = sphi 0, %s74
      %s94 = sphi 0, %s96
      %s97 = sphi 0, %s94
      %s98 = sphi 0, %s97
      %s114 = sphi 0, %s98
    $region4: #{patch_discriminator_forward.6} parent=1 // loop_header_branch
      %19 = sbr.rel (%p17) target = $region8
    $region5: #{patch_discriminator_forward.6} parent=1 // loop_body
      %s21 = ssub.s32 %s16, 1
      %s22 = ssub.s32 %s16, 2
      %s23 = sadd.s32 %s16, 1
      %s24 = ssub.s32 %s16, %s23
      %p25 = scmp.eq.s32.totalorder %s24, 0
      %s27 = sadd.s32 %s26, 1
      %s28 = scalar_select %p25, %s26, %s27
      %p31 = pneg %p25
      %p32 = scmp.eq.s32.totalorder %s16, 1
      %p33 = por %p31, %p32
      %p34 = scmp.ne.s32.totalorder %s26, %s29
      %p35 = scmp.eq.s32.totalorder %s16, 0
      %p36 = por %p34, %p35
      %p37 = scmp.ne.s32.totalorder %s26, %s29
      %p38 = scmp.eq.s32.totalorder %s21, 1
      %p39 = por %p37, %p38
      %p40 = scmp.ne.s32.totalorder %s29, %s30
      %p41 = scmp.eq.s32.totalorder %s21, 0
      %p42 = por %p40, %p41
      %p43 = scmp.ne.s32.totalorder %s29, %s30
      %p44 = scmp.eq.s32.totalorder %s22, 1
      %p45 = por %p43, %p44
      %p47 = scmp.ne.s32.totalorder %s30, %s46
      %p48 = scmp.eq.s32.totalorder %s22, 0
      %p49 = por %p47, %p48
      %s51 = sadd.s32 %s50, 1
      %p54 = scmp.eq.s32.totalorder %s16, 1
      %p55 = scmp.ne.s32.totalorder %s50, %s52
      %p56 = scmp.eq.s32.totalorder %s16, 0
      %p57 = por %p55, %p56
      %p58 = scmp.ne.s32.totalorder %s50, %s52
      %p59 = scmp.eq.s32.totalorder %s21, 1
      %p60 = por %p58, %p59
      %p61 = scmp.ne.s32.totalorder %s52, %s53
      %p62 = scmp.eq.s32.totalorder %s21, 0
      %p63 = por %p61, %p62
      %p64 = scmp.ne.s32.totalorder %s52, %s53
      %p65 = scmp.eq.s32.totalorder %s22, 1
      %p66 = por %p64, %p65
      %p68 = scmp.ne.s32.totalorder %s53, %s67
      %p69 = scmp.eq.s32.totalorder %s22, 0
      %p70 = por %p68, %p69
      %s72 = sadd.s32 %s71, 1
      %p75 = scmp.eq.s32.totalorder %s16, 1
      %p76 = scmp.ne.s32.totalorder %s71, %s73
      %p77 = scmp.eq.s32.totalorder %s16, 0
      %p78 = por %p76, %p77
      %p79 = scmp.ne.s32.totalorder %s71, %s73
      %p80 = scmp.eq.s32.totalorder %s21, 1
      %p81 = por %p79, %p80
      %p82 = scmp.ne.s32.totalorder %s73, %s74
      %p83 = scmp.eq.s32.totalorder %s21, 0
      %p84 = por %p82, %p83
      %p85 = scmp.ne.s32.totalorder %s73, %s74
      %p86 = scmp.eq.s32.totalorder %s22, 1
      %p87 = por %p85, %p86
      %p89 = scmp.ne.s32.totalorder %s74, %s88
      %p90 = scmp.eq.s32.totalorder %s22, 0
      %p91 = por %p89, %p90
      %s92 = ssub.s32 %s16, %s23
      %p93 = scmp.eq.s32.totalorder %s92, 0
      %s95 = sadd.s32 %s94, 1
      %s96 = scalar_select %p93, %s94, %s95
      %p99 = pneg %p93
      %p100 = scmp.eq.s32.totalorder %s16, 1
      %p101 = por %p99, %p100
      %p102 = scmp.ne.s32.totalorder %s94, %s97
      %p103 = scmp.eq.s32.totalorder %s16, 0
      %p104 = por %p102, %p103
      %p105 = scmp.ne.s32.totalorder %s94, %s97
      %p106 = scmp.eq.s32.totalorder %s21, 1
      %p107 = por %p105, %p106
      %p108 = scmp.ne.s32.totalorder %s97, %s98
      %p109 = scmp.eq.s32.totalorder %s21, 0
      %p110 = por %p108, %p109
      %p111 = scmp.ne.s32.totalorder %s97, %s98
      %p112 = scmp.eq.s32.totalorder %s22, 1
      %p113 = por %p111, %p112
      %p115 = scmp.ne.s32.totalorder %s98, %s114
      %p116 = scmp.eq.s32.totalorder %s22, 0
      %p117 = por %p115, %p116
      %p118 = scmp.le.s32.totalorder 1, %s16
      %p119 = scmp.lt.s32.totalorder %s16, 3
      %p120 = pnand %p118, %p119
      %p121 = pneg %p120
      // Predicated region
      $region9: #{patch_discriminator_forward.6} parent=5 // pred_check
        _
      $region10: #{patch_discriminator_forward.6} parent=5 // pred_check_branch
        %123 = sbr.rel (%p120) target = $region12
      $region11: #{patch_discriminator_forward.6} parent=5 // pred_region
        %s124 = ssub.s32 %s16, 1
        // Predicated region
        $region13: #{patch_discriminator_forward.6} parent=11 // pred_check
          %p125 = pneg %p63
        $region14: #{patch_discriminator_forward.6} parent=11 // pred_check_branch
          %127 = sbr.rel (%p125) target = $region16
        $region15: #{patch_discriminator_forward.6} parent=11 // pred_region
          %s129 = ssub.s32 1024, 1024
          %130 = vsyncadd [#allocation6], %s129
          %s131 = sshll.u32 [#allocation5], 4
          %s132 = int_to_ptr.vmem [resolvable:$true] %s131
          %137 = dma.hbm_to_vmem [thread:$0]  %s1, 1024, %s132, [#allocation6], 64, 64, 4
        $region16: #{patch_discriminator_forward.6} parent=11 // pred_fallthru
          _
        // Predicated region
        $region17: #{patch_discriminator_forward.6} parent=11 // pred_check
          %p138 = pneg %p84
        $region18: #{patch_discriminator_forward.6} parent=11 // pred_check_branch
          %140 = sbr.rel (%p138) target = $region20
        $region19: #{patch_discriminator_forward.6} parent=11 // pred_region
          %s142 = ssub.s32 16, 16
          %143 = vsyncadd [#allocation6], %s142
          %s145 = sshll.u32 [#allocation7], 4
          %s146 = int_to_ptr.vmem [resolvable:$true] %s145
          %148 = dma.hbm_to_vmem [thread:$0]  %s2, 16, %s146, [#allocation6]
        $region20: #{patch_discriminator_forward.6} parent=11 // pred_fallthru
          _
      $region12: #{patch_discriminator_forward.6} parent=5 // pred_fallthru
        _
      %p149 = scmp.lt.s32.totalorder %s16, 2
      // Predicated region
      $region21: #{patch_discriminator_forward.6} parent=5 // pred_check
        %p150 = pneg %p149
      $region22: #{patch_discriminator_forward.6} parent=5 // pred_check_branch
        %152 = sbr.rel (%p150) target = $region24
      $region23: #{patch_discriminator_forward.6} parent=5 // pred_region
        // Predicated region
        $region25: #{patch_discriminator_forward.6} parent=23 // pred_check
          %p153 = pneg %p36
        $region26: #{patch_discriminator_forward.6} parent=23 // pred_check_branch
          %155 = sbr.rel (%p153) target = $region28
        $region27: #{patch_discriminator_forward.6} parent=23 // pred_region
          %s156 = sand.u32 %s26, 1
          %s157 = scalar_lea.sflag [#allocation3], %s156
          %s158 = sand.u32 %s26, 1
          %s159 = smul.addr %s158, 76
          %s160 = scalar_lea.vmem [#allocation2], %s159
          %s162 = ssub.s32 1216, 1216
          %163 = vsyncadd %s157, %s162
          %s164 = smul.addr %s16, 19
          %s165 = smul.addr %s164, 64
          %s166 = scalar_lea.hbm %s0, %s165
          %s167 = sshll.u32 %s160, 4
          %s168 = int_to_ptr.vmem [resolvable:$true] %s167
          %173 = dma.hbm_to_vmem [thread:$0]  %s166, 1216, %s168, %s157, 64, 64, 4
        $region28: #{patch_discriminator_forward.6} parent=23 // pred_fallthru
          _
      $region24: #{patch_discriminator_forward.6} parent=5 // pred_fallthru
        _
      %p174 = scmp.le.s32.totalorder 1, %s16
      %p175 = scmp.lt.s32.totalorder %s16, 3
      %p176 = pnand %p174, %p175
      %p177 = pneg %p176
      // Predicated region
      $region29: #{patch_discriminator_forward.6} parent=5 // pred_check
        _
      $region30: #{patch_discriminator_forward.6} parent=5 // pred_check_branch
        %179 = sbr.rel (%p176) target = $region32
      $region31: #{patch_discriminator_forward.6} parent=5 // pred_region
        %s180 = ssub.s32 %s16, 1
        %s181 = sand.u32 %s29, 1
        %s182 = scalar_lea.sflag [#allocation3], %s181
        %s183 = sand.u32 %s29, 1
        %s184 = smul.addr %s183, 76
        %s185 = scalar_lea.vmem [#allocation2], %s184
        // Predicated region
        $region33: #{patch_discriminator_forward.6} parent=31 // pred_check
          %p186 = pneg %p42
        $region34: #{patch_discriminator_forward.6} parent=31 // pred_check_branch
          %188 = sbr.rel (%p186) target = $region36
        $region35: #{patch_discriminator_forward.6} parent=31 // pred_region
          %189 = dma.done %s182, 1216
        $region36: #{patch_discriminator_forward.6} parent=31 // pred_fallthru
          _
        // Predicated region
        $region37: #{patch_discriminator_forward.6} parent=31 // pred_check
          %p190 = pneg %p63
        $region38: #{patch_discriminator_forward.6} parent=31 // pred_check_branch
          %192 = sbr.rel (%p190) target = $region40
        $region39: #{patch_discriminator_forward.6} parent=31 // pred_region
          %193 = dma.done [#allocation6], 1024
        $region40: #{patch_discriminator_forward.6} parent=31 // pred_fallthru
          _
        // Predicated region
        $region41: #{patch_discriminator_forward.6} parent=31 // pred_check
          %p194 = pneg %p84
        $region42: #{patch_discriminator_forward.6} parent=31 // pred_check_branch
          %196 = sbr.rel (%p194) target = $region44
        $region43: #{patch_discriminator_forward.6} parent=31 // pred_region
          %197 = dma.done [#allocation6], 16
        $region44: #{patch_discriminator_forward.6} parent=31 // pred_fallthru
          _
        %s198 = sand.u32 %s29, 1
        %s199 = scalar_lea.sflag [#allocation3], %s198
        %s200 = sand.u32 %s29, 1
        %s201 = smul.addr %s200, 76
        %s202 = scalar_lea.vmem [#allocation2], %s201
        %p203 = pneg %p42
        %p204 = pneg %p39
        %p205 = pneg %p63
        %p206 = pneg %p60
        %p207 = pneg %p84
        %p208 = pneg %p81
        %p209 = pneg %p110
        %p210 = pneg %p107
        %s211 = sand.u32 %s97, 1
        %s212 = scalar_lea.sflag [#allocation4], %s211
        %s213 = sand.u32 %s97, 1
        %s214 = smul.addr %s213, 64
        %s215 = scalar_lea.vmem [#allocation8], %s214
        %v217 = vld [vmem:[%s185] sm:$0xf]
        %v218 = vld [vmem:[%s185 + $0x4] sm:$0xf]
        %v219 = vld [vmem:[%s185 + $0x8] sm:$0xf]
        %v220 = vld [vmem:[%s185 + $0xc] sm:$0xf]
        %v221 = vld [vmem:[%s185 + $0x10] sm:$0xf]
        %v222 = vld [vmem:[%s185 + $0x14] sm:$0xf]
        %v223 = vld [vmem:[%s185 + $0x18] sm:$0xf]
        %v224 = vld [vmem:[%s185 + $0x1c] sm:$0xf]
        %v225 = vld [vmem:[%s185 + $0x20] sm:$0xf]
        %v226 = vld [vmem:[%s185 + $0x24] sm:$0xf]
        %v227 = vld [vmem:[%s185 + $0x28] sm:$0xf]
        %v228 = vld [vmem:[%s185 + $0x2c] sm:$0xf]
        %v229 = vld [vmem:[%s185 + $0x30] sm:$0xf]
        %v230 = vld [vmem:[%s185 + $0x34] sm:$0xf]
        %v231 = vld [vmem:[%s185 + $0x38] sm:$0xf]
        %v232 = vld [vmem:[%s185 + $0x3c] sm:$0xf]
        %v233 = vld [vmem:[#allocation5] sm:$0xf]
        %v234 = vld [vmem:[#allocation5 + $0x4] sm:$0xf]
        %v235 = vld [vmem:[#allocation5 + $0x8] sm:$0xf]
        %v236 = vld [vmem:[#allocation5 + $0xc] sm:$0xf]
        %v237 = vld [vmem:[%s185 + $0x40] sm:$0x1]
        %s238 = scalar_lea.vmem [#allocation5], 16
        %v239 = vld [vmem:[%s238] sm:$0xf]
        %v240 = vld [vmem:[%s238 + $0x4] sm:$0xf]
        %v241 = vld [vmem:[%s238 + $0x8] sm:$0xf]
        %v242 = vld [vmem:[%s238 + $0xc] sm:$0xf]
        %v260 = vunpack.c.l.b16 %v217
        %v261 = vunpack.c.l.b16 %v218
        %v262 = vunpack.c.l.b16 %v219
        %v263 = vunpack.c.l.b16 %v220
        %v264 = vunpack.c.l.b16 %v221
        %v265 = vunpack.c.l.b16 %v222
        %v266 = vunpack.c.l.b16 %v223
        %v267 = vunpack.c.l.b16 %v224
        %v268 = vunpack.c.l.b16 %v225
        %v269 = vunpack.c.l.b16 %v226
        %v270 = vunpack.c.l.b16 %v227
        %v271 = vunpack.c.l.b16 %v228
        %v272 = vunpack.c.l.b16 %v229
        %v273 = vunpack.c.l.b16 %v230
        %v274 = vunpack.c.l.b16 %v231
        %v275 = vunpack.c.l.b16 %v232
        %v276 = vunpack.c.l.b16 %v237
        %v277 = vpack.c.b16 %v261, %v260
        %v278 = vpack.c.b16 %v263, %v262
        %v279 = vpack.c.b16 %v265, %v264
        %v280 = vpack.c.b16 %v267, %v266
        %v281 = vpack.c.b16 %v269, %v268
        %v282 = vpack.c.b16 %v271, %v270
        %v283 = vpack.c.b16 %v273, %v272
        %v284 = vpack.c.b16 %v275, %v274
        %v285 = vpack.c.b16 %v276, %v276
        %vm286 = vsmask.f32 7424
        %v288 = vshrl.u32 %v277, 16
        %v290 = vshll.u32 %v277, 16
        %v292 = vrot.slane %v290, 1
        %v293 = vor.u32 %v288, %v292
        %v295 = vshll.u32 %v278, 16
        %v297 = vrot.slane %v295, 1
        %v298 = vsel %vm286, %v293, %v297
        %v299 = vshrl.u32 %v278, 16
        %v301 = vor.u32 %v299, %v297
        %v303 = vshll.u32 %v279, 16
        %v305 = vrot.slane %v303, 1
        %v306 = vsel %vm286, %v301, %v305
        %v307 = vshrl.u32 %v279, 16
        %v309 = vor.u32 %v307, %v305
        %v311 = vshll.u32 %v280, 16
        %v313 = vrot.slane %v311, 1
        %v314 = vsel %vm286, %v309, %v313
        %v315 = vshrl.u32 %v280, 16
        %v317 = vor.u32 %v315, %v313
        %v319 = vshll.u32 %v281, 16
        %v321 = vrot.slane %v319, 1
        %v322 = vsel %vm286, %v317, %v321
        %v323 = vshrl.u32 %v281, 16
        %v325 = vor.u32 %v323, %v321
        %v327 = vshll.u32 %v282, 16
        %v329 = vrot.slane %v327, 1
        %v330 = vsel %vm286, %v325, %v329
        %v331 = vshrl.u32 %v282, 16
        %v333 = vor.u32 %v331, %v329
        %v335 = vshll.u32 %v283, 16
        %v337 = vrot.slane %v335, 1
        %v338 = vsel %vm286, %v333, %v337
        %v339 = vshrl.u32 %v283, 16
        %v341 = vor.u32 %v339, %v337
        %v343 = vshll.u32 %v284, 16
        %v345 = vrot.slane %v343, 1
        %v346 = vsel %vm286, %v341, %v345
        %v347 = vshrl.u32 %v284, 16
        %v349 = vor.u32 %v347, %v345
        %v351 = vshll.u32 %v285, 16
        %v353 = vrot.slane %v351, 1
        %v354 = vsel %vm286, %v349, %v353
        %v359 = vunpack.c.l.b16 %v239
        %v360 = vunpack.c.l.b16 %v240
        %v361 = vunpack.c.l.b16 %v241
        %v362 = vunpack.c.l.b16 %v242
        %v363 = vpack.c.b16 %v360, %v359
        %v364 = vpack.c.b16 %v362, %v361
        %vm367 = vcmask 261120
        %v369 = vsel %vm367, %v298, 0
        %v372 = vsel %vm367, %v306, 0
        %v375 = vsel %vm367, %v314, 0
        %v378 = vsel %vm367, %v322, 0
        %v381 = vsel %vm367, %v330, 0
        %v384 = vsel %vm367, %v338, 0
        %v387 = vsel %vm367, %v346, 0
        %v390 = vsel %vm367, %v354, 0
        %392 = vmatprep.subr.bf16.mxu0 0
        %393 = vmatpush1.bf16.msra.mxu0 %v363
        %394 = vmatprep.subr.bf16.mxu0 0
        %395 = vmatpush1.bf16.msra.mxu0 %v364
        %396 = vmatprep.subr.bf16.mxu0 0
        %397 = vmatpush1.bf16.msra.mxu0 0
        %398 = vmatprep.subr.bf16.mxu0 0
        %399 = vmatpush1.bf16.msra.mxu0 0
        %400 = vmatprep.subr.bf16.mxu0 0
        %401 = vmatpush1.bf16.msra.mxu0 0
        %402 = vmatprep.subr.bf16.mxu0 0
        %403 = vmatpush1.bf16.msra.mxu0 0
        %404 = vmatprep.subr.bf16.mxu0 0
        %405 = vmatpush1.bf16.msra.mxu0 0
        %406 = vmatprep.subr.bf16.mxu0 0
        %407 = vmatpush1.bf16.msra.mxu0 0
        %408 = vmatprep.subr.bf16.mxu0 0
        %409 = vmatpush1.bf16.msra.mxu0 0
        %410 = vmatprep.subr.bf16.mxu0 0
        %411 = vmatpush1.bf16.msra.mxu0 0
        %412 = vmatprep.subr.bf16.mxu0 0
        %413 = vmatpush1.bf16.msra.mxu0 0
        %414 = vmatprep.subr.bf16.mxu0 0
        %415 = vmatpush1.bf16.msra.mxu0 0
        %416 = vmatprep.subr.bf16.mxu0 0
        %417 = vmatpush1.bf16.msra.mxu0 0
        %418 = vmatprep.subr.bf16.mxu0 0
        %419 = vmatpush1.bf16.msra.mxu0 0
        %420 = vmatprep.subr.bf16.mxu0 0
        %421 = vmatpush1.bf16.msra.mxu0 0
        %422 = vmatprep.subr.bf16.mxu0 0
        %423 = vmatpush1.bf16.msra.mxu0 0
        %424 = vmatprep.mubr.bf16.mxu0 0
        %425 = vmatmul.mubr.bf16.gmra.mrb[0].mxu0 %v369
        %v426 = vpop.f32.mrb[0].mxu0
        %v427 = vadd.f32 0.0, %v426
        %v428 = vpop.f32.mrb[0].mxu0
        %v429 = vpop.f32.mrb[0].mxu0
        %v430 = vadd.f32 0.0, %v429
        %v431 = vpop.f32.mrb[0].mxu0
        %432 = vmatprep.mubr.bf16.mxu0 0
        %433 = vmatmul.mubr.bf16.gmra.mrb[0].mxu0 %v372
        %v434 = vpop.f32.mrb[0].mxu0
        %v435 = vadd.f32 0.0, %v434
        %v436 = vpop.f32.mrb[0].mxu0
        %v437 = vpop.f32.mrb[0].mxu0
        %v438 = vadd.f32 0.0, %v437
        %v439 = vpop.f32.mrb[0].mxu0
        %440 = vmatprep.mubr.bf16.mxu0 0
        %441 = vmatmul.mubr.bf16.gmra.mrb[0].mxu0 %v375
        %v442 = vpop.f32.mrb[0].mxu0
        %v443 = vadd.f32 0.0, %v442
        %v444 = vpop.f32.mrb[0].mxu0
        %v445 = vpop.f32.mrb[0].mxu0
        %v446 = vadd.f32 0.0, %v445
        %v447 = vpop.f32.mrb[0].mxu0
        %448 = vmatprep.mubr.bf16.mxu0 0
        %449 = vmatmul.mubr.bf16.gmra.mrb[0].mxu0 %v378
        %v450 = vpop.f32.mrb[0].mxu0
        %v451 = vadd.f32 0.0, %v450
        %v452 = vpop.f32.mrb[0].mxu0
        %v453 = vpop.f32.mrb[0].mxu0
        %v454 = vadd.f32 0.0, %v453
        %v455 = vpop.f32.mrb[0].mxu0
        %456 = vmatprep.mubr.bf16.mxu0 0
        %457 = vmatmul.mubr.bf16.gmra.mrb[0].mxu0 %v381
        %v458 = vpop.f32.mrb[0].mxu0
        %v459 = vadd.f32 0.0, %v458
        %v460 = vpop.f32.mrb[0].mxu0
        %v461 = vpop.f32.mrb[0].mxu0
        %v462 = vadd.f32 0.0, %v461
        %v463 = vpop.f32.mrb[0].mxu0
        %464 = vmatprep.mubr.bf16.mxu0 0
        %465 = vmatmul.mubr.bf16.gmra.mrb[0].mxu0 %v384
        %v466 = vpop.f32.mrb[0].mxu0
        %v467 = vadd.f32 0.0, %v466
        %v468 = vpop.f32.mrb[0].mxu0
        %v469 = vpop.f32.mrb[0].mxu0
        %v470 = vadd.f32 0.0, %v469
        %v471 = vpop.f32.mrb[0].mxu0
        %472 = vmatprep.mubr.bf16.mxu0 0
        %473 = vmatmul.mubr.bf16.gmra.mrb[0].mxu0 %v387
        %v474 = vpop.f32.mrb[0].mxu0
        %v475 = vadd.f32 0.0, %v474
        %v476 = vpop.f32.mrb[0].mxu0
        %v477 = vpop.f32.mrb[0].mxu0
        %v478 = vadd.f32 0.0, %v477
        %v479 = vpop.f32.mrb[0].mxu0
        %480 = vmatprep.mubr.bf16.mxu0 0
        %481 = vmatmul.mubr.bf16.gmra.mrb[0].mxu0 %v390
        %v482 = vpop.f32.mrb[0].mxu0
        %v483 = vadd.f32 0.0, %v482
        %v484 = vpop.f32.mrb[0].mxu0
        %v485 = vpop.f32.mrb[0].mxu0
        %v486 = vadd.f32 0.0, %v485
        %v487 = vpop.f32.mrb[0].mxu0
        %488 = vdwg.mxu0
        %v493 = vunpack.c.l.b16 %v233
        %v494 = vunpack.c.l.b16 %v234
        %v495 = vunpack.c.l.b16 %v235
        %v496 = vunpack.c.l.b16 %v236
        %v497 = vpack.c.b16 %v494, %v493
        %v498 = vpack.c.b16 %v496, %v495
        %v501 = vsel %vm367, %v277, 0
        %v503 = vsel %vm367, %v278, 0
        %v505 = vsel %vm367, %v279, 0
        %v507 = vsel %vm367, %v280, 0
        %v509 = vsel %vm367, %v281, 0
        %v511 = vsel %vm367, %v282, 0
        %v513 = vsel %vm367, %v283, 0
        %v515 = vsel %vm367, %v284, 0
        %517 = vmatprep.subr.bf16.mxu0 0
        %518 = vmatpush1.bf16.msra.mxu0 %v497
        %519 = vmatprep.subr.bf16.mxu0 0
        %520 = vmatpush1.bf16.msra.mxu0 %v498
        %521 = vmatprep.subr.bf16.mxu0 0
        %522 = vmatpush1.bf16.msra.mxu0 0
        %523 = vmatprep.subr.bf16.mxu0 0
        %524 = vmatpush1.bf16.msra.mxu0 0
        %525 = vmatprep.subr.bf16.mxu0 0
        %526 = vmatpush1.bf16.msra.mxu0 0
        %527 = vmatprep.subr.bf16.mxu0 0
        %528 = vmatpush1.bf16.msra.mxu0 0
        %529 = vmatprep.subr.bf16.mxu0 0
        %530 = vmatpush1.bf16.msra.mxu0 0
        %531 = vmatprep.subr.bf16.mxu0 0
        %532 = vmatpush1.bf16.msra.mxu0 0
        %533 = vmatprep.subr.bf16.mxu0 0
        %534 = vmatpush1.bf16.msra.mxu0 0
        %535 = vmatprep.subr.bf16.mxu0 0
        %536 = vmatpush1.bf16.msra.mxu0 0
        %537 = vmatprep.subr.bf16.mxu0 0
        %538 = vmatpush1.bf16.msra.mxu0 0
        %539 = vmatprep.subr.bf16.mxu0 0
        %540 = vmatpush1.bf16.msra.mxu0 0
        %541 = vmatprep.subr.bf16.mxu0 0
        %542 = vmatpush1.bf16.msra.mxu0 0
        %543 = vmatprep.subr.bf16.mxu0 0
        %544 = vmatpush1.bf16.msra.mxu0 0
        %545 = vmatprep.subr.bf16.mxu0 0
        %546 = vmatpush1.bf16.msra.mxu0 0
        %547 = vmatprep.subr.bf16.mxu0 0
        %548 = vmatpush1.bf16.msra.mxu0 0
        %549 = vmatprep.mubr.bf16.mxu0 0
        %550 = vmatmul.mubr.bf16.gmra.mrb[0].mxu0 %v501
        %v551 = vpop.f32.mrb[0].mxu0
        %v552 = vadd.f32 %v427, %v551
        %v553 = vpop.f32.mrb[0].mxu0
        %v554 = vpop.f32.mrb[0].mxu0
        %v555 = vadd.f32 %v430, %v554
        %v556 = vpop.f32.mrb[0].mxu0
        %557 = vmatprep.mubr.bf16.mxu0 0
        %558 = vmatmul.mubr.bf16.gmra.mrb[0].mxu0 %v503
        %v559 = vpop.f32.mrb[0].mxu0
        %v560 = vadd.f32 %v435, %v559
        %v561 = vpop.f32.mrb[0].mxu0
        %v562 = vpop.f32.mrb[0].mxu0
        %v563 = vadd.f32 %v438, %v562
        %v564 = vpop.f32.mrb[0].mxu0
        %565 = vmatprep.mubr.bf16.mxu0 0
        %566 = vmatmul.mubr.bf16.gmra.mrb[0].mxu0 %v505
        %v567 = vpop.f32.mrb[0].mxu0
        %v568 = vadd.f32 %v443, %v567
        %v569 = vpop.f32.mrb[0].mxu0
        %v570 = vpop.f32.mrb[0].mxu0
        %v571 = vadd.f32 %v446, %v570
        %v572 = vpop.f32.mrb[0].mxu0
        %573 = vmatprep.mubr.bf16.mxu0 0
        %574 = vmatmul.mubr.bf16.gmra.mrb[0].mxu0 %v507
        %v575 = vpop.f32.mrb[0].mxu0
        %v576 = vadd.f32 %v451, %v575
        %v577 = vpop.f32.mrb[0].mxu0
        %v578 = vpop.f32.mrb[0].mxu0
        %v579 = vadd.f32 %v454, %v578
        %v580 = vpop.f32.mrb[0].mxu0
        %581 = vmatprep.mubr.bf16.mxu0 0
        %582 = vmatmul.mubr.bf16.gmra.mrb[0].mxu0 %v509
        %v583 = vpop.f32.mrb[0].mxu0
        %v584 = vadd.f32 %v459, %v583
        %v585 = vpop.f32.mrb[0].mxu0
        %v586 = vpop.f32.mrb[0].mxu0
        %v587 = vadd.f32 %v462, %v586
        %v588 = vpop.f32.mrb[0].mxu0
        %589 = vmatprep.mubr.bf16.mxu0 0
        %590 = vmatmul.mubr.bf16.gmra.mrb[0].mxu0 %v511
        %v591 = vpop.f32.mrb[0].mxu0
        %v592 = vadd.f32 %v467, %v591
        %v593 = vpop.f32.mrb[0].mxu0
        %v594 = vpop.f32.mrb[0].mxu0
        %v595 = vadd.f32 %v470, %v594
        %v596 = vpop.f32.mrb[0].mxu0
        %597 = vmatprep.mubr.bf16.mxu0 0
        %598 = vmatmul.mubr.bf16.gmra.mrb[0].mxu0 %v513
        %v599 = vpop.f32.mrb[0].mxu0
        %v600 = vadd.f32 %v475, %v599
        %v601 = vpop.f32.mrb[0].mxu0
        %v602 = vpop.f32.mrb[0].mxu0
        %v603 = vadd.f32 %v478, %v602
        %v604 = vpop.f32.mrb[0].mxu0
        %605 = vmatprep.mubr.bf16.mxu0 0
        %606 = vmatmul.mubr.bf16.gmra.mrb[0].mxu0 %v515
        %v607 = vpop.f32.mrb[0].mxu0
        %v608 = vadd.f32 %v483, %v607
        %v609 = vpop.f32.mrb[0].mxu0
        %v610 = vpop.f32.mrb[0].mxu0
        %v611 = vadd.f32 %v486, %v610
        %v612 = vpop.f32.mrb[0].mxu0
        %613 = vdwg.mxu0
        %v614 = vld [vmem:[%s185 + $0x8] sm:$0xf]
        %v615 = vld [vmem:[%s185 + $0xc] sm:$0xf]
        %v616 = vld [vmem:[%s185 + $0x10] sm:$0xf]
        %v617 = vld [vmem:[%s185 + $0x14] sm:$0xf]
        %v618 = vld [vmem:[%s185 + $0x18] sm:$0xf]
        %v619 = vld [vmem:[%s185 + $0x1c] sm:$0xf]
        %v620 = vld [vmem:[%s185 + $0x20] sm:$0xf]
        %v621 = vld [vmem:[%s185 + $0x24] sm:$0xf]
        %v622 = vld [vmem:[%s185 + $0x28] sm:$0xf]
        %v623 = vld [vmem:[%s185 + $0x2c] sm:$0xf]
        %v624 = vld [vmem:[%s185 + $0x30] sm:$0xf]
        %v625 = vld [vmem:[%s185 + $0x34] sm:$0xf]
        %v626 = vld [vmem:[%s185 + $0x38] sm:$0xf]
        %v627 = vld [vmem:[%s185 + $0x3c] sm:$0xf]
        %v628 = vld [vmem:[%s185 + $0x40] sm:$0xf]
        %v629 = vld [vmem:[%s185 + $0x44] sm:$0xf]
        %s630 = scalar_lea.vmem [#allocation5], 32
        %v631 = vld [vmem:[%s630] sm:$0xf]
        %v632 = vld [vmem:[%s630 + $0x4] sm:$0xf]
        %v633 = vld [vmem:[%s630 + $0x8] sm:$0xf]
        %v634 = vld [vmem:[%s630 + $0xc] sm:$0xf]
        %v651 = vunpack.c.l.b16 %v614
        %v652 = vunpack.c.l.b16 %v615
        %v653 = vunpack.c.l.b16 %v616
        %v654 = vunpack.c.l.b16 %v617
        %v655 = vunpack.c.l.b16 %v618
        %v656 = vunpack.c.l.b16 %v619
        %v657 = vunpack.c.l.b16 %v620
        %v658 = vunpack.c.l.b16 %v621
        %v659 = vunpack.c.l.b16 %v622
        %v660 = vunpack.c.l.b16 %v623
        %v661 = vunpack.c.l.b16 %v624
        %v662 = vunpack.c.l.b16 %v625
        %v663 = vunpack.c.l.b16 %v626
        %v664 = vunpack.c.l.b16 %v627
        %v665 = vunpack.c.l.b16 %v628
        %v666 = vunpack.c.l.b16 %v629
        %v667 = vpack.c.b16 %v652, %v651
        %v668 = vpack.c.b16 %v654, %v653
        %v669 = vpack.c.b16 %v656, %v655
        %v670 = vpack.c.b16 %v658, %v657
        %v671 = vpack.c.b16 %v660, %v659
        %v672 = vpack.c.b16 %v662, %v661
        %v673 = vpack.c.b16 %v664, %v663
        %v674 = vpack.c.b16 %v666, %v665
        %v679 = vunpack.c.l.b16 %v631
        %v680 = vunpack.c.l.b16 %v632
        %v681 = vunpack.c.l.b16 %v633
        %v682 = vunpack.c.l.b16 %v634
        %v683 = vpack.c.b16 %v680, %v679
        %v684 = vpack.c.b16 %v682, %v681
        %v688 = vsel %vm367, %v667, 0
        %v691 = vsel %vm367, %v668, 0
        %v694 = vsel %vm367, %v669, 0
        %v697 = vsel %vm367, %v670, 0
        %v700 = vsel %vm367, %v671, 0
        %v703 = vsel %vm367, %v672, 0
        %v706 = vsel %vm367, %v673, 0
        %v709 = vsel %vm367, %v674, 0
        %711 = vmatprep.subr.bf16.mxu0 0
        %712 = vmatpush1.bf16.msra.mxu0 %v683
        %713 = vmatprep.subr.bf16.mxu0 0
        %714 = vmatpush1.bf16.msra.mxu0 %v684
        %715 = vmatprep.subr.bf16.mxu0 0
        %716 = vmatpush1.bf16.msra.mxu0 0
        %717 = vmatprep.subr.bf16.mxu0 0
        %718 = vmatpush1.bf16.msra.mxu0 0
        %719 = vmatprep.subr.bf16.mxu0 0
        %720 = vmatpush1.bf16.msra.mxu0 0
        %721 = vmatprep.subr.bf16.mxu0 0
        %722 = vmatpush1.bf16.msra.mxu0 0
        %723 = vmatprep.subr.bf16.mxu0 0
        %724 = vmatpush1.bf16.msra.mxu0 0
        %725 = vmatprep.subr.bf16.mxu0 0
        %726 = vmatpush1.bf16.msra.mxu0 0
        %727 = vmatprep.subr.bf16.mxu0 0
        %728 = vmatpush1.bf16.msra.mxu0 0
        %729 = vmatprep.subr.bf16.mxu0 0
        %730 = vmatpush1.bf16.msra.mxu0 0
        %731 = vmatprep.subr.bf16.mxu0 0
        %732 = vmatpush1.bf16.msra.mxu0 0
        %733 = vmatprep.subr.bf16.mxu0 0
        %734 = vmatpush1.bf16.msra.mxu0 0
        %735 = vmatprep.subr.bf16.mxu0 0
        %736 = vmatpush1.bf16.msra.mxu0 0
        %737 = vmatprep.subr.bf16.mxu0 0
        %738 = vmatpush1.bf16.msra.mxu0 0
        %739 = vmatprep.subr.bf16.mxu0 0
        %740 = vmatpush1.bf16.msra.mxu0 0
        %741 = vmatprep.subr.bf16.mxu0 0
        %742 = vmatpush1.bf16.msra.mxu0 0
        %743 = vmatprep.mubr.bf16.mxu0 0
        %744 = vmatmul.mubr.bf16.gmra.mrb[0].mxu0 %v688
        %v745 = vpop.f32.mrb[0].mxu0
        %v746 = vadd.f32 0.0, %v745
        %v747 = vpop.f32.mrb[0].mxu0
        %v748 = vpop.f32.mrb[0].mxu0
        %v749 = vadd.f32 0.0, %v748
        %v750 = vpop.f32.mrb[0].mxu0
        %751 = vmatprep.mubr.bf16.mxu0 0
        %752 = vmatmul.mubr.bf16.gmra.mrb[0].mxu0 %v691
        %v753 = vpop.f32.mrb[0].mxu0
        %v754 = vadd.f32 0.0, %v753
        %v755 = vpop.f32.mrb[0].mxu0
        %v756 = vpop.f32.mrb[0].mxu0
        %v757 = vadd.f32 0.0, %v756
        %v758 = vpop.f32.mrb[0].mxu0
        %759 = vmatprep.mubr.bf16.mxu0 0
        %760 = vmatmul.mubr.bf16.gmra.mrb[0].mxu0 %v694
        %v761 = vpop.f32.mrb[0].mxu0
        %v762 = vadd.f32 0.0, %v761
        %v763 = vpop.f32.mrb[0].mxu0
        %v764 = vpop.f32.mrb[0].mxu0
        %v765 = vadd.f32 0.0, %v764
        %v766 = vpop.f32.mrb[0].mxu0
        %767 = vmatprep.mubr.bf16.mxu0 0
        %768 = vmatmul.mubr.bf16.gmra.mrb[0].mxu0 %v697
        %v769 = vpop.f32.mrb[0].mxu0
        %v770 = vadd.f32 0.0, %v769
        %v771 = vpop.f32.mrb[0].mxu0
        %v772 = vpop.f32.mrb[0].mxu0
        %v773 = vadd.f32 0.0, %v772
        %v774 = vpop.f32.mrb[0].mxu0
        %775 = vmatprep.mubr.bf16.mxu0 0
        %776 = vmatmul.mubr.bf16.gmra.mrb[0].mxu0 %v700
        %v777 = vpop.f32.mrb[0].mxu0
        %v778 = vadd.f32 0.0, %v777
        %v779 = vpop.f32.mrb[0].mxu0
        %v780 = vpop.f32.mrb[0].mxu0
        %v781 = vadd.f32 0.0, %v780
        %v782 = vpop.f32.mrb[0].mxu0
        %783 = vmatprep.mubr.bf16.mxu0 0
        %784 = vmatmul.mubr.bf16.gmra.mrb[0].mxu0 %v703
        %v785 = vpop.f32.mrb[0].mxu0
        %v786 = vadd.f32 0.0, %v785
        %v787 = vpop.f32.mrb[0].mxu0
        %v788 = vpop.f32.mrb[0].mxu0
        %v789 = vadd.f32 0.0, %v788
        %v790 = vpop.f32.mrb[0].mxu0
        %791 = vmatprep.mubr.bf16.mxu0 0
        %792 = vmatmul.mubr.bf16.gmra.mrb[0].mxu0 %v706
        %v793 = vpop.f32.mrb[0].mxu0
        %v794 = vadd.f32 0.0, %v793
        %v795 = vpop.f32.mrb[0].mxu0
        %v796 = vpop.f32.mrb[0].mxu0
        %v797 = vadd.f32 0.0, %v796
        %v798 = vpop.f32.mrb[0].mxu0
        %799 = vmatprep.mubr.bf16.mxu0 0
        %800 = vmatmul.mubr.bf16.gmra.mrb[0].mxu0 %v709
        %v801 = vpop.f32.mrb[0].mxu0
        %v802 = vadd.f32 0.0, %v801
        %v803 = vpop.f32.mrb[0].mxu0
        %v804 = vpop.f32.mrb[0].mxu0
        %v805 = vadd.f32 0.0, %v804
        %v806 = vpop.f32.mrb[0].mxu0
        %807 = vdwg.mxu0
        %v808 = vadd.f32 %v552, %v746
        %v809 = vadd.f32 %v555, %v749
        %v810 = vadd.f32 %v560, %v754
        %v811 = vadd.f32 %v563, %v757
        %v812 = vadd.f32 %v568, %v762
        %v813 = vadd.f32 %v571, %v765
        %v814 = vadd.f32 %v576, %v770
        %v815 = vadd.f32 %v579, %v773
        %v816 = vadd.f32 %v584, %v778
        %v817 = vadd.f32 %v587, %v781
        %v818 = vadd.f32 %v592, %v786
        %v819 = vadd.f32 %v595, %v789
        %v820 = vadd.f32 %v600, %v794
        %v821 = vadd.f32 %v603, %v797
        %v822 = vadd.f32 %v608, %v802
        %v823 = vadd.f32 %v611, %v805
        %v824 = vld [vmem:[%s185 + $0x8] sm:$0xf]
        %v825 = vld [vmem:[%s185 + $0xc] sm:$0xf]
        %v826 = vld [vmem:[%s185 + $0x10] sm:$0xf]
        %v827 = vld [vmem:[%s185 + $0x14] sm:$0xf]
        %v828 = vld [vmem:[%s185 + $0x18] sm:$0xf]
        %v829 = vld [vmem:[%s185 + $0x1c] sm:$0xf]
        %v830 = vld [vmem:[%s185 + $0x20] sm:$0xf]
        %v831 = vld [vmem:[%s185 + $0x24] sm:$0xf]
        %v832 = vld [vmem:[%s185 + $0x28] sm:$0xf]
        %v833 = vld [vmem:[%s185 + $0x2c] sm:$0xf]
        %v834 = vld [vmem:[%s185 + $0x30] sm:$0xf]
        %v835 = vld [vmem:[%s185 + $0x34] sm:$0xf]
        %v836 = vld [vmem:[%s185 + $0x38] sm:$0xf]
        %v837 = vld [vmem:[%s185 + $0x3c] sm:$0xf]
        %v838 = vld [vmem:[%s185 + $0x40] sm:$0xf]
        %v839 = vld [vmem:[%s185 + $0x44] sm:$0xf]
        %v840 = vld [vmem:[%s185 + $0x48] sm:$0x1]
        %s841 = scalar_lea.vmem [#allocation5], 48
        %v842 = vld [vmem:[%s841] sm:$0xf]
        %v843 = vld [vmem:[%s841 + $0x4] sm:$0xf]
        %v844 = vld [vmem:[%s841 + $0x8] sm:$0xf]
        %v845 = vld [vmem:[%s841 + $0xc] sm:$0xf]
        %v863 = vunpack.c.l.b16 %v824
        %v864 = vunpack.c.l.b16 %v825
        %v865 = vunpack.c.l.b16 %v826
        %v866 = vunpack.c.l.b16 %v827
        %v867 = vunpack.c.l.b16 %v828
        %v868 = vunpack.c.l.b16 %v829
        %v869 = vunpack.c.l.b16 %v830
        %v870 = vunpack.c.l.b16 %v831
        %v871 = vunpack.c.l.b16 %v832
        %v872 = vunpack.c.l.b16 %v833
        %v873 = vunpack.c.l.b16 %v834
        %v874 = vunpack.c.l.b16 %v835
        %v875 = vunpack.c.l.b16 %v836
        %v876 = vunpack.c.l.b16 %v837
        %v877 = vunpack.c.l.b16 %v838
        %v878 = vunpack.c.l.b16 %v839
        %v879 = vunpack.c.l.b16 %v840
        %v880 = vpack.c.b16 %v864, %v863
        %v881 = vpack.c.b16 %v866, %v865
        %v882 = vpack.c.b16 %v868, %v867
        %v883 = vpack.c.b16 %v870, %v869
        %v884 = vpack.c.b16 %v872, %v871
        %v885 = vpack.c.b16 %v874, %v873
        %v886 = vpack.c.b16 %v876, %v875
        %v887 = vpack.c.b16 %v878, %v877
        %v888 = vpack.c.b16 %v879, %v879
        %v890 = vshrl.u32 %v880, 16
        %v892 = vshll.u32 %v880, 16
        %v894 = vrot.slane %v892, 1
        %v895 = vor.u32 %v890, %v894
        %v897 = vshll.u32 %v881, 16
        %v899 = vrot.slane %v897, 1
        %v900 = vsel %vm286, %v895, %v899
        %v901 = vshrl.u32 %v881, 16
        %v903 = vor.u32 %v901, %v899
        %v905 = vshll.u32 %v882, 16
        %v907 = vrot.slane %v905, 1
        %v908 = vsel %vm286, %v903, %v907
        %v909 = vshrl.u32 %v882, 16
        %v911 = vor.u32 %v909, %v907
        %v913 = vshll.u32 %v883, 16
        %v915 = vrot.slane %v913, 1
        %v916 = vsel %vm286, %v911, %v915
        %v917 = vshrl.u32 %v883, 16
        %v919 = vor.u32 %v917, %v915
        %v921 = vshll.u32 %v884, 16
        %v923 = vrot.slane %v921, 1
        %v924 = vsel %vm286, %v919, %v923
        %v925 = vshrl.u32 %v884, 16
        %v927 = vor.u32 %v925, %v923
        %v929 = vshll.u32 %v885, 16
        %v931 = vrot.slane %v929, 1
        %v932 = vsel %vm286, %v927, %v931
        %v933 = vshrl.u32 %v885, 16
        %v935 = vor.u32 %v933, %v931
        %v937 = vshll.u32 %v886, 16
        %v939 = vrot.slane %v937, 1
        %v940 = vsel %vm286, %v935, %v939
        %v941 = vshrl.u32 %v886, 16
        %v943 = vor.u32 %v941, %v939
        %v945 = vshll.u32 %v887, 16
        %v947 = vrot.slane %v945, 1
        %v948 = vsel %vm286, %v943, %v947
        %v949 = vshrl.u32 %v887, 16
        %v951 = vor.u32 %v949, %v947
        %v953 = vshll.u32 %v888, 16
        %v955 = vrot.slane %v953, 1
        %v956 = vsel %vm286, %v951, %v955
        %v961 = vunpack.c.l.b16 %v842
        %v962 = vunpack.c.l.b16 %v843
        %v963 = vunpack.c.l.b16 %v844
        %v964 = vunpack.c.l.b16 %v845
        %v965 = vpack.c.b16 %v962, %v961
        %v966 = vpack.c.b16 %v964, %v963
        %v970 = vsel %vm367, %v900, 0
        %v973 = vsel %vm367, %v908, 0
        %v976 = vsel %vm367, %v916, 0
        %v979 = vsel %vm367, %v924, 0
        %v982 = vsel %vm367, %v932, 0
        %v985 = vsel %vm367, %v940, 0
        %v988 = vsel %vm367, %v948, 0
        %v991 = vsel %vm367, %v956, 0
        %993 = vmatprep.subr.bf16.mxu0 0
        %994 = vmatpush1.bf16.msra.mxu0 %v965
        %995 = vmatprep.subr.bf16.mxu0 0
        %996 = vmatpush1.bf16.msra.mxu0 %v966
        %997 = vmatprep.subr.bf16.mxu0 0
        %998 = vmatpush1.bf16.msra.mxu0 0
        %999 = vmatprep.subr.bf16.mxu0 0
        %1000 = vmatpush1.bf16.msra.mxu0 0
        %1001 = vmatprep.subr.bf16.mxu0 0
        %1002 = vmatpush1.bf16.msra.mxu0 0
        %1003 = vmatprep.subr.bf16.mxu0 0
        %1004 = vmatpush1.bf16.msra.mxu0 0
        %1005 = vmatprep.subr.bf16.mxu0 0
        %1006 = vmatpush1.bf16.msra.mxu0 0
        %1007 = vmatprep.subr.bf16.mxu0 0
        %1008 = vmatpush1.bf16.msra.mxu0 0
        %1009 = vmatprep.subr.bf16.mxu0 0
        %1010 = vmatpush1.bf16.msra.mxu0 0
        %1011 = vmatprep.subr.bf16.mxu0 0
        %1012 = vmatpush1.bf16.msra.mxu0 0
        %1013 = vmatprep.subr.bf16.mxu0 0
        %1014 = vmatpush1.bf16.msra.mxu0 0
        %1015 = vmatprep.subr.bf16.mxu0 0
        %1016 = vmatpush1.bf16.msra.mxu0 0
        %1017 = vmatprep.subr.bf16.mxu0 0
        %1018 = vmatpush1.bf16.msra.mxu0 0
        %1019 = vmatprep.subr.bf16.mxu0 0
        %1020 = vmatpush1.bf16.msra.mxu0 0
        %1021 = vmatprep.subr.bf16.mxu0 0
        %1022 = vmatpush1.bf16.msra.mxu0 0
        %1023 = vmatprep.subr.bf16.mxu0 0
        %1024 = vmatpush1.bf16.msra.mxu0 0
        %1025 = vmatprep.mubr.bf16.mxu0 0
        %1026 = vmatmul.mubr.bf16.gmra.mrb[0].mxu0 %v970
        %v1027 = vpop.f32.mrb[0].mxu0
        %v1028 = vadd.f32 0.0, %v1027
        %v1029 = vpop.f32.mrb[0].mxu0
        %v1030 = vpop.f32.mrb[0].mxu0
        %v1031 = vadd.f32 0.0, %v1030
        %v1032 = vpop.f32.mrb[0].mxu0
        %1033 = vmatprep.mubr.bf16.mxu0 0
        %1034 = vmatmul.mubr.bf16.gmra.mrb[0].mxu0 %v973
        %v1035 = vpop.f32.mrb[0].mxu0
        %v1036 = vadd.f32 0.0, %v1035
        %v1037 = vpop.f32.mrb[0].mxu0
        %v1038 = vpop.f32.mrb[0].mxu0
        %v1039 = vadd.f32 0.0, %v1038
        %v1040 = vpop.f32.mrb[0].mxu0
        %1041 = vmatprep.mubr.bf16.mxu0 0
        %1042 = vmatmul.mubr.bf16.gmra.mrb[0].mxu0 %v976
        %v1043 = vpop.f32.mrb[0].mxu0
        %v1044 = vadd.f32 0.0, %v1043
        %v1045 = vpop.f32.mrb[0].mxu0
        %v1046 = vpop.f32.mrb[0].mxu0
        %v1047 = vadd.f32 0.0, %v1046
        %v1048 = vpop.f32.mrb[0].mxu0
        %1049 = vmatprep.mubr.bf16.mxu0 0
        %1050 = vmatmul.mubr.bf16.gmra.mrb[0].mxu0 %v979
        %v1051 = vpop.f32.mrb[0].mxu0
        %v1052 = vadd.f32 0.0, %v1051
        %v1053 = vpop.f32.mrb[0].mxu0
        %v1054 = vpop.f32.mrb[0].mxu0
        %v1055 = vadd.f32 0.0, %v1054
        %v1056 = vpop.f32.mrb[0].mxu0
        %1057 = vmatprep.mubr.bf16.mxu0 0
        %1058 = vmatmul.mubr.bf16.gmra.mrb[0].mxu0 %v982
        %v1059 = vpop.f32.mrb[0].mxu0
        %v1060 = vadd.f32 0.0, %v1059
        %v1061 = vpop.f32.mrb[0].mxu0
        %v1062 = vpop.f32.mrb[0].mxu0
        %v1063 = vadd.f32 0.0, %v1062
        %v1064 = vpop.f32.mrb[0].mxu0
        %1065 = vmatprep.mubr.bf16.mxu0 0
        %1066 = vmatmul.mubr.bf16.gmra.mrb[0].mxu0 %v985
        %v1067 = vpop.f32.mrb[0].mxu0
        %v1068 = vadd.f32 0.0, %v1067
        %v1069 = vpop.f32.mrb[0].mxu0
        %v1070 = vpop.f32.mrb[0].mxu0
        %v1071 = vadd.f32 0.0, %v1070
        %v1072 = vpop.f32.mrb[0].mxu0
        %1073 = vmatprep.mubr.bf16.mxu0 0
        %1074 = vmatmul.mubr.bf16.gmra.mrb[0].mxu0 %v988
        %v1075 = vpop.f32.mrb[0].mxu0
        %v1076 = vadd.f32 0.0, %v1075
        %v1077 = vpop.f32.mrb[0].mxu0
        %v1078 = vpop.f32.mrb[0].mxu0
        %v1079 = vadd.f32 0.0, %v1078
        %v1080 = vpop.f32.mrb[0].mxu0
        %1081 = vmatprep.mubr.bf16.mxu0 0
        %1082 = vmatmul.mubr.bf16.gmra.mrb[0].mxu0 %v991
        %v1083 = vpop.f32.mrb[0].mxu0
        %v1084 = vadd.f32 0.0, %v1083
        %v1085 = vpop.f32.mrb[0].mxu0
        %v1086 = vpop.f32.mrb[0].mxu0
        %v1087 = vadd.f32 0.0, %v1086
        %v1088 = vpop.f32.mrb[0].mxu0
        %1089 = vdwg.mxu0
        %v1090 = vadd.f32 %v808, %v1028
        %v1091 = vadd.f32 %v809, %v1031
        %v1092 = vadd.f32 %v810, %v1036
        %v1093 = vadd.f32 %v811, %v1039
        %v1094 = vadd.f32 %v812, %v1044
        %v1095 = vadd.f32 %v813, %v1047
        %v1096 = vadd.f32 %v814, %v1052
        %v1097 = vadd.f32 %v815, %v1055
        %v1098 = vadd.f32 %v816, %v1060
        %v1099 = vadd.f32 %v817, %v1063
        %v1100 = vadd.f32 %v818, %v1068
        %v1101 = vadd.f32 %v819, %v1071
        %v1102 = vadd.f32 %v820, %v1076
        %v1103 = vadd.f32 %v821, %v1079
        %v1104 = vadd.f32 %v822, %v1084
        %v1105 = vadd.f32 %v823, %v1087
        %v1106 = vld [vmem:[#allocation7] sm:$0x1]
        %v1108 = vlaneseq
        %v1109 = vshrl.u32 %v1108, 7
        %v1110 = vsub.s32 0, %v1109
        %v1111 = vrot.slane %v1106, %v1110
        %v1113 = vadd.f32 %v1090, %v1111
        %v1114 = vadd.f32 %v1091, %v1111
        %v1115 = vadd.f32 %v1092, %v1111
        %v1116 = vadd.f32 %v1093, %v1111
        %v1117 = vadd.f32 %v1094, %v1111
        %v1118 = vadd.f32 %v1095, %v1111
        %v1119 = vadd.f32 %v1096, %v1111
        %v1120 = vadd.f32 %v1097, %v1111
        %v1121 = vadd.f32 %v1098, %v1111
        %v1122 = vadd.f32 %v1099, %v1111
        %v1123 = vadd.f32 %v1100, %v1111
        %v1124 = vadd.f32 %v1101, %v1111
        %v1125 = vadd.f32 %v1102, %v1111
        %v1126 = vadd.f32 %v1103, %v1111
        %v1127 = vadd.f32 %v1104, %v1111
        %v1128 = vadd.f32 %v1105, %v1111
        %v1129 = vlaneseq
        %v1130 = vshrl.u32 %v1129, 7
        %v1131 = vadd.s32 %v1130, 8
        %v1132 = vadd.s32 %v1130, 16
        %v1133 = vadd.s32 %v1130, 24
        %v1134 = vadd.s32 %v1130, 32
        %v1135 = vadd.s32 %v1130, 40
        %v1136 = vadd.s32 %v1130, 48
        %v1137 = vadd.s32 %v1130, 56
        %v1138 = vadd.s32 %v1130, 64
        %v1139 = vadd.s32 %v1130, 72
        %v1140 = vadd.s32 %v1130, 80
        %v1141 = vadd.s32 %v1130, 88
        %v1142 = vadd.s32 %v1130, 96
        %v1143 = vadd.s32 %v1130, 104
        %v1144 = vadd.s32 %v1130, 112
        %v1145 = vadd.s32 %v1130, 120
        %vm1146 = vcmp.lt.s32.totalorder %v1130, 0
        %v1147 = vsub.s32 0, %v1130
        %v1148 = vsel %vm1146, %v1147, %v1130
        %v1149 = vshrl.u32 %v1148, 4
        %v1150 = vand.u32 %v1148, 15
        %v1151 = vsub.s32 0, %v1150
        %v1152 = vsel %vm1146, %v1151, %v1150
        %vm1153 = vcmp.lt.s32.totalorder %v1131, 0
        %v1154 = vsub.s32 0, %v1131
        %v1155 = vsel %vm1153, %v1154, %v1131
        %v1156 = vshrl.u32 %v1155, 4
        %v1157 = vand.u32 %v1155, 15
        %v1158 = vsub.s32 0, %v1157
        %v1159 = vsel %vm1153, %v1158, %v1157
        %vm1160 = vcmp.lt.s32.totalorder %v1132, 0
        %v1161 = vsub.s32 0, %v1132
        %v1162 = vsel %vm1160, %v1161, %v1132
        %v1163 = vshrl.u32 %v1162, 4
        %v1164 = vand.u32 %v1162, 15
        %v1165 = vsub.s32 0, %v1164
        %v1166 = vsel %vm1160, %v1165, %v1164
        %vm1167 = vcmp.lt.s32.totalorder %v1133, 0
        %v1168 = vsub.s32 0, %v1133
        %v1169 = vsel %vm1167, %v1168, %v1133
        %v1170 = vshrl.u32 %v1169, 4
        %v1171 = vand.u32 %v1169, 15
        %v1172 = vsub.s32 0, %v1171
        %v1173 = vsel %vm1167, %v1172, %v1171
        %vm1174 = vcmp.lt.s32.totalorder %v1134, 0
        %v1175 = vsub.s32 0, %v1134
        %v1176 = vsel %vm1174, %v1175, %v1134
        %v1177 = vshrl.u32 %v1176, 4
        %v1178 = vand.u32 %v1176, 15
        %v1179 = vsub.s32 0, %v1178
        %v1180 = vsel %vm1174, %v1179, %v1178
        %vm1181 = vcmp.lt.s32.totalorder %v1135, 0
        %v1182 = vsub.s32 0, %v1135
        %v1183 = vsel %vm1181, %v1182, %v1135
        %v1184 = vshrl.u32 %v1183, 4
        %v1185 = vand.u32 %v1183, 15
        %v1186 = vsub.s32 0, %v1185
        %v1187 = vsel %vm1181, %v1186, %v1185
        %vm1188 = vcmp.lt.s32.totalorder %v1136, 0
        %v1189 = vsub.s32 0, %v1136
        %v1190 = vsel %vm1188, %v1189, %v1136
        %v1191 = vshrl.u32 %v1190, 4
        %v1192 = vand.u32 %v1190, 15
        %v1193 = vsub.s32 0, %v1192
        %v1194 = vsel %vm1188, %v1193, %v1192
        %vm1195 = vcmp.lt.s32.totalorder %v1137, 0
        %v1196 = vsub.s32 0, %v1137
        %v1197 = vsel %vm1195, %v1196, %v1137
        %v1198 = vshrl.u32 %v1197, 4
        %v1199 = vand.u32 %v1197, 15
        %v1200 = vsub.s32 0, %v1199
        %v1201 = vsel %vm1195, %v1200, %v1199
        %vm1202 = vcmp.lt.s32.totalorder %v1138, 0
        %v1203 = vsub.s32 0, %v1138
        %v1204 = vsel %vm1202, %v1203, %v1138
        %v1205 = vshrl.u32 %v1204, 4
        %v1206 = vand.u32 %v1204, 15
        %v1207 = vsub.s32 0, %v1206
        %v1208 = vsel %vm1202, %v1207, %v1206
        %vm1209 = vcmp.lt.s32.totalorder %v1139, 0
        %v1210 = vsub.s32 0, %v1139
        %v1211 = vsel %vm1209, %v1210, %v1139
        %v1212 = vshrl.u32 %v1211, 4
        %v1213 = vand.u32 %v1211, 15
        %v1214 = vsub.s32 0, %v1213
        %v1215 = vsel %vm1209, %v1214, %v1213
        %vm1216 = vcmp.lt.s32.totalorder %v1140, 0
        %v1217 = vsub.s32 0, %v1140
        %v1218 = vsel %vm1216, %v1217, %v1140
        %v1219 = vshrl.u32 %v1218, 4
        %v1220 = vand.u32 %v1218, 15
        %v1221 = vsub.s32 0, %v1220
        %v1222 = vsel %vm1216, %v1221, %v1220
        %vm1223 = vcmp.lt.s32.totalorder %v1141, 0
        %v1224 = vsub.s32 0, %v1141
        %v1225 = vsel %vm1223, %v1224, %v1141
        %v1226 = vshrl.u32 %v1225, 4
        %v1227 = vand.u32 %v1225, 15
        %v1228 = vsub.s32 0, %v1227
        %v1229 = vsel %vm1223, %v1228, %v1227
        %vm1230 = vcmp.lt.s32.totalorder %v1142, 0
        %v1231 = vsub.s32 0, %v1142
        %v1232 = vsel %vm1230, %v1231, %v1142
        %v1233 = vshrl.u32 %v1232, 4
        %v1234 = vand.u32 %v1232, 15
        %v1235 = vsub.s32 0, %v1234
        %v1236 = vsel %vm1230, %v1235, %v1234
        %vm1237 = vcmp.lt.s32.totalorder %v1143, 0
        %v1238 = vsub.s32 0, %v1143
        %v1239 = vsel %vm1237, %v1238, %v1143
        %v1240 = vshrl.u32 %v1239, 4
        %v1241 = vand.u32 %v1239, 15
        %v1242 = vsub.s32 0, %v1241
        %v1243 = vsel %vm1237, %v1242, %v1241
        %vm1244 = vcmp.lt.s32.totalorder %v1144, 0
        %v1245 = vsub.s32 0, %v1144
        %v1246 = vsel %vm1244, %v1245, %v1144
        %v1247 = vshrl.u32 %v1246, 4
        %v1248 = vand.u32 %v1246, 15
        %v1249 = vsub.s32 0, %v1248
        %v1250 = vsel %vm1244, %v1249, %v1248
        %vm1251 = vcmp.lt.s32.totalorder %v1145, 0
        %v1252 = vsub.s32 0, %v1145
        %v1253 = vsel %vm1251, %v1252, %v1145
        %v1254 = vshrl.u32 %v1253, 4
        %v1255 = vand.u32 %v1253, 15
        %v1256 = vsub.s32 0, %v1255
        %v1257 = vsel %vm1251, %v1256, %v1255
        %vm1258 = vcmp.ne.s32.totalorder %v1152, 0
        %vm1259 = vcmp.ne.s32.totalorder %v1159, 0
        %vm1260 = vcmp.ne.s32.totalorder %v1166, 0
        %vm1261 = vcmp.ne.s32.totalorder %v1173, 0
        %vm1262 = vcmp.ne.s32.totalorder %v1180, 0
        %vm1263 = vcmp.ne.s32.totalorder %v1187, 0
        %vm1264 = vcmp.ne.s32.totalorder %v1194, 0
        %vm1265 = vcmp.ne.s32.totalorder %v1201, 0
        %vm1266 = vcmp.ne.s32.totalorder %v1208, 0
        %vm1267 = vcmp.ne.s32.totalorder %v1215, 0
        %vm1268 = vcmp.ne.s32.totalorder %v1222, 0
        %vm1269 = vcmp.ne.s32.totalorder %v1229, 0
        %vm1270 = vcmp.ne.s32.totalorder %v1236, 0
        %vm1271 = vcmp.ne.s32.totalorder %v1243, 0
        %vm1272 = vcmp.ne.s32.totalorder %v1250, 0
        %vm1273 = vcmp.ne.s32.totalorder %v1257, 0
        %vm1274 = vcmp.lt.s32.totalorder %v1152, 0
        %vm1275 = vcmp.lt.s32.totalorder %v1159, 0
        %vm1276 = vcmp.lt.s32.totalorder %v1166, 0
        %vm1277 = vcmp.lt.s32.totalorder %v1173, 0
        %vm1278 = vcmp.lt.s32.totalorder %v1180, 0
        %vm1279 = vcmp.lt.s32.totalorder %v1187, 0
        %vm1280 = vcmp.lt.s32.totalorder %v1194, 0
        %vm1281 = vcmp.lt.s32.totalorder %v1201, 0
        %vm1282 = vcmp.lt.s32.totalorder %v1208, 0
        %vm1283 = vcmp.lt.s32.totalorder %v1215, 0
        %vm1284 = vcmp.lt.s32.totalorder %v1222, 0
        %vm1285 = vcmp.lt.s32.totalorder %v1229, 0
        %vm1286 = vcmp.lt.s32.totalorder %v1236, 0
        %vm1287 = vcmp.lt.s32.totalorder %v1243, 0
        %vm1288 = vcmp.lt.s32.totalorder %v1250, 0
        %vm1289 = vcmp.lt.s32.totalorder %v1257, 0
        %vm1290 = vmand %vm1274, %vm1258
        %vm1291 = vmand %vm1275, %vm1259
        %vm1292 = vmand %vm1276, %vm1260
        %vm1293 = vmand %vm1277, %vm1261
        %vm1294 = vmand %vm1278, %vm1262
        %vm1295 = vmand %vm1279, %vm1263
        %vm1296 = vmand %vm1280, %vm1264
        %vm1297 = vmand %vm1281, %vm1265
        %vm1298 = vmand %vm1282, %vm1266
        %vm1299 = vmand %vm1283, %vm1267
        %vm1300 = vmand %vm1284, %vm1268
        %vm1301 = vmand %vm1285, %vm1269
        %vm1302 = vmand %vm1286, %vm1270
        %vm1303 = vmand %vm1287, %vm1271
        %vm1304 = vmand %vm1288, %vm1272
        %vm1305 = vmand %vm1289, %vm1273
        %v1306 = vadd.s32 %v1152, 16
        %v1307 = vadd.s32 %v1159, 16
        %v1308 = vadd.s32 %v1166, 16
        %v1309 = vadd.s32 %v1173, 16
        %v1310 = vadd.s32 %v1180, 16
        %v1311 = vadd.s32 %v1187, 16
        %v1312 = vadd.s32 %v1194, 16
        %v1313 = vadd.s32 %v1201, 16
        %v1314 = vadd.s32 %v1208, 16
        %v1315 = vadd.s32 %v1215, 16
        %v1316 = vadd.s32 %v1222, 16
        %v1317 = vadd.s32 %v1229, 16
        %v1318 = vadd.s32 %v1236, 16
        %v1319 = vadd.s32 %v1243, 16
        %v1320 = vadd.s32 %v1250, 16
        %v1321 = vadd.s32 %v1257, 16
        %v1322 = vsel %vm1290, %v1306, %v1152
        %v1323 = vsel %vm1291, %v1307, %v1159
        %v1324 = vsel %vm1292, %v1308, %v1166
        %v1325 = vsel %vm1293, %v1309, %v1173
        %v1326 = vsel %vm1294, %v1310, %v1180
        %v1327 = vsel %vm1295, %v1311, %v1187
        %v1328 = vsel %vm1296, %v1312, %v1194
        %v1329 = vsel %vm1297, %v1313, %v1201
        %v1330 = vsel %vm1298, %v1314, %v1208
        %v1331 = vsel %vm1299, %v1315, %v1215
        %v1332 = vsel %vm1300, %v1316, %v1222
        %v1333 = vsel %vm1301, %v1317, %v1229
        %v1334 = vsel %vm1302, %v1318, %v1236
        %v1335 = vsel %vm1303, %v1319, %v1243
        %v1336 = vsel %vm1304, %v1320, %v1250
        %v1337 = vsel %vm1305, %v1321, %v1257
        %vm1338 = vcmp.lt.s32.totalorder %v1322, 8
        %vm1339 = vcmp.lt.s32.totalorder %v1323, 8
        %vm1340 = vcmp.lt.s32.totalorder %v1324, 8
        %vm1341 = vcmp.lt.s32.totalorder %v1325, 8
        %vm1342 = vcmp.lt.s32.totalorder %v1326, 8
        %vm1343 = vcmp.lt.s32.totalorder %v1327, 8
        %vm1344 = vcmp.lt.s32.totalorder %v1328, 8
        %vm1345 = vcmp.lt.s32.totalorder %v1329, 8
        %vm1346 = vcmp.lt.s32.totalorder %v1330, 8
        %vm1347 = vcmp.lt.s32.totalorder %v1331, 8
        %vm1348 = vcmp.lt.s32.totalorder %v1332, 8
        %vm1349 = vcmp.lt.s32.totalorder %v1333, 8
        %vm1350 = vcmp.lt.s32.totalorder %v1334, 8
        %vm1351 = vcmp.lt.s32.totalorder %v1335, 8
        %vm1352 = vcmp.lt.s32.totalorder %v1336, 8
        %vm1353 = vcmp.lt.s32.totalorder %v1337, 8
        %vm1354 = vcmp.ge.f32.partialorder %v1113, 0.0
        %vm1355 = vcmp.ge.f32.partialorder %v1114, 0.0
        %vm1356 = vcmp.ge.f32.partialorder %v1115, 0.0
        %vm1357 = vcmp.ge.f32.partialorder %v1116, 0.0
        %vm1358 = vcmp.ge.f32.partialorder %v1117, 0.0
        %vm1359 = vcmp.ge.f32.partialorder %v1118, 0.0
        %vm1360 = vcmp.ge.f32.partialorder %v1119, 0.0
        %vm1361 = vcmp.ge.f32.partialorder %v1120, 0.0
        %vm1362 = vcmp.ge.f32.partialorder %v1121, 0.0
        %vm1363 = vcmp.ge.f32.partialorder %v1122, 0.0
        %vm1364 = vcmp.ge.f32.partialorder %v1123, 0.0
        %vm1365 = vcmp.ge.f32.partialorder %v1124, 0.0
        %vm1366 = vcmp.ge.f32.partialorder %v1125, 0.0
        %vm1367 = vcmp.ge.f32.partialorder %v1126, 0.0
        %vm1368 = vcmp.ge.f32.partialorder %v1127, 0.0
        %vm1369 = vcmp.ge.f32.partialorder %v1128, 0.0
        %v1370 = vmul.f32 %v1113, 0.2
        %v1371 = vmul.f32 %v1114, 0.2
        %v1372 = vmul.f32 %v1115, 0.2
        %v1373 = vmul.f32 %v1116, 0.2
        %v1374 = vmul.f32 %v1117, 0.2
        %v1375 = vmul.f32 %v1118, 0.2
        %v1376 = vmul.f32 %v1119, 0.2
        %v1377 = vmul.f32 %v1120, 0.2
        %v1378 = vmul.f32 %v1121, 0.2
        %v1379 = vmul.f32 %v1122, 0.2
        %v1380 = vmul.f32 %v1123, 0.2
        %v1381 = vmul.f32 %v1124, 0.2
        %v1382 = vmul.f32 %v1125, 0.2
        %v1383 = vmul.f32 %v1126, 0.2
        %v1384 = vmul.f32 %v1127, 0.2
        %v1385 = vmul.f32 %v1128, 0.2
        %v1386 = vsel %vm1354, %v1113, %v1370
        %v1387 = vsel %vm1355, %v1114, %v1371
        %v1388 = vsel %vm1356, %v1115, %v1372
        %v1389 = vsel %vm1357, %v1116, %v1373
        %v1390 = vsel %vm1358, %v1117, %v1374
        %v1391 = vsel %vm1359, %v1118, %v1375
        %v1392 = vsel %vm1360, %v1119, %v1376
        %v1393 = vsel %vm1361, %v1120, %v1377
        %v1394 = vsel %vm1362, %v1121, %v1378
        %v1395 = vsel %vm1363, %v1122, %v1379
        %v1396 = vsel %vm1364, %v1123, %v1380
        %v1397 = vsel %vm1365, %v1124, %v1381
        %v1398 = vsel %vm1366, %v1125, %v1382
        %v1399 = vsel %vm1367, %v1126, %v1383
        %v1400 = vsel %vm1368, %v1127, %v1384
        %v1401 = vsel %vm1369, %v1128, %v1385
        %v1402 = vsel %vm1338, 1, 0
        %v1403 = vsel %vm1339, 1, 0
        %v1404 = vsel %vm1340, 1, 0
        %v1405 = vsel %vm1341, 1, 0
        %v1406 = vsel %vm1342, 1, 0
        %v1407 = vsel %vm1343, 1, 0
        %v1408 = vsel %vm1344, 1, 0
        %v1409 = vsel %vm1345, 1, 0
        %v1410 = vsel %vm1346, 1, 0
        %v1411 = vsel %vm1347, 1, 0
        %v1412 = vsel %vm1348, 1, 0
        %v1413 = vsel %vm1349, 1, 0
        %v1414 = vsel %vm1350, 1, 0
        %v1415 = vsel %vm1351, 1, 0
        %v1416 = vsel %vm1352, 1, 0
        %v1417 = vsel %vm1353, 1, 0
        %vm1418 = vcmp.eq.s32.totalorder %v1402, 1
        %vm1419 = vcmp.eq.s32.totalorder %v1403, 1
        %vm1420 = vcmp.eq.s32.totalorder %v1404, 1
        %vm1421 = vcmp.eq.s32.totalorder %v1405, 1
        %vm1422 = vcmp.eq.s32.totalorder %v1406, 1
        %vm1423 = vcmp.eq.s32.totalorder %v1407, 1
        %vm1424 = vcmp.eq.s32.totalorder %v1408, 1
        %vm1425 = vcmp.eq.s32.totalorder %v1409, 1
        %vm1426 = vcmp.eq.s32.totalorder %v1410, 1
        %vm1427 = vcmp.eq.s32.totalorder %v1411, 1
        %vm1428 = vcmp.eq.s32.totalorder %v1412, 1
        %vm1429 = vcmp.eq.s32.totalorder %v1413, 1
        %vm1430 = vcmp.eq.s32.totalorder %v1414, 1
        %vm1431 = vcmp.eq.s32.totalorder %v1415, 1
        %vm1432 = vcmp.eq.s32.totalorder %v1416, 1
        %vm1433 = vcmp.eq.s32.totalorder %v1417, 1
        %v1434 = vsel %vm1418, %v1386, 0.0
        %v1435 = vsel %vm1419, %v1387, 0.0
        %v1436 = vsel %vm1420, %v1388, 0.0
        %v1437 = vsel %vm1421, %v1389, 0.0
        %v1438 = vsel %vm1422, %v1390, 0.0
        %v1439 = vsel %vm1423, %v1391, 0.0
        %v1440 = vsel %vm1424, %v1392, 0.0
        %v1441 = vsel %vm1425, %v1393, 0.0
        %v1442 = vsel %vm1426, %v1394, 0.0
        %v1443 = vsel %vm1427, %v1395, 0.0
        %v1444 = vsel %vm1428, %v1396, 0.0
        %v1445 = vsel %vm1429, %v1397, 0.0
        %v1446 = vsel %vm1430, %v1398, 0.0
        %v1447 = vsel %vm1431, %v1399, 0.0
        %v1448 = vsel %vm1432, %v1400, 0.0
        %v1449 = vsel %vm1433, %v1401, 0.0
        %v1450 = vpack.c.bf16 %v1435, %v1434
        %v1451 = vpack.c.bf16 %v1437, %v1436
        %v1452 = vpack.c.bf16 %v1439, %v1438
        %v1453 = vpack.c.bf16 %v1441, %v1440
        %v1454 = vpack.c.bf16 %v1443, %v1442
        %v1455 = vpack.c.bf16 %v1445, %v1444
        %v1456 = vpack.c.bf16 %v1447, %v1446
        %v1457 = vpack.c.bf16 %v1449, %v1448
        %v1466 = vunpack.c.l.b16 %v1450
        %v1467 = vunpack.c.h.b16 %v1450
        %v1468 = vunpack.c.l.b16 %v1451
        %v1469 = vunpack.c.h.b16 %v1451
        %v1470 = vunpack.c.l.b16 %v1452
        %v1471 = vunpack.c.h.b16 %v1452
        %v1472 = vunpack.c.l.b16 %v1453
        %v1473 = vunpack.c.h.b16 %v1453
        %v1474 = vunpack.c.l.b16 %v1454
        %v1475 = vunpack.c.h.b16 %v1454
        %v1476 = vunpack.c.l.b16 %v1455
        %v1477 = vunpack.c.h.b16 %v1455
        %v1478 = vunpack.c.l.b16 %v1456
        %v1479 = vunpack.c.h.b16 %v1456
        %v1480 = vunpack.c.l.b16 %v1457
        %v1481 = vunpack.c.h.b16 %v1457
        %v1482 = vpack.c.b16 %v1466, %v1466
        %v1483 = vpack.c.b16 %v1467, %v1467
        %v1484 = vpack.c.b16 %v1468, %v1468
        %v1485 = vpack.c.b16 %v1469, %v1469
        %v1486 = vpack.c.b16 %v1470, %v1470
        %v1487 = vpack.c.b16 %v1471, %v1471
        %v1488 = vpack.c.b16 %v1472, %v1472
        %v1489 = vpack.c.b16 %v1473, %v1473
        %v1490 = vpack.c.b16 %v1474, %v1474
        %v1491 = vpack.c.b16 %v1475, %v1475
        %v1492 = vpack.c.b16 %v1476, %v1476
        %v1493 = vpack.c.b16 %v1477, %v1477
        %v1494 = vpack.c.b16 %v1478, %v1478
        %v1495 = vpack.c.b16 %v1479, %v1479
        %v1496 = vpack.c.b16 %v1480, %v1480
        %v1497 = vpack.c.b16 %v1481, %v1481
        %1514 = vst [vmem:[%s215] sm:$0xf] %v1482
        %1515 = vst [vmem:[%s215 + $0x4] sm:$0xf] %v1483
        %1516 = vst [vmem:[%s215 + $0x8] sm:$0xf] %v1484
        %1517 = vst [vmem:[%s215 + $0xc] sm:$0xf] %v1485
        %1518 = vst [vmem:[%s215 + $0x10] sm:$0xf] %v1486
        %1519 = vst [vmem:[%s215 + $0x14] sm:$0xf] %v1487
        %1520 = vst [vmem:[%s215 + $0x18] sm:$0xf] %v1488
        %1521 = vst [vmem:[%s215 + $0x1c] sm:$0xf] %v1489
        %1522 = vst [vmem:[%s215 + $0x20] sm:$0xf] %v1490
        %1523 = vst [vmem:[%s215 + $0x24] sm:$0xf] %v1491
        %1524 = vst [vmem:[%s215 + $0x28] sm:$0xf] %v1492
        %1525 = vst [vmem:[%s215 + $0x2c] sm:$0xf] %v1493
        %1526 = vst [vmem:[%s215 + $0x30] sm:$0xf] %v1494
        %1527 = vst [vmem:[%s215 + $0x34] sm:$0xf] %v1495
        %1528 = vst [vmem:[%s215 + $0x38] sm:$0xf] %v1496
        %1529 = vst [vmem:[%s215 + $0x3c] sm:$0xf] %v1497
        %s1530 = sand.u32 %s97, 1
        %s1531 = scalar_lea.sflag [#allocation4], %s1530
        %s1532 = sand.u32 %s97, 1
        %s1533 = smul.addr %s1532, 64
        %s1534 = scalar_lea.vmem [#allocation8], %s1533
        // Predicated region
        $region45: #{patch_discriminator_forward.6} parent=31 // pred_check
          %p1535 = pneg %p107
        $region46: #{patch_discriminator_forward.6} parent=31 // pred_check_branch
          %1537 = sbr.rel (%p1535) target = $region48
        $region47: #{patch_discriminator_forward.6} parent=31 // pred_region
          %s1539 = ssub.s32 1024, 1024
          %1540 = vsyncadd %s1531, %s1539
          %s1541 = smul.addr %s21, 16
          %s1542 = smul.addr %s1541, 64
          %s1543 = scalar_lea.hbm %s3, %s1542
          %s1544 = sshll.u32 %s1534, 4
          %s1545 = int_to_ptr.vmem [resolvable:$true] %s1544
          %1550 = dma.vmem_to_hbm [thread:$0]  %s1545, 1024, %s1543, %s1531, 64, 64, 4
        $region48: #{patch_discriminator_forward.6} parent=31 // pred_fallthru
          _
      $region32: #{patch_discriminator_forward.6} parent=5 // pred_fallthru
        _
      %p1551 = scmp.le.s32.totalorder 2, %s16
      // Predicated region
      $region49: #{patch_discriminator_forward.6} parent=5 // pred_check
        %p1552 = pneg %p1551
      $region50: #{patch_discriminator_forward.6} parent=5 // pred_check_branch
        %1554 = sbr.rel (%p1552) target = $region52
      $region51: #{patch_discriminator_forward.6} parent=5 // pred_region
        %s1555 = ssub.s32 %s16, 2
        // Predicated region
        $region53: #{patch_discriminator_forward.6} parent=51 // pred_check
          %p1556 = pneg %p113
        $region54: #{patch_discriminator_forward.6} parent=51 // pred_check_branch
          %1558 = sbr.rel (%p1556) target = $region56
        $region55: #{patch_discriminator_forward.6} parent=51 // pred_region
          %s1559 = sand.u32 %s98, 1
          %s1560 = scalar_lea.sflag [#allocation4], %s1559
          %s1561 = sand.u32 %s98, 1
          %s1562 = smul.addr %s1561, 64
          %s1563 = scalar_lea.vmem [#allocation8], %s1562
          %1564 = dma.done %s1560, 1024
        $region56: #{patch_discriminator_forward.6} parent=51 // pred_fallthru
          _
      $region52: #{patch_discriminator_forward.6} parent=5 // pred_fallthru
        _
    $region6: #{patch_discriminator_forward.6} parent=1 // loop_footer
      %s20 = sadd.s32 1, %s16
    $region7: #{patch_discriminator_forward.6} parent=1 // loop_footer_branch
      %15 = sbr.rel target = $region3
    $region8: #{patch_discriminator_forward.6} parent=1 // loop_exit
      _
    %1565 = vsyncpa [#allocation3], 1
    %s1566 = scalar_lea.sflag [#allocation3], 1
    %1567 = vsyncpa %s1566, 1
    %1568 = vsyncpa [#allocation6], 1
    %1569 = vsyncpa [#allocation4], 1
    %s1570 = scalar_lea.sflag [#allocation4], 1
    %1571 = vsyncpa %s1570, 1

// kernel: patch_discriminator_forward.7
$region0: #{patch_discriminator_forward.7}
  #allocation0 [shape = 'u32[]', space=smem, size = 0x4, offset = 0x4, fixed_abs, tag = 'smem constant byte address 0x4 - core index']
  #allocation1 [shape = 'u32[144,128]{1,0:T(1,128)}', space=vmem, size = 0x12000, scoped, tag = 'internal scratch']
  %s0 = inlined_call_operand.hbm [shape: bf16[2,41,64], index: 0, kind: input, shape index: {}]
  %s1 = inlined_call_operand.hbm [shape: bf16[4,64,128], index: 1, kind: input, shape index: {}]
  %s2 = inlined_call_operand.hbm [shape: f32[1,128], index: 2, kind: input, shape index: {}]
  %s3 = inlined_call_operand.hbm [shape: bf16[2,32,128], index: 3, kind: output, shape index: {0}]
  %s4 = inlined_call_operand.hbm [shape: f32[2,1,128], index: 4, kind: output, shape index: {1}]
  %s5 = inlined_call_operand.hbm [shape: f32[2,1,128], index: 5, kind: output, shape index: {2}]
  %6 = xla_tuple %s3, %s4, %s5
  %s7 = sld [smem:[#allocation0]]
  $region73: #{patch_discriminator_forward.7} parent=0
    _
  %s9 = ssub.s32 1, %s7
  %s10 = scalar_select 0, %s9, %s7
  $region1: #{patch_discriminator_forward.7} parent=0
    #allocation2 [shape = 'u8[24576]{0}', space=vmem, size = 0x6000, scoped, tag = 'input window, operand 0']
    #allocation3 [shape = 's32[2]{0}', space=sflag, size = 0x8, scoped, tag = 'scoped memory for patch_discriminator_forward.7']
    #allocation4 [shape = 's32[2]{0}', space=sflag, size = 0x8, scoped, tag = 'scoped memory for patch_discriminator_forward.7']
    #allocation5 [shape = 'u8[65536]{0}', space=vmem, size = 0x10000, scoped, tag = 'input window, operand 1, single buffered']
    #allocation6 [shape = 's32[1]{0}', space=sflag, size = 0x4, scoped, tag = 'scoped memory for patch_discriminator_forward.7']
    #allocation7 [shape = 'u8[512]{0}', space=vmem, size = 0x400, scoped, tag = 'input window, operand 2, single buffered']
    #allocation8 [shape = 'u8[16384]{0}', space=vmem, size = 0x4000, scoped, tag = 'output window, operand 0']
    #allocation9 [shape = 'u8[1024]{0}', space=vmem, size = 0x400, scoped, tag = 'output window, operand 1']
    #allocation10 [shape = 's32[2]{0}', space=sflag, size = 0x8, scoped, tag = 'scoped memory for patch_discriminator_forward.7']
    #allocation11 [shape = 'u8[1024]{0}', space=vmem, size = 0x400, scoped, tag = 'output window, operand 2']
    %11 = vsyncpa [#allocation3], 0
    %s12 = scalar_lea.sflag [#allocation3], 1
    %13 = vsyncpa %s12, 0
    %14 = vsyncpa [#allocation6], 0
    %15 = vsyncpa [#allocation4], 0
    %s16 = scalar_lea.sflag [#allocation4], 1
    %17 = vsyncpa %s16, 0
    %18 = vsyncpa [#allocation10], 0
    %s19 = scalar_lea.sflag [#allocation10], 1
    %20 = vsyncpa %s19, 0
    loop: start=0, step=1, limit=4
    $region2: #{patch_discriminator_forward.7} parent=1 // loop_pre_header
      _
    $region3: #{patch_discriminator_forward.7} parent=1 // loop_header
      %s22 = sphi 0, %s26
      %p23 = scmp.ge.s32.totalorder %s22, 4
      %s32 = sphi 0, %s34
      %s35 = sphi 0, %s32
      %s36 = sphi 0, %s35
      %s52 = sphi 0, %s36
      %s56 = sphi 0, %s56
      %s58 = sphi 0, %s56
      %s59 = sphi 0, %s58
      %s73 = sphi 0, %s59
      %s77 = sphi 0, %s77
      %s79 = sphi 0, %s77
      %s80 = sphi 0, %s79
      %s94 = sphi 0, %s80
      %s100 = sphi 0, %s102
      %s103 = sphi 0, %s100
      %s104 = sphi 0, %s103
      %s120 = sphi 0, %s104
      %s126 = sphi 0, %s128
      %s129 = sphi 0, %s126
      %s130 = sphi 0, %s129
      %s146 = sphi 0, %s130
      %s152 = sphi 0, %s154
      %s155 = sphi 0, %s152
      %s156 = sphi 0, %s155
      %s172 = sphi 0, %s156
    $region4: #{patch_discriminator_forward.7} parent=1 // loop_header_branch
      %25 = sbr.rel (%p23) target = $region8
    $region5: #{patch_discriminator_forward.7} parent=1 // loop_body
      %s27 = ssub.s32 %s22, 1
      %s28 = ssub.s32 %s22, 2
      %s29 = sadd.s32 %s22, 1
      %s30 = ssub.s32 %s22, %s29
      %p31 = scmp.eq.s32.totalorder %s30, 0
      %s33 = sadd.s32 %s32, 1
      %s34 = scalar_select %p31, %s32, %s33
      %p37 = pneg %p31
      %p38 = scmp.eq.s32.totalorder %s22, 1
      %p39 = por %p37, %p38
      %p40 = scmp.ne.s32.totalorder %s32, %s35
      %p41 = scmp.eq.s32.totalorder %s22, 0
      %p42 = por %p40, %p41
      %p43 = scmp.ne.s32.totalorder %s32, %s35
      %p44 = scmp.eq.s32.totalorder %s27, 1
      %p45 = por %p43, %p44
      %p46 = scmp.ne.s32.totalorder %s35, %s36
      %p47 = scmp.eq.s32.totalorder %s27, 0
      %p48 = por %p46, %p47
      %p49 = scmp.ne.s32.totalorder %s35, %s36
      %p50 = scmp.eq.s32.totalorder %s28, 1
      %p51 = por %p49, %p50
      %p53 = scmp.ne.s32.totalorder %s36, %s52
      %p54 = scmp.eq.s32.totalorder %s28, 0
      %p55 = por %p53, %p54
      %s57 = sadd.s32 %s56, 1
      %p60 = scmp.eq.s32.totalorder %s22, 1
      %p61 = scmp.ne.s32.totalorder %s56, %s58
      %p62 = scmp.eq.s32.totalorder %s22, 0
      %p63 = por %p61, %p62
      %p64 = scmp.ne.s32.totalorder %s56, %s58
      %p65 = scmp.eq.s32.totalorder %s27, 1
      %p66 = por %p64, %p65
      %p67 = scmp.ne.s32.totalorder %s58, %s59
      %p68 = scmp.eq.s32.totalorder %s27, 0
      %p69 = por %p67, %p68
      %p70 = scmp.ne.s32.totalorder %s58, %s59
      %p71 = scmp.eq.s32.totalorder %s28, 1
      %p72 = por %p70, %p71
      %p74 = scmp.ne.s32.totalorder %s59, %s73
      %p75 = scmp.eq.s32.totalorder %s28, 0
      %p76 = por %p74, %p75
      %s78 = sadd.s32 %s77, 1
      %p81 = scmp.eq.s32.totalorder %s22, 1
      %p82 = scmp.ne.s32.totalorder %s77, %s79
      %p83 = scmp.eq.s32.totalorder %s22, 0
      %p84 = por %p82, %p83
      %p85 = scmp.ne.s32.totalorder %s77, %s79
      %p86 = scmp.eq.s32.totalorder %s27, 1
      %p87 = por %p85, %p86
      %p88 = scmp.ne.s32.totalorder %s79, %s80
      %p89 = scmp.eq.s32.totalorder %s27, 0
      %p90 = por %p88, %p89
      %p91 = scmp.ne.s32.totalorder %s79, %s80
      %p92 = scmp.eq.s32.totalorder %s28, 1
      %p93 = por %p91, %p92
      %p95 = scmp.ne.s32.totalorder %s80, %s94
      %p96 = scmp.eq.s32.totalorder %s28, 0
      %p97 = por %p95, %p96
      %s98 = ssub.s32 %s22, %s29
      %p99 = scmp.eq.s32.totalorder %s98, 0
      %s101 = sadd.s32 %s100, 1
      %s102 = scalar_select %p99, %s100, %s101
      %p105 = pneg %p99
      %p106 = scmp.eq.s32.totalorder %s22, 1
      %p107 = por %p105, %p106
      %p108 = scmp.ne.s32.totalorder %s100, %s103
      %p109 = scmp.eq.s32.totalorder %s22, 0
      %p110 = por %p108, %p109
      %p111 = scmp.ne.s32.totalorder %s100, %s103
      %p112 = scmp.eq.s32.totalorder %s27, 1
      %p113 = por %p111, %p112
      %p114 = scmp.ne.s32.totalorder %s103, %s104
      %p115 = scmp.eq.s32.totalorder %s27, 0
      %p116 = por %p114, %p115
      %p117 = scmp.ne.s32.totalorder %s103, %s104
      %p118 = scmp.eq.s32.totalorder %s28, 1
      %p119 = por %p117, %p118
      %p121 = scmp.ne.s32.totalorder %s104, %s120
      %p122 = scmp.eq.s32.totalorder %s28, 0
      %p123 = por %p121, %p122
      %s124 = ssub.s32 %s22, %s29
      %p125 = scmp.eq.s32.totalorder %s124, 0
      %s127 = sadd.s32 %s126, 1
      %s128 = scalar_select %p125, %s126, %s127
      %p131 = pneg %p125
      %p132 = scmp.eq.s32.totalorder %s22, 1
      %p133 = por %p131, %p132
      %p134 = scmp.ne.s32.totalorder %s126, %s129
      %p135 = scmp.eq.s32.totalorder %s22, 0
      %p136 = por %p134, %p135
      %p137 = scmp.ne.s32.totalorder %s126, %s129
      %p138 = scmp.eq.s32.totalorder %s27, 1
      %p139 = por %p137, %p138
      %p140 = scmp.ne.s32.totalorder %s129, %s130
      %p141 = scmp.eq.s32.totalorder %s27, 0
      %p142 = por %p140, %p141
      %p143 = scmp.ne.s32.totalorder %s129, %s130
      %p144 = scmp.eq.s32.totalorder %s28, 1
      %p145 = por %p143, %p144
      %p147 = scmp.ne.s32.totalorder %s130, %s146
      %p148 = scmp.eq.s32.totalorder %s28, 0
      %p149 = por %p147, %p148
      %s150 = ssub.s32 %s22, %s29
      %p151 = scmp.eq.s32.totalorder %s150, 0
      %s153 = sadd.s32 %s152, 1
      %s154 = scalar_select %p151, %s152, %s153
      %p157 = pneg %p151
      %p158 = scmp.eq.s32.totalorder %s22, 1
      %p159 = por %p157, %p158
      %p160 = scmp.ne.s32.totalorder %s152, %s155
      %p161 = scmp.eq.s32.totalorder %s22, 0
      %p162 = por %p160, %p161
      %p163 = scmp.ne.s32.totalorder %s152, %s155
      %p164 = scmp.eq.s32.totalorder %s27, 1
      %p165 = por %p163, %p164
      %p166 = scmp.ne.s32.totalorder %s155, %s156
      %p167 = scmp.eq.s32.totalorder %s27, 0
      %p168 = por %p166, %p167
      %p169 = scmp.ne.s32.totalorder %s155, %s156
      %p170 = scmp.eq.s32.totalorder %s28, 1
      %p171 = por %p169, %p170
      %p173 = scmp.ne.s32.totalorder %s156, %s172
      %p174 = scmp.eq.s32.totalorder %s28, 0
      %p175 = por %p173, %p174
      %p176 = scmp.le.s32.totalorder 1, %s22
      %p177 = scmp.lt.s32.totalorder %s22, 3
      %p178 = pnand %p176, %p177
      %p179 = pneg %p178
      // Predicated region
      $region9: #{patch_discriminator_forward.7} parent=5 // pred_check
        _
      $region10: #{patch_discriminator_forward.7} parent=5 // pred_check_branch
        %181 = sbr.rel (%p178) target = $region12
      $region11: #{patch_discriminator_forward.7} parent=5 // pred_region
        %s182 = ssub.s32 %s22, 1
        // Predicated region
        $region13: #{patch_discriminator_forward.7} parent=11 // pred_check
          %p183 = pneg %p69
        $region14: #{patch_discriminator_forward.7} parent=11 // pred_check_branch
          %185 = sbr.rel (%p183) target = $region16
        $region15: #{patch_discriminator_forward.7} parent=11 // pred_region
          %s187 = ssub.s32 2048, 2048
          %188 = vsyncadd [#allocation6], %s187
          %s189 = sshll.u32 [#allocation5], 4
          %s190 = int_to_ptr.vmem [resolvable:$true] %s189
          %195 = dma.hbm_to_vmem [thread:$0]  %s1, 2048, %s190, [#allocation6], 64, 64, 4
        $region16: #{patch_discriminator_forward.7} parent=11 // pred_fallthru
          _
        // Predicated region
        $region17: #{patch_discriminator_forward.7} parent=11 // pred_check
          %p196 = pneg %p90
        $region18: #{patch_discriminator_forward.7} parent=11 // pred_check_branch
          %198 = sbr.rel (%p196) target = $region20
        $region19: #{patch_discriminator_forward.7} parent=11 // pred_region
          %s200 = ssub.s32 16, 16
          %201 = vsyncadd [#allocation6], %s200
          %s203 = sshll.u32 [#allocation7], 4
          %s204 = int_to_ptr.vmem [resolvable:$true] %s203
          %206 = dma.hbm_to_vmem [thread:$0]  %s2, 16, %s204, [#allocation6]
        $region20: #{patch_discriminator_forward.7} parent=11 // pred_fallthru
          _
      $region12: #{patch_discriminator_forward.7} parent=5 // pred_fallthru
        _
      %p207 = scmp.lt.s32.totalorder %s22, 2
      // Predicated region
      $region21: #{patch_discriminator_forward.7} parent=5 // pred_check
        %p208 = pneg %p207
      $region22: #{patch_discriminator_forward.7} parent=5 // pred_check_branch
        %210 = sbr.rel (%p208) target = $region24
      $region23: #{patch_discriminator_forward.7} parent=5 // pred_region
        // Predicated region
        $region25: #{patch_discriminator_forward.7} parent=23 // pred_check
          %p211 = pneg %p42
        $region26: #{patch_discriminator_forward.7} parent=23 // pred_check_branch
          %213 = sbr.rel (%p211) target = $region28
        $region27: #{patch_discriminator_forward.7} parent=23 // pred_region
          %s214 = sand.u32 %s32, 1
          %s215 = scalar_lea.sflag [#allocation3], %s214
          %s216 = sand.u32 %s32, 1
          %s217 = smul.addr %s216, 24
          %s218 = scalar_lea.vmem [#allocation2], %s217
          %s220 = ssub.s32 384, 384
          %221 = vsyncadd %s215, %s220
          %s222 = smul.addr %s22, 6
          %s223 = smul.addr %s222, 64
          %s224 = scalar_lea.hbm %s0, %s223
          %s225 = sshll.u32 %s218, 4
          %s226 = int_to_ptr.vmem [resolvable:$true] %s225
          %231 = dma.hbm_to_vmem [thread:$0]  %s224, 384, %s226, %s215, 64, 64, 4
        $region28: #{patch_discriminator_forward.7} parent=23 // pred_fallthru
          _
      $region24: #{patch_discriminator_forward.7} parent=5 // pred_fallthru
        _
      %p232 = scmp.le.s32.totalorder 1, %s22
      %p233 = scmp.lt.s32.totalorder %s22, 3
      %p234 = pnand %p232, %p233
      %p235 = pneg %p234
      // Predicated region
      $region29: #{patch_discriminator_forward.7} parent=5 // pred_check
        _
      $region30: #{patch_discriminator_forward.7} parent=5 // pred_check_branch
        %237 = sbr.rel (%p234) target = $region32
      $region31: #{patch_discriminator_forward.7} parent=5 // pred_region
        %s238 = ssub.s32 %s22, 1
        %s239 = sand.u32 %s35, 1
        %s240 = scalar_lea.sflag [#allocation3], %s239
        %s241 = sand.u32 %s35, 1
        %s242 = smul.addr %s241, 24
        %s243 = scalar_lea.vmem [#allocation2], %s242
        // Predicated region
        $region33: #{patch_discriminator_forward.7} parent=31 // pred_check
          %p244 = pneg %p48
        $region34: #{patch_discriminator_forward.7} parent=31 // pred_check_branch
          %246 = sbr.rel (%p244) target = $region36
        $region35: #{patch_discriminator_forward.7} parent=31 // pred_region
          %247 = dma.done %s240, 384
        $region36: #{patch_discriminator_forward.7} parent=31 // pred_fallthru
          _
        // Predicated region
        $region37: #{patch_discriminator_forward.7} parent=31 // pred_check
          %p248 = pneg %p69
        $region38: #{patch_discriminator_forward.7} parent=31 // pred_check_branch
          %250 = sbr.rel (%p248) target = $region40
        $region39: #{patch_discriminator_forward.7} parent=31 // pred_region
          %251 = dma.done [#allocation6], 2048
        $region40: #{patch_discriminator_forward.7} parent=31 // pred_fallthru
          _
        // Predicated region
        $region41: #{patch_discriminator_forward.7} parent=31 // pred_check
          %p252 = pneg %p90
        $region42: #{patch_discriminator_forward.7} parent=31 // pred_check_branch
          %254 = sbr.rel (%p252) target = $region44
        $region43: #{patch_discriminator_forward.7} parent=31 // pred_region
          %255 = dma.done [#allocation6], 16
        $region44: #{patch_discriminator_forward.7} parent=31 // pred_fallthru
          _
        %s256 = sand.u32 %s35, 1
        %s257 = scalar_lea.sflag [#allocation3], %s256
        %s258 = sand.u32 %s35, 1
        %s259 = smul.addr %s258, 24
        %s260 = scalar_lea.vmem [#allocation2], %s259
        %p261 = pneg %p48
        %p262 = pneg %p45
        %p263 = pneg %p69
        %p264 = pneg %p66
        %p265 = pneg %p90
        %p266 = pneg %p87
        %p267 = pneg %p116
        %p268 = pneg %p113
        %s269 = sand.u32 %s103, 1
        %s270 = scalar_lea.sflag [#allocation4], %s269
        %s271 = sand.u32 %s103, 1
        %s272 = smul.addr %s271, 16
        %s273 = scalar_lea.vmem [#allocation8], %s272
        %p274 = pneg %p142
        %p275 = pneg %p139
        %s276 = sand.u32 %s27, 1
        %s277 = scalar_lea.sflag [#allocation10], %s276
        %s278 = sand.u32 %s129, 1
        %s279 = scalar_lea.vmem [#allocation9], %s278
        %p280 = pneg %p168
        %p281 = pneg %p165
        %s282 = sand.u32 %s27, 1
        %s283 = scalar_lea.sflag [#allocation10], %s282
        %s284 = sand.u32 %s155, 1
        %s285 = scalar_lea.vmem [#allocation11], %s284
        %v287 = vld [vmem:[%s243] sm:$0xf]
        %v288 = vld [vmem:[%s243 + $0x4] sm:$0xf]
        %v289 = vld [vmem:[%s243 + $0x8] sm:$0xf]
        %v290 = vld [vmem:[%s243 + $0xc] sm:$0xf]
        %v291 = vld [vmem:[#allocation5] sm:$0xf]
        %v292 = vld [vmem:[#allocation5 + $0x4] sm:$0xf]
        %v293 = vld [vmem:[#allocation5 + $0x8] sm:$0xf]
        %v294 = vld [vmem:[#allocation5 + $0xc] sm:$0xf]
        %v295 = vld [vmem:[#allocation5 + $0x10] sm:$0xf]
        %v296 = vld [vmem:[#allocation5 + $0x14] sm:$0xf]
        %v297 = vld [vmem:[#allocation5 + $0x18] sm:$0xf]
        %v298 = vld [vmem:[#allocation5 + $0x1c] sm:$0xf]
        %v299 = vld [vmem:[%s243 + $0x10] sm:$0x1]
        %s300 = scalar_lea.vmem [#allocation5], 32
        %v301 = vld [vmem:[%s300] sm:$0xf]
        %v302 = vld [vmem:[%s300 + $0x4] sm:$0xf]
        %v303 = vld [vmem:[%s300 + $0x8] sm:$0xf]
        %v304 = vld [vmem:[%s300 + $0xc] sm:$0xf]
        %v305 = vld [vmem:[%s300 + $0x10] sm:$0xf]
        %v306 = vld [vmem:[%s300 + $0x14] sm:$0xf]
        %v307 = vld [vmem:[%s300 + $0x18] sm:$0xf]
        %v308 = vld [vmem:[%s300 + $0x1c] sm:$0xf]
        %v314 = vunpack.c.l.b16 %v287
        %v315 = vunpack.c.l.b16 %v288
        %v316 = vunpack.c.l.b16 %v289
        %v317 = vunpack.c.l.b16 %v290
        %v318 = vunpack.c.l.b16 %v299
        %v319 = vpack.c.b16 %v315, %v314
        %v320 = vpack.c.b16 %v317, %v316
        %v321 = vpack.c.b16 %v318, %v318
        %vm322 = vsmask.f32 7424
        %v324 = vshrl.u32 %v319, 16
        %v326 = vshll.u32 %v319, 16
        %v328 = vrot.slane %v326, 1
        %v329 = vor.u32 %v324, %v328
        %v331 = vshll.u32 %v320, 16
        %v333 = vrot.slane %v331, 1
        %v334 = vsel %vm322, %v329, %v333
        %v335 = vshrl.u32 %v320, 16
        %v337 = vor.u32 %v335, %v333
        %v339 = vshll.u32 %v321, 16
        %v341 = vrot.slane %v339, 1
        %v342 = vsel %vm322, %v337, %v341
        %v351 = vunpack.c.l.b16 %v301
        %v352 = vunpack.c.l.b16 %v302
        %v353 = vunpack.c.l.b16 %v303
        %v354 = vunpack.c.l.b16 %v304
        %v355 = vunpack.c.l.b16 %v305
        %v356 = vunpack.c.l.b16 %v306
        %v357 = vunpack.c.l.b16 %v307
        %v358 = vunpack.c.l.b16 %v308
        %v359 = vpack.c.b16 %v352, %v351
        %v360 = vpack.c.b16 %v354, %v353
        %v361 = vpack.c.b16 %v356, %v355
        %v362 = vpack.c.b16 %v358, %v357
        %vm367 = vcmask 523264
        %v369 = vsel %vm367, %v334, 0
        %v372 = vsel %vm367, %v342, 0
        %374 = vmatprep.subr.bf16.mxu0 0
        %375 = vmatpush1.bf16.msra.mxu0 %v359
        %376 = vmatprep.subr.bf16.mxu0 0
        %377 = vmatpush1.bf16.msra.mxu0 %v360
        %378 = vmatprep.subr.bf16.mxu0 0
        %379 = vmatpush1.bf16.msra.mxu0 %v361
        %380 = vmatprep.subr.bf16.mxu0 0
        %381 = vmatpush1.bf16.msra.mxu0 %v362
        %382 = vmatprep.subr.bf16.mxu0 0
        %383 = vmatpush1.bf16.msra.mxu0 0
        %384 = vmatprep.subr.bf16.mxu0 0
        %385 = vmatpush1.bf16.msra.mxu0 0
        %386 = vmatprep.subr.bf16.mxu0 0
        %387 = vmatpush1.bf16.msra.mxu0 0
        %388 = vmatprep.subr.bf16.mxu0 0
        %389 = vmatpush1.bf16.msra.mxu0 0
        %390 = vmatprep.subr.bf16.mxu0 0
        %391 = vmatpush1.bf16.msra.mxu0 0
        %392 = vmatprep.subr.bf16.mxu0 0
        %393 = vmatpush1.bf16.msra.mxu0 0
        %394 = vmatprep.subr.bf16.mxu0 0
        %395 = vmatpush1.bf16.msra.mxu0 0
        %396 = vmatprep.subr.bf16.mxu0 0
        %397 = vmatpush1.bf16.msra.mxu0 0
        %398 = vmatprep.subr.bf16.mxu0 0
        %399 = vmatpush1.bf16.msra.mxu0 0
        %400 = vmatprep.subr.bf16.mxu0 0
        %401 = vmatpush1.bf16.msra.mxu0 0
        %402 = vmatprep.subr.bf16.mxu0 0
        %403 = vmatpush1.bf16.msra.mxu0 0
        %404 = vmatprep.subr.bf16.mxu0 0
        %405 = vmatpush1.bf16.msra.mxu0 0
        %406 = vmatprep.mubr.bf16.mxu0 0
        %407 = vmatmul.mubr.bf16.gmra.mrb[0].mxu0 %v369
        %v408 = vpop.f32.mrb[0].mxu0
        %v409 = vadd.f32 0.0, %v408
        %v410 = vpop.f32.mrb[0].mxu0
        %v411 = vpop.f32.mrb[0].mxu0
        %v412 = vadd.f32 0.0, %v411
        %v413 = vpop.f32.mrb[0].mxu0
        %414 = vmatprep.mubr.bf16.mxu0 0
        %415 = vmatmul.mubr.bf16.gmra.mrb[0].mxu0 %v372
        %v416 = vpop.f32.mrb[0].mxu0
        %v417 = vadd.f32 0.0, %v416
        %v418 = vpop.f32.mrb[0].mxu0
        %v419 = vpop.f32.mrb[0].mxu0
        %v420 = vadd.f32 0.0, %v419
        %v421 = vpop.f32.mrb[0].mxu0
        %422 = vdwg.mxu0
        %v431 = vunpack.c.l.b16 %v291
        %v432 = vunpack.c.l.b16 %v292
        %v433 = vunpack.c.l.b16 %v293
        %v434 = vunpack.c.l.b16 %v294
        %v435 = vunpack.c.l.b16 %v295
        %v436 = vunpack.c.l.b16 %v296
        %v437 = vunpack.c.l.b16 %v297
        %v438 = vunpack.c.l.b16 %v298
        %v439 = vpack.c.b16 %v432, %v431
        %v440 = vpack.c.b16 %v434, %v433
        %v441 = vpack.c.b16 %v436, %v435
        %v442 = vpack.c.b16 %v438, %v437
        %v447 = vsel %vm367, %v319, 0
        %v449 = vsel %vm367, %v320, 0
        %451 = vmatprep.subr.bf16.mxu0 0
        %452 = vmatpush1.bf16.msra.mxu0 %v439
        %453 = vmatprep.subr.bf16.mxu0 0
        %454 = vmatpush1.bf16.msra.mxu0 %v440
        %455 = vmatprep.subr.bf16.mxu0 0
        %456 = vmatpush1.bf16.msra.mxu0 %v441
        %457 = vmatprep.subr.bf16.mxu0 0
        %458 = vmatpush1.bf16.msra.mxu0 %v442
        %459 = vmatprep.subr.bf16.mxu0 0
        %460 = vmatpush1.bf16.msra.mxu0 0
        %461 = vmatprep.subr.bf16.mxu0 0
        %462 = vmatpush1.bf16.msra.mxu0 0
        %463 = vmatprep.subr.bf16.mxu0 0
        %464 = vmatpush1.bf16.msra.mxu0 0
        %465 = vmatprep.subr.bf16.mxu0 0
        %466 = vmatpush1.bf16.msra.mxu0 0
        %467 = vmatprep.subr.bf16.mxu0 0
        %468 = vmatpush1.bf16.msra.mxu0 0
        %469 = vmatprep.subr.bf16.mxu0 0
        %470 = vmatpush1.bf16.msra.mxu0 0
        %471 = vmatprep.subr.bf16.mxu0 0
        %472 = vmatpush1.bf16.msra.mxu0 0
        %473 = vmatprep.subr.bf16.mxu0 0
        %474 = vmatpush1.bf16.msra.mxu0 0
        %475 = vmatprep.subr.bf16.mxu0 0
        %476 = vmatpush1.bf16.msra.mxu0 0
        %477 = vmatprep.subr.bf16.mxu0 0
        %478 = vmatpush1.bf16.msra.mxu0 0
        %479 = vmatprep.subr.bf16.mxu0 0
        %480 = vmatpush1.bf16.msra.mxu0 0
        %481 = vmatprep.subr.bf16.mxu0 0
        %482 = vmatpush1.bf16.msra.mxu0 0
        %483 = vmatprep.mubr.bf16.mxu0 0
        %484 = vmatmul.mubr.bf16.gmra.mrb[0].mxu0 %v447
        %v485 = vpop.f32.mrb[0].mxu0
        %v486 = vadd.f32 %v409, %v485
        %v487 = vpop.f32.mrb[0].mxu0
        %v488 = vpop.f32.mrb[0].mxu0
        %v489 = vadd.f32 %v412, %v488
        %v490 = vpop.f32.mrb[0].mxu0
        %491 = vmatprep.mubr.bf16.mxu0 0
        %492 = vmatmul.mubr.bf16.gmra.mrb[0].mxu0 %v449
        %v493 = vpop.f32.mrb[0].mxu0
        %v494 = vadd.f32 %v417, %v493
        %v495 = vpop.f32.mrb[0].mxu0
        %v496 = vpop.f32.mrb[0].mxu0
        %v497 = vadd.f32 %v420, %v496
        %v498 = vpop.f32.mrb[0].mxu0
        %499 = vdwg.mxu0
        %v500 = vld [vmem:[%s243 + $0x10] sm:$0xf]
        %s501 = scalar_lea.vmem [#allocation5], 64
        %v502 = vld [vmem:[%s501] sm:$0xf]
        %v503 = vld [vmem:[%s501 + $0x4] sm:$0xf]
        %v504 = vld [vmem:[%s501 + $0x8] sm:$0xf]
        %v505 = vld [vmem:[%s501 + $0xc] sm:$0xf]
        %v506 = vld [vmem:[%s501 + $0x10] sm:$0xf]
        %v507 = vld [vmem:[%s501 + $0x14] sm:$0xf]
        %v508 = vld [vmem:[%s501 + $0x18] sm:$0xf]
        %v509 = vld [vmem:[%s501 + $0x1c] sm:$0xf]
        %v511 = vunpack.c.l.b16 %v500
        %v512 = vpack.c.b16 %v316, %v315
        %v513 = vpack.c.b16 %v511, %v317
        %v522 = vunpack.c.l.b16 %v502
        %v523 = vunpack.c.l.b16 %v503
        %v524 = vunpack.c.l.b16 %v504
        %v525 = vunpack.c.l.b16 %v505
        %v526 = vunpack.c.l.b16 %v506
        %v527 = vunpack.c.l.b16 %v507
        %v528 = vunpack.c.l.b16 %v508
        %v529 = vunpack.c.l.b16 %v509
        %v530 = vpack.c.b16 %v523, %v522
        %v531 = vpack.c.b16 %v525, %v524
        %v532 = vpack.c.b16 %v527, %v526
        %v533 = vpack.c.b16 %v529, %v528
        %v539 = vsel %vm367, %v512, 0
        %v542 = vsel %vm367, %v513, 0
        %544 = vmatprep.subr.bf16.mxu0 0
        %545 = vmatpush1.bf16.msra.mxu0 %v530
        %546 = vmatprep.subr.bf16.mxu0 0
        %547 = vmatpush1.bf16.msra.mxu0 %v531
        %548 = vmatprep.subr.bf16.mxu0 0
        %549 = vmatpush1.bf16.msra.mxu0 %v532
        %550 = vmatprep.subr.bf16.mxu0 0
        %551 = vmatpush1.bf16.msra.mxu0 %v533
        %552 = vmatprep.subr.bf16.mxu0 0
        %553 = vmatpush1.bf16.msra.mxu0 0
        %554 = vmatprep.subr.bf16.mxu0 0
        %555 = vmatpush1.bf16.msra.mxu0 0
        %556 = vmatprep.subr.bf16.mxu0 0
        %557 = vmatpush1.bf16.msra.mxu0 0
        %558 = vmatprep.subr.bf16.mxu0 0
        %559 = vmatpush1.bf16.msra.mxu0 0
        %560 = vmatprep.subr.bf16.mxu0 0
        %561 = vmatpush1.bf16.msra.mxu0 0
        %562 = vmatprep.subr.bf16.mxu0 0
        %563 = vmatpush1.bf16.msra.mxu0 0
        %564 = vmatprep.subr.bf16.mxu0 0
        %565 = vmatpush1.bf16.msra.mxu0 0
        %566 = vmatprep.subr.bf16.mxu0 0
        %567 = vmatpush1.bf16.msra.mxu0 0
        %568 = vmatprep.subr.bf16.mxu0 0
        %569 = vmatpush1.bf16.msra.mxu0 0
        %570 = vmatprep.subr.bf16.mxu0 0
        %571 = vmatpush1.bf16.msra.mxu0 0
        %572 = vmatprep.subr.bf16.mxu0 0
        %573 = vmatpush1.bf16.msra.mxu0 0
        %574 = vmatprep.subr.bf16.mxu0 0
        %575 = vmatpush1.bf16.msra.mxu0 0
        %576 = vmatprep.mubr.bf16.mxu0 0
        %577 = vmatmul.mubr.bf16.gmra.mrb[0].mxu0 %v539
        %v578 = vpop.f32.mrb[0].mxu0
        %v579 = vadd.f32 0.0, %v578
        %v580 = vpop.f32.mrb[0].mxu0
        %v581 = vpop.f32.mrb[0].mxu0
        %v582 = vadd.f32 0.0, %v581
        %v583 = vpop.f32.mrb[0].mxu0
        %584 = vmatprep.mubr.bf16.mxu0 0
        %585 = vmatmul.mubr.bf16.gmra.mrb[0].mxu0 %v542
        %v586 = vpop.f32.mrb[0].mxu0
        %v587 = vadd.f32 0.0, %v586
        %v588 = vpop.f32.mrb[0].mxu0
        %v589 = vpop.f32.mrb[0].mxu0
        %v590 = vadd.f32 0.0, %v589
        %v591 = vpop.f32.mrb[0].mxu0
        %592 = vdwg.mxu0
        %v593 = vadd.f32 %v486, %v579
        %v594 = vadd.f32 %v489, %v582
        %v595 = vadd.f32 %v494, %v587
        %v596 = vadd.f32 %v497, %v590
        %v597 = vld [vmem:[%s243 + $0x4] sm:$0xf]
        %v598 = vld [vmem:[%s243 + $0x8] sm:$0xf]
        %v599 = vld [vmem:[%s243 + $0xc] sm:$0xf]
        %v600 = vld [vmem:[%s243 + $0x10] sm:$0xf]
        %v601 = vld [vmem:[%s243 + $0x14] sm:$0x1]
        %s602 = scalar_lea.vmem [#allocation5], 96
        %v603 = vld [vmem:[%s602] sm:$0xf]
        %v604 = vld [vmem:[%s602 + $0x4] sm:$0xf]
        %v605 = vld [vmem:[%s602 + $0x8] sm:$0xf]
        %v606 = vld [vmem:[%s602 + $0xc] sm:$0xf]
        %v607 = vld [vmem:[%s602 + $0x10] sm:$0xf]
        %v608 = vld [vmem:[%s602 + $0x14] sm:$0xf]
        %v609 = vld [vmem:[%s602 + $0x18] sm:$0xf]
        %v610 = vld [vmem:[%s602 + $0x1c] sm:$0xf]
        %v616 = vunpack.c.l.b16 %v597
        %v617 = vunpack.c.l.b16 %v598
        %v618 = vunpack.c.l.b16 %v599
        %v619 = vunpack.c.l.b16 %v600
        %v620 = vunpack.c.l.b16 %v601
        %v621 = vpack.c.b16 %v617, %v616
        %v622 = vpack.c.b16 %v619, %v618
        %v623 = vpack.c.b16 %v620, %v620
        %v625 = vshrl.u32 %v621, 16
        %v627 = vshll.u32 %v621, 16
        %v629 = vrot.slane %v627, 1
        %v630 = vor.u32 %v625, %v629
        %v632 = vshll.u32 %v622, 16
        %v634 = vrot.slane %v632, 1
        %v635 = vsel %vm322, %v630, %v634
        %v636 = vshrl.u32 %v622, 16
        %v638 = vor.u32 %v636, %v634
        %v640 = vshll.u32 %v623, 16
        %v642 = vrot.slane %v640, 1
        %v643 = vsel %vm322, %v638, %v642
        %v652 = vunpack.c.l.b16 %v603
        %v653 = vunpack.c.l.b16 %v604
        %v654 = vunpack.c.l.b16 %v605
        %v655 = vunpack.c.l.b16 %v606
        %v656 = vunpack.c.l.b16 %v607
        %v657 = vunpack.c.l.b16 %v608
        %v658 = vunpack.c.l.b16 %v609
        %v659 = vunpack.c.l.b16 %v610
        %v660 = vpack.c.b16 %v653, %v652
        %v661 = vpack.c.b16 %v655, %v654
        %v662 = vpack.c.b16 %v657, %v656
        %v663 = vpack.c.b16 %v659, %v658
        %v669 = vsel %vm367, %v635, 0
        %v672 = vsel %vm367, %v643, 0
        %674 = vmatprep.subr.bf16.mxu0 0
        %675 = vmatpush1.bf16.msra.mxu0 %v660
        %676 = vmatprep.subr.bf16.mxu0 0
        %677 = vmatpush1.bf16.msra.mxu0 %v661
        %678 = vmatprep.subr.bf16.mxu0 0
        %679 = vmatpush1.bf16.msra.mxu0 %v662
        %680 = vmatprep.subr.bf16.mxu0 0
        %681 = vmatpush1.bf16.msra.mxu0 %v663
        %682 = vmatprep.subr.bf16.mxu0 0
        %683 = vmatpush1.bf16.msra.mxu0 0
        %684 = vmatprep.subr.bf16.mxu0 0
        %685 = vmatpush1.bf16.msra.mxu0 0
        %686 = vmatprep.subr.bf16.mxu0 0
        %687 = vmatpush1.bf16.msra.mxu0 0
        %688 = vmatprep.subr.bf16.mxu0 0
        %689 = vmatpush1.bf16.msra.mxu0 0
        %690 = vmatprep.subr.bf16.mxu0 0
        %691 = vmatpush1.bf16.msra.mxu0 0
        %692 = vmatprep.subr.bf16.mxu0 0
        %693 = vmatpush1.bf16.msra.mxu0 0
        %694 = vmatprep.subr.bf16.mxu0 0
        %695 = vmatpush1.bf16.msra.mxu0 0
        %696 = vmatprep.subr.bf16.mxu0 0
        %697 = vmatpush1.bf16.msra.mxu0 0
        %698 = vmatprep.subr.bf16.mxu0 0
        %699 = vmatpush1.bf16.msra.mxu0 0
        %700 = vmatprep.subr.bf16.mxu0 0
        %701 = vmatpush1.bf16.msra.mxu0 0
        %702 = vmatprep.subr.bf16.mxu0 0
        %703 = vmatpush1.bf16.msra.mxu0 0
        %704 = vmatprep.subr.bf16.mxu0 0
        %705 = vmatpush1.bf16.msra.mxu0 0
        %706 = vmatprep.mubr.bf16.mxu0 0
        %707 = vmatmul.mubr.bf16.gmra.mrb[0].mxu0 %v669
        %v708 = vpop.f32.mrb[0].mxu0
        %v709 = vadd.f32 0.0, %v708
        %v710 = vpop.f32.mrb[0].mxu0
        %v711 = vpop.f32.mrb[0].mxu0
        %v712 = vadd.f32 0.0, %v711
        %v713 = vpop.f32.mrb[0].mxu0
        %714 = vmatprep.mubr.bf16.mxu0 0
        %715 = vmatmul.mubr.bf16.gmra.mrb[0].mxu0 %v672
        %v716 = vpop.f32.mrb[0].mxu0
        %v717 = vadd.f32 0.0, %v716
        %v718 = vpop.f32.mrb[0].mxu0
        %v719 = vpop.f32.mrb[0].mxu0
        %v720 = vadd.f32 0.0, %v719
        %v721 = vpop.f32.mrb[0].mxu0
        %722 = vdwg.mxu0
        %v723 = vadd.f32 %v593, %v709
        %v724 = vadd.f32 %v594, %v712
        %v725 = vadd.f32 %v595, %v717
        %v726 = vadd.f32 %v596, %v720
        %v727 = vld [vmem:[#allocation7] sm:$0x1]
        %v729 = vlaneseq
        %v730 = vshrl.u32 %v729, 7
        %v731 = vsub.s32 0, %v730
        %v732 = vrot.slane %v727, %v731
        %v734 = vadd.f32 %v723, %v732
        %v735 = vadd.f32 %v724, %v732
        %v736 = vadd.f32 %v725, %v732
        %v737 = vadd.f32 %v726, %v732
        %v738 = vlaneseq
        %v739 = vshrl.u32 %v738, 7
        %v740 = vadd.s32 %v739, 8
        %v741 = vadd.s32 %v739, 16
        %v742 = vadd.s32 %v739, 24
        %vm743 = vcmp.lt.s32.totalorder %v739, 0
        %v744 = vsub.s32 0, %v739
        %v745 = vsel %vm743, %v744, %v739
        %v746 = vshrl.u32 %v745, 3
        %v747 = vand.u32 %v745, 7
        %v748 = vsub.s32 0, %v747
        %v749 = vsel %vm743, %v748, %v747
        %vm750 = vcmp.lt.s32.totalorder %v740, 0
        %v751 = vsub.s32 0, %v740
        %v752 = vsel %vm750, %v751, %v740
        %v753 = vshrl.u32 %v752, 3
        %v754 = vand.u32 %v752, 7
        %v755 = vsub.s32 0, %v754
        %v756 = vsel %vm750, %v755, %v754
        %vm757 = vcmp.lt.s32.totalorder %v741, 0
        %v758 = vsub.s32 0, %v741
        %v759 = vsel %vm757, %v758, %v741
        %v760 = vshrl.u32 %v759, 3
        %v761 = vand.u32 %v759, 7
        %v762 = vsub.s32 0, %v761
        %v763 = vsel %vm757, %v762, %v761
        %vm764 = vcmp.lt.s32.totalorder %v742, 0
        %v765 = vsub.s32 0, %v742
        %v766 = vsel %vm764, %v765, %v742
        %v767 = vshrl.u32 %v766, 3
        %v768 = vand.u32 %v766, 7
        %v769 = vsub.s32 0, %v768
        %v770 = vsel %vm764, %v769, %v768
        %vm771 = vcmp.ne.s32.totalorder %v749, 0
        %vm772 = vcmp.ne.s32.totalorder %v756, 0
        %vm773 = vcmp.ne.s32.totalorder %v763, 0
        %vm774 = vcmp.ne.s32.totalorder %v770, 0
        %vm775 = vcmp.lt.s32.totalorder %v749, 0
        %vm776 = vcmp.lt.s32.totalorder %v756, 0
        %vm777 = vcmp.lt.s32.totalorder %v763, 0
        %vm778 = vcmp.lt.s32.totalorder %v770, 0
        %vm779 = vmand %vm775, %vm771
        %vm780 = vmand %vm776, %vm772
        %vm781 = vmand %vm777, %vm773
        %vm782 = vmand %vm778, %vm774
        %v783 = vadd.s32 %v749, 8
        %v784 = vadd.s32 %v756, 8
        %v785 = vadd.s32 %v763, 8
        %v786 = vadd.s32 %v770, 8
        %v787 = vsel %vm779, %v783, %v749
        %v788 = vsel %vm780, %v784, %v756
        %v789 = vsel %vm781, %v785, %v763
        %v790 = vsel %vm782, %v786, %v770
        %vm791 = vcmp.lt.s32.totalorder %v787, 4
        %vm792 = vcmp.lt.s32.totalorder %v788, 4
        %vm793 = vcmp.lt.s32.totalorder %v789, 4
        %vm794 = vcmp.lt.s32.totalorder %v790, 4
        %v795 = vsel %vm791, 1, 0
        %v796 = vsel %vm792, 1, 0
        %v797 = vsel %vm793, 1, 0
        %v798 = vsel %vm794, 1, 0
        %vm799 = vcmp.eq.s32.totalorder %v795, 1
        %vm800 = vcmp.eq.s32.totalorder %v796, 1
        %vm801 = vcmp.eq.s32.totalorder %v797, 1
        %vm802 = vcmp.eq.s32.totalorder %v798, 1
        %v803 = vsel %vm799, %v734, 0.0
        %v804 = vsel %vm800, %v735, 0.0
        %v805 = vsel %vm801, %v736, 0.0
        %v806 = vsel %vm802, %v737, 0.0
        %v807 = vadd.f32 %v803, %v804
        %v808 = vadd.f32 %v807, %v805
        %v809 = vadd.f32 %v808, %v806
        %v810 = vrot.slane %v809, 4
        %v811 = vadd.f32 %v809, %v810
        %v812 = vrot.slane %v811, 2
        %v813 = vadd.f32 %v811, %v812
        %v814 = vrot.slane %v813, 1
        %v815 = vadd.f32 %v813, %v814
        %816 = vst [vmem:[%s279] sm:$0x1] %v815
        %v817 = vmul.f32 %v803, %v803
        %v818 = vmul.f32 %v804, %v804
        %v819 = vmul.f32 %v805, %v805
        %v820 = vmul.f32 %v806, %v806
        %v821 = vadd.f32 %v817, %v818
        %v822 = vadd.f32 %v821, %v819
        %v823 = vadd.f32 %v822, %v820
        %v824 = vrot.slane %v823, 4
        %v825 = vadd.f32 %v823, %v824
        %v826 = vrot.slane %v825, 2
        %v827 = vadd.f32 %v825, %v826
        %v828 = vrot.slane %v827, 1
        %v829 = vadd.f32 %v827, %v828
        %830 = vst [vmem:[%s285] sm:$0x1] %v829
        %v831 = vpack.c.bf16 %v804, %v803
        %v832 = vpack.c.bf16 %v806, %v805
        %v835 = vunpack.c.l.b16 %v831
        %v836 = vunpack.c.h.b16 %v831
        %v837 = vunpack.c.l.b16 %v832
        %v838 = vunpack.c.h.b16 %v832
        %v839 = vpack.c.b16 %v835, %v835
        %v840 = vpack.c.b16 %v836, %v836
        %v841 = vpack.c.b16 %v837, %v837
        %v842 = vpack.c.b16 %v838, %v838
        %847 = vst [vmem:[%s273] sm:$0xf] %v839
        %848 = vst [vmem:[%s273 + $0x4] sm:$0xf] %v840
        %849 = vst [vmem:[%s273 + $0x8] sm:$0xf] %v841
        %850 = vst [vmem:[%s273 + $0xc] sm:$0xf] %v842
        %s851 = sand.u32 %s103, 1
        %s852 = scalar_lea.sflag [#allocation4], %s851
        %s853 = sand.u32 %s103, 1
        %s854 = smul.addr %s853, 16
        %s855 = scalar_lea.vmem [#allocation8], %s854
        %s856 = sand.u32 %s27, 1
        %s857 = scalar_lea.sflag [#allocation10], %s856
        %s858 = sand.u32 %s129, 1
        %s859 = scalar_lea.vmem [#allocation9], %s858
        %s860 = sand.u32 %s27, 1
        %s861 = scalar_lea.sflag [#allocation10], %s860
        %s862 = sand.u32 %s155, 1
        %s863 = scalar_lea.vmem [#allocation11], %s862
        // Predicated region
        $region45: #{patch_discriminator_forward.7} parent=31 // pred_check
          %p864 = pneg %p113
        $region46: #{patch_discriminator_forward.7} parent=31 // pred_check_branch
          %866 = sbr.rel (%p864) target = $region48
        $region47: #{patch_discriminator_forward.7} parent=31 // pred_region
          %s868 = ssub.s32 256, 256
          %869 = vsyncadd %s852, %s868
          %s870 = smul.addr %s27, 4
          %s871 = smul.addr %s870, 64
          %s872 = scalar_lea.hbm %s3, %s871
          %s873 = sshll.u32 %s855, 4
          %s874 = int_to_ptr.vmem [resolvable:$true] %s873
          %879 = dma.vmem_to_hbm [thread:$0]  %s874, 256, %s872, %s852, 64, 64, 4
        $region48: #{patch_discriminator_forward.7} parent=31 // pred_fallthru
          _
        // Predicated region
        $region49: #{patch_discriminator_forward.7} parent=31 // pred_check
          %p880 = pneg %p139
        $region50: #{patch_discriminator_forward.7} parent=31 // pred_check_branch
          %882 = sbr.rel (%p880) target = $region52
        $region51: #{patch_discriminator_forward.7} parent=31 // pred_region
          %s884 = ssub.s32 16, 16
          %885 = vsyncadd %s857, %s884
          %s886 = smul.addr %s27, 16
          %s887 = scalar_lea.hbm %s4, %s886
          %s889 = sshll.u32 %s859, 4
          %s890 = int_to_ptr.vmem [resolvable:$true] %s889
          %892 = dma.vmem_to_hbm [thread:$0]  %s890, 16, %s887, %s857
        $region52: #{patch_discriminator_forward.7} parent=31 // pred_fallthru
          _
        // Predicated region
        $region53: #{patch_discriminator_forward.7} parent=31 // pred_check
          %p893 = pneg %p165
        $region54: #{patch_discriminator_forward.7} parent=31 // pred_check_branch
          %895 = sbr.rel (%p893) target = $region56
        $region55: #{patch_discriminator_forward.7} parent=31 // pred_region
          %s897 = ssub.s32 16, 16
          %898 = vsyncadd %s861, %s897
          %s899 = smul.addr %s27, 16
          %s900 = scalar_lea.hbm %s5, %s899
          %s902 = sshll.u32 %s863, 4
          %s903 = int_to_ptr.vmem [resolvable:$true] %s902
          %905 = dma.vmem_to_hbm [thread:$0]  %s903, 16, %s900, %s861
        $region56: #{patch_discriminator_forward.7} parent=31 // pred_fallthru
          _
      $region32: #{patch_discriminator_forward.7} parent=5 // pred_fallthru
        _
      %p906 = scmp.le.s32.totalorder 2, %s22
      // Predicated region
      $region57: #{patch_discriminator_forward.7} parent=5 // pred_check
        %p907 = pneg %p906
      $region58: #{patch_discriminator_forward.7} parent=5 // pred_check_branch
        %909 = sbr.rel (%p907) target = $region60
      $region59: #{patch_discriminator_forward.7} parent=5 // pred_region
        %s910 = ssub.s32 %s22, 2
        // Predicated region
        $region61: #{patch_discriminator_forward.7} parent=59 // pred_check
          %p911 = pneg %p119
        $region62: #{patch_discriminator_forward.7} parent=59 // pred_check_branch
          %913 = sbr.rel (%p911) target = $region64
        $region63: #{patch_discriminator_forward.7} parent=59 // pred_region
          %s914 = sand.u32 %s104, 1
          %s915 = scalar_lea.sflag [#allocation4], %s914
          %s916 = sand.u32 %s104, 1
          %s917 = smul.addr %s916, 16
          %s918 = scalar_lea.vmem [#allocation8], %s917
          %919 = dma.done %s915, 256
        $region64: #{patch_discriminator_forward.7} parent=59 // pred_fallthru
          _
        // Predicated region
        $region65: #{patch_discriminator_forward.7} parent=59 // pred_check
          %p920 = pneg %p145
        $region66: #{patch_discriminator_forward.7} parent=59 // pred_check_branch
          %922 = sbr.rel (%p920) target = $region68
        $region67: #{patch_discriminator_forward.7} parent=59 // pred_region
          %s923 = sand.u32 %s28, 1
          %s924 = scalar_lea.sflag [#allocation10], %s923
          %s925 = sand.u32 %s130, 1
          %s926 = scalar_lea.vmem [#allocation9], %s925
          %927 = dma.done %s924, 16
        $region68: #{patch_discriminator_forward.7} parent=59 // pred_fallthru
          _
        // Predicated region
        $region69: #{patch_discriminator_forward.7} parent=59 // pred_check
          %p928 = pneg %p171
        $region70: #{patch_discriminator_forward.7} parent=59 // pred_check_branch
          %930 = sbr.rel (%p928) target = $region72
        $region71: #{patch_discriminator_forward.7} parent=59 // pred_region
          %s931 = sand.u32 %s28, 1
          %s932 = scalar_lea.sflag [#allocation10], %s931
          %s933 = sand.u32 %s156, 1
          %s934 = scalar_lea.vmem [#allocation11], %s933
          %935 = dma.done %s932, 16
        $region72: #{patch_discriminator_forward.7} parent=59 // pred_fallthru
          _
      $region60: #{patch_discriminator_forward.7} parent=5 // pred_fallthru
        _
    $region6: #{patch_discriminator_forward.7} parent=1 // loop_footer
      %s26 = sadd.s32 1, %s22
    $region7: #{patch_discriminator_forward.7} parent=1 // loop_footer_branch
      %21 = sbr.rel target = $region3
    $region8: #{patch_discriminator_forward.7} parent=1 // loop_exit
      _
    %936 = vsyncpa [#allocation3], 1
    %s937 = scalar_lea.sflag [#allocation3], 1
    %938 = vsyncpa %s937, 1
    %939 = vsyncpa [#allocation6], 1
    %940 = vsyncpa [#allocation4], 1
    %s941 = scalar_lea.sflag [#allocation4], 1
    %942 = vsyncpa %s941, 1
    %943 = vsyncpa [#allocation10], 1
    %s944 = scalar_lea.sflag [#allocation10], 1
    %945 = vsyncpa %s944, 1

// kernel: patch_discriminator_forward.9
$region0: #{patch_discriminator_forward.9}
  #allocation0 [shape = 'u32[]', space=smem, size = 0x4, offset = 0x4, fixed_abs, tag = 'smem constant byte address 0x4 - core index']
  #allocation1 [shape = 'u32[144,128]{1,0:T(1,128)}', space=vmem, size = 0x12000, scoped, tag = 'internal scratch']
  %s0 = inlined_call_operand.hbm [shape: bf16[2,43,128], index: 0, kind: input, shape index: {}]
  %s1 = inlined_call_operand.hbm [shape: bf16[128,128], index: 1, kind: input, shape index: {}]
  %s2 = inlined_call_operand.hbm [shape: f32[1,128], index: 2, kind: input, shape index: {}]
  %s3 = inlined_call_operand.hbm [shape: f32[1,128], index: 3, kind: input, shape index: {}]
  %s4 = inlined_call_operand.hbm [shape: f32[1,128], index: 4, kind: input, shape index: {}]
  %s5 = inlined_call_operand.hbm [shape: f32[2,16,128], index: 5, kind: output, shape index: {}]
  %s6 = sld [smem:[#allocation0]]
  $region73: #{patch_discriminator_forward.9} parent=0
    _
  %s8 = ssub.s32 1, %s6
  %s9 = scalar_select 0, %s8, %s6
  $region1: #{patch_discriminator_forward.9} parent=0
    #allocation2 [shape = 'u8[24576]{0}', space=vmem, size = 0x6000, scoped, tag = 'input window, operand 0']
    #allocation3 [shape = 's32[2]{0}', space=sflag, size = 0x8, scoped, tag = 'scoped memory for patch_discriminator_forward.9']
    #allocation4 [shape = 's32[2]{0}', space=sflag, size = 0x8, scoped, tag = 'scoped memory for patch_discriminator_forward.9']
    #allocation5 [shape = 'u8[32768]{0}', space=vmem, size = 0x8000, scoped, tag = 'input window, operand 1, single buffered']
    #allocation6 [shape = 's32[1]{0}', space=sflag, size = 0x4, scoped, tag = 'scoped memory for patch_discriminator_forward.9']
    #allocation7 [shape = 'u8[512]{0}', space=vmem, size = 0x400, scoped, tag = 'input window, operand 2, single buffered']
    #allocation8 [shape = 'u8[512]{0}', space=vmem, size = 0x400, scoped, tag = 'input window, operand 3, single buffered']
    #allocation9 [shape = 's32[1]{0}', space=sflag, size = 0x4, scoped, tag = 'scoped memory for patch_discriminator_forward.9']
    #allocation10 [shape = 'u8[512]{0}', space=vmem, size = 0x400, scoped, tag = 'input window, operand 4, single buffered']
    #allocation11 [shape = 'u8[16384]{0}', space=vmem, size = 0x4000, scoped, tag = 'output window, operand 0']
    %10 = vsyncpa [#allocation3], 0
    %s11 = scalar_lea.sflag [#allocation3], 1
    %12 = vsyncpa %s11, 0
    %13 = vsyncpa [#allocation6], 0
    %14 = vsyncpa [#allocation9], 0
    %15 = vsyncpa [#allocation4], 0
    %s16 = scalar_lea.sflag [#allocation4], 1
    %17 = vsyncpa %s16, 0
    loop: start=0, step=1, limit=4
    $region2: #{patch_discriminator_forward.9} parent=1 // loop_pre_header
      _
    $region3: #{patch_discriminator_forward.9} parent=1 // loop_header
      %s19 = sphi 0, %s23
      %p20 = scmp.ge.s32.totalorder %s19, 4
      %s29 = sphi 0, %s31
      %s32 = sphi 0, %s29
      %s33 = sphi 0, %s32
      %s49 = sphi 0, %s33
      %s53 = sphi 0, %s53
      %s55 = sphi 0, %s53
      %s56 = sphi 0, %s55
      %s70 = sphi 0, %s56
      %s74 = sphi 0, %s74
      %s76 = sphi 0, %s74
      %s77 = sphi 0, %s76
      %s91 = sphi 0, %s77
      %s95 = sphi 0, %s95
      %s97 = sphi 0, %s95
      %s98 = sphi 0, %s97
      %s112 = sphi 0, %s98
      %s116 = sphi 0, %s116
      %s118 = sphi 0, %s116
      %s119 = sphi 0, %s118
      %s133 = sphi 0, %s119
      %s139 = sphi 0, %s141
      %s142 = sphi 0, %s139
      %s143 = sphi 0, %s142
      %s159 = sphi 0, %s143
    $region4: #{patch_discriminator_forward.9} parent=1 // loop_header_branch
      %22 = sbr.rel (%p20) target = $region8
    $region5: #{patch_discriminator_forward.9} parent=1 // loop_body
      %s24 = ssub.s32 %s19, 1
      %s25 = ssub.s32 %s19, 2
      %s26 = sadd.s32 %s19, 1
      %s27 = ssub.s32 %s19, %s26
      %p28 = scmp.eq.s32.totalorder %s27, 0
      %s30 = sadd.s32 %s29, 1
      %s31 = scalar_select %p28, %s29, %s30
      %p34 = pneg %p28
      %p35 = scmp.eq.s32.totalorder %s19, 1
      %p36 = por %p34, %p35
      %p37 = scmp.ne.s32.totalorder %s29, %s32
      %p38 = scmp.eq.s32.totalorder %s19, 0
      %p39 = por %p37, %p38
      %p40 = scmp.ne.s32.totalorder %s29, %s32
      %p41 = scmp.eq.s32.totalorder %s24, 1
      %p42 = por %p40, %p41
      %p43 = scmp.ne.s32.totalorder %s32, %s33
      %p44 = scmp.eq.s32.totalorder %s24, 0
      %p45 = por %p43, %p44
      %p46 = scmp.ne.s32.totalorder %s32, %s33
      %p47 = scmp.eq.s32.totalorder %s25, 1
      %p48 = por %p46, %p47
      %p50 = scmp.ne.s32.totalorder %s33, %s49
      %p51 = scmp.eq.s32.totalorder %s25, 0
      %p52 = por %p50, %p51
      %s54 = sadd.s32 %s53, 1
      %p57 = scmp.eq.s32.totalorder %s19, 1
      %p58 = scmp.ne.s32.totalorder %s53, %s55
      %p59 = scmp.eq.s32.totalorder %s19, 0
      %p60 = por %p58, %p59
      %p61 = scmp.ne.s32.totalorder %s53, %s55
      %p62 = scmp.eq.s32.totalorder %s24, 1
      %p63 = por %p61, %p62
      %p64 = scmp.ne.s32.totalorder %s55, %s56
      %p65 = scmp.eq.s32.totalorder %s24, 0
      %p66 = por %p64, %p65
      %p67 = scmp.ne.s32.totalorder %s55, %s56
      %p68 = scmp.eq.s32.totalorder %s25, 1
      %p69 = por %p67, %p68
      %p71 = scmp.ne.s32.totalorder %s56, %s70
      %p72 = scmp.eq.s32.totalorder %s25, 0
      %p73 = por %p71, %p72
      %s75 = sadd.s32 %s74, 1
      %p78 = scmp.eq.s32.totalorder %s19, 1
      %p79 = scmp.ne.s32.totalorder %s74, %s76
      %p80 = scmp.eq.s32.totalorder %s19, 0
      %p81 = por %p79, %p80
      %p82 = scmp.ne.s32.totalorder %s74, %s76
      %p83 = scmp.eq.s32.totalorder %s24, 1
      %p84 = por %p82, %p83
      %p85 = scmp.ne.s32.totalorder %s76, %s77
      %p86 = scmp.eq.s32.totalorder %s24, 0
      %p87 = por %p85, %p86
      %p88 = scmp.ne.s32.totalorder %s76, %s77
      %p89 = scmp.eq.s32.totalorder %s25, 1
      %p90 = por %p88, %p89
      %p92 = scmp.ne.s32.totalorder %s77, %s91
      %p93 = scmp.eq.s32.totalorder %s25, 0
      %p94 = por %p92, %p93
      %s96 = sadd.s32 %s95, 1
      %p99 = scmp.eq.s32.totalorder %s19, 1
      %p100 = scmp.ne.s32.totalorder %s95, %s97
      %p101 = scmp.eq.s32.totalorder %s19, 0
      %p102 = por %p100, %p101
      %p103 = scmp.ne.s32.totalorder %s95, %s97
      %p104 = scmp.eq.s32.totalorder %s24, 1
      %p105 = por %p103, %p104
      %p106 = scmp.ne.s32.totalorder %s97, %s98
      %p107 = scmp.eq.s32.totalorder %s24, 0
      %p108 = por %p106, %p107
      %p109 = scmp.ne.s32.totalorder %s97, %s98
      %p110 = scmp.eq.s32.totalorder %s25, 1
      %p111 = por %p109, %p110
      %p113 = scmp.ne.s32.totalorder %s98, %s112
      %p114 = scmp.eq.s32.totalorder %s25, 0
      %p115 = por %p113, %p114
      %s117 = sadd.s32 %s116, 1
      %p120 = scmp.eq.s32.totalorder %s19, 1
      %p121 = scmp.ne.s32.totalorder %s116, %s118
      %p122 = scmp.eq.s32.totalorder %s19, 0
      %p123 = por %p121, %p122
      %p124 = scmp.ne.s32.totalorder %s116, %s118
      %p125 = scmp.eq.s32.totalorder %s24, 1
      %p126 = por %p124, %p125
      %p127 = scmp.ne.s32.totalorder %s118, %s119
      %p128 = scmp.eq.s32.totalorder %s24, 0
      %p129 = por %p127, %p128
      %p130 = scmp.ne.s32.totalorder %s118, %s119
      %p131 = scmp.eq.s32.totalorder %s25, 1
      %p132 = por %p130, %p131
      %p134 = scmp.ne.s32.totalorder %s119, %s133
      %p135 = scmp.eq.s32.totalorder %s25, 0
      %p136 = por %p134, %p135
      %s137 = ssub.s32 %s19, %s26
      %p138 = scmp.eq.s32.totalorder %s137, 0
      %s140 = sadd.s32 %s139, 1
      %s141 = scalar_select %p138, %s139, %s140
      %p144 = pneg %p138
      %p145 = scmp.eq.s32.totalorder %s19, 1
      %p146 = por %p144, %p145
      %p147 = scmp.ne.s32.totalorder %s139, %s142
      %p148 = scmp.eq.s32.totalorder %s19, 0
      %p149 = por %p147, %p148
      %p150 = scmp.ne.s32.totalorder %s139, %s142
      %p151 = scmp.eq.s32.totalorder %s24, 1
      %p152 = por %p150, %p151
      %p153 = scmp.ne.s32.totalorder %s142, %s143
      %p154 = scmp.eq.s32.totalorder %s24, 0
      %p155 = por %p153, %p154
      %p156 = scmp.ne.s32.totalorder %s142, %s143
      %p157 = scmp.eq.s32.totalorder %s25, 1
      %p158 = por %p156, %p157
      %p160 = scmp.ne.s32.totalorder %s143, %s159
      %p161 = scmp.eq.s32.totalorder %s25, 0
      %p162 = por %p160, %p161
      %p163 = scmp.le.s32.totalorder 1, %s19
      %p164 = scmp.lt.s32.totalorder %s19, 3
      %p165 = pnand %p163, %p164
      %p166 = pneg %p165
      // Predicated region
      $region9: #{patch_discriminator_forward.9} parent=5 // pred_check
        _
      $region10: #{patch_discriminator_forward.9} parent=5 // pred_check_branch
        %168 = sbr.rel (%p165) target = $region12
      $region11: #{patch_discriminator_forward.9} parent=5 // pred_region
        %s169 = ssub.s32 %s19, 1
        // Predicated region
        $region13: #{patch_discriminator_forward.9} parent=11 // pred_check
          %p170 = pneg %p66
        $region14: #{patch_discriminator_forward.9} parent=11 // pred_check_branch
          %172 = sbr.rel (%p170) target = $region16
        $region15: #{patch_discriminator_forward.9} parent=11 // pred_region
          %s174 = ssub.s32 1024, 1024
          %175 = vsyncadd [#allocation6], %s174
          %s176 = sshll.u32 [#allocation5], 4
          %s177 = int_to_ptr.vmem [resolvable:$true] %s176
          %182 = dma.hbm_to_vmem [thread:$0]  %s1, 1024, %s177, [#allocation6], 64, 64, 4
        $region16: #{patch_discriminator_forward.9} parent=11 // pred_fallthru
          _
        // Predicated region
        $region17: #{patch_discriminator_forward.9} parent=11 // pred_check
          %p183 = pneg %p87
        $region18: #{patch_discriminator_forward.9} parent=11 // pred_check_branch
          %185 = sbr.rel (%p183) target = $region20
        $region19: #{patch_discriminator_forward.9} parent=11 // pred_region
          %s187 = ssub.s32 16, 16
          %188 = vsyncadd [#allocation6], %s187
          %s190 = sshll.u32 [#allocation7], 4
          %s191 = int_to_ptr.vmem [resolvable:$true] %s190
          %193 = dma.hbm_to_vmem [thread:$0]  %s2, 16, %s191, [#allocation6]
        $region20: #{patch_discriminator_forward.9} parent=11 // pred_fallthru
          _
        // Predicated region
        $region21: #{patch_discriminator_forward.9} parent=11 // pred_check
          %p194 = pneg %p108
        $region22: #{patch_discriminator_forward.9} parent=11 // pred_check_branch
          %196 = sbr.rel (%p194) target = $region24
        $region23: #{patch_discriminator_forward.9} parent=11 // pred_region
          %s198 = ssub.s32 16, 16
          %199 = vsyncadd [#allocation9], %s198
          %s201 = sshll.u32 [#allocation8], 4
          %s202 = int_to_ptr.vmem [resolvable:$true] %s201
          %204 = dma.hbm_to_vmem [thread:$0]  %s3, 16, %s202, [#allocation9]
        $region24: #{patch_discriminator_forward.9} parent=11 // pred_fallthru
          _
        // Predicated region
        $region25: #{patch_discriminator_forward.9} parent=11 // pred_check
          %p205 = pneg %p129
        $region26: #{patch_discriminator_forward.9} parent=11 // pred_check_branch
          %207 = sbr.rel (%p205) target = $region28
        $region27: #{patch_discriminator_forward.9} parent=11 // pred_region
          %s209 = ssub.s32 16, 16
          %210 = vsyncadd [#allocation9], %s209
          %s212 = sshll.u32 [#allocation10], 4
          %s213 = int_to_ptr.vmem [resolvable:$true] %s212
          %215 = dma.hbm_to_vmem [thread:$0]  %s4, 16, %s213, [#allocation9]
        $region28: #{patch_discriminator_forward.9} parent=11 // pred_fallthru
          _
      $region12: #{patch_discriminator_forward.9} parent=5 // pred_fallthru
        _
      %p216 = scmp.lt.s32.totalorder %s19, 2
      // Predicated region
      $region29: #{patch_discriminator_forward.9} parent=5 // pred_check
        %p217 = pneg %p216
      $region30: #{patch_discriminator_forward.9} parent=5 // pred_check_branch
        %219 = sbr.rel (%p217) target = $region32
      $region31: #{patch_discriminator_forward.9} parent=5 // pred_region
        // Predicated region
        $region33: #{patch_discriminator_forward.9} parent=31 // pred_check
          %p220 = pneg %p39
        $region34: #{patch_discriminator_forward.9} parent=31 // pred_check_branch
          %222 = sbr.rel (%p220) target = $region36
        $region35: #{patch_discriminator_forward.9} parent=31 // pred_region
          %s223 = sand.u32 %s29, 1
          %s224 = scalar_lea.sflag [#allocation3], %s223
          %s225 = sand.u32 %s29, 1
          %s226 = smul.addr %s225, 24
          %s227 = scalar_lea.vmem [#allocation2], %s226
          %s229 = ssub.s32 384, 384
          %230 = vsyncadd %s224, %s229
          %s231 = smul.addr %s19, 6
          %s232 = smul.addr %s231, 64
          %s233 = scalar_lea.hbm %s0, %s232
          %s234 = sshll.u32 %s227, 4
          %s235 = int_to_ptr.vmem [resolvable:$true] %s234
          %240 = dma.hbm_to_vmem [thread:$0]  %s233, 384, %s235, %s224, 64, 64, 4
        $region36: #{patch_discriminator_forward.9} parent=31 // pred_fallthru
          _
      $region32: #{patch_discriminator_forward.9} parent=5 // pred_fallthru
        _
      %p241 = scmp.le.s32.totalorder 1, %s19
      %p242 = scmp.lt.s32.totalorder %s19, 3
      %p243 = pnand %p241, %p242
      %p244 = pneg %p243
      // Predicated region
      $region37: #{patch_discriminator_forward.9} parent=5 // pred_check
        _
      $region38: #{patch_discriminator_forward.9} parent=5 // pred_check_branch
        %246 = sbr.rel (%p243) target = $region40
      $region39: #{patch_discriminator_forward.9} parent=5 // pred_region
        %s247 = ssub.s32 %s19, 1
        %s248 = sand.u32 %s32, 1
        %s249 = scalar_lea.sflag [#allocation3], %s248
        %s250 = sand.u32 %s32, 1
        %s251 = smul.addr %s250, 24
        %s252 = scalar_lea.vmem [#allocation2], %s251
        // Predicated region
        $region41: #{patch_discriminator_forward.9} parent=39 // pred_check
          %p253 = pneg %p45
        $region42: #{patch_discriminator_forward.9} parent=39 // pred_check_branch
          %255 = sbr.rel (%p253) target = $region44
        $region43: #{patch_discriminator_forward.9} parent=39 // pred_region
          %256 = dma.done %s249, 384
        $region44: #{patch_discriminator_forward.9} parent=39 // pred_fallthru
          _
        // Predicated region
        $region45: #{patch_discriminator_forward.9} parent=39 // pred_check
          %p257 = pneg %p66
        $region46: #{patch_discriminator_forward.9} parent=39 // pred_check_branch
          %259 = sbr.rel (%p257) target = $region48
        $region47: #{patch_discriminator_forward.9} parent=39 // pred_region
          %260 = dma.done [#allocation6], 1024
        $region48: #{patch_discriminator_forward.9} parent=39 // pred_fallthru
          _
        // Predicated region
        $region49: #{patch_discriminator_forward.9} parent=39 // pred_check
          %p261 = pneg %p87
        $region50: #{patch_discriminator_forward.9} parent=39 // pred_check_branch
          %263 = sbr.rel (%p261) target = $region52
        $region51: #{patch_discriminator_forward.9} parent=39 // pred_region
          %264 = dma.done [#allocation6], 16
        $region52: #{patch_discriminator_forward.9} parent=39 // pred_fallthru
          _
        // Predicated region
        $region53: #{patch_discriminator_forward.9} parent=39 // pred_check
          %p265 = pneg %p108
        $region54: #{patch_discriminator_forward.9} parent=39 // pred_check_branch
          %267 = sbr.rel (%p265) target = $region56
        $region55: #{patch_discriminator_forward.9} parent=39 // pred_region
          %268 = dma.done [#allocation9], 16
        $region56: #{patch_discriminator_forward.9} parent=39 // pred_fallthru
          _
        // Predicated region
        $region57: #{patch_discriminator_forward.9} parent=39 // pred_check
          %p269 = pneg %p129
        $region58: #{patch_discriminator_forward.9} parent=39 // pred_check_branch
          %271 = sbr.rel (%p269) target = $region60
        $region59: #{patch_discriminator_forward.9} parent=39 // pred_region
          %272 = dma.done [#allocation9], 16
        $region60: #{patch_discriminator_forward.9} parent=39 // pred_fallthru
          _
        %s273 = sand.u32 %s32, 1
        %s274 = scalar_lea.sflag [#allocation3], %s273
        %s275 = sand.u32 %s32, 1
        %s276 = smul.addr %s275, 24
        %s277 = scalar_lea.vmem [#allocation2], %s276
        %p278 = pneg %p45
        %p279 = pneg %p42
        %p280 = pneg %p66
        %p281 = pneg %p63
        %p282 = pneg %p87
        %p283 = pneg %p84
        %p284 = pneg %p108
        %p285 = pneg %p105
        %p286 = pneg %p129
        %p287 = pneg %p126
        %p288 = pneg %p155
        %p289 = pneg %p152
        %s290 = sand.u32 %s142, 1
        %s291 = scalar_lea.sflag [#allocation4], %s290
        %s292 = sand.u32 %s142, 1
        %s293 = smul.addr %s292, 16
        %s294 = scalar_lea.vmem [#allocation11], %s293
        %v296 = vld [vmem:[%s252] sm:$0xf]
        %v297 = vld [vmem:[%s252 + $0x4] sm:$0xf]
        %v298 = vld [vmem:[%s252 + $0x8] sm:$0xf]
        %v299 = vld [vmem:[%s252 + $0xc] sm:$0xf]
        %v300 = vld [vmem:[%s252 + $0x10] sm:$0xf]
        %v301 = vld [vmem:[%s252 + $0x14] sm:$0x3]
        %v302 = vlaneseq
        %v303 = vshrl.u32 %v302, 7
        %v304 = vadd.s32 %v303, 8
        %v305 = vadd.s32 %v303, 16
        %v306 = vadd.s32 %v303, 24
        %v307 = vadd.s32 %v303, 32
        %v308 = vadd.s32 %v303, 40
        %vm309 = vcmp.lt.s32.totalorder %v303, 0
        %v310 = vsub.s32 0, %v303
        %v311 = vsel %vm309, %v310, %v303
        %v312 = vshrl.u32 %v311, 3
        %v313 = vand.u32 %v311, 7
        %v314 = vsub.s32 0, %v313
        %v315 = vsel %vm309, %v314, %v313
        %vm316 = vcmp.lt.s32.totalorder %v304, 0
        %v317 = vsub.s32 0, %v304
        %v318 = vsel %vm316, %v317, %v304
        %v319 = vshrl.u32 %v318, 3
        %v320 = vand.u32 %v318, 7
        %v321 = vsub.s32 0, %v320
        %v322 = vsel %vm316, %v321, %v320
        %vm323 = vcmp.lt.s32.totalorder %v305, 0
        %v324 = vsub.s32 0, %v305
        %v325 = vsel %vm323, %v324, %v305
        %v326 = vshrl.u32 %v325, 3
        %v327 = vand.u32 %v325, 7
        %v328 = vsub.s32 0, %v327
        %v329 = vsel %vm323, %v328, %v327
        %vm330 = vcmp.lt.s32.totalorder %v306, 0
        %v331 = vsub.s32 0, %v306
        %v332 = vsel %vm330, %v331, %v306
        %v333 = vshrl.u32 %v332, 3
        %v334 = vand.u32 %v332, 7
        %v335 = vsub.s32 0, %v334
        %v336 = vsel %vm330, %v335, %v334
        %vm337 = vcmp.lt.s32.totalorder %v307, 0
        %v338 = vsub.s32 0, %v307
        %v339 = vsel %vm337, %v338, %v307
        %v340 = vshrl.u32 %v339, 3
        %v341 = vand.u32 %v339, 7
        %v342 = vsub.s32 0, %v341
        %v343 = vsel %vm337, %v342, %v341
        %vm344 = vcmp.lt.s32.totalorder %v308, 0
        %v345 = vsub.s32 0, %v308
        %v346 = vsel %vm344, %v345, %v308
        %v347 = vshrl.u32 %v346, 3
        %v348 = vand.u32 %v346, 7
        %v349 = vsub.s32 0, %v348
        %v350 = vsel %vm344, %v349, %v348
        %vm351 = vcmp.ne.s32.totalorder %v315, 0
        %vm352 = vcmp.ne.s32.totalorder %v322, 0
        %vm353 = vcmp.ne.s32.totalorder %v329, 0
        %vm354 = vcmp.ne.s32.totalorder %v336, 0
        %vm355 = vcmp.ne.s32.totalorder %v343, 0
        %vm356 = vcmp.ne.s32.totalorder %v350, 0
        %vm357 = vcmp.lt.s32.totalorder %v315, 0
        %vm358 = vcmp.lt.s32.totalorder %v322, 0
        %vm359 = vcmp.lt.s32.totalorder %v329, 0
        %vm360 = vcmp.lt.s32.totalorder %v336, 0
        %vm361 = vcmp.lt.s32.totalorder %v343, 0
        %vm362 = vcmp.lt.s32.totalorder %v350, 0
        %vm363 = vmand %vm357, %vm351
        %vm364 = vmand %vm358, %vm352
        %vm365 = vmand %vm359, %vm353
        %vm366 = vmand %vm360, %vm354
        %vm367 = vmand %vm361, %vm355
        %vm368 = vmand %vm362, %vm356
        %v369 = vadd.s32 %v315, 8
        %v370 = vadd.s32 %v322, 8
        %v371 = vadd.s32 %v329, 8
        %v372 = vadd.s32 %v336, 8
        %v373 = vadd.s32 %v343, 8
        %v374 = vadd.s32 %v350, 8
        %v375 = vsel %vm363, %v369, %v315
        %v376 = vsel %vm364, %v370, %v322
        %v377 = vsel %vm365, %v371, %v329
        %v378 = vsel %vm366, %v372, %v336
        %v379 = vsel %vm367, %v373, %v343
        %v380 = vsel %vm368, %v374, %v350
        %vm381 = vcmp.ge.s32.totalorder %v303, 8
        %vm382 = vcmp.ge.s32.totalorder %v304, 8
        %vm383 = vcmp.ge.s32.totalorder %v305, 8
        %vm384 = vcmp.ge.s32.totalorder %v306, 8
        %vm385 = vcmp.ge.s32.totalorder %v307, 8
        %vm386 = vcmp.ge.s32.totalorder %v308, 8
        %vm387 = vcmp.lt.s32.totalorder %v303, 32
        %vm388 = vcmp.lt.s32.totalorder %v304, 32
        %vm389 = vcmp.lt.s32.totalorder %v305, 32
        %vm390 = vcmp.lt.s32.totalorder %v306, 32
        %vm391 = vcmp.lt.s32.totalorder %v307, 32
        %vm392 = vcmp.lt.s32.totalorder %v308, 32
        %vm393 = vmand %vm381, %vm387
        %vm394 = vmand %vm382, %vm388
        %vm395 = vmand %vm383, %vm389
        %vm396 = vmand %vm384, %vm390
        %vm397 = vmand %vm385, %vm391
        %vm398 = vmand %vm386, %vm392
        %vm399 = vcmp.ge.s32.totalorder %v375, 1
        %vm400 = vcmp.ge.s32.totalorder %v376, 1
        %vm401 = vcmp.ge.s32.totalorder %v377, 1
        %vm402 = vcmp.ge.s32.totalorder %v378, 1
        %vm403 = vcmp.ge.s32.totalorder %v379, 1
        %vm404 = vcmp.ge.s32.totalorder %v380, 1
        %vm405 = vmand %vm393, %vm399
        %vm406 = vmand %vm394, %vm400
        %vm407 = vmand %vm395, %vm401
        %vm408 = vmand %vm396, %vm402
        %vm409 = vmand %vm397, %vm403
        %vm410 = vmand %vm398, %vm404
        %vm411 = vcmp.le.s32.totalorder %v375, 3
        %vm412 = vcmp.le.s32.totalorder %v376, 3
        %vm413 = vcmp.le.s32.totalorder %v377, 3
        %vm414 = vcmp.le.s32.totalorder %v378, 3
        %vm415 = vcmp.le.s32.totalorder %v379, 3
        %vm416 = vcmp.le.s32.totalorder %v380, 3
        %vm417 = vmand %vm405, %vm411
        %vm418 = vmand %vm406, %vm412
        %vm419 = vmand %vm407, %vm413
        %vm420 = vmand %vm408, %vm414
        %vm421 = vmand %vm409, %vm415
        %vm422 = vmand %vm410, %vm416
        %v423 = vunpack.c.l.bf16 %v296
        %v424 = vunpack.c.l.bf16 %v297
        %v425 = vunpack.c.l.bf16 %v298
        %v426 = vunpack.c.l.bf16 %v299
        %v427 = vunpack.c.l.bf16 %v300
        %v428 = vunpack.c.l.bf16 %v301
        %v429 = vld [vmem:[#allocation8] sm:$0x1]
        %v431 = vlaneseq
        %v432 = vshrl.u32 %v431, 7
        %v433 = vsub.s32 0, %v432
        %v434 = vrot.slane %v429, %v433
        %v436 = vmul.f32 %v423, %v434
        %v437 = vmul.f32 %v424, %v434
        %v438 = vmul.f32 %v425, %v434
        %v439 = vmul.f32 %v426, %v434
        %v440 = vmul.f32 %v427, %v434
        %v441 = vmul.f32 %v428, %v434
        %v442 = vld [vmem:[#allocation10] sm:$0x1]
        %v444 = vlaneseq
        %v445 = vshrl.u32 %v444, 7
        %v446 = vsub.s32 0, %v445
        %v447 = vrot.slane %v442, %v446
        %v449 = vadd.f32 %v436, %v447
        %v450 = vadd.f32 %v437, %v447
        %v451 = vadd.f32 %v438, %v447
        %v452 = vadd.f32 %v439, %v447
        %v453 = vadd.f32 %v440, %v447
        %v454 = vadd.f32 %v441, %v447
        %vm455 = vcmp.ge.f32.partialorder %v449, 0.0
        %vm456 = vcmp.ge.f32.partialorder %v450, 0.0
        %vm457 = vcmp.ge.f32.partialorder %v451, 0.0
        %vm458 = vcmp.ge.f32.partialorder %v452, 0.0
        %vm459 = vcmp.ge.f32.partialorder %v453, 0.0
        %vm460 = vcmp.ge.f32.partialorder %v454, 0.0
        %v461 = vmul.f32 %v449, 0.2
        %v462 = vmul.f32 %v450, 0.2
        %v463 = vmul.f32 %v451, 0.2
        %v464 = vmul.f32 %v452, 0.2
        %v465 = vmul.f32 %v453, 0.2
        %v466 = vmul.f32 %v454, 0.2
        %v467 = vsel %vm455, %v449, %v461
        %v468 = vsel %vm456, %v450, %v462
        %v469 = vsel %vm457, %v451, %v463
        %v470 = vsel %vm458, %v452, %v464
        %v471 = vsel %vm459, %v453, %v465
        %v472 = vsel %vm460, %v454, %v466
        %v473 = vsel %vm417, 1, 0
        %v474 = vsel %vm418, 1, 0
        %v475 = vsel %vm419, 1, 0
        %v476 = vsel %vm420, 1, 0
        %v477 = vsel %vm421, 1, 0
        %v478 = vsel %vm422, 1, 0
        %vm479 = vcmp.eq.s32.totalorder %v473, 1
        %vm480 = vcmp.eq.s32.totalorder %v474, 1
        %vm481 = vcmp.eq.s32.totalorder %v475, 1
        %vm482 = vcmp.eq.s32.totalorder %v476, 1
        %vm483 = vcmp.eq.s32.totalorder %v477, 1
        %vm484 = vcmp.eq.s32.totalorder %v478, 1
        %v485 = vsel %vm479, %v467, 0.0
        %v486 = vsel %vm480, %v468, 0.0
        %v487 = vsel %vm481, %v469, 0.0
        %v488 = vsel %vm482, %v470, 0.0
        %v489 = vsel %vm483, %v471, 0.0
        %v490 = vsel %vm484, %v472, 0.0
        %v491 = vpack.c.bf16 %v486, %v485
        %v492 = vpack.c.bf16 %v488, %v487
        %v493 = vpack.c.bf16 %v490, %v489
        %v494 = vld [vmem:[#allocation5] sm:$0xf]
        %v495 = vld [vmem:[#allocation5 + $0x4] sm:$0xf]
        %v496 = vld [vmem:[#allocation5 + $0x8] sm:$0xf]
        %v497 = vld [vmem:[#allocation5 + $0xc] sm:$0xf]
        %v498 = vld [vmem:[#allocation5 + $0x10] sm:$0xf]
        %v499 = vld [vmem:[#allocation5 + $0x14] sm:$0xf]
        %v500 = vld [vmem:[#allocation5 + $0x18] sm:$0xf]
        %v501 = vld [vmem:[#allocation5 + $0x1c] sm:$0xf]
        %v502 = vld [vmem:[#allocation5 + $0x20] sm:$0xf]
        %v503 = vld [vmem:[#allocation5 + $0x24] sm:$0xf]
        %v504 = vld [vmem:[#allocation5 + $0x28] sm:$0xf]
        %v505 = vld [vmem:[#allocation5 + $0x2c] sm:$0xf]
        %v506 = vld [vmem:[#allocation5 + $0x30] sm:$0xf]
        %v507 = vld [vmem:[#allocation5 + $0x34] sm:$0xf]
        %v508 = vld [vmem:[#allocation5 + $0x38] sm:$0xf]
        %v509 = vld [vmem:[#allocation5 + $0x3c] sm:$0xf]
        %v526 = vunpack.c.l.b16 %v494
        %v527 = vunpack.c.l.b16 %v495
        %v528 = vunpack.c.l.b16 %v496
        %v529 = vunpack.c.l.b16 %v497
        %v530 = vunpack.c.l.b16 %v498
        %v531 = vunpack.c.l.b16 %v499
        %v532 = vunpack.c.l.b16 %v500
        %v533 = vunpack.c.l.b16 %v501
        %v534 = vunpack.c.l.b16 %v502
        %v535 = vunpack.c.l.b16 %v503
        %v536 = vunpack.c.l.b16 %v504
        %v537 = vunpack.c.l.b16 %v505
        %v538 = vunpack.c.l.b16 %v506
        %v539 = vunpack.c.l.b16 %v507
        %v540 = vunpack.c.l.b16 %v508
        %v541 = vunpack.c.l.b16 %v509
        %v542 = vpack.c.b16 %v527, %v526
        %v543 = vpack.c.b16 %v529, %v528
        %v544 = vpack.c.b16 %v531, %v530
        %v545 = vpack.c.b16 %v533, %v532
        %v546 = vpack.c.b16 %v535, %v534
        %v547 = vpack.c.b16 %v537, %v536
        %v548 = vpack.c.b16 %v539, %v538
        %v549 = vpack.c.b16 %v541, %v540
        %558 = vmatprep.subr.bf16.mxu0 0
        %559 = vmatpush1.bf16.msra.mxu0 %v542
        %560 = vmatprep.subr.bf16.mxu0 0
        %561 = vmatpush1.bf16.msra.mxu0 %v543
        %562 = vmatprep.subr.bf16.mxu0 0
        %563 = vmatpush1.bf16.msra.mxu0 %v544
        %564 = vmatprep.subr.bf16.mxu0 0
        %565 = vmatpush1.bf16.msra.mxu0 %v545
        %566 = vmatprep.subr.bf16.mxu0 0
        %567 = vmatpush1.bf16.msra.mxu0 %v546
        %568 = vmatprep.subr.bf16.mxu0 0
        %569 = vmatpush1.bf16.msra.mxu0 %v547
        %570 = vmatprep.subr.bf16.mxu0 0
        %571 = vmatpush1.bf16.msra.mxu0 %v548
        %572 = vmatprep.subr.bf16.mxu0 0
        %573 = vmatpush1.bf16.msra.mxu0 %v549
        %574 = vmatprep.subr.bf16.mxu0 0
        %575 = vmatpush1.bf16.msra.mxu0 0
        %576 = vmatprep.subr.bf16.mxu0 0
        %577 = vmatpush1.bf16.msra.mxu0 0
        %578 = vmatprep.subr.bf16.mxu0 0
        %579 = vmatpush1.bf16.msra.mxu0 0
        %580 = vmatprep.subr.bf16.mxu0 0
        %581 = vmatpush1.bf16.msra.mxu0 0
        %582 = vmatprep.subr.bf16.mxu0 0
        %583 = vmatpush1.bf16.msra.mxu0 0
        %584 = vmatprep.subr.bf16.mxu0 0
        %585 = vmatpush1.bf16.msra.mxu0 0
        %586 = vmatprep.subr.bf16.mxu0 0
        %587 = vmatpush1.bf16.msra.mxu0 0
        %588 = vmatprep.subr.bf16.mxu0 0
        %589 = vmatpush1.bf16.msra.mxu0 0
        %590 = vmatprep.mubr.bf16.mxu0 0
        %591 = vmatmul.mubr.bf16.gmra.mrb[0].mxu0 %v491
        %v592 = vpop.f32.mrb[0].mxu0
        %v593 = vadd.f32 0.0, %v592
        %v594 = vpop.f32.mrb[0].mxu0
        %v595 = vpop.f32.mrb[0].mxu0
        %v596 = vadd.f32 0.0, %v595
        %v597 = vpop.f32.mrb[0].mxu0
        %598 = vmatprep.mubr.bf16.mxu0 0
        %599 = vmatmul.mubr.bf16.gmra.mrb[0].mxu0 %v492
        %v600 = vpop.f32.mrb[0].mxu0
        %v601 = vadd.f32 0.0, %v600
        %v602 = vpop.f32.mrb[0].mxu0
        %v603 = vpop.f32.mrb[0].mxu0
        %v604 = vadd.f32 0.0, %v603
        %v605 = vpop.f32.mrb[0].mxu0
        %606 = vmatprep.mubr.bf16.mxu0 0
        %607 = vmatmul.mubr.bf16.gmra.mrb[0].mxu0 %v493
        %v608 = vpop.f32.mrb[0].mxu0
        %v609 = vadd.f32 0.0, %v608
        %v610 = vpop.f32.mrb[0].mxu0
        %v611 = vpop.f32.mrb[0].mxu0
        %v612 = vadd.f32 0.0, %v611
        %v613 = vpop.f32.mrb[0].mxu0
        %614 = vdwg.mxu0
        %v615 = vlaneseq
        %v616 = vand.u32 %v615, 127
        %vm617 = vcmp.eq.s32.totalorder %v616, 0
        %v618 = vsel %vm617, %v593, 0.0
        %v619 = vsel %vm617, %v596, 0.0
        %vm620 = vcmp.eq.s32.totalorder %v616, 1
        %v621 = vsel %vm620, %v593, 0.0
        %v622 = vsel %vm620, %v596, 0.0
        %v623 = vsel %vm620, %v601, 0.0
        %vm627 = vcmask 1046528
        %v628 = vrot.slane %v621, 1
        %v629 = vrot.slane %v622, 1
        %v630 = vsel %vm627, %v628, %v629
        %v631 = vrot.slane %v623, 1
        %v632 = vsel %vm627, %v629, %v631
        %v635 = vadd.f32 %v618, %v630
        %v636 = vadd.f32 %v619, %v632
        %vm637 = vcmp.eq.s32.totalorder %v616, 2
        %v638 = vsel %vm637, %v593, 0.0
        %v639 = vsel %vm637, %v596, 0.0
        %v640 = vsel %vm637, %v601, 0.0
        %vm644 = vcmask 1045504
        %v645 = vrot.slane %v638, 2
        %v646 = vrot.slane %v639, 2
        %v647 = vsel %vm644, %v645, %v646
        %v648 = vrot.slane %v640, 2
        %v649 = vsel %vm644, %v646, %v648
        %v652 = vadd.f32 %v635, %v647
        %v653 = vadd.f32 %v636, %v649
        %vm654 = vcmp.eq.s32.totalorder %v616, 3
        %v655 = vsel %vm654, %v593, 0.0
        %v656 = vsel %vm654, %v596, 0.0
        %v657 = vsel %vm654, %v601, 0.0
        %vm661 = vcmask 1044480
        %v662 = vrot.slane %v655, 3
        %v663 = vrot.slane %v656, 3
        %v664 = vsel %vm661, %v662, %v663
        %v665 = vrot.slane %v657, 3
        %v666 = vsel %vm661, %v663, %v665
        %v669 = vadd.f32 %v652, %v664
        %v670 = vadd.f32 %v653, %v666
        %vm671 = vcmp.eq.s32.totalorder %v616, 4
        %v672 = vsel %vm671, %v596, 0.0
        %v673 = vsel %vm671, %v601, 0.0
        %v674 = vadd.f32 %v669, %v672
        %v675 = vadd.f32 %v670, %v673
        %vm676 = vcmp.eq.s32.totalorder %v616, 5
        %v677 = vsel %vm676, %v596, 0.0
        %v678 = vsel %vm676, %v601, 0.0
        %v679 = vsel %vm676, %v604, 0.0
        %v683 = vrot.slane %v677, 1
        %v684 = vrot.slane %v678, 1
        %v685 = vsel %vm627, %v683, %v684
        %v686 = vrot.slane %v679, 1
        %v687 = vsel %vm627, %v684, %v686
        %v690 = vadd.f32 %v674, %v685
        %v691 = vadd.f32 %v675, %v687
        %vm692 = vcmp.eq.s32.totalorder %v616, 6
        %v693 = vsel %vm692, %v596, 0.0
        %v694 = vsel %vm692, %v601, 0.0
        %v695 = vsel %vm692, %v604, 0.0
        %v699 = vrot.slane %v693, 2
        %v700 = vrot.slane %v694, 2
        %v701 = vsel %vm644, %v699, %v700
        %v702 = vrot.slane %v695, 2
        %v703 = vsel %vm644, %v700, %v702
        %v706 = vadd.f32 %v690, %v701
        %v707 = vadd.f32 %v691, %v703
        %vm708 = vcmp.eq.s32.totalorder %v616, 7
        %v709 = vsel %vm708, %v596, 0.0
        %v710 = vsel %vm708, %v601, 0.0
        %v711 = vsel %vm708, %v604, 0.0
        %v715 = vrot.slane %v709, 3
        %v716 = vrot.slane %v710, 3
        %v717 = vsel %vm661, %v715, %v716
        %v718 = vrot.slane %v711, 3
        %v719 = vsel %vm661, %v716, %v718
        %v722 = vadd.f32 %v706, %v717
        %v723 = vadd.f32 %v707, %v719
        %vm724 = vcmp.eq.s32.totalorder %v616, 8
        %v725 = vsel %vm724, %v601, 0.0
        %v726 = vsel %vm724, %v604, 0.0
        %v727 = vadd.f32 %v722, %v725
        %v728 = vadd.f32 %v723, %v726
        %vm729 = vcmp.eq.s32.totalorder %v616, 9
        %v730 = vsel %vm729, %v601, 0.0
        %v731 = vsel %vm729, %v604, 0.0
        %v732 = vsel %vm729, %v609, 0.0
        %v736 = vrot.slane %v730, 1
        %v737 = vrot.slane %v731, 1
        %v738 = vsel %vm627, %v736, %v737
        %v739 = vrot.slane %v732, 1
        %v740 = vsel %vm627, %v737, %v739
        %v743 = vadd.f32 %v727, %v738
        %v744 = vadd.f32 %v728, %v740
        %vm745 = vcmp.eq.s32.totalorder %v616, 10
        %v746 = vsel %vm745, %v601, 0.0
        %v747 = vsel %vm745, %v604, 0.0
        %v748 = vsel %vm745, %v609, 0.0
        %v752 = vrot.slane %v746, 2
        %v753 = vrot.slane %v747, 2
        %v754 = vsel %vm644, %v752, %v753
        %v755 = vrot.slane %v748, 2
        %v756 = vsel %vm644, %v753, %v755
        %v759 = vadd.f32 %v743, %v754
        %v760 = vadd.f32 %v744, %v756
        %vm761 = vcmp.eq.s32.totalorder %v616, 11
        %v762 = vsel %vm761, %v601, 0.0
        %v763 = vsel %vm761, %v604, 0.0
        %v764 = vsel %vm761, %v609, 0.0
        %v768 = vrot.slane %v762, 3
        %v769 = vrot.slane %v763, 3
        %v770 = vsel %vm661, %v768, %v769
        %v771 = vrot.slane %v764, 3
        %v772 = vsel %vm661, %v769, %v771
        %v775 = vadd.f32 %v759, %v770
        %v776 = vadd.f32 %v760, %v772
        %vm777 = vcmp.eq.s32.totalorder %v616, 12
        %v778 = vsel %vm777, %v604, 0.0
        %v779 = vsel %vm777, %v609, 0.0
        %v780 = vadd.f32 %v775, %v778
        %v781 = vadd.f32 %v776, %v779
        %vm782 = vcmp.eq.s32.totalorder %v616, 13
        %v783 = vsel %vm782, %v604, 0.0
        %v784 = vsel %vm782, %v609, 0.0
        %v785 = vsel %vm782, %v612, 0.0
        %v789 = vrot.slane %v783, 1
        %v790 = vrot.slane %v784, 1
        %v791 = vsel %vm627, %v789, %v790
        %v792 = vrot.slane %v785, 1
        %v793 = vsel %vm627, %v790, %v792
        %v796 = vadd.f32 %v780, %v791
        %v797 = vadd.f32 %v781, %v793
        %vm798 = vcmp.eq.s32.totalorder %v616, 14
        %v799 = vsel %vm798, %v604, 0.0
        %v800 = vsel %vm798, %v609, 0.0
        %v801 = vsel %vm798, %v612, 0.0
        %v805 = vrot.slane %v799, 2
        %v806 = vrot.slane %v800, 2
        %v807 = vsel %vm644, %v805, %v806
        %v808 = vrot.slane %v801, 2
        %v809 = vsel %vm644, %v806, %v808
        %v812 = vadd.f32 %v796, %v807
        %v813 = vadd.f32 %v797, %v809
        %vm814 = vcmp.eq.s32.totalorder %v616, 15
        %v815 = vsel %vm814, %v604, 0.0
        %v816 = vsel %vm814, %v609, 0.0
        %v817 = vsel %vm814, %v612, 0.0
        %v821 = vrot.slane %v815, 3
        %v822 = vrot.slane %v816, 3
        %v823 = vsel %vm661, %v821, %v822
        %v824 = vrot.slane %v817, 3
        %v825 = vsel %vm661, %v822, %v824
        %v828 = vadd.f32 %v812, %v823
        %v829 = vadd.f32 %v813, %v825
        %830 = vadd.xlane.f32.xlu0 %v828
        %v831 = vpop.xlane.xlu0 %830
        %832 = vadd.xlane.f32.xlu0 %v829
        %v833 = vpop.xlane.xlu0 %832
        %v834 = vld [vmem:[#allocation7] sm:$0x1]
        %v836 = vlaneseq
        %v837 = vshrl.u32 %v836, 7
        %v838 = vsub.s32 0, %v837
        %v839 = vrot.slane %v834, %v838
        %v841 = vadd.f32 %v831, %v839
        %v842 = vadd.f32 %v833, %v839
        %843 = vst [vmem:[%s294] sm:$0xff] %v841
        %844 = vst [vmem:[%s294 + $0x8] sm:$0xff] %v842
        %s845 = sand.u32 %s142, 1
        %s846 = scalar_lea.sflag [#allocation4], %s845
        %s847 = sand.u32 %s142, 1
        %s848 = smul.addr %s847, 16
        %s849 = scalar_lea.vmem [#allocation11], %s848
        // Predicated region
        $region61: #{patch_discriminator_forward.9} parent=39 // pred_check
          %p850 = pneg %p152
        $region62: #{patch_discriminator_forward.9} parent=39 // pred_check_branch
          %852 = sbr.rel (%p850) target = $region64
        $region63: #{patch_discriminator_forward.9} parent=39 // pred_region
          %s854 = ssub.s32 256, 256
          %855 = vsyncadd %s846, %s854
          %s856 = smul.addr %s24, 2
          %s857 = smul.addr %s856, 128
          %s858 = scalar_lea.hbm %s5, %s857
          %s859 = sshll.u32 %s849, 4
          %s860 = int_to_ptr.vmem [resolvable:$true] %s859
          %865 = dma.vmem_to_hbm [thread:$0]  %s860, 256, %s858, %s846, 128, 128, 8
        $region64: #{patch_discriminator_forward.9} parent=39 // pred_fallthru
          _
      $region40: #{patch_discriminator_forward.9} parent=5 // pred_fallthru
        _
      %p866 = scmp.le.s32.totalorder 2, %s19
      // Predicated region
      $region65: #{patch_discriminator_forward.9} parent=5 // pred_check
        %p867 = pneg %p866
      $region66: #{patch_discriminator_forward.9} parent=5 // pred_check_branch
        %869 = sbr.rel (%p867) target = $region68
      $region67: #{patch_discriminator_forward.9} parent=5 // pred_region
        %s870 = ssub.s32 %s19, 2
        // Predicated region
        $region69: #{patch_discriminator_forward.9} parent=67 // pred_check
          %p871 = pneg %p158
        $region70: #{patch_discriminator_forward.9} parent=67 // pred_check_branch
          %873 = sbr.rel (%p871) target = $region72
        $region71: #{patch_discriminator_forward.9} parent=67 // pred_region
          %s874 = sand.u32 %s143, 1
          %s875 = scalar_lea.sflag [#allocation4], %s874
          %s876 = sand.u32 %s143, 1
          %s877 = smul.addr %s876, 16
          %s878 = scalar_lea.vmem [#allocation11], %s877
          %879 = dma.done %s875, 256
        $region72: #{patch_discriminator_forward.9} parent=67 // pred_fallthru
          _
      $region68: #{patch_discriminator_forward.9} parent=5 // pred_fallthru
        _
    $region6: #{patch_discriminator_forward.9} parent=1 // loop_footer
      %s23 = sadd.s32 1, %s19
    $region7: #{patch_discriminator_forward.9} parent=1 // loop_footer_branch
      %18 = sbr.rel target = $region3
    $region8: #{patch_discriminator_forward.9} parent=1 // loop_exit
      _
    %880 = vsyncpa [#allocation3], 1
    %s881 = scalar_lea.sflag [#allocation3], 1
    %882 = vsyncpa %s881, 1
    %883 = vsyncpa [#allocation6], 1
    %884 = vsyncpa [#allocation9], 1
    %885 = vsyncpa [#allocation4], 1
    %s886 = scalar_lea.sflag [#allocation4], 1
    %887 = vsyncpa %s886, 1

// kernel: patch_discriminator_forward.8
$region0: #{patch_discriminator_forward.8}
  #allocation0 [shape = 'u32[]', space=smem, size = 0x4, offset = 0x4, fixed_abs, tag = 'smem constant byte address 0x4 - core index']
  #allocation1 [shape = 'u32[144,128]{1,0:T(1,128)}', space=vmem, size = 0x12000, scoped, tag = 'internal scratch']
  %s0 = inlined_call_operand.hbm [shape: bf16[2,51,128], index: 0, kind: input, shape index: {}]
  %s1 = inlined_call_operand.hbm [shape: bf16[16,128,128], index: 1, kind: input, shape index: {}]
  %s2 = inlined_call_operand.hbm [shape: f32[1,128], index: 2, kind: input, shape index: {}]
  %s3 = inlined_call_operand.hbm [shape: f32[1,128], index: 3, kind: input, shape index: {}]
  %s4 = inlined_call_operand.hbm [shape: f32[1,128], index: 4, kind: input, shape index: {}]
  %s5 = inlined_call_operand.hbm [shape: bf16[2,24,128], index: 5, kind: output, shape index: {0}]
  %s6 = inlined_call_operand.hbm [shape: f32[2,1,128], index: 6, kind: output, shape index: {1}]
  %s7 = inlined_call_operand.hbm [shape: f32[2,1,128], index: 7, kind: output, shape index: {2}]
  %8 = xla_tuple %s5, %s6, %s7
  %s9 = sld [smem:[#allocation0]]
  $region89: #{patch_discriminator_forward.8} parent=0
    _
  %s11 = ssub.s32 1, %s9
  %s12 = scalar_select 0, %s11, %s9
  $region1: #{patch_discriminator_forward.8} parent=0
    #allocation2 [shape = 'u8[28672]{0}', space=vmem, size = 0x7000, scoped, tag = 'input window, operand 0']
    #allocation3 [shape = 's32[2]{0}', space=sflag, size = 0x8, scoped, tag = 'scoped memory for patch_discriminator_forward.8']
    #allocation4 [shape = 's32[2]{0}', space=sflag, size = 0x8, scoped, tag = 'scoped memory for patch_discriminator_forward.8']
    #allocation5 [shape = 'u8[524288]{0}', space=vmem, size = 0x80000, scoped, tag = 'input window, operand 1, single buffered']
    #allocation6 [shape = 's32[1]{0}', space=sflag, size = 0x4, scoped, tag = 'scoped memory for patch_discriminator_forward.8']
    #allocation7 [shape = 'u8[512]{0}', space=vmem, size = 0x400, scoped, tag = 'input window, operand 2, single buffered']
    #allocation8 [shape = 'u8[512]{0}', space=vmem, size = 0x400, scoped, tag = 'input window, operand 3, single buffered']
    #allocation9 [shape = 's32[1]{0}', space=sflag, size = 0x4, scoped, tag = 'scoped memory for patch_discriminator_forward.8']
    #allocation10 [shape = 'u8[512]{0}', space=vmem, size = 0x400, scoped, tag = 'input window, operand 4, single buffered']
    #allocation11 [shape = 'u8[12288]{0}', space=vmem, size = 0x3000, scoped, tag = 'output window, operand 0']
    #allocation12 [shape = 'u8[1024]{0}', space=vmem, size = 0x400, scoped, tag = 'output window, operand 1']
    #allocation13 [shape = 's32[2]{0}', space=sflag, size = 0x8, scoped, tag = 'scoped memory for patch_discriminator_forward.8']
    #allocation14 [shape = 'u8[1024]{0}', space=vmem, size = 0x400, scoped, tag = 'output window, operand 2']
    %13 = vsyncpa [#allocation3], 0
    %s14 = scalar_lea.sflag [#allocation3], 1
    %15 = vsyncpa %s14, 0
    %16 = vsyncpa [#allocation6], 0
    %17 = vsyncpa [#allocation9], 0
    %18 = vsyncpa [#allocation4], 0
    %s19 = scalar_lea.sflag [#allocation4], 1
    %20 = vsyncpa %s19, 0
    %21 = vsyncpa [#allocation13], 0
    %s22 = scalar_lea.sflag [#allocation13], 1
    %23 = vsyncpa %s22, 0
    loop: start=0, step=1, limit=4
    $region2: #{patch_discriminator_forward.8} parent=1 // loop_pre_header
      _
    $region3: #{patch_discriminator_forward.8} parent=1 // loop_header
      %s25 = sphi 0, %s29
      %p26 = scmp.ge.s32.totalorder %s25, 4
      %s35 = sphi 0, %s37
      %s38 = sphi 0, %s35
      %s39 = sphi 0, %s38
      %s55 = sphi 0, %s39
      %s59 = sphi 0, %s59
      %s61 = sphi 0, %s59
      %s62 = sphi 0, %s61
      %s76 = sphi 0, %s62
      %s80 = sphi 0, %s80
      %s82 = sphi 0, %s80
      %s83 = sphi 0, %s82
      %s97 = sphi 0, %s83
      %s101 = sphi 0, %s101
      %s103 = sphi 0, %s101
      %s104 = sphi 0, %s103
      %s118 = sphi 0, %s104
      %s122 = sphi 0, %s122
      %s124 = sphi 0, %s122
      %s125 = sphi 0, %s124
      %s139 = sphi 0, %s125
      %s145 = sphi 0, %s147
      %s148 = sphi 0, %s145
      %s149 = sphi 0, %s148
      %s165 = sphi 0, %s149
      %s171 = sphi 0, %s173
      %s174 = sphi 0, %s171
      %s175 = sphi 0, %s174
      %s191 = sphi 0, %s175
      %s197 = sphi 0, %s199
      %s200 = sphi 0, %s197
      %s201 = sphi 0, %s200
      %s217 = sphi 0, %s201
    $region4: #{patch_discriminator_forward.8} parent=1 // loop_header_branch
      %28 = sbr.rel (%p26) target = $region8
    $region5: #{patch_discriminator_forward.8} parent=1 // loop_body
      %s30 = ssub.s32 %s25, 1
      %s31 = ssub.s32 %s25, 2
      %s32 = sadd.s32 %s25, 1
      %s33 = ssub.s32 %s25, %s32
      %p34 = scmp.eq.s32.totalorder %s33, 0
      %s36 = sadd.s32 %s35, 1
      %s37 = scalar_select %p34, %s35, %s36
      %p40 = pneg %p34
      %p41 = scmp.eq.s32.totalorder %s25, 1
      %p42 = por %p40, %p41
      %p43 = scmp.ne.s32.totalorder %s35, %s38
      %p44 = scmp.eq.s32.totalorder %s25, 0
      %p45 = por %p43, %p44
      %p46 = scmp.ne.s32.totalorder %s35, %s38
      %p47 = scmp.eq.s32.totalorder %s30, 1
      %p48 = por %p46, %p47
      %p49 = scmp.ne.s32.totalorder %s38, %s39
      %p50 = scmp.eq.s32.totalorder %s30, 0
      %p51 = por %p49, %p50
      %p52 = scmp.ne.s32.totalorder %s38, %s39
      %p53 = scmp.eq.s32.totalorder %s31, 1
      %p54 = por %p52, %p53
      %p56 = scmp.ne.s32.totalorder %s39, %s55
      %p57 = scmp.eq.s32.totalorder %s31, 0
      %p58 = por %p56, %p57
      %s60 = sadd.s32 %s59, 1
      %p63 = scmp.eq.s32.totalorder %s25, 1
      %p64 = scmp.ne.s32.totalorder %s59, %s61
      %p65 = scmp.eq.s32.totalorder %s25, 0
      %p66 = por %p64, %p65
      %p67 = scmp.ne.s32.totalorder %s59, %s61
      %p68 = scmp.eq.s32.totalorder %s30, 1
      %p69 = por %p67, %p68
      %p70 = scmp.ne.s32.totalorder %s61, %s62
      %p71 = scmp.eq.s32.totalorder %s30, 0
      %p72 = por %p70, %p71
      %p73 = scmp.ne.s32.totalorder %s61, %s62
      %p74 = scmp.eq.s32.totalorder %s31, 1
      %p75 = por %p73, %p74
      %p77 = scmp.ne.s32.totalorder %s62, %s76
      %p78 = scmp.eq.s32.totalorder %s31, 0
      %p79 = por %p77, %p78
      %s81 = sadd.s32 %s80, 1
      %p84 = scmp.eq.s32.totalorder %s25, 1
      %p85 = scmp.ne.s32.totalorder %s80, %s82
      %p86 = scmp.eq.s32.totalorder %s25, 0
      %p87 = por %p85, %p86
      %p88 = scmp.ne.s32.totalorder %s80, %s82
      %p89 = scmp.eq.s32.totalorder %s30, 1
      %p90 = por %p88, %p89
      %p91 = scmp.ne.s32.totalorder %s82, %s83
      %p92 = scmp.eq.s32.totalorder %s30, 0
      %p93 = por %p91, %p92
      %p94 = scmp.ne.s32.totalorder %s82, %s83
      %p95 = scmp.eq.s32.totalorder %s31, 1
      %p96 = por %p94, %p95
      %p98 = scmp.ne.s32.totalorder %s83, %s97
      %p99 = scmp.eq.s32.totalorder %s31, 0
      %p100 = por %p98, %p99
      %s102 = sadd.s32 %s101, 1
      %p105 = scmp.eq.s32.totalorder %s25, 1
      %p106 = scmp.ne.s32.totalorder %s101, %s103
      %p107 = scmp.eq.s32.totalorder %s25, 0
      %p108 = por %p106, %p107
      %p109 = scmp.ne.s32.totalorder %s101, %s103
      %p110 = scmp.eq.s32.totalorder %s30, 1
      %p111 = por %p109, %p110
      %p112 = scmp.ne.s32.totalorder %s103, %s104
      %p113 = scmp.eq.s32.totalorder %s30, 0
      %p114 = por %p112, %p113
      %p115 = scmp.ne.s32.totalorder %s103, %s104
      %p116 = scmp.eq.s32.totalorder %s31, 1
      %p117 = por %p115, %p116
      %p119 = scmp.ne.s32.totalorder %s104, %s118
      %p120 = scmp.eq.s32.totalorder %s31, 0
      %p121 = por %p119, %p120
      %s123 = sadd.s32 %s122, 1
      %p126 = scmp.eq.s32.totalorder %s25, 1
      %p127 = scmp.ne.s32.totalorder %s122, %s124
      %p128 = scmp.eq.s32.totalorder %s25, 0
      %p129 = por %p127, %p128
      %p130 = scmp.ne.s32.totalorder %s122, %s124
      %p131 = scmp.eq.s32.totalorder %s30, 1
      %p132 = por %p130, %p131
      %p133 = scmp.ne.s32.totalorder %s124, %s125
      %p134 = scmp.eq.s32.totalorder %s30, 0
      %p135 = por %p133, %p134
      %p136 = scmp.ne.s32.totalorder %s124, %s125
      %p137 = scmp.eq.s32.totalorder %s31, 1
      %p138 = por %p136, %p137
      %p140 = scmp.ne.s32.totalorder %s125, %s139
      %p141 = scmp.eq.s32.totalorder %s31, 0
      %p142 = por %p140, %p141
      %s143 = ssub.s32 %s25, %s32
      %p144 = scmp.eq.s32.totalorder %s143, 0
      %s146 = sadd.s32 %s145, 1
      %s147 = scalar_select %p144, %s145, %s146
      %p150 = pneg %p144
      %p151 = scmp.eq.s32.totalorder %s25, 1
      %p152 = por %p150, %p151
      %p153 = scmp.ne.s32.totalorder %s145, %s148
      %p154 = scmp.eq.s32.totalorder %s25, 0
      %p155 = por %p153, %p154
      %p156 = scmp.ne.s32.totalorder %s145, %s148
      %p157 = scmp.eq.s32.totalorder %s30, 1
      %p158 = por %p156, %p157
      %p159 = scmp.ne.s32.totalorder %s148, %s149
      %p160 = scmp.eq.s32.totalorder %s30, 0
      %p161 = por %p159, %p160
      %p162 = scmp.ne.s32.totalorder %s148, %s149
      %p163 = scmp.eq.s32.totalorder %s31, 1
      %p164 = por %p162, %p163
      %p166 = scmp.ne.s32.totalorder %s149, %s165
      %p167 = scmp.eq.s32.totalorder %s31, 0
      %p168 = por %p166, %p167
      %s169 = ssub.s32 %s25, %s32
      %p170 = scmp.eq.s32.totalorder %s169, 0
      %s172 = sadd.s32 %s171, 1
      %s173 = scalar_select %p170, %s171, %s172
      %p176 = pneg %p170
      %p177 = scmp.eq.s32.totalorder %s25, 1
      %p178 = por %p176, %p177
      %p179 = scmp.ne.s32.totalorder %s171, %s174
      %p180 = scmp.eq.s32.totalorder %s25, 0
      %p181 = por %p179, %p180
      %p182 = scmp.ne.s32.totalorder %s171, %s174
      %p183 = scmp.eq.s32.totalorder %s30, 1
      %p184 = por %p182, %p183
      %p185 = scmp.ne.s32.totalorder %s174, %s175
      %p186 = scmp.eq.s32.totalorder %s30, 0
      %p187 = por %p185, %p186
      %p188 = scmp.ne.s32.totalorder %s174, %s175
      %p189 = scmp.eq.s32.totalorder %s31, 1
      %p190 = por %p188, %p189
      %p192 = scmp.ne.s32.totalorder %s175, %s191
      %p193 = scmp.eq.s32.totalorder %s31, 0
      %p194 = por %p192, %p193
      %s195 = ssub.s32 %s25, %s32
      %p196 = scmp.eq.s32.totalorder %s195, 0
      %s198 = sadd.s32 %s197, 1
      %s199 = scalar_select %p196, %s197, %s198
      %p202 = pneg %p196
      %p203 = scmp.eq.s32.totalorder %s25, 1
      %p204 = por %p202, %p203
      %p205 = scmp.ne.s32.totalorder %s197, %s200
      %p206 = scmp.eq.s32.totalorder %s25, 0
      %p207 = por %p205, %p206
      %p208 = scmp.ne.s32.totalorder %s197, %s200
      %p209 = scmp.eq.s32.totalorder %s30, 1
      %p210 = por %p208, %p209
      %p211 = scmp.ne.s32.totalorder %s200, %s201
      %p212 = scmp.eq.s32.totalorder %s30, 0
      %p213 = por %p211, %p212
      %p214 = scmp.ne.s32.totalorder %s200, %s201
      %p215 = scmp.eq.s32.totalorder %s31, 1
      %p216 = por %p214, %p215
      %p218 = scmp.ne.s32.totalorder %s201, %s217
      %p219 = scmp.eq.s32.totalorder %s31, 0
      %p220 = por %p218, %p219
      %p221 = scmp.le.s32.totalorder 1, %s25
      %p222 = scmp.lt.s32.totalorder %s25, 3
      %p223 = pnand %p221, %p222
      %p224 = pneg %p223
      // Predicated region
      $region9: #{patch_discriminator_forward.8} parent=5 // pred_check
        _
      $region10: #{patch_discriminator_forward.8} parent=5 // pred_check_branch
        %226 = sbr.rel (%p223) target = $region12
      $region11: #{patch_discriminator_forward.8} parent=5 // pred_region
        %s227 = ssub.s32 %s25, 1
        // Predicated region
        $region13: #{patch_discriminator_forward.8} parent=11 // pred_check
          %p228 = pneg %p72
        $region14: #{patch_discriminator_forward.8} parent=11 // pred_check_branch
          %230 = sbr.rel (%p228) target = $region16
        $region15: #{patch_discriminator_forward.8} parent=11 // pred_region
          %s232 = ssub.s32 16384, 16384
          %233 = vsyncadd [#allocation6], %s232
          %s234 = sshll.u32 [#allocation5], 4
          %s235 = int_to_ptr.vmem [resolvable:$true] %s234
          %240 = dma.hbm_to_vmem [thread:$0]  %s1, 16384, %s235, [#allocation6], 64, 64, 4
        $region16: #{patch_discriminator_forward.8} parent=11 // pred_fallthru
          _
        // Predicated region
        $region17: #{patch_discriminator_forward.8} parent=11 // pred_check
          %p241 = pneg %p93
        $region18: #{patch_discriminator_forward.8} parent=11 // pred_check_branch
          %243 = sbr.rel (%p241) target = $region20
        $region19: #{patch_discriminator_forward.8} parent=11 // pred_region
          %s245 = ssub.s32 16, 16
          %246 = vsyncadd [#allocation6], %s245
          %s248 = sshll.u32 [#allocation7], 4
          %s249 = int_to_ptr.vmem [resolvable:$true] %s248
          %251 = dma.hbm_to_vmem [thread:$0]  %s2, 16, %s249, [#allocation6]
        $region20: #{patch_discriminator_forward.8} parent=11 // pred_fallthru
          _
        // Predicated region
        $region21: #{patch_discriminator_forward.8} parent=11 // pred_check
          %p252 = pneg %p114
        $region22: #{patch_discriminator_forward.8} parent=11 // pred_check_branch
          %254 = sbr.rel (%p252) target = $region24
        $region23: #{patch_discriminator_forward.8} parent=11 // pred_region
          %s256 = ssub.s32 16, 16
          %257 = vsyncadd [#allocation9], %s256
          %s259 = sshll.u32 [#allocation8], 4
          %s260 = int_to_ptr.vmem [resolvable:$true] %s259
          %262 = dma.hbm_to_vmem [thread:$0]  %s3, 16, %s260, [#allocation9]
        $region24: #{patch_discriminator_forward.8} parent=11 // pred_fallthru
          _
        // Predicated region
        $region25: #{patch_discriminator_forward.8} parent=11 // pred_check
          %p263 = pneg %p135
        $region26: #{patch_discriminator_forward.8} parent=11 // pred_check_branch
          %265 = sbr.rel (%p263) target = $region28
        $region27: #{patch_discriminator_forward.8} parent=11 // pred_region
          %s267 = ssub.s32 16, 16
          %268 = vsyncadd [#allocation9], %s267
          %s270 = sshll.u32 [#allocation10], 4
          %s271 = int_to_ptr.vmem [resolvable:$true] %s270
          %273 = dma.hbm_to_vmem [thread:$0]  %s4, 16, %s271, [#allocation9]
        $region28: #{patch_discriminator_forward.8} parent=11 // pred_fallthru
          _
      $region12: #{patch_discriminator_forward.8} parent=5 // pred_fallthru
        _
      %p274 = scmp.lt.s32.totalorder %s25, 2
      // Predicated region
      $region29: #{patch_discriminator_forward.8} parent=5 // pred_check
        %p275 = pneg %p274
      $region30: #{patch_discriminator_forward.8} parent=5 // pred_check_branch
        %277 = sbr.rel (%p275) target = $region32
      $region31: #{patch_discriminator_forward.8} parent=5 // pred_region
        // Predicated region
        $region33: #{patch_discriminator_forward.8} parent=31 // pred_check
          %p278 = pneg %p45
        $region34: #{patch_discriminator_forward.8} parent=31 // pred_check_branch
          %280 = sbr.rel (%p278) target = $region36
        $region35: #{patch_discriminator_forward.8} parent=31 // pred_region
          %s281 = sand.u32 %s35, 1
          %s282 = scalar_lea.sflag [#allocation3], %s281
          %s283 = sand.u32 %s35, 1
          %s284 = smul.addr %s283, 28
          %s285 = scalar_lea.vmem [#allocation2], %s284
          %s287 = ssub.s32 448, 448
          %288 = vsyncadd %s282, %s287
          %s289 = smul.addr %s25, 7
          %s290 = smul.addr %s289, 64
          %s291 = scalar_lea.hbm %s0, %s290
          %s292 = sshll.u32 %s285, 4
          %s293 = int_to_ptr.vmem [resolvable:$true] %s292
          %298 = dma.hbm_to_vmem [thread:$0]  %s291, 448, %s293, %s282, 64, 64, 4
        $region36: #{patch_discriminator_forward.8} parent=31 // pred_fallthru
          _
      $region32: #{patch_discriminator_forward.8} parent=5 // pred_fallthru
        _
      %p299 = scmp.le.s32.totalorder 1, %s25
      %p300 = scmp.lt.s32.totalorder %s25, 3
      %p301 = pnand %p299, %p300
      %p302 = pneg %p301
      // Predicated region
      $region37: #{patch_discriminator_forward.8} parent=5 // pred_check
        _
      $region38: #{patch_discriminator_forward.8} parent=5 // pred_check_branch
        %304 = sbr.rel (%p301) target = $region40
      $region39: #{patch_discriminator_forward.8} parent=5 // pred_region
        %s305 = ssub.s32 %s25, 1
        %s306 = sand.u32 %s38, 1
        %s307 = scalar_lea.sflag [#allocation3], %s306
        %s308 = sand.u32 %s38, 1
        %s309 = smul.addr %s308, 28
        %s310 = scalar_lea.vmem [#allocation2], %s309
        // Predicated region
        $region41: #{patch_discriminator_forward.8} parent=39 // pred_check
          %p311 = pneg %p51
        $region42: #{patch_discriminator_forward.8} parent=39 // pred_check_branch
          %313 = sbr.rel (%p311) target = $region44
        $region43: #{patch_discriminator_forward.8} parent=39 // pred_region
          %314 = dma.done %s307, 448
        $region44: #{patch_discriminator_forward.8} parent=39 // pred_fallthru
          _
        // Predicated region
        $region45: #{patch_discriminator_forward.8} parent=39 // pred_check
          %p315 = pneg %p72
        $region46: #{patch_discriminator_forward.8} parent=39 // pred_check_branch
          %317 = sbr.rel (%p315) target = $region48
        $region47: #{patch_discriminator_forward.8} parent=39 // pred_region
          %318 = dma.done [#allocation6], 16384
        $region48: #{patch_discriminator_forward.8} parent=39 // pred_fallthru
          _
        // Predicated region
        $region49: #{patch_discriminator_forward.8} parent=39 // pred_check
          %p319 = pneg %p93
        $region50: #{patch_discriminator_forward.8} parent=39 // pred_check_branch
          %321 = sbr.rel (%p319) target = $region52
        $region51: #{patch_discriminator_forward.8} parent=39 // pred_region
          %322 = dma.done [#allocation6], 16
        $region52: #{patch_discriminator_forward.8} parent=39 // pred_fallthru
          _
        // Predicated region
        $region53: #{patch_discriminator_forward.8} parent=39 // pred_check
          %p323 = pneg %p114
        $region54: #{patch_discriminator_forward.8} parent=39 // pred_check_branch
          %325 = sbr.rel (%p323) target = $region56
        $region55: #{patch_discriminator_forward.8} parent=39 // pred_region
          %326 = dma.done [#allocation9], 16
        $region56: #{patch_discriminator_forward.8} parent=39 // pred_fallthru
          _
        // Predicated region
        $region57: #{patch_discriminator_forward.8} parent=39 // pred_check
          %p327 = pneg %p135
        $region58: #{patch_discriminator_forward.8} parent=39 // pred_check_branch
          %329 = sbr.rel (%p327) target = $region60
        $region59: #{patch_discriminator_forward.8} parent=39 // pred_region
          %330 = dma.done [#allocation9], 16
        $region60: #{patch_discriminator_forward.8} parent=39 // pred_fallthru
          _
        %s331 = sand.u32 %s38, 1
        %s332 = scalar_lea.sflag [#allocation3], %s331
        %s333 = sand.u32 %s38, 1
        %s334 = smul.addr %s333, 28
        %s335 = scalar_lea.vmem [#allocation2], %s334
        %p336 = pneg %p51
        %p337 = pneg %p48
        %p338 = pneg %p72
        %p339 = pneg %p69
        %p340 = pneg %p93
        %p341 = pneg %p90
        %p342 = pneg %p114
        %p343 = pneg %p111
        %p344 = pneg %p135
        %p345 = pneg %p132
        %p346 = pneg %p161
        %p347 = pneg %p158
        %s348 = sand.u32 %s148, 1
        %s349 = scalar_lea.sflag [#allocation4], %s348
        %s350 = sand.u32 %s148, 1
        %s351 = smul.addr %s350, 12
        %s352 = scalar_lea.vmem [#allocation11], %s351
        %p353 = pneg %p187
        %p354 = pneg %p184
        %s355 = sand.u32 %s30, 1
        %s356 = scalar_lea.sflag [#allocation13], %s355
        %s357 = sand.u32 %s174, 1
        %s358 = scalar_lea.vmem [#allocation12], %s357
        %p359 = pneg %p213
        %p360 = pneg %p210
        %s361 = sand.u32 %s30, 1
        %s362 = scalar_lea.sflag [#allocation13], %s361
        %s363 = sand.u32 %s200, 1
        %s364 = scalar_lea.vmem [#allocation14], %s363
        %v366 = vld [vmem:[%s310] sm:$0xf]
        %v367 = vld [vmem:[%s310 + $0x4] sm:$0xf]
        %v368 = vld [vmem:[%s310 + $0x8] sm:$0xf]
        %v369 = vld [vmem:[%s310 + $0xc] sm:$0xf]
        %v370 = vld [vmem:[%s310 + $0x10] sm:$0xf]
        %v371 = vld [vmem:[%s310 + $0x14] sm:$0xf]
        %v372 = vld [vmem:[%s310 + $0x18] sm:$0x3]
        %v373 = vlaneseq
        %v374 = vshrl.u32 %v373, 7
        %v375 = vadd.s32 %v374, 8
        %v376 = vadd.s32 %v374, 16
        %v377 = vadd.s32 %v374, 24
        %v378 = vadd.s32 %v374, 32
        %v379 = vadd.s32 %v374, 40
        %v380 = vadd.s32 %v374, 48
        %vm381 = vcmp.lt.s32.totalorder %v374, 0
        %v382 = vsub.s32 0, %v374
        %v383 = vsel %vm381, %v382, %v374
        %v384 = vshrl.u32 %v383, 3
        %v385 = vand.u32 %v383, 7
        %v386 = vsub.s32 0, %v385
        %v387 = vsel %vm381, %v386, %v385
        %vm388 = vcmp.lt.s32.totalorder %v375, 0
        %v389 = vsub.s32 0, %v375
        %v390 = vsel %vm388, %v389, %v375
        %v391 = vshrl.u32 %v390, 3
        %v392 = vand.u32 %v390, 7
        %v393 = vsub.s32 0, %v392
        %v394 = vsel %vm388, %v393, %v392
        %vm395 = vcmp.lt.s32.totalorder %v376, 0
        %v396 = vsub.s32 0, %v376
        %v397 = vsel %vm395, %v396, %v376
        %v398 = vshrl.u32 %v397, 3
        %v399 = vand.u32 %v397, 7
        %v400 = vsub.s32 0, %v399
        %v401 = vsel %vm395, %v400, %v399
        %vm402 = vcmp.lt.s32.totalorder %v377, 0
        %v403 = vsub.s32 0, %v377
        %v404 = vsel %vm402, %v403, %v377
        %v405 = vshrl.u32 %v404, 3
        %v406 = vand.u32 %v404, 7
        %v407 = vsub.s32 0, %v406
        %v408 = vsel %vm402, %v407, %v406
        %vm409 = vcmp.lt.s32.totalorder %v378, 0
        %v410 = vsub.s32 0, %v378
        %v411 = vsel %vm409, %v410, %v378
        %v412 = vshrl.u32 %v411, 3
        %v413 = vand.u32 %v411, 7
        %v414 = vsub.s32 0, %v413
        %v415 = vsel %vm409, %v414, %v413
        %vm416 = vcmp.lt.s32.totalorder %v379, 0
        %v417 = vsub.s32 0, %v379
        %v418 = vsel %vm416, %v417, %v379
        %v419 = vshrl.u32 %v418, 3
        %v420 = vand.u32 %v418, 7
        %v421 = vsub.s32 0, %v420
        %v422 = vsel %vm416, %v421, %v420
        %vm423 = vcmp.lt.s32.totalorder %v380, 0
        %v424 = vsub.s32 0, %v380
        %v425 = vsel %vm423, %v424, %v380
        %v426 = vshrl.u32 %v425, 3
        %v427 = vand.u32 %v425, 7
        %v428 = vsub.s32 0, %v427
        %v429 = vsel %vm423, %v428, %v427
        %vm430 = vcmp.ne.s32.totalorder %v387, 0
        %vm431 = vcmp.ne.s32.totalorder %v394, 0
        %vm432 = vcmp.ne.s32.totalorder %v401, 0
        %vm433 = vcmp.ne.s32.totalorder %v408, 0
        %vm434 = vcmp.ne.s32.totalorder %v415, 0
        %vm435 = vcmp.ne.s32.totalorder %v422, 0
        %vm436 = vcmp.ne.s32.totalorder %v429, 0
        %vm437 = vcmp.lt.s32.totalorder %v387, 0
        %vm438 = vcmp.lt.s32.totalorder %v394, 0
        %vm439 = vcmp.lt.s32.totalorder %v401, 0
        %vm440 = vcmp.lt.s32.totalorder %v408, 0
        %vm441 = vcmp.lt.s32.totalorder %v415, 0
        %vm442 = vcmp.lt.s32.totalorder %v422, 0
        %vm443 = vcmp.lt.s32.totalorder %v429, 0
        %vm444 = vmand %vm437, %vm430
        %vm445 = vmand %vm438, %vm431
        %vm446 = vmand %vm439, %vm432
        %vm447 = vmand %vm440, %vm433
        %vm448 = vmand %vm441, %vm434
        %vm449 = vmand %vm442, %vm435
        %vm450 = vmand %vm443, %vm436
        %v451 = vadd.s32 %v387, 8
        %v452 = vadd.s32 %v394, 8
        %v453 = vadd.s32 %v401, 8
        %v454 = vadd.s32 %v408, 8
        %v455 = vadd.s32 %v415, 8
        %v456 = vadd.s32 %v422, 8
        %v457 = vadd.s32 %v429, 8
        %v458 = vsel %vm444, %v451, %v387
        %v459 = vsel %vm445, %v452, %v394
        %v460 = vsel %vm446, %v453, %v401
        %v461 = vsel %vm447, %v454, %v408
        %v462 = vsel %vm448, %v455, %v415
        %v463 = vsel %vm449, %v456, %v422
        %v464 = vsel %vm450, %v457, %v429
        %vm465 = vcmp.ge.s32.totalorder %v374, 8
        %vm466 = vcmp.ge.s32.totalorder %v375, 8
        %vm467 = vcmp.ge.s32.totalorder %v376, 8
        %vm468 = vcmp.ge.s32.totalorder %v377, 8
        %vm469 = vcmp.ge.s32.totalorder %v378, 8
        %vm470 = vcmp.ge.s32.totalorder %v379, 8
        %vm471 = vcmp.ge.s32.totalorder %v380, 8
        %vm472 = vcmp.lt.s32.totalorder %v374, 40
        %vm473 = vcmp.lt.s32.totalorder %v375, 40
        %vm474 = vcmp.lt.s32.totalorder %v376, 40
        %vm475 = vcmp.lt.s32.totalorder %v377, 40
        %vm476 = vcmp.lt.s32.totalorder %v378, 40
        %vm477 = vcmp.lt.s32.totalorder %v379, 40
        %vm478 = vcmp.lt.s32.totalorder %v380, 40
        %vm479 = vmand %vm465, %vm472
        %vm480 = vmand %vm466, %vm473
        %vm481 = vmand %vm467, %vm474
        %vm482 = vmand %vm468, %vm475
        %vm483 = vmand %vm469, %vm476
        %vm484 = vmand %vm470, %vm477
        %vm485 = vmand %vm471, %vm478
        %vm486 = vcmp.ge.s32.totalorder %v458, 1
        %vm487 = vcmp.ge.s32.totalorder %v459, 1
        %vm488 = vcmp.ge.s32.totalorder %v460, 1
        %vm489 = vcmp.ge.s32.totalorder %v461, 1
        %vm490 = vcmp.ge.s32.totalorder %v462, 1
        %vm491 = vcmp.ge.s32.totalorder %v463, 1
        %vm492 = vcmp.ge.s32.totalorder %v464, 1
        %vm493 = vmand %vm479, %vm486
        %vm494 = vmand %vm480, %vm487
        %vm495 = vmand %vm481, %vm488
        %vm496 = vmand %vm482, %vm489
        %vm497 = vmand %vm483, %vm490
        %vm498 = vmand %vm484, %vm491
        %vm499 = vmand %vm485, %vm492
        %vm500 = vcmp.le.s32.totalorder %v458, 4
        %vm501 = vcmp.le.s32.totalorder %v459, 4
        %vm502 = vcmp.le.s32.totalorder %v460, 4
        %vm503 = vcmp.le.s32.totalorder %v461, 4
        %vm504 = vcmp.le.s32.totalorder %v462, 4
        %vm505 = vcmp.le.s32.totalorder %v463, 4
        %vm506 = vcmp.le.s32.totalorder %v464, 4
        %vm507 = vmand %vm493, %vm500
        %vm508 = vmand %vm494, %vm501
        %vm509 = vmand %vm495, %vm502
        %vm510 = vmand %vm496, %vm503
        %vm511 = vmand %vm497, %vm504
        %vm512 = vmand %vm498, %vm505
        %vm513 = vmand %vm499, %vm506
        %v514 = vunpack.c.l.bf16 %v366
        %v515 = vunpack.c.l.bf16 %v367
        %v516 = vunpack.c.l.bf16 %v368
        %v517 = vunpack.c.l.bf16 %v369
        %v518 = vunpack.c.l.bf16 %v370
        %v519 = vunpack.c.l.bf16 %v371
        %v520 = vunpack.c.l.bf16 %v372
        %v521 = vld [vmem:[#allocation8] sm:$0x1]
        %v523 = vlaneseq
        %v524 = vshrl.u32 %v523, 7
        %v525 = vsub.s32 0, %v524
        %v526 = vrot.slane %v521, %v525
        %v528 = vmul.f32 %v514, %v526
        %v529 = vmul.f32 %v515, %v526
        %v530 = vmul.f32 %v516, %v526
        %v531 = vmul.f32 %v517, %v526
        %v532 = vmul.f32 %v518, %v526
        %v533 = vmul.f32 %v519, %v526
        %v534 = vmul.f32 %v520, %v526
        %v535 = vld [vmem:[#allocation10] sm:$0x1]
        %v537 = vlaneseq
        %v538 = vshrl.u32 %v537, 7
        %v539 = vsub.s32 0, %v538
        %v540 = vrot.slane %v535, %v539
        %v542 = vadd.f32 %v528, %v540
        %v543 = vadd.f32 %v529, %v540
        %v544 = vadd.f32 %v530, %v540
        %v545 = vadd.f32 %v531, %v540
        %v546 = vadd.f32 %v532, %v540
        %v547 = vadd.f32 %v533, %v540
        %v548 = vadd.f32 %v534, %v540
        %vm549 = vcmp.ge.f32.partialorder %v542, 0.0
        %vm550 = vcmp.ge.f32.partialorder %v543, 0.0
        %vm551 = vcmp.ge.f32.partialorder %v544, 0.0
        %vm552 = vcmp.ge.f32.partialorder %v545, 0.0
        %vm553 = vcmp.ge.f32.partialorder %v546, 0.0
        %vm554 = vcmp.ge.f32.partialorder %v547, 0.0
        %vm555 = vcmp.ge.f32.partialorder %v548, 0.0
        %v556 = vmul.f32 %v542, 0.2
        %v557 = vmul.f32 %v543, 0.2
        %v558 = vmul.f32 %v544, 0.2
        %v559 = vmul.f32 %v545, 0.2
        %v560 = vmul.f32 %v546, 0.2
        %v561 = vmul.f32 %v547, 0.2
        %v562 = vmul.f32 %v548, 0.2
        %v563 = vsel %vm549, %v542, %v556
        %v564 = vsel %vm550, %v543, %v557
        %v565 = vsel %vm551, %v544, %v558
        %v566 = vsel %vm552, %v545, %v559
        %v567 = vsel %vm553, %v546, %v560
        %v568 = vsel %vm554, %v547, %v561
        %v569 = vsel %vm555, %v548, %v562
        %v570 = vsel %vm507, 1, 0
        %v571 = vsel %vm508, 1, 0
        %v572 = vsel %vm509, 1, 0
        %v573 = vsel %vm510, 1, 0
        %v574 = vsel %vm511, 1, 0
        %v575 = vsel %vm512, 1, 0
        %v576 = vsel %vm513, 1, 0
        %vm577 = vcmp.eq.s32.totalorder %v570, 1
        %vm578 = vcmp.eq.s32.totalorder %v571, 1
        %vm579 = vcmp.eq.s32.totalorder %v572, 1
        %vm580 = vcmp.eq.s32.totalorder %v573, 1
        %vm581 = vcmp.eq.s32.totalorder %v574, 1
        %vm582 = vcmp.eq.s32.totalorder %v575, 1
        %vm583 = vcmp.eq.s32.totalorder %v576, 1
        %v584 = vsel %vm577, %v563, 0.0
        %v585 = vsel %vm578, %v564, 0.0
        %v586 = vsel %vm579, %v565, 0.0
        %v587 = vsel %vm580, %v566, 0.0
        %v588 = vsel %vm581, %v567, 0.0
        %v589 = vsel %vm582, %v568, 0.0
        %v590 = vsel %vm583, %v569, 0.0
        %v591 = vpack.c.bf16 %v585, %v584
        %v592 = vpack.c.bf16 %v587, %v586
        %v593 = vpack.c.bf16 %v589, %v588
        %v594 = vpack.c.bf16 %v590, %v590
        %v595 = vld [vmem:[#allocation5] sm:$0xf]
        %v596 = vld [vmem:[#allocation5 + $0x4] sm:$0xf]
        %v597 = vld [vmem:[#allocation5 + $0x8] sm:$0xf]
        %v598 = vld [vmem:[#allocation5 + $0xc] sm:$0xf]
        %v599 = vld [vmem:[#allocation5 + $0x10] sm:$0xf]
        %v600 = vld [vmem:[#allocation5 + $0x14] sm:$0xf]
        %v601 = vld [vmem:[#allocation5 + $0x18] sm:$0xf]
        %v602 = vld [vmem:[#allocation5 + $0x1c] sm:$0xf]
        %v603 = vld [vmem:[#allocation5 + $0x20] sm:$0xf]
        %v604 = vld [vmem:[#allocation5 + $0x24] sm:$0xf]
        %v605 = vld [vmem:[#allocation5 + $0x28] sm:$0xf]
        %v606 = vld [vmem:[#allocation5 + $0x2c] sm:$0xf]
        %v607 = vld [vmem:[#allocation5 + $0x30] sm:$0xf]
        %v608 = vld [vmem:[#allocation5 + $0x34] sm:$0xf]
        %v609 = vld [vmem:[#allocation5 + $0x38] sm:$0xf]
        %v610 = vld [vmem:[#allocation5 + $0x3c] sm:$0xf]
        %s611 = scalar_lea.vmem [#allocation5], 64
        %v612 = vld [vmem:[%s611] sm:$0xf]
        %v613 = vld [vmem:[%s611 + $0x4] sm:$0xf]
        %v614 = vld [vmem:[%s611 + $0x8] sm:$0xf]
        %v615 = vld [vmem:[%s611 + $0xc] sm:$0xf]
        %v616 = vld [vmem:[%s611 + $0x10] sm:$0xf]
        %v617 = vld [vmem:[%s611 + $0x14] sm:$0xf]
        %v618 = vld [vmem:[%s611 + $0x18] sm:$0xf]
        %v619 = vld [vmem:[%s611 + $0x1c] sm:$0xf]
        %v620 = vld [vmem:[%s611 + $0x20] sm:$0xf]
        %v621 = vld [vmem:[%s611 + $0x24] sm:$0xf]
        %v622 = vld [vmem:[%s611 + $0x28] sm:$0xf]
        %v623 = vld [vmem:[%s611 + $0x2c] sm:$0xf]
        %v624 = vld [vmem:[%s611 + $0x30] sm:$0xf]
        %v625 = vld [vmem:[%s611 + $0x34] sm:$0xf]
        %v626 = vld [vmem:[%s611 + $0x38] sm:$0xf]
        %v627 = vld [vmem:[%s611 + $0x3c] sm:$0xf]
        %vm628 = vsmask.f32 7424
        %v630 = vshrl.u32 %v591, 16
        %v632 = vshll.u32 %v591, 16
        %v634 = vrot.slane %v632, 1
        %v635 = vor.u32 %v630, %v634
        %v637 = vshll.u32 %v592, 16
        %v639 = vrot.slane %v637, 1
        %v640 = vsel %vm628, %v635, %v639
        %v641 = vshrl.u32 %v592, 16
        %v643 = vor.u32 %v641, %v639
        %v662 = vunpack.c.l.b16 %v612
        %v663 = vunpack.c.l.b16 %v613
        %v664 = vunpack.c.l.b16 %v614
        %v665 = vunpack.c.l.b16 %v615
        %v666 = vunpack.c.l.b16 %v616
        %v667 = vunpack.c.l.b16 %v617
        %v668 = vunpack.c.l.b16 %v618
        %v669 = vunpack.c.l.b16 %v619
        %v670 = vunpack.c.l.b16 %v620
        %v671 = vunpack.c.l.b16 %v621
        %v672 = vunpack.c.l.b16 %v622
        %v673 = vunpack.c.l.b16 %v623
        %v674 = vunpack.c.l.b16 %v624
        %v675 = vunpack.c.l.b16 %v625
        %v676 = vunpack.c.l.b16 %v626
        %v677 = vunpack.c.l.b16 %v627
        %v678 = vpack.c.b16 %v663, %v662
        %v679 = vpack.c.b16 %v665, %v664
        %v680 = vpack.c.b16 %v667, %v666
        %v681 = vpack.c.b16 %v669, %v668
        %v682 = vpack.c.b16 %v671, %v670
        %v683 = vpack.c.b16 %v673, %v672
        %v684 = vpack.c.b16 %v675, %v674
        %v685 = vpack.c.b16 %v677, %v676
        %694 = vmatprep.subr.bf16.mxu0 0
        %695 = vmatpush1.bf16.msra.mxu0 %v678
        %696 = vmatprep.subr.bf16.mxu0 0
        %697 = vmatpush1.bf16.msra.mxu0 %v679
        %698 = vmatprep.subr.bf16.mxu0 0
        %699 = vmatpush1.bf16.msra.mxu0 %v680
        %700 = vmatprep.subr.bf16.mxu0 0
        %701 = vmatpush1.bf16.msra.mxu0 %v681
        %702 = vmatprep.subr.bf16.mxu0 0
        %703 = vmatpush1.bf16.msra.mxu0 %v682
        %704 = vmatprep.subr.bf16.mxu0 0
        %705 = vmatpush1.bf16.msra.mxu0 %v683
        %706 = vmatprep.subr.bf16.mxu0 0
        %707 = vmatpush1.bf16.msra.mxu0 %v684
        %708 = vmatprep.subr.bf16.mxu0 0
        %709 = vmatpush1.bf16.msra.mxu0 %v685
        %710 = vmatprep.subr.bf16.mxu0 0
        %711 = vmatpush1.bf16.msra.mxu0 0
        %712 = vmatprep.subr.bf16.mxu0 0
        %713 = vmatpush1.bf16.msra.mxu0 0
        %714 = vmatprep.subr.bf16.mxu0 0
        %715 = vmatpush1.bf16.msra.mxu0 0
        %716 = vmatprep.subr.bf16.mxu0 0
        %717 = vmatpush1.bf16.msra.mxu0 0
        %718 = vmatprep.subr.bf16.mxu0 0
        %719 = vmatpush1.bf16.msra.mxu0 0
        %720 = vmatprep.subr.bf16.mxu0 0
        %721 = vmatpush1.bf16.msra.mxu0 0
        %722 = vmatprep.subr.bf16.mxu0 0
        %723 = vmatpush1.bf16.msra.mxu0 0
        %724 = vmatprep.subr.bf16.mxu0 0
        %725 = vmatpush1.bf16.msra.mxu0 0
        %726 = vmatprep.mubr.bf16.mxu0 0
        %727 = vmatmul.mubr.bf16.gmra.mrb[0].mxu0 %v640
        %v728 = vpop.f32.mrb[0].mxu0
        %v729 = vadd.f32 0.0, %v728
        %v730 = vpop.f32.mrb[0].mxu0
        %v731 = vpop.f32.mrb[0].mxu0
        %v732 = vadd.f32 0.0, %v731
        %v733 = vpop.f32.mrb[0].mxu0
        %734 = vmatprep.mubr.bf16.mxu0 0
        %735 = vmatmul.mubr.bf16.gmra.mrb[0].mxu0 %v643
        %v736 = vpop.f32.mrb[0].mxu0
        %v737 = vadd.f32 0.0, %v736
        %v738 = vpop.f32.mrb[0].mxu0
        %v739 = vpop.f32.mrb[0].mxu0
        %v740 = vpop.f32.mrb[0].mxu0
        %741 = vdwg.mxu0
        %v758 = vunpack.c.l.b16 %v595
        %v759 = vunpack.c.l.b16 %v596
        %v760 = vunpack.c.l.b16 %v597
        %v761 = vunpack.c.l.b16 %v598
        %v762 = vunpack.c.l.b16 %v599
        %v763 = vunpack.c.l.b16 %v600
        %v764 = vunpack.c.l.b16 %v601
        %v765 = vunpack.c.l.b16 %v602
        %v766 = vunpack.c.l.b16 %v603
        %v767 = vunpack.c.l.b16 %v604
        %v768 = vunpack.c.l.b16 %v605
        %v769 = vunpack.c.l.b16 %v606
        %v770 = vunpack.c.l.b16 %v607
        %v771 = vunpack.c.l.b16 %v608
        %v772 = vunpack.c.l.b16 %v609
        %v773 = vunpack.c.l.b16 %v610
        %v774 = vpack.c.b16 %v759, %v758
        %v775 = vpack.c.b16 %v761, %v760
        %v776 = vpack.c.b16 %v763, %v762
        %v777 = vpack.c.b16 %v765, %v764
        %v778 = vpack.c.b16 %v767, %v766
        %v779 = vpack.c.b16 %v769, %v768
        %v780 = vpack.c.b16 %v771, %v770
        %v781 = vpack.c.b16 %v773, %v772
        %790 = vmatprep.subr.bf16.mxu0 0
        %791 = vmatpush1.bf16.msra.mxu0 %v774
        %792 = vmatprep.subr.bf16.mxu0 0
        %793 = vmatpush1.bf16.msra.mxu0 %v775
        %794 = vmatprep.subr.bf16.mxu0 0
        %795 = vmatpush1.bf16.msra.mxu0 %v776
        %796 = vmatprep.subr.bf16.mxu0 0
        %797 = vmatpush1.bf16.msra.mxu0 %v777
        %798 = vmatprep.subr.bf16.mxu0 0
        %799 = vmatpush1.bf16.msra.mxu0 %v778
        %800 = vmatprep.subr.bf16.mxu0 0
        %801 = vmatpush1.bf16.msra.mxu0 %v779
        %802 = vmatprep.subr.bf16.mxu0 0
        %803 = vmatpush1.bf16.msra.mxu0 %v780
        %804 = vmatprep.subr.bf16.mxu0 0
        %805 = vmatpush1.bf16.msra.mxu0 %v781
        %806 = vmatprep.subr.bf16.mxu0 0
        %807 = vmatpush1.bf16.msra.mxu0 0
        %808 = vmatprep.subr.bf16.mxu0 0
        %809 = vmatpush1.bf16.msra.mxu0 0
        %810 = vmatprep.subr.bf16.mxu0 0
        %811 = vmatpush1.bf16.msra.mxu0 0
        %812 = vmatprep.subr.bf16.mxu0 0
        %813 = vmatpush1.bf16.msra.mxu0 0
        %814 = vmatprep.subr.bf16.mxu0 0
        %815 = vmatpush1.bf16.msra.mxu0 0
        %816 = vmatprep.subr.bf16.mxu0 0
        %817 = vmatpush1.bf16.msra.mxu0 0
        %818 = vmatprep.subr.bf16.mxu0 0
        %819 = vmatpush1.bf16.msra.mxu0 0
        %820 = vmatprep.subr.bf16.mxu0 0
        %821 = vmatpush1.bf16.msra.mxu0 0
        %822 = vmatprep.mubr.bf16.mxu0 0
        %823 = vmatmul.mubr.bf16.gmra.mrb[0].mxu0 %v591
        %v824 = vpop.f32.mrb[0].mxu0
        %v825 = vadd.f32 %v729, %v824
        %v826 = vpop.f32.mrb[0].mxu0
        %v827 = vpop.f32.mrb[0].mxu0
        %v828 = vadd.f32 %v732, %v827
        %v829 = vpop.f32.mrb[0].mxu0
        %830 = vmatprep.mubr.bf16.mxu0 0
        %831 = vmatmul.mubr.bf16.gmra.mrb[0].mxu0 %v592
        %v832 = vpop.f32.mrb[0].mxu0
        %v833 = vadd.f32 %v737, %v832
        %v834 = vpop.f32.mrb[0].mxu0
        %v835 = vpop.f32.mrb[0].mxu0
        %v836 = vpop.f32.mrb[0].mxu0
        %837 = vdwg.mxu0
        %s838 = scalar_lea.vmem [#allocation5], 128
        %v839 = vld [vmem:[%s838] sm:$0xf]
        %v840 = vld [vmem:[%s838 + $0x4] sm:$0xf]
        %v841 = vld [vmem:[%s838 + $0x8] sm:$0xf]
        %v842 = vld [vmem:[%s838 + $0xc] sm:$0xf]
        %v843 = vld [vmem:[%s838 + $0x10] sm:$0xf]
        %v844 = vld [vmem:[%s838 + $0x14] sm:$0xf]
        %v845 = vld [vmem:[%s838 + $0x18] sm:$0xf]
        %v846 = vld [vmem:[%s838 + $0x1c] sm:$0xf]
        %v847 = vld [vmem:[%s838 + $0x20] sm:$0xf]
        %v848 = vld [vmem:[%s838 + $0x24] sm:$0xf]
        %v849 = vld [vmem:[%s838 + $0x28] sm:$0xf]
        %v850 = vld [vmem:[%s838 + $0x2c] sm:$0xf]
        %v851 = vld [vmem:[%s838 + $0x30] sm:$0xf]
        %v852 = vld [vmem:[%s838 + $0x34] sm:$0xf]
        %v853 = vld [vmem:[%s838 + $0x38] sm:$0xf]
        %v854 = vld [vmem:[%s838 + $0x3c] sm:$0xf]
        %vm857 = vcmask 1046528
        %v858 = vrot.slane %v591, 1
        %v859 = vrot.slane %v592, 1
        %v860 = vsel %vm857, %v858, %v859
        %v879 = vunpack.c.l.b16 %v839
        %v880 = vunpack.c.l.b16 %v840
        %v881 = vunpack.c.l.b16 %v841
        %v882 = vunpack.c.l.b16 %v842
        %v883 = vunpack.c.l.b16 %v843
        %v884 = vunpack.c.l.b16 %v844
        %v885 = vunpack.c.l.b16 %v845
        %v886 = vunpack.c.l.b16 %v846
        %v887 = vunpack.c.l.b16 %v847
        %v888 = vunpack.c.l.b16 %v848
        %v889 = vunpack.c.l.b16 %v849
        %v890 = vunpack.c.l.b16 %v850
        %v891 = vunpack.c.l.b16 %v851
        %v892 = vunpack.c.l.b16 %v852
        %v893 = vunpack.c.l.b16 %v853
        %v894 = vunpack.c.l.b16 %v854
        %v895 = vpack.c.b16 %v880, %v879
        %v896 = vpack.c.b16 %v882, %v881
        %v897 = vpack.c.b16 %v884, %v883
        %v898 = vpack.c.b16 %v886, %v885
        %v899 = vpack.c.b16 %v888, %v887
        %v900 = vpack.c.b16 %v890, %v889
        %v901 = vpack.c.b16 %v892, %v891
        %v902 = vpack.c.b16 %v894, %v893
        %911 = vmatprep.subr.bf16.mxu0 0
        %912 = vmatpush1.bf16.msra.mxu0 %v895
        %913 = vmatprep.subr.bf16.mxu0 0
        %914 = vmatpush1.bf16.msra.mxu0 %v896
        %915 = vmatprep.subr.bf16.mxu0 0
        %916 = vmatpush1.bf16.msra.mxu0 %v897
        %917 = vmatprep.subr.bf16.mxu0 0
        %918 = vmatpush1.bf16.msra.mxu0 %v898
        %919 = vmatprep.subr.bf16.mxu0 0
        %920 = vmatpush1.bf16.msra.mxu0 %v899
        %921 = vmatprep.subr.bf16.mxu0 0
        %922 = vmatpush1.bf16.msra.mxu0 %v900
        %923 = vmatprep.subr.bf16.mxu0 0
        %924 = vmatpush1.bf16.msra.mxu0 %v901
        %925 = vmatprep.subr.bf16.mxu0 0
        %926 = vmatpush1.bf16.msra.mxu0 %v902
        %927 = vmatprep.subr.bf16.mxu0 0
        %928 = vmatpush1.bf16.msra.mxu0 0
        %929 = vmatprep.subr.bf16.mxu0 0
        %930 = vmatpush1.bf16.msra.mxu0 0
        %931 = vmatprep.subr.bf16.mxu0 0
        %932 = vmatpush1.bf16.msra.mxu0 0
        %933 = vmatprep.subr.bf16.mxu0 0
        %934 = vmatpush1.bf16.msra.mxu0 0
        %935 = vmatprep.subr.bf16.mxu0 0
        %936 = vmatpush1.bf16.msra.mxu0 0
        %937 = vmatprep.subr.bf16.mxu0 0
        %938 = vmatpush1.bf16.msra.mxu0 0
        %939 = vmatprep.subr.bf16.mxu0 0
        %940 = vmatpush1.bf16.msra.mxu0 0
        %941 = vmatprep.subr.bf16.mxu0 0
        %942 = vmatpush1.bf16.msra.mxu0 0
        %943 = vmatprep.mubr.bf16.mxu0 0
        %944 = vmatmul.mubr.bf16.gmra.mrb[0].mxu0 %v860
        %v945 = vpop.f32.mrb[0].mxu0
        %v946 = vadd.f32 0.0, %v945
        %v947 = vpop.f32.mrb[0].mxu0
        %v948 = vpop.f32.mrb[0].mxu0
        %v949 = vadd.f32 0.0, %v948
        %v950 = vpop.f32.mrb[0].mxu0
        %951 = vmatprep.mubr.bf16.mxu0 0
        %952 = vmatmul.mubr.bf16.gmra.mrb[0].mxu0 %v859
        %v953 = vpop.f32.mrb[0].mxu0
        %v954 = vadd.f32 0.0, %v953
        %v955 = vpop.f32.mrb[0].mxu0
        %v956 = vpop.f32.mrb[0].mxu0
        %v957 = vpop.f32.mrb[0].mxu0
        %958 = vdwg.mxu0
        %v959 = vadd.f32 %v825, %v946
        %v960 = vadd.f32 %v828, %v949
        %v961 = vadd.f32 %v833, %v954
        %s962 = scalar_lea.vmem [#allocation5], 192
        %v963 = vld [vmem:[%s962] sm:$0xf]
        %v964 = vld [vmem:[%s962 + $0x4] sm:$0xf]
        %v965 = vld [vmem:[%s962 + $0x8] sm:$0xf]
        %v966 = vld [vmem:[%s962 + $0xc] sm:$0xf]
        %v967 = vld [vmem:[%s962 + $0x10] sm:$0xf]
        %v968 = vld [vmem:[%s962 + $0x14] sm:$0xf]
        %v969 = vld [vmem:[%s962 + $0x18] sm:$0xf]
        %v970 = vld [vmem:[%s962 + $0x1c] sm:$0xf]
        %v971 = vld [vmem:[%s962 + $0x20] sm:$0xf]
        %v972 = vld [vmem:[%s962 + $0x24] sm:$0xf]
        %v973 = vld [vmem:[%s962 + $0x28] sm:$0xf]
        %v974 = vld [vmem:[%s962 + $0x2c] sm:$0xf]
        %v975 = vld [vmem:[%s962 + $0x30] sm:$0xf]
        %v976 = vld [vmem:[%s962 + $0x34] sm:$0xf]
        %v977 = vld [vmem:[%s962 + $0x38] sm:$0xf]
        %v978 = vld [vmem:[%s962 + $0x3c] sm:$0xf]
        %vm979 = vsmask.f32 6400
        %v980 = vrot.slane %v630, 1
        %v981 = vrot.slane %v632, 2
        %v982 = vor.u32 %v980, %v981
        %v983 = vrot.slane %v641, 1
        %v984 = vrot.slane %v637, 2
        %v985 = vor.u32 %v983, %v984
        %v986 = vsel %vm979, %v982, %v985
        %v1005 = vunpack.c.l.b16 %v963
        %v1006 = vunpack.c.l.b16 %v964
        %v1007 = vunpack.c.l.b16 %v965
        %v1008 = vunpack.c.l.b16 %v966
        %v1009 = vunpack.c.l.b16 %v967
        %v1010 = vunpack.c.l.b16 %v968
        %v1011 = vunpack.c.l.b16 %v969
        %v1012 = vunpack.c.l.b16 %v970
        %v1013 = vunpack.c.l.b16 %v971
        %v1014 = vunpack.c.l.b16 %v972
        %v1015 = vunpack.c.l.b16 %v973
        %v1016 = vunpack.c.l.b16 %v974
        %v1017 = vunpack.c.l.b16 %v975
        %v1018 = vunpack.c.l.b16 %v976
        %v1019 = vunpack.c.l.b16 %v977
        %v1020 = vunpack.c.l.b16 %v978
        %v1021 = vpack.c.b16 %v1006, %v1005
        %v1022 = vpack.c.b16 %v1008, %v1007
        %v1023 = vpack.c.b16 %v1010, %v1009
        %v1024 = vpack.c.b16 %v1012, %v1011
        %v1025 = vpack.c.b16 %v1014, %v1013
        %v1026 = vpack.c.b16 %v1016, %v1015
        %v1027 = vpack.c.b16 %v1018, %v1017
        %v1028 = vpack.c.b16 %v1020, %v1019
        %1037 = vmatprep.subr.bf16.mxu0 0
        %1038 = vmatpush1.bf16.msra.mxu0 %v1021
        %1039 = vmatprep.subr.bf16.mxu0 0
        %1040 = vmatpush1.bf16.msra.mxu0 %v1022
        %1041 = vmatprep.subr.bf16.mxu0 0
        %1042 = vmatpush1.bf16.msra.mxu0 %v1023
        %1043 = vmatprep.subr.bf16.mxu0 0
        %1044 = vmatpush1.bf16.msra.mxu0 %v1024
        %1045 = vmatprep.subr.bf16.mxu0 0
        %1046 = vmatpush1.bf16.msra.mxu0 %v1025
        %1047 = vmatprep.subr.bf16.mxu0 0
        %1048 = vmatpush1.bf16.msra.mxu0 %v1026
        %1049 = vmatprep.subr.bf16.mxu0 0
        %1050 = vmatpush1.bf16.msra.mxu0 %v1027
        %1051 = vmatprep.subr.bf16.mxu0 0
        %1052 = vmatpush1.bf16.msra.mxu0 %v1028
        %1053 = vmatprep.subr.bf16.mxu0 0
        %1054 = vmatpush1.bf16.msra.mxu0 0
        %1055 = vmatprep.subr.bf16.mxu0 0
        %1056 = vmatpush1.bf16.msra.mxu0 0
        %1057 = vmatprep.subr.bf16.mxu0 0
        %1058 = vmatpush1.bf16.msra.mxu0 0
        %1059 = vmatprep.subr.bf16.mxu0 0
        %1060 = vmatpush1.bf16.msra.mxu0 0
        %1061 = vmatprep.subr.bf16.mxu0 0
        %1062 = vmatpush1.bf16.msra.mxu0 0
        %1063 = vmatprep.subr.bf16.mxu0 0
        %1064 = vmatpush1.bf16.msra.mxu0 0
        %1065 = vmatprep.subr.bf16.mxu0 0
        %1066 = vmatpush1.bf16.msra.mxu0 0
        %1067 = vmatprep.subr.bf16.mxu0 0
        %1068 = vmatpush1.bf16.msra.mxu0 0
        %1069 = vmatprep.mubr.bf16.mxu0 0
        %1070 = vmatmul.mubr.bf16.gmra.mrb[0].mxu0 %v986
        %v1071 = vpop.f32.mrb[0].mxu0
        %v1072 = vadd.f32 0.0, %v1071
        %v1073 = vpop.f32.mrb[0].mxu0
        %v1074 = vpop.f32.mrb[0].mxu0
        %v1075 = vadd.f32 0.0, %v1074
        %v1076 = vpop.f32.mrb[0].mxu0
        %1077 = vmatprep.mubr.bf16.mxu0 0
        %1078 = vmatmul.mubr.bf16.gmra.mrb[0].mxu0 %v985
        %v1079 = vpop.f32.mrb[0].mxu0
        %v1080 = vadd.f32 0.0, %v1079
        %v1081 = vpop.f32.mrb[0].mxu0
        %v1082 = vpop.f32.mrb[0].mxu0
        %v1083 = vpop.f32.mrb[0].mxu0
        %1084 = vdwg.mxu0
        %v1085 = vadd.f32 %v959, %v1072
        %v1086 = vadd.f32 %v960, %v1075
        %v1087 = vadd.f32 %v961, %v1080
        %s1088 = scalar_lea.vmem [#allocation5], 256
        %v1089 = vld [vmem:[%s1088] sm:$0xf]
        %v1090 = vld [vmem:[%s1088 + $0x4] sm:$0xf]
        %v1091 = vld [vmem:[%s1088 + $0x8] sm:$0xf]
        %v1092 = vld [vmem:[%s1088 + $0xc] sm:$0xf]
        %v1093 = vld [vmem:[%s1088 + $0x10] sm:$0xf]
        %v1094 = vld [vmem:[%s1088 + $0x14] sm:$0xf]
        %v1095 = vld [vmem:[%s1088 + $0x18] sm:$0xf]
        %v1096 = vld [vmem:[%s1088 + $0x1c] sm:$0xf]
        %v1097 = vld [vmem:[%s1088 + $0x20] sm:$0xf]
        %v1098 = vld [vmem:[%s1088 + $0x24] sm:$0xf]
        %v1099 = vld [vmem:[%s1088 + $0x28] sm:$0xf]
        %v1100 = vld [vmem:[%s1088 + $0x2c] sm:$0xf]
        %v1101 = vld [vmem:[%s1088 + $0x30] sm:$0xf]
        %v1102 = vld [vmem:[%s1088 + $0x34] sm:$0xf]
        %v1103 = vld [vmem:[%s1088 + $0x38] sm:$0xf]
        %v1104 = vld [vmem:[%s1088 + $0x3c] sm:$0xf]
        %vm1105 = vcmask 1043456
        %v1106 = vrot.slane %v591, 4
        %v1107 = vrot.slane %v592, 4
        %v1108 = vsel %vm1105, %v1106, %v1107
        %v1127 = vunpack.c.l.b16 %v1089
        %v1128 = vunpack.c.l.b16 %v1090
        %v1129 = vunpack.c.l.b16 %v1091
        %v1130 = vunpack.c.l.b16 %v1092
        %v1131 = vunpack.c.l.b16 %v1093
        %v1132 = vunpack.c.l.b16 %v1094
        %v1133 = vunpack.c.l.b16 %v1095
        %v1134 = vunpack.c.l.b16 %v1096
        %v1135 = vunpack.c.l.b16 %v1097
        %v1136 = vunpack.c.l.b16 %v1098
        %v1137 = vunpack.c.l.b16 %v1099
        %v1138 = vunpack.c.l.b16 %v1100
        %v1139 = vunpack.c.l.b16 %v1101
        %v1140 = vunpack.c.l.b16 %v1102
        %v1141 = vunpack.c.l.b16 %v1103
        %v1142 = vunpack.c.l.b16 %v1104
        %v1143 = vpack.c.b16 %v1128, %v1127
        %v1144 = vpack.c.b16 %v1130, %v1129
        %v1145 = vpack.c.b16 %v1132, %v1131
        %v1146 = vpack.c.b16 %v1134, %v1133
        %v1147 = vpack.c.b16 %v1136, %v1135
        %v1148 = vpack.c.b16 %v1138, %v1137
        %v1149 = vpack.c.b16 %v1140, %v1139
        %v1150 = vpack.c.b16 %v1142, %v1141
        %1159 = vmatprep.subr.bf16.mxu0 0
        %1160 = vmatpush1.bf16.msra.mxu0 %v1143
        %1161 = vmatprep.subr.bf16.mxu0 0
        %1162 = vmatpush1.bf16.msra.mxu0 %v1144
        %1163 = vmatprep.subr.bf16.mxu0 0
        %1164 = vmatpush1.bf16.msra.mxu0 %v1145
        %1165 = vmatprep.subr.bf16.mxu0 0
        %1166 = vmatpush1.bf16.msra.mxu0 %v1146
        %1167 = vmatprep.subr.bf16.mxu0 0
        %1168 = vmatpush1.bf16.msra.mxu0 %v1147
        %1169 = vmatprep.subr.bf16.mxu0 0
        %1170 = vmatpush1.bf16.msra.mxu0 %v1148
        %1171 = vmatprep.subr.bf16.mxu0 0
        %1172 = vmatpush1.bf16.msra.mxu0 %v1149
        %1173 = vmatprep.subr.bf16.mxu0 0
        %1174 = vmatpush1.bf16.msra.mxu0 %v1150
        %1175 = vmatprep.subr.bf16.mxu0 0
        %1176 = vmatpush1.bf16.msra.mxu0 0
        %1177 = vmatprep.subr.bf16.mxu0 0
        %1178 = vmatpush1.bf16.msra.mxu0 0
        %1179 = vmatprep.subr.bf16.mxu0 0
        %1180 = vmatpush1.bf16.msra.mxu0 0
        %1181 = vmatprep.subr.bf16.mxu0 0
        %1182 = vmatpush1.bf16.msra.mxu0 0
        %1183 = vmatprep.subr.bf16.mxu0 0
        %1184 = vmatpush1.bf16.msra.mxu0 0
        %1185 = vmatprep.subr.bf16.mxu0 0
        %1186 = vmatpush1.bf16.msra.mxu0 0
        %1187 = vmatprep.subr.bf16.mxu0 0
        %1188 = vmatpush1.bf16.msra.mxu0 0
        %1189 = vmatprep.subr.bf16.mxu0 0
        %1190 = vmatpush1.bf16.msra.mxu0 0
        %1191 = vmatprep.mubr.bf16.mxu0 0
        %1192 = vmatmul.mubr.bf16.gmra.mrb[0].mxu0 %v1108
        %v1193 = vpop.f32.mrb[0].mxu0
        %v1194 = vadd.f32 0.0, %v1193
        %v1195 = vpop.f32.mrb[0].mxu0
        %v1196 = vpop.f32.mrb[0].mxu0
        %v1197 = vadd.f32 0.0, %v1196
        %v1198 = vpop.f32.mrb[0].mxu0
        %1199 = vmatprep.mubr.bf16.mxu0 0
        %1200 = vmatmul.mubr.bf16.gmra.mrb[0].mxu0 %v1107
        %v1201 = vpop.f32.mrb[0].mxu0
        %v1202 = vadd.f32 0.0, %v1201
        %v1203 = vpop.f32.mrb[0].mxu0
        %v1204 = vpop.f32.mrb[0].mxu0
        %v1205 = vpop.f32.mrb[0].mxu0
        %1206 = vdwg.mxu0
        %v1207 = vadd.f32 %v1085, %v1194
        %v1208 = vadd.f32 %v1086, %v1197
        %v1209 = vadd.f32 %v1087, %v1202
        %s1210 = scalar_lea.vmem [#allocation5], 320
        %v1211 = vld [vmem:[%s1210] sm:$0xf]
        %v1212 = vld [vmem:[%s1210 + $0x4] sm:$0xf]
        %v1213 = vld [vmem:[%s1210 + $0x8] sm:$0xf]
        %v1214 = vld [vmem:[%s1210 + $0xc] sm:$0xf]
        %v1215 = vld [vmem:[%s1210 + $0x10] sm:$0xf]
        %v1216 = vld [vmem:[%s1210 + $0x14] sm:$0xf]
        %v1217 = vld [vmem:[%s1210 + $0x18] sm:$0xf]
        %v1218 = vld [vmem:[%s1210 + $0x1c] sm:$0xf]
        %v1219 = vld [vmem:[%s1210 + $0x20] sm:$0xf]
        %v1220 = vld [vmem:[%s1210 + $0x24] sm:$0xf]
        %v1221 = vld [vmem:[%s1210 + $0x28] sm:$0xf]
        %v1222 = vld [vmem:[%s1210 + $0x2c] sm:$0xf]
        %v1223 = vld [vmem:[%s1210 + $0x30] sm:$0xf]
        %v1224 = vld [vmem:[%s1210 + $0x34] sm:$0xf]
        %v1225 = vld [vmem:[%s1210 + $0x38] sm:$0xf]
        %v1226 = vld [vmem:[%s1210 + $0x3c] sm:$0xf]
        %vm1227 = vsmask.f32 3328
        %v1228 = vrot.slane %v630, 4
        %v1229 = vrot.slane %v632, 5
        %v1230 = vor.u32 %v1228, %v1229
        %v1231 = vrot.slane %v641, 4
        %v1232 = vrot.slane %v637, 5
        %v1233 = vor.u32 %v1231, %v1232
        %v1234 = vsel %vm1227, %v1230, %v1233
        %v1236 = vshll.u32 %v593, 16
        %v1238 = vrot.slane %v1236, 5
        %v1239 = vsel %vm1227, %v1233, %v1238
        %v1258 = vunpack.c.l.b16 %v1211
        %v1259 = vunpack.c.l.b16 %v1212
        %v1260 = vunpack.c.l.b16 %v1213
        %v1261 = vunpack.c.l.b16 %v1214
        %v1262 = vunpack.c.l.b16 %v1215
        %v1263 = vunpack.c.l.b16 %v1216
        %v1264 = vunpack.c.l.b16 %v1217
        %v1265 = vunpack.c.l.b16 %v1218
        %v1266 = vunpack.c.l.b16 %v1219
        %v1267 = vunpack.c.l.b16 %v1220
        %v1268 = vunpack.c.l.b16 %v1221
        %v1269 = vunpack.c.l.b16 %v1222
        %v1270 = vunpack.c.l.b16 %v1223
        %v1271 = vunpack.c.l.b16 %v1224
        %v1272 = vunpack.c.l.b16 %v1225
        %v1273 = vunpack.c.l.b16 %v1226
        %v1274 = vpack.c.b16 %v1259, %v1258
        %v1275 = vpack.c.b16 %v1261, %v1260
        %v1276 = vpack.c.b16 %v1263, %v1262
        %v1277 = vpack.c.b16 %v1265, %v1264
        %v1278 = vpack.c.b16 %v1267, %v1266
        %v1279 = vpack.c.b16 %v1269, %v1268
        %v1280 = vpack.c.b16 %v1271, %v1270
        %v1281 = vpack.c.b16 %v1273, %v1272
        %1290 = vmatprep.subr.bf16.mxu0 0
        %1291 = vmatpush1.bf16.msra.mxu0 %v1274
        %1292 = vmatprep.subr.bf16.mxu0 0
        %1293 = vmatpush1.bf16.msra.mxu0 %v1275
        %1294 = vmatprep.subr.bf16.mxu0 0
        %1295 = vmatpush1.bf16.msra.mxu0 %v1276
        %1296 = vmatprep.subr.bf16.mxu0 0
        %1297 = vmatpush1.bf16.msra.mxu0 %v1277
        %1298 = vmatprep.subr.bf16.mxu0 0
        %1299 = vmatpush1.bf16.msra.mxu0 %v1278
        %1300 = vmatprep.subr.bf16.mxu0 0
        %1301 = vmatpush1.bf16.msra.mxu0 %v1279
        %1302 = vmatprep.subr.bf16.mxu0 0
        %1303 = vmatpush1.bf16.msra.mxu0 %v1280
        %1304 = vmatprep.subr.bf16.mxu0 0
        %1305 = vmatpush1.bf16.msra.mxu0 %v1281
        %1306 = vmatprep.subr.bf16.mxu0 0
        %1307 = vmatpush1.bf16.msra.mxu0 0
        %1308 = vmatprep.subr.bf16.mxu0 0
        %1309 = vmatpush1.bf16.msra.mxu0 0
        %1310 = vmatprep.subr.bf16.mxu0 0
        %1311 = vmatpush1.bf16.msra.mxu0 0
        %1312 = vmatprep.subr.bf16.mxu0 0
        %1313 = vmatpush1.bf16.msra.mxu0 0
        %1314 = vmatprep.subr.bf16.mxu0 0
        %1315 = vmatpush1.bf16.msra.mxu0 0
        %1316 = vmatprep.subr.bf16.mxu0 0
        %1317 = vmatpush1.bf16.msra.mxu0 0
        %1318 = vmatprep.subr.bf16.mxu0 0
        %1319 = vmatpush1.bf16.msra.mxu0 0
        %1320 = vmatprep.subr.bf16.mxu0 0
        %1321 = vmatpush1.bf16.msra.mxu0 0
        %1322 = vmatprep.mubr.bf16.mxu0 0
        %1323 = vmatmul.mubr.bf16.gmra.mrb[0].mxu0 %v1234
        %v1324 = vpop.f32.mrb[0].mxu0
        %v1325 = vadd.f32 0.0, %v1324
        %v1326 = vpop.f32.mrb[0].mxu0
        %v1327 = vpop.f32.mrb[0].mxu0
        %v1328 = vadd.f32 0.0, %v1327
        %v1329 = vpop.f32.mrb[0].mxu0
        %1330 = vmatprep.mubr.bf16.mxu0 0
        %1331 = vmatmul.mubr.bf16.gmra.mrb[0].mxu0 %v1239
        %v1332 = vpop.f32.mrb[0].mxu0
        %v1333 = vadd.f32 0.0, %v1332
        %v1334 = vpop.f32.mrb[0].mxu0
        %v1335 = vpop.f32.mrb[0].mxu0
        %v1336 = vpop.f32.mrb[0].mxu0
        %1337 = vdwg.mxu0
        %v1338 = vadd.f32 %v1207, %v1325
        %v1339 = vadd.f32 %v1208, %v1328
        %v1340 = vadd.f32 %v1209, %v1333
        %s1341 = scalar_lea.vmem [#allocation5], 384
        %v1342 = vld [vmem:[%s1341] sm:$0xf]
        %v1343 = vld [vmem:[%s1341 + $0x4] sm:$0xf]
        %v1344 = vld [vmem:[%s1341 + $0x8] sm:$0xf]
        %v1345 = vld [vmem:[%s1341 + $0xc] sm:$0xf]
        %v1346 = vld [vmem:[%s1341 + $0x10] sm:$0xf]
        %v1347 = vld [vmem:[%s1341 + $0x14] sm:$0xf]
        %v1348 = vld [vmem:[%s1341 + $0x18] sm:$0xf]
        %v1349 = vld [vmem:[%s1341 + $0x1c] sm:$0xf]
        %v1350 = vld [vmem:[%s1341 + $0x20] sm:$0xf]
        %v1351 = vld [vmem:[%s1341 + $0x24] sm:$0xf]
        %v1352 = vld [vmem:[%s1341 + $0x28] sm:$0xf]
        %v1353 = vld [vmem:[%s1341 + $0x2c] sm:$0xf]
        %v1354 = vld [vmem:[%s1341 + $0x30] sm:$0xf]
        %v1355 = vld [vmem:[%s1341 + $0x34] sm:$0xf]
        %v1356 = vld [vmem:[%s1341 + $0x38] sm:$0xf]
        %v1357 = vld [vmem:[%s1341 + $0x3c] sm:$0xf]
        %vm1359 = vcmask 1042432
        %v1360 = vrot.slane %v591, 5
        %v1361 = vrot.slane %v592, 5
        %v1362 = vsel %vm1359, %v1360, %v1361
        %v1363 = vrot.slane %v593, 5
        %v1364 = vsel %vm1359, %v1361, %v1363
        %v1383 = vunpack.c.l.b16 %v1342
        %v1384 = vunpack.c.l.b16 %v1343
        %v1385 = vunpack.c.l.b16 %v1344
        %v1386 = vunpack.c.l.b16 %v1345
        %v1387 = vunpack.c.l.b16 %v1346
        %v1388 = vunpack.c.l.b16 %v1347
        %v1389 = vunpack.c.l.b16 %v1348
        %v1390 = vunpack.c.l.b16 %v1349
        %v1391 = vunpack.c.l.b16 %v1350
        %v1392 = vunpack.c.l.b16 %v1351
        %v1393 = vunpack.c.l.b16 %v1352
        %v1394 = vunpack.c.l.b16 %v1353
        %v1395 = vunpack.c.l.b16 %v1354
        %v1396 = vunpack.c.l.b16 %v1355
        %v1397 = vunpack.c.l.b16 %v1356
        %v1398 = vunpack.c.l.b16 %v1357
        %v1399 = vpack.c.b16 %v1384, %v1383
        %v1400 = vpack.c.b16 %v1386, %v1385
        %v1401 = vpack.c.b16 %v1388, %v1387
        %v1402 = vpack.c.b16 %v1390, %v1389
        %v1403 = vpack.c.b16 %v1392, %v1391
        %v1404 = vpack.c.b16 %v1394, %v1393
        %v1405 = vpack.c.b16 %v1396, %v1395
        %v1406 = vpack.c.b16 %v1398, %v1397
        %1415 = vmatprep.subr.bf16.mxu0 0
        %1416 = vmatpush1.bf16.msra.mxu0 %v1399
        %1417 = vmatprep.subr.bf16.mxu0 0
        %1418 = vmatpush1.bf16.msra.mxu0 %v1400
        %1419 = vmatprep.subr.bf16.mxu0 0
        %1420 = vmatpush1.bf16.msra.mxu0 %v1401
        %1421 = vmatprep.subr.bf16.mxu0 0
        %1422 = vmatpush1.bf16.msra.mxu0 %v1402
        %1423 = vmatprep.subr.bf16.mxu0 0
        %1424 = vmatpush1.bf16.msra.mxu0 %v1403
        %1425 = vmatprep.subr.bf16.mxu0 0
        %1426 = vmatpush1.bf16.msra.mxu0 %v1404
        %1427 = vmatprep.subr.bf16.mxu0 0
        %1428 = vmatpush1.bf16.msra.mxu0 %v1405
        %1429 = vmatprep.subr.bf16.mxu0 0
        %1430 = vmatpush1.bf16.msra.mxu0 %v1406
        %1431 = vmatprep.subr.bf16.mxu0 0
        %1432 = vmatpush1.bf16.msra.mxu0 0
        %1433 = vmatprep.subr.bf16.mxu0 0
        %1434 = vmatpush1.bf16.msra.mxu0 0
        %1435 = vmatprep.subr.bf16.mxu0 0
        %1436 = vmatpush1.bf16.msra.mxu0 0
        %1437 = vmatprep.subr.bf16.mxu0 0
        %1438 = vmatpush1.bf16.msra.mxu0 0
        %1439 = vmatprep.subr.bf16.mxu0 0
        %1440 = vmatpush1.bf16.msra.mxu0 0
        %1441 = vmatprep.subr.bf16.mxu0 0
        %1442 = vmatpush1.bf16.msra.mxu0 0
        %1443 = vmatprep.subr.bf16.mxu0 0
        %1444 = vmatpush1.bf16.msra.mxu0 0
        %1445 = vmatprep.subr.bf16.mxu0 0
        %1446 = vmatpush1.bf16.msra.mxu0 0
        %1447 = vmatprep.mubr.bf16.mxu0 0
        %1448 = vmatmul.mubr.bf16.gmra.mrb[0].mxu0 %v1362
        %v1449 = vpop.f32.mrb[0].mxu0
        %v1450 = vadd.f32 0.0, %v1449
        %v1451 = vpop.f32.mrb[0].mxu0
        %v1452 = vpop.f32.mrb[0].mxu0
        %v1453 = vadd.f32 0.0, %v1452
        %v1454 = vpop.f32.mrb[0].mxu0
        %1455 = vmatprep.mubr.bf16.mxu0 0
        %1456 = vmatmul.mubr.bf16.gmra.mrb[0].mxu0 %v1364
        %v1457 = vpop.f32.mrb[0].mxu0
        %v1458 = vadd.f32 0.0, %v1457
        %v1459 = vpop.f32.mrb[0].mxu0
        %v1460 = vpop.f32.mrb[0].mxu0
        %v1461 = vpop.f32.mrb[0].mxu0
        %1462 = vdwg.mxu0
        %v1463 = vadd.f32 %v1338, %v1450
        %v1464 = vadd.f32 %v1339, %v1453
        %v1465 = vadd.f32 %v1340, %v1458
        %s1466 = scalar_lea.vmem [#allocation5], 448
        %v1467 = vld [vmem:[%s1466] sm:$0xf]
        %v1468 = vld [vmem:[%s1466 + $0x4] sm:$0xf]
        %v1469 = vld [vmem:[%s1466 + $0x8] sm:$0xf]
        %v1470 = vld [vmem:[%s1466 + $0xc] sm:$0xf]
        %v1471 = vld [vmem:[%s1466 + $0x10] sm:$0xf]
        %v1472 = vld [vmem:[%s1466 + $0x14] sm:$0xf]
        %v1473 = vld [vmem:[%s1466 + $0x18] sm:$0xf]
        %v1474 = vld [vmem:[%s1466 + $0x1c] sm:$0xf]
        %v1475 = vld [vmem:[%s1466 + $0x20] sm:$0xf]
        %v1476 = vld [vmem:[%s1466 + $0x24] sm:$0xf]
        %v1477 = vld [vmem:[%s1466 + $0x28] sm:$0xf]
        %v1478 = vld [vmem:[%s1466 + $0x2c] sm:$0xf]
        %v1479 = vld [vmem:[%s1466 + $0x30] sm:$0xf]
        %v1480 = vld [vmem:[%s1466 + $0x34] sm:$0xf]
        %v1481 = vld [vmem:[%s1466 + $0x38] sm:$0xf]
        %v1482 = vld [vmem:[%s1466 + $0x3c] sm:$0xf]
        %vm1483 = vsmask.f32 2304
        %v1484 = vrot.slane %v630, 5
        %v1485 = vrot.slane %v632, 6
        %v1486 = vor.u32 %v1484, %v1485
        %v1487 = vrot.slane %v641, 5
        %v1488 = vrot.slane %v637, 6
        %v1489 = vor.u32 %v1487, %v1488
        %v1490 = vsel %vm1483, %v1486, %v1489
        %v1491 = vshrl.u32 %v593, 16
        %v1493 = vrot.slane %v1491, 5
        %v1494 = vrot.slane %v1236, 6
        %v1495 = vor.u32 %v1493, %v1494
        %v1496 = vsel %vm1483, %v1489, %v1495
        %v1515 = vunpack.c.l.b16 %v1467
        %v1516 = vunpack.c.l.b16 %v1468
        %v1517 = vunpack.c.l.b16 %v1469
        %v1518 = vunpack.c.l.b16 %v1470
        %v1519 = vunpack.c.l.b16 %v1471
        %v1520 = vunpack.c.l.b16 %v1472
        %v1521 = vunpack.c.l.b16 %v1473
        %v1522 = vunpack.c.l.b16 %v1474
        %v1523 = vunpack.c.l.b16 %v1475
        %v1524 = vunpack.c.l.b16 %v1476
        %v1525 = vunpack.c.l.b16 %v1477
        %v1526 = vunpack.c.l.b16 %v1478
        %v1527 = vunpack.c.l.b16 %v1479
        %v1528 = vunpack.c.l.b16 %v1480
        %v1529 = vunpack.c.l.b16 %v1481
        %v1530 = vunpack.c.l.b16 %v1482
        %v1531 = vpack.c.b16 %v1516, %v1515
        %v1532 = vpack.c.b16 %v1518, %v1517
        %v1533 = vpack.c.b16 %v1520, %v1519
        %v1534 = vpack.c.b16 %v1522, %v1521
        %v1535 = vpack.c.b16 %v1524, %v1523
        %v1536 = vpack.c.b16 %v1526, %v1525
        %v1537 = vpack.c.b16 %v1528, %v1527
        %v1538 = vpack.c.b16 %v1530, %v1529
        %1547 = vmatprep.subr.bf16.mxu0 0
        %1548 = vmatpush1.bf16.msra.mxu0 %v1531
        %1549 = vmatprep.subr.bf16.mxu0 0
        %1550 = vmatpush1.bf16.msra.mxu0 %v1532
        %1551 = vmatprep.subr.bf16.mxu0 0
        %1552 = vmatpush1.bf16.msra.mxu0 %v1533
        %1553 = vmatprep.subr.bf16.mxu0 0
        %1554 = vmatpush1.bf16.msra.mxu0 %v1534
        %1555 = vmatprep.subr.bf16.mxu0 0
        %1556 = vmatpush1.bf16.msra.mxu0 %v1535
        %1557 = vmatprep.subr.bf16.mxu0 0
        %1558 = vmatpush1.bf16.msra.mxu0 %v1536
        %1559 = vmatprep.subr.bf16.mxu0 0
        %1560 = vmatpush1.bf16.msra.mxu0 %v1537
        %1561 = vmatprep.subr.bf16.mxu0 0
        %1562 = vmatpush1.bf16.msra.mxu0 %v1538
        %1563 = vmatprep.subr.bf16.mxu0 0
        %1564 = vmatpush1.bf16.msra.mxu0 0
        %1565 = vmatprep.subr.bf16.mxu0 0
        %1566 = vmatpush1.bf16.msra.mxu0 0
        %1567 = vmatprep.subr.bf16.mxu0 0
        %1568 = vmatpush1.bf16.msra.mxu0 0
        %1569 = vmatprep.subr.bf16.mxu0 0
        %1570 = vmatpush1.bf16.msra.mxu0 0
        %1571 = vmatprep.subr.bf16.mxu0 0
        %1572 = vmatpush1.bf16.msra.mxu0 0
        %1573 = vmatprep.subr.bf16.mxu0 0
        %1574 = vmatpush1.bf16.msra.mxu0 0
        %1575 = vmatprep.subr.bf16.mxu0 0
        %1576 = vmatpush1.bf16.msra.mxu0 0
        %1577 = vmatprep.subr.bf16.mxu0 0
        %1578 = vmatpush1.bf16.msra.mxu0 0
        %1579 = vmatprep.mubr.bf16.mxu0 0
        %1580 = vmatmul.mubr.bf16.gmra.mrb[0].mxu0 %v1490
        %v1581 = vpop.f32.mrb[0].mxu0
        %v1582 = vadd.f32 0.0, %v1581
        %v1583 = vpop.f32.mrb[0].mxu0
        %v1584 = vpop.f32.mrb[0].mxu0
        %v1585 = vadd.f32 0.0, %v1584
        %v1586 = vpop.f32.mrb[0].mxu0
        %1587 = vmatprep.mubr.bf16.mxu0 0
        %1588 = vmatmul.mubr.bf16.gmra.mrb[0].mxu0 %v1496
        %v1589 = vpop.f32.mrb[0].mxu0
        %v1590 = vadd.f32 0.0, %v1589
        %v1591 = vpop.f32.mrb[0].mxu0
        %v1592 = vpop.f32.mrb[0].mxu0
        %v1593 = vpop.f32.mrb[0].mxu0
        %1594 = vdwg.mxu0
        %v1595 = vadd.f32 %v1463, %v1582
        %v1596 = vadd.f32 %v1464, %v1585
        %v1597 = vadd.f32 %v1465, %v1590
        %s1598 = scalar_lea.vmem [#allocation5], 512
        %v1599 = vld [vmem:[%s1598] sm:$0xf]
        %v1600 = vld [vmem:[%s1598 + $0x4] sm:$0xf]
        %v1601 = vld [vmem:[%s1598 + $0x8] sm:$0xf]
        %v1602 = vld [vmem:[%s1598 + $0xc] sm:$0xf]
        %v1603 = vld [vmem:[%s1598 + $0x10] sm:$0xf]
        %v1604 = vld [vmem:[%s1598 + $0x14] sm:$0xf]
        %v1605 = vld [vmem:[%s1598 + $0x18] sm:$0xf]
        %v1606 = vld [vmem:[%s1598 + $0x1c] sm:$0xf]
        %v1607 = vld [vmem:[%s1598 + $0x20] sm:$0xf]
        %v1608 = vld [vmem:[%s1598 + $0x24] sm:$0xf]
        %v1609 = vld [vmem:[%s1598 + $0x28] sm:$0xf]
        %v1610 = vld [vmem:[%s1598 + $0x2c] sm:$0xf]
        %v1611 = vld [vmem:[%s1598 + $0x30] sm:$0xf]
        %v1612 = vld [vmem:[%s1598 + $0x34] sm:$0xf]
        %v1613 = vld [vmem:[%s1598 + $0x38] sm:$0xf]
        %v1614 = vld [vmem:[%s1598 + $0x3c] sm:$0xf]
        %v1631 = vunpack.c.l.b16 %v1599
        %v1632 = vunpack.c.l.b16 %v1600
        %v1633 = vunpack.c.l.b16 %v1601
        %v1634 = vunpack.c.l.b16 %v1602
        %v1635 = vunpack.c.l.b16 %v1603
        %v1636 = vunpack.c.l.b16 %v1604
        %v1637 = vunpack.c.l.b16 %v1605
        %v1638 = vunpack.c.l.b16 %v1606
        %v1639 = vunpack.c.l.b16 %v1607
        %v1640 = vunpack.c.l.b16 %v1608
        %v1641 = vunpack.c.l.b16 %v1609
        %v1642 = vunpack.c.l.b16 %v1610
        %v1643 = vunpack.c.l.b16 %v1611
        %v1644 = vunpack.c.l.b16 %v1612
        %v1645 = vunpack.c.l.b16 %v1613
        %v1646 = vunpack.c.l.b16 %v1614
        %v1647 = vpack.c.b16 %v1632, %v1631
        %v1648 = vpack.c.b16 %v1634, %v1633
        %v1649 = vpack.c.b16 %v1636, %v1635
        %v1650 = vpack.c.b16 %v1638, %v1637
        %v1651 = vpack.c.b16 %v1640, %v1639
        %v1652 = vpack.c.b16 %v1642, %v1641
        %v1653 = vpack.c.b16 %v1644, %v1643
        %v1654 = vpack.c.b16 %v1646, %v1645
        %1663 = vmatprep.subr.bf16.mxu0 0
        %1664 = vmatpush1.bf16.msra.mxu0 %v1647
        %1665 = vmatprep.subr.bf16.mxu0 0
        %1666 = vmatpush1.bf16.msra.mxu0 %v1648
        %1667 = vmatprep.subr.bf16.mxu0 0
        %1668 = vmatpush1.bf16.msra.mxu0 %v1649
        %1669 = vmatprep.subr.bf16.mxu0 0
        %1670 = vmatpush1.bf16.msra.mxu0 %v1650
        %1671 = vmatprep.subr.bf16.mxu0 0
        %1672 = vmatpush1.bf16.msra.mxu0 %v1651
        %1673 = vmatprep.subr.bf16.mxu0 0
        %1674 = vmatpush1.bf16.msra.mxu0 %v1652
        %1675 = vmatprep.subr.bf16.mxu0 0
        %1676 = vmatpush1.bf16.msra.mxu0 %v1653
        %1677 = vmatprep.subr.bf16.mxu0 0
        %1678 = vmatpush1.bf16.msra.mxu0 %v1654
        %1679 = vmatprep.subr.bf16.mxu0 0
        %1680 = vmatpush1.bf16.msra.mxu0 0
        %1681 = vmatprep.subr.bf16.mxu0 0
        %1682 = vmatpush1.bf16.msra.mxu0 0
        %1683 = vmatprep.subr.bf16.mxu0 0
        %1684 = vmatpush1.bf16.msra.mxu0 0
        %1685 = vmatprep.subr.bf16.mxu0 0
        %1686 = vmatpush1.bf16.msra.mxu0 0
        %1687 = vmatprep.subr.bf16.mxu0 0
        %1688 = vmatpush1.bf16.msra.mxu0 0
        %1689 = vmatprep.subr.bf16.mxu0 0
        %1690 = vmatpush1.bf16.msra.mxu0 0
        %1691 = vmatprep.subr.bf16.mxu0 0
        %1692 = vmatpush1.bf16.msra.mxu0 0
        %1693 = vmatprep.subr.bf16.mxu0 0
        %1694 = vmatpush1.bf16.msra.mxu0 0
        %1695 = vmatprep.mubr.bf16.mxu0 0
        %1696 = vmatmul.mubr.bf16.gmra.mrb[0].mxu0 %v592
        %v1697 = vpop.f32.mrb[0].mxu0
        %v1698 = vadd.f32 0.0, %v1697
        %v1699 = vpop.f32.mrb[0].mxu0
        %v1700 = vpop.f32.mrb[0].mxu0
        %v1701 = vadd.f32 0.0, %v1700
        %v1702 = vpop.f32.mrb[0].mxu0
        %1703 = vmatprep.mubr.bf16.mxu0 0
        %1704 = vmatmul.mubr.bf16.gmra.mrb[0].mxu0 %v593
        %v1705 = vpop.f32.mrb[0].mxu0
        %v1706 = vadd.f32 0.0, %v1705
        %v1707 = vpop.f32.mrb[0].mxu0
        %v1708 = vpop.f32.mrb[0].mxu0
        %v1709 = vpop.f32.mrb[0].mxu0
        %1710 = vdwg.mxu0
        %v1711 = vadd.f32 %v1595, %v1698
        %v1712 = vadd.f32 %v1596, %v1701
        %v1713 = vadd.f32 %v1597, %v1706
        %s1714 = scalar_lea.vmem [#allocation5], 576
        %v1715 = vld [vmem:[%s1714] sm:$0xf]
        %v1716 = vld [vmem:[%s1714 + $0x4] sm:$0xf]
        %v1717 = vld [vmem:[%s1714 + $0x8] sm:$0xf]
        %v1718 = vld [vmem:[%s1714 + $0xc] sm:$0xf]
        %v1719 = vld [vmem:[%s1714 + $0x10] sm:$0xf]
        %v1720 = vld [vmem:[%s1714 + $0x14] sm:$0xf]
        %v1721 = vld [vmem:[%s1714 + $0x18] sm:$0xf]
        %v1722 = vld [vmem:[%s1714 + $0x1c] sm:$0xf]
        %v1723 = vld [vmem:[%s1714 + $0x20] sm:$0xf]
        %v1724 = vld [vmem:[%s1714 + $0x24] sm:$0xf]
        %v1725 = vld [vmem:[%s1714 + $0x28] sm:$0xf]
        %v1726 = vld [vmem:[%s1714 + $0x2c] sm:$0xf]
        %v1727 = vld [vmem:[%s1714 + $0x30] sm:$0xf]
        %v1728 = vld [vmem:[%s1714 + $0x34] sm:$0xf]
        %v1729 = vld [vmem:[%s1714 + $0x38] sm:$0xf]
        %v1730 = vld [vmem:[%s1714 + $0x3c] sm:$0xf]
        %v1731 = vrot.slane %v1236, 1
        %v1732 = vsel %vm628, %v643, %v1731
        %v1733 = vor.u32 %v1491, %v1731
        %v1752 = vunpack.c.l.b16 %v1715
        %v1753 = vunpack.c.l.b16 %v1716
        %v1754 = vunpack.c.l.b16 %v1717
        %v1755 = vunpack.c.l.b16 %v1718
        %v1756 = vunpack.c.l.b16 %v1719
        %v1757 = vunpack.c.l.b16 %v1720
        %v1758 = vunpack.c.l.b16 %v1721
        %v1759 = vunpack.c.l.b16 %v1722
        %v1760 = vunpack.c.l.b16 %v1723
        %v1761 = vunpack.c.l.b16 %v1724
        %v1762 = vunpack.c.l.b16 %v1725
        %v1763 = vunpack.c.l.b16 %v1726
        %v1764 = vunpack.c.l.b16 %v1727
        %v1765 = vunpack.c.l.b16 %v1728
        %v1766 = vunpack.c.l.b16 %v1729
        %v1767 = vunpack.c.l.b16 %v1730
        %v1768 = vpack.c.b16 %v1753, %v1752
        %v1769 = vpack.c.b16 %v1755, %v1754
        %v1770 = vpack.c.b16 %v1757, %v1756
        %v1771 = vpack.c.b16 %v1759, %v1758
        %v1772 = vpack.c.b16 %v1761, %v1760
        %v1773 = vpack.c.b16 %v1763, %v1762
        %v1774 = vpack.c.b16 %v1765, %v1764
        %v1775 = vpack.c.b16 %v1767, %v1766
        %1784 = vmatprep.subr.bf16.mxu0 0
        %1785 = vmatpush1.bf16.msra.mxu0 %v1768
        %1786 = vmatprep.subr.bf16.mxu0 0
        %1787 = vmatpush1.bf16.msra.mxu0 %v1769
        %1788 = vmatprep.subr.bf16.mxu0 0
        %1789 = vmatpush1.bf16.msra.mxu0 %v1770
        %1790 = vmatprep.subr.bf16.mxu0 0
        %1791 = vmatpush1.bf16.msra.mxu0 %v1771
        %1792 = vmatprep.subr.bf16.mxu0 0
        %1793 = vmatpush1.bf16.msra.mxu0 %v1772
        %1794 = vmatprep.subr.bf16.mxu0 0
        %1795 = vmatpush1.bf16.msra.mxu0 %v1773
        %1796 = vmatprep.subr.bf16.mxu0 0
        %1797 = vmatpush1.bf16.msra.mxu0 %v1774
        %1798 = vmatprep.subr.bf16.mxu0 0
        %1799 = vmatpush1.bf16.msra.mxu0 %v1775
        %1800 = vmatprep.subr.bf16.mxu0 0
        %1801 = vmatpush1.bf16.msra.mxu0 0
        %1802 = vmatprep.subr.bf16.mxu0 0
        %1803 = vmatpush1.bf16.msra.mxu0 0
        %1804 = vmatprep.subr.bf16.mxu0 0
        %1805 = vmatpush1.bf16.msra.mxu0 0
        %1806 = vmatprep.subr.bf16.mxu0 0
        %1807 = vmatpush1.bf16.msra.mxu0 0
        %1808 = vmatprep.subr.bf16.mxu0 0
        %1809 = vmatpush1.bf16.msra.mxu0 0
        %1810 = vmatprep.subr.bf16.mxu0 0
        %1811 = vmatpush1.bf16.msra.mxu0 0
        %1812 = vmatprep.subr.bf16.mxu0 0
        %1813 = vmatpush1.bf16.msra.mxu0 0
        %1814 = vmatprep.subr.bf16.mxu0 0
        %1815 = vmatpush1.bf16.msra.mxu0 0
        %1816 = vmatprep.mubr.bf16.mxu0 0
        %1817 = vmatmul.mubr.bf16.gmra.mrb[0].mxu0 %v1732
        %v1818 = vpop.f32.mrb[0].mxu0
        %v1819 = vadd.f32 0.0, %v1818
        %v1820 = vpop.f32.mrb[0].mxu0
        %v1821 = vpop.f32.mrb[0].mxu0
        %v1822 = vadd.f32 0.0, %v1821
        %v1823 = vpop.f32.mrb[0].mxu0
        %1824 = vmatprep.mubr.bf16.mxu0 0
        %1825 = vmatmul.mubr.bf16.gmra.mrb[0].mxu0 %v1733
        %v1826 = vpop.f32.mrb[0].mxu0
        %v1827 = vadd.f32 0.0, %v1826
        %v1828 = vpop.f32.mrb[0].mxu0
        %v1829 = vpop.f32.mrb[0].mxu0
        %v1830 = vpop.f32.mrb[0].mxu0
        %1831 = vdwg.mxu0
        %v1832 = vadd.f32 %v1711, %v1819
        %v1833 = vadd.f32 %v1712, %v1822
        %v1834 = vadd.f32 %v1713, %v1827
        %s1835 = scalar_lea.vmem [#allocation5], 640
        %v1836 = vld [vmem:[%s1835] sm:$0xf]
        %v1837 = vld [vmem:[%s1835 + $0x4] sm:$0xf]
        %v1838 = vld [vmem:[%s1835 + $0x8] sm:$0xf]
        %v1839 = vld [vmem:[%s1835 + $0xc] sm:$0xf]
        %v1840 = vld [vmem:[%s1835 + $0x10] sm:$0xf]
        %v1841 = vld [vmem:[%s1835 + $0x14] sm:$0xf]
        %v1842 = vld [vmem:[%s1835 + $0x18] sm:$0xf]
        %v1843 = vld [vmem:[%s1835 + $0x1c] sm:$0xf]
        %v1844 = vld [vmem:[%s1835 + $0x20] sm:$0xf]
        %v1845 = vld [vmem:[%s1835 + $0x24] sm:$0xf]
        %v1846 = vld [vmem:[%s1835 + $0x28] sm:$0xf]
        %v1847 = vld [vmem:[%s1835 + $0x2c] sm:$0xf]
        %v1848 = vld [vmem:[%s1835 + $0x30] sm:$0xf]
        %v1849 = vld [vmem:[%s1835 + $0x34] sm:$0xf]
        %v1850 = vld [vmem:[%s1835 + $0x38] sm:$0xf]
        %v1851 = vld [vmem:[%s1835 + $0x3c] sm:$0xf]
        %v1852 = vrot.slane %v593, 1
        %v1853 = vsel %vm857, %v859, %v1852
        %v1872 = vunpack.c.l.b16 %v1836
        %v1873 = vunpack.c.l.b16 %v1837
        %v1874 = vunpack.c.l.b16 %v1838
        %v1875 = vunpack.c.l.b16 %v1839
        %v1876 = vunpack.c.l.b16 %v1840
        %v1877 = vunpack.c.l.b16 %v1841
        %v1878 = vunpack.c.l.b16 %v1842
        %v1879 = vunpack.c.l.b16 %v1843
        %v1880 = vunpack.c.l.b16 %v1844
        %v1881 = vunpack.c.l.b16 %v1845
        %v1882 = vunpack.c.l.b16 %v1846
        %v1883 = vunpack.c.l.b16 %v1847
        %v1884 = vunpack.c.l.b16 %v1848
        %v1885 = vunpack.c.l.b16 %v1849
        %v1886 = vunpack.c.l.b16 %v1850
        %v1887 = vunpack.c.l.b16 %v1851
        %v1888 = vpack.c.b16 %v1873, %v1872
        %v1889 = vpack.c.b16 %v1875, %v1874
        %v1890 = vpack.c.b16 %v1877, %v1876
        %v1891 = vpack.c.b16 %v1879, %v1878
        %v1892 = vpack.c.b16 %v1881, %v1880
        %v1893 = vpack.c.b16 %v1883, %v1882
        %v1894 = vpack.c.b16 %v1885, %v1884
        %v1895 = vpack.c.b16 %v1887, %v1886
        %1904 = vmatprep.subr.bf16.mxu0 0
        %1905 = vmatpush1.bf16.msra.mxu0 %v1888
        %1906 = vmatprep.subr.bf16.mxu0 0
        %1907 = vmatpush1.bf16.msra.mxu0 %v1889
        %1908 = vmatprep.subr.bf16.mxu0 0
        %1909 = vmatpush1.bf16.msra.mxu0 %v1890
        %1910 = vmatprep.subr.bf16.mxu0 0
        %1911 = vmatpush1.bf16.msra.mxu0 %v1891
        %1912 = vmatprep.subr.bf16.mxu0 0
        %1913 = vmatpush1.bf16.msra.mxu0 %v1892
        %1914 = vmatprep.subr.bf16.mxu0 0
        %1915 = vmatpush1.bf16.msra.mxu0 %v1893
        %1916 = vmatprep.subr.bf16.mxu0 0
        %1917 = vmatpush1.bf16.msra.mxu0 %v1894
        %1918 = vmatprep.subr.bf16.mxu0 0
        %1919 = vmatpush1.bf16.msra.mxu0 %v1895
        %1920 = vmatprep.subr.bf16.mxu0 0
        %1921 = vmatpush1.bf16.msra.mxu0 0
        %1922 = vmatprep.subr.bf16.mxu0 0
        %1923 = vmatpush1.bf16.msra.mxu0 0
        %1924 = vmatprep.subr.bf16.mxu0 0
        %1925 = vmatpush1.bf16.msra.mxu0 0
        %1926 = vmatprep.subr.bf16.mxu0 0
        %1927 = vmatpush1.bf16.msra.mxu0 0
        %1928 = vmatprep.subr.bf16.mxu0 0
        %1929 = vmatpush1.bf16.msra.mxu0 0
        %1930 = vmatprep.subr.bf16.mxu0 0
        %1931 = vmatpush1.bf16.msra.mxu0 0
        %1932 = vmatprep.subr.bf16.mxu0 0
        %1933 = vmatpush1.bf16.msra.mxu0 0
        %1934 = vmatprep.subr.bf16.mxu0 0
        %1935 = vmatpush1.bf16.msra.mxu0 0
        %1936 = vmatprep.mubr.bf16.mxu0 0
        %1937 = vmatmul.mubr.bf16.gmra.mrb[0].mxu0 %v1853
        %v1938 = vpop.f32.mrb[0].mxu0
        %v1939 = vadd.f32 0.0, %v1938
        %v1940 = vpop.f32.mrb[0].mxu0
        %v1941 = vpop.f32.mrb[0].mxu0
        %v1942 = vadd.f32 0.0, %v1941
        %v1943 = vpop.f32.mrb[0].mxu0
        %1944 = vmatprep.mubr.bf16.mxu0 0
        %1945 = vmatmul.mubr.bf16.gmra.mrb[0].mxu0 %v1852
        %v1946 = vpop.f32.mrb[0].mxu0
        %v1947 = vadd.f32 0.0, %v1946
        %v1948 = vpop.f32.mrb[0].mxu0
        %v1949 = vpop.f32.mrb[0].mxu0
        %v1950 = vpop.f32.mrb[0].mxu0
        %1951 = vdwg.mxu0
        %v1952 = vadd.f32 %v1832, %v1939
        %v1953 = vadd.f32 %v1833, %v1942
        %v1954 = vadd.f32 %v1834, %v1947
        %s1955 = scalar_lea.vmem [#allocation5], 704
        %v1956 = vld [vmem:[%s1955] sm:$0xf]
        %v1957 = vld [vmem:[%s1955 + $0x4] sm:$0xf]
        %v1958 = vld [vmem:[%s1955 + $0x8] sm:$0xf]
        %v1959 = vld [vmem:[%s1955 + $0xc] sm:$0xf]
        %v1960 = vld [vmem:[%s1955 + $0x10] sm:$0xf]
        %v1961 = vld [vmem:[%s1955 + $0x14] sm:$0xf]
        %v1962 = vld [vmem:[%s1955 + $0x18] sm:$0xf]
        %v1963 = vld [vmem:[%s1955 + $0x1c] sm:$0xf]
        %v1964 = vld [vmem:[%s1955 + $0x20] sm:$0xf]
        %v1965 = vld [vmem:[%s1955 + $0x24] sm:$0xf]
        %v1966 = vld [vmem:[%s1955 + $0x28] sm:$0xf]
        %v1967 = vld [vmem:[%s1955 + $0x2c] sm:$0xf]
        %v1968 = vld [vmem:[%s1955 + $0x30] sm:$0xf]
        %v1969 = vld [vmem:[%s1955 + $0x34] sm:$0xf]
        %v1970 = vld [vmem:[%s1955 + $0x38] sm:$0xf]
        %v1971 = vld [vmem:[%s1955 + $0x3c] sm:$0xf]
        %v1972 = vrot.slane %v1491, 1
        %v1973 = vrot.slane %v1236, 2
        %v1974 = vor.u32 %v1972, %v1973
        %v1975 = vsel %vm979, %v985, %v1974
        %v1994 = vunpack.c.l.b16 %v1956
        %v1995 = vunpack.c.l.b16 %v1957
        %v1996 = vunpack.c.l.b16 %v1958
        %v1997 = vunpack.c.l.b16 %v1959
        %v1998 = vunpack.c.l.b16 %v1960
        %v1999 = vunpack.c.l.b16 %v1961
        %v2000 = vunpack.c.l.b16 %v1962
        %v2001 = vunpack.c.l.b16 %v1963
        %v2002 = vunpack.c.l.b16 %v1964
        %v2003 = vunpack.c.l.b16 %v1965
        %v2004 = vunpack.c.l.b16 %v1966
        %v2005 = vunpack.c.l.b16 %v1967
        %v2006 = vunpack.c.l.b16 %v1968
        %v2007 = vunpack.c.l.b16 %v1969
        %v2008 = vunpack.c.l.b16 %v1970
        %v2009 = vunpack.c.l.b16 %v1971
        %v2010 = vpack.c.b16 %v1995, %v1994
        %v2011 = vpack.c.b16 %v1997, %v1996
        %v2012 = vpack.c.b16 %v1999, %v1998
        %v2013 = vpack.c.b16 %v2001, %v2000
        %v2014 = vpack.c.b16 %v2003, %v2002
        %v2015 = vpack.c.b16 %v2005, %v2004
        %v2016 = vpack.c.b16 %v2007, %v2006
        %v2017 = vpack.c.b16 %v2009, %v2008
        %2026 = vmatprep.subr.bf16.mxu0 0
        %2027 = vmatpush1.bf16.msra.mxu0 %v2010
        %2028 = vmatprep.subr.bf16.mxu0 0
        %2029 = vmatpush1.bf16.msra.mxu0 %v2011
        %2030 = vmatprep.subr.bf16.mxu0 0
        %2031 = vmatpush1.bf16.msra.mxu0 %v2012
        %2032 = vmatprep.subr.bf16.mxu0 0
        %2033 = vmatpush1.bf16.msra.mxu0 %v2013
        %2034 = vmatprep.subr.bf16.mxu0 0
        %2035 = vmatpush1.bf16.msra.mxu0 %v2014
        %2036 = vmatprep.subr.bf16.mxu0 0
        %2037 = vmatpush1.bf16.msra.mxu0 %v2015
        %2038 = vmatprep.subr.bf16.mxu0 0
        %2039 = vmatpush1.bf16.msra.mxu0 %v2016
        %2040 = vmatprep.subr.bf16.mxu0 0
        %2041 = vmatpush1.bf16.msra.mxu0 %v2017
        %2042 = vmatprep.subr.bf16.mxu0 0
        %2043 = vmatpush1.bf16.msra.mxu0 0
        %2044 = vmatprep.subr.bf16.mxu0 0
        %2045 = vmatpush1.bf16.msra.mxu0 0
        %2046 = vmatprep.subr.bf16.mxu0 0
        %2047 = vmatpush1.bf16.msra.mxu0 0
        %2048 = vmatprep.subr.bf16.mxu0 0
        %2049 = vmatpush1.bf16.msra.mxu0 0
        %2050 = vmatprep.subr.bf16.mxu0 0
        %2051 = vmatpush1.bf16.msra.mxu0 0
        %2052 = vmatprep.subr.bf16.mxu0 0
        %2053 = vmatpush1.bf16.msra.mxu0 0
        %2054 = vmatprep.subr.bf16.mxu0 0
        %2055 = vmatpush1.bf16.msra.mxu0 0
        %2056 = vmatprep.subr.bf16.mxu0 0
        %2057 = vmatpush1.bf16.msra.mxu0 0
        %2058 = vmatprep.mubr.bf16.mxu0 0
        %2059 = vmatmul.mubr.bf16.gmra.mrb[0].mxu0 %v1975
        %v2060 = vpop.f32.mrb[0].mxu0
        %v2061 = vadd.f32 0.0, %v2060
        %v2062 = vpop.f32.mrb[0].mxu0
        %v2063 = vpop.f32.mrb[0].mxu0
        %v2064 = vadd.f32 0.0, %v2063
        %v2065 = vpop.f32.mrb[0].mxu0
        %2066 = vmatprep.mubr.bf16.mxu0 0
        %2067 = vmatmul.mubr.bf16.gmra.mrb[0].mxu0 %v1974
        %v2068 = vpop.f32.mrb[0].mxu0
        %v2069 = vadd.f32 0.0, %v2068
        %v2070 = vpop.f32.mrb[0].mxu0
        %v2071 = vpop.f32.mrb[0].mxu0
        %v2072 = vpop.f32.mrb[0].mxu0
        %2073 = vdwg.mxu0
        %v2074 = vadd.f32 %v1952, %v2061
        %v2075 = vadd.f32 %v1953, %v2064
        %v2076 = vadd.f32 %v1954, %v2069
        %s2077 = scalar_lea.vmem [#allocation5], 768
        %v2078 = vld [vmem:[%s2077] sm:$0xf]
        %v2079 = vld [vmem:[%s2077 + $0x4] sm:$0xf]
        %v2080 = vld [vmem:[%s2077 + $0x8] sm:$0xf]
        %v2081 = vld [vmem:[%s2077 + $0xc] sm:$0xf]
        %v2082 = vld [vmem:[%s2077 + $0x10] sm:$0xf]
        %v2083 = vld [vmem:[%s2077 + $0x14] sm:$0xf]
        %v2084 = vld [vmem:[%s2077 + $0x18] sm:$0xf]
        %v2085 = vld [vmem:[%s2077 + $0x1c] sm:$0xf]
        %v2086 = vld [vmem:[%s2077 + $0x20] sm:$0xf]
        %v2087 = vld [vmem:[%s2077 + $0x24] sm:$0xf]
        %v2088 = vld [vmem:[%s2077 + $0x28] sm:$0xf]
        %v2089 = vld [vmem:[%s2077 + $0x2c] sm:$0xf]
        %v2090 = vld [vmem:[%s2077 + $0x30] sm:$0xf]
        %v2091 = vld [vmem:[%s2077 + $0x34] sm:$0xf]
        %v2092 = vld [vmem:[%s2077 + $0x38] sm:$0xf]
        %v2093 = vld [vmem:[%s2077 + $0x3c] sm:$0xf]
        %v2094 = vrot.slane %v593, 4
        %v2095 = vsel %vm1105, %v1107, %v2094
        %v2114 = vunpack.c.l.b16 %v2078
        %v2115 = vunpack.c.l.b16 %v2079
        %v2116 = vunpack.c.l.b16 %v2080
        %v2117 = vunpack.c.l.b16 %v2081
        %v2118 = vunpack.c.l.b16 %v2082
        %v2119 = vunpack.c.l.b16 %v2083
        %v2120 = vunpack.c.l.b16 %v2084
        %v2121 = vunpack.c.l.b16 %v2085
        %v2122 = vunpack.c.l.b16 %v2086
        %v2123 = vunpack.c.l.b16 %v2087
        %v2124 = vunpack.c.l.b16 %v2088
        %v2125 = vunpack.c.l.b16 %v2089
        %v2126 = vunpack.c.l.b16 %v2090
        %v2127 = vunpack.c.l.b16 %v2091
        %v2128 = vunpack.c.l.b16 %v2092
        %v2129 = vunpack.c.l.b16 %v2093
        %v2130 = vpack.c.b16 %v2115, %v2114
        %v2131 = vpack.c.b16 %v2117, %v2116
        %v2132 = vpack.c.b16 %v2119, %v2118
        %v2133 = vpack.c.b16 %v2121, %v2120
        %v2134 = vpack.c.b16 %v2123, %v2122
        %v2135 = vpack.c.b16 %v2125, %v2124
        %v2136 = vpack.c.b16 %v2127, %v2126
        %v2137 = vpack.c.b16 %v2129, %v2128
        %2146 = vmatprep.subr.bf16.mxu0 0
        %2147 = vmatpush1.bf16.msra.mxu0 %v2130
        %2148 = vmatprep.subr.bf16.mxu0 0
        %2149 = vmatpush1.bf16.msra.mxu0 %v2131
        %2150 = vmatprep.subr.bf16.mxu0 0
        %2151 = vmatpush1.bf16.msra.mxu0 %v2132
        %2152 = vmatprep.subr.bf16.mxu0 0
        %2153 = vmatpush1.bf16.msra.mxu0 %v2133
        %2154 = vmatprep.subr.bf16.mxu0 0
        %2155 = vmatpush1.bf16.msra.mxu0 %v2134
        %2156 = vmatprep.subr.bf16.mxu0 0
        %2157 = vmatpush1.bf16.msra.mxu0 %v2135
        %2158 = vmatprep.subr.bf16.mxu0 0
        %2159 = vmatpush1.bf16.msra.mxu0 %v2136
        %2160 = vmatprep.subr.bf16.mxu0 0
        %2161 = vmatpush1.bf16.msra.mxu0 %v2137
        %2162 = vmatprep.subr.bf16.mxu0 0
        %2163 = vmatpush1.bf16.msra.mxu0 0
        %2164 = vmatprep.subr.bf16.mxu0 0
        %2165 = vmatpush1.bf16.msra.mxu0 0
        %2166 = vmatprep.subr.bf16.mxu0 0
        %2167 = vmatpush1.bf16.msra.mxu0 0
        %2168 = vmatprep.subr.bf16.mxu0 0
        %2169 = vmatpush1.bf16.msra.mxu0 0
        %2170 = vmatprep.subr.bf16.mxu0 0
        %2171 = vmatpush1.bf16.msra.mxu0 0
        %2172 = vmatprep.subr.bf16.mxu0 0
        %2173 = vmatpush1.bf16.msra.mxu0 0
        %2174 = vmatprep.subr.bf16.mxu0 0
        %2175 = vmatpush1.bf16.msra.mxu0 0
        %2176 = vmatprep.subr.bf16.mxu0 0
        %2177 = vmatpush1.bf16.msra.mxu0 0
        %2178 = vmatprep.mubr.bf16.mxu0 0
        %2179 = vmatmul.mubr.bf16.gmra.mrb[0].mxu0 %v2095
        %v2180 = vpop.f32.mrb[0].mxu0
        %v2181 = vadd.f32 0.0, %v2180
        %v2182 = vpop.f32.mrb[0].mxu0
        %v2183 = vpop.f32.mrb[0].mxu0
        %v2184 = vadd.f32 0.0, %v2183
        %v2185 = vpop.f32.mrb[0].mxu0
        %2186 = vmatprep.mubr.bf16.mxu0 0
        %2187 = vmatmul.mubr.bf16.gmra.mrb[0].mxu0 %v2094
        %v2188 = vpop.f32.mrb[0].mxu0
        %v2189 = vadd.f32 0.0, %v2188
        %v2190 = vpop.f32.mrb[0].mxu0
        %v2191 = vpop.f32.mrb[0].mxu0
        %v2192 = vpop.f32.mrb[0].mxu0
        %2193 = vdwg.mxu0
        %v2194 = vadd.f32 %v2074, %v2181
        %v2195 = vadd.f32 %v2075, %v2184
        %v2196 = vadd.f32 %v2076, %v2189
        %s2197 = scalar_lea.vmem [#allocation5], 832
        %v2198 = vld [vmem:[%s2197] sm:$0xf]
        %v2199 = vld [vmem:[%s2197 + $0x4] sm:$0xf]
        %v2200 = vld [vmem:[%s2197 + $0x8] sm:$0xf]
        %v2201 = vld [vmem:[%s2197 + $0xc] sm:$0xf]
        %v2202 = vld [vmem:[%s2197 + $0x10] sm:$0xf]
        %v2203 = vld [vmem:[%s2197 + $0x14] sm:$0xf]
        %v2204 = vld [vmem:[%s2197 + $0x18] sm:$0xf]
        %v2205 = vld [vmem:[%s2197 + $0x1c] sm:$0xf]
        %v2206 = vld [vmem:[%s2197 + $0x20] sm:$0xf]
        %v2207 = vld [vmem:[%s2197 + $0x24] sm:$0xf]
        %v2208 = vld [vmem:[%s2197 + $0x28] sm:$0xf]
        %v2209 = vld [vmem:[%s2197 + $0x2c] sm:$0xf]
        %v2210 = vld [vmem:[%s2197 + $0x30] sm:$0xf]
        %v2211 = vld [vmem:[%s2197 + $0x34] sm:$0xf]
        %v2212 = vld [vmem:[%s2197 + $0x38] sm:$0xf]
        %v2213 = vld [vmem:[%s2197 + $0x3c] sm:$0xf]
        %v2214 = vrot.slane %v1491, 4
        %v2215 = vor.u32 %v2214, %v1238
        %v2216 = vsel %vm1227, %v1233, %v2215
        %v2218 = vshll.u32 %v594, 16
        %v2220 = vrot.slane %v2218, 5
        %v2221 = vsel %vm1227, %v2215, %v2220
        %v2240 = vunpack.c.l.b16 %v2198
        %v2241 = vunpack.c.l.b16 %v2199
        %v2242 = vunpack.c.l.b16 %v2200
        %v2243 = vunpack.c.l.b16 %v2201
        %v2244 = vunpack.c.l.b16 %v2202
        %v2245 = vunpack.c.l.b16 %v2203
        %v2246 = vunpack.c.l.b16 %v2204
        %v2247 = vunpack.c.l.b16 %v2205
        %v2248 = vunpack.c.l.b16 %v2206
        %v2249 = vunpack.c.l.b16 %v2207
        %v2250 = vunpack.c.l.b16 %v2208
        %v2251 = vunpack.c.l.b16 %v2209
        %v2252 = vunpack.c.l.b16 %v2210
        %v2253 = vunpack.c.l.b16 %v2211
        %v2254 = vunpack.c.l.b16 %v2212
        %v2255 = vunpack.c.l.b16 %v2213
        %v2256 = vpack.c.b16 %v2241, %v2240
        %v2257 = vpack.c.b16 %v2243, %v2242
        %v2258 = vpack.c.b16 %v2245, %v2244
        %v2259 = vpack.c.b16 %v2247, %v2246
        %v2260 = vpack.c.b16 %v2249, %v2248
        %v2261 = vpack.c.b16 %v2251, %v2250
        %v2262 = vpack.c.b16 %v2253, %v2252
        %v2263 = vpack.c.b16 %v2255, %v2254
        %2272 = vmatprep.subr.bf16.mxu0 0
        %2273 = vmatpush1.bf16.msra.mxu0 %v2256
        %2274 = vmatprep.subr.bf16.mxu0 0
        %2275 = vmatpush1.bf16.msra.mxu0 %v2257
        %2276 = vmatprep.subr.bf16.mxu0 0
        %2277 = vmatpush1.bf16.msra.mxu0 %v2258
        %2278 = vmatprep.subr.bf16.mxu0 0
        %2279 = vmatpush1.bf16.msra.mxu0 %v2259
        %2280 = vmatprep.subr.bf16.mxu0 0
        %2281 = vmatpush1.bf16.msra.mxu0 %v2260
        %2282 = vmatprep.subr.bf16.mxu0 0
        %2283 = vmatpush1.bf16.msra.mxu0 %v2261
        %2284 = vmatprep.subr.bf16.mxu0 0
        %2285 = vmatpush1.bf16.msra.mxu0 %v2262
        %2286 = vmatprep.subr.bf16.mxu0 0
        %2287 = vmatpush1.bf16.msra.mxu0 %v2263
        %2288 = vmatprep.subr.bf16.mxu0 0
        %2289 = vmatpush1.bf16.msra.mxu0 0
        %2290 = vmatprep.subr.bf16.mxu0 0
        %2291 = vmatpush1.bf16.msra.mxu0 0
        %2292 = vmatprep.subr.bf16.mxu0 0
        %2293 = vmatpush1.bf16.msra.mxu0 0
        %2294 = vmatprep.subr.bf16.mxu0 0
        %2295 = vmatpush1.bf16.msra.mxu0 0
        %2296 = vmatprep.subr.bf16.mxu0 0
        %2297 = vmatpush1.bf16.msra.mxu0 0
        %2298 = vmatprep.subr.bf16.mxu0 0
        %2299 = vmatpush1.bf16.msra.mxu0 0
        %2300 = vmatprep.subr.bf16.mxu0 0
        %2301 = vmatpush1.bf16.msra.mxu0 0
        %2302 = vmatprep.subr.bf16.mxu0 0
        %2303 = vmatpush1.bf16.msra.mxu0 0
        %2304 = vmatprep.mubr.bf16.mxu0 0
        %2305 = vmatmul.mubr.bf16.gmra.mrb[0].mxu0 %v2216
        %v2306 = vpop.f32.mrb[0].mxu0
        %v2307 = vadd.f32 0.0, %v2306
        %v2308 = vpop.f32.mrb[0].mxu0
        %v2309 = vpop.f32.mrb[0].mxu0
        %v2310 = vadd.f32 0.0, %v2309
        %v2311 = vpop.f32.mrb[0].mxu0
        %2312 = vmatprep.mubr.bf16.mxu0 0
        %2313 = vmatmul.mubr.bf16.gmra.mrb[0].mxu0 %v2221
        %v2314 = vpop.f32.mrb[0].mxu0
        %v2315 = vadd.f32 0.0, %v2314
        %v2316 = vpop.f32.mrb[0].mxu0
        %v2317 = vpop.f32.mrb[0].mxu0
        %v2318 = vpop.f32.mrb[0].mxu0
        %2319 = vdwg.mxu0
        %v2320 = vadd.f32 %v2194, %v2307
        %v2321 = vadd.f32 %v2195, %v2310
        %v2322 = vadd.f32 %v2196, %v2315
        %s2323 = scalar_lea.vmem [#allocation5], 896
        %v2324 = vld [vmem:[%s2323] sm:$0xf]
        %v2325 = vld [vmem:[%s2323 + $0x4] sm:$0xf]
        %v2326 = vld [vmem:[%s2323 + $0x8] sm:$0xf]
        %v2327 = vld [vmem:[%s2323 + $0xc] sm:$0xf]
        %v2328 = vld [vmem:[%s2323 + $0x10] sm:$0xf]
        %v2329 = vld [vmem:[%s2323 + $0x14] sm:$0xf]
        %v2330 = vld [vmem:[%s2323 + $0x18] sm:$0xf]
        %v2331 = vld [vmem:[%s2323 + $0x1c] sm:$0xf]
        %v2332 = vld [vmem:[%s2323 + $0x20] sm:$0xf]
        %v2333 = vld [vmem:[%s2323 + $0x24] sm:$0xf]
        %v2334 = vld [vmem:[%s2323 + $0x28] sm:$0xf]
        %v2335 = vld [vmem:[%s2323 + $0x2c] sm:$0xf]
        %v2336 = vld [vmem:[%s2323 + $0x30] sm:$0xf]
        %v2337 = vld [vmem:[%s2323 + $0x34] sm:$0xf]
        %v2338 = vld [vmem:[%s2323 + $0x38] sm:$0xf]
        %v2339 = vld [vmem:[%s2323 + $0x3c] sm:$0xf]
        %v2341 = vrot.slane %v594, 5
        %v2342 = vsel %vm1359, %v1363, %v2341
        %v2360 = vunpack.c.l.b16 %v2324
        %v2361 = vunpack.c.l.b16 %v2325
        %v2362 = vunpack.c.l.b16 %v2326
        %v2363 = vunpack.c.l.b16 %v2327
        %v2364 = vunpack.c.l.b16 %v2328
        %v2365 = vunpack.c.l.b16 %v2329
        %v2366 = vunpack.c.l.b16 %v2330
        %v2367 = vunpack.c.l.b16 %v2331
        %v2368 = vunpack.c.l.b16 %v2332
        %v2369 = vunpack.c.l.b16 %v2333
        %v2370 = vunpack.c.l.b16 %v2334
        %v2371 = vunpack.c.l.b16 %v2335
        %v2372 = vunpack.c.l.b16 %v2336
        %v2373 = vunpack.c.l.b16 %v2337
        %v2374 = vunpack.c.l.b16 %v2338
        %v2375 = vunpack.c.l.b16 %v2339
        %v2376 = vpack.c.b16 %v2361, %v2360
        %v2377 = vpack.c.b16 %v2363, %v2362
        %v2378 = vpack.c.b16 %v2365, %v2364
        %v2379 = vpack.c.b16 %v2367, %v2366
        %v2380 = vpack.c.b16 %v2369, %v2368
        %v2381 = vpack.c.b16 %v2371, %v2370
        %v2382 = vpack.c.b16 %v2373, %v2372
        %v2383 = vpack.c.b16 %v2375, %v2374
        %2392 = vmatprep.subr.bf16.mxu0 0
        %2393 = vmatpush1.bf16.msra.mxu0 %v2376
        %2394 = vmatprep.subr.bf16.mxu0 0
        %2395 = vmatpush1.bf16.msra.mxu0 %v2377
        %2396 = vmatprep.subr.bf16.mxu0 0
        %2397 = vmatpush1.bf16.msra.mxu0 %v2378
        %2398 = vmatprep.subr.bf16.mxu0 0
        %2399 = vmatpush1.bf16.msra.mxu0 %v2379
        %2400 = vmatprep.subr.bf16.mxu0 0
        %2401 = vmatpush1.bf16.msra.mxu0 %v2380
        %2402 = vmatprep.subr.bf16.mxu0 0
        %2403 = vmatpush1.bf16.msra.mxu0 %v2381
        %2404 = vmatprep.subr.bf16.mxu0 0
        %2405 = vmatpush1.bf16.msra.mxu0 %v2382
        %2406 = vmatprep.subr.bf16.mxu0 0
        %2407 = vmatpush1.bf16.msra.mxu0 %v2383
        %2408 = vmatprep.subr.bf16.mxu0 0
        %2409 = vmatpush1.bf16.msra.mxu0 0
        %2410 = vmatprep.subr.bf16.mxu0 0
        %2411 = vmatpush1.bf16.msra.mxu0 0
        %2412 = vmatprep.subr.bf16.mxu0 0
        %2413 = vmatpush1.bf16.msra.mxu0 0
        %2414 = vmatprep.subr.bf16.mxu0 0
        %2415 = vmatpush1.bf16.msra.mxu0 0
        %2416 = vmatprep.subr.bf16.mxu0 0
        %2417 = vmatpush1.bf16.msra.mxu0 0
        %2418 = vmatprep.subr.bf16.mxu0 0
        %2419 = vmatpush1.bf16.msra.mxu0 0
        %2420 = vmatprep.subr.bf16.mxu0 0
        %2421 = vmatpush1.bf16.msra.mxu0 0
        %2422 = vmatprep.subr.bf16.mxu0 0
        %2423 = vmatpush1.bf16.msra.mxu0 0
        %2424 = vmatprep.mubr.bf16.mxu0 0
        %2425 = vmatmul.mubr.bf16.gmra.mrb[0].mxu0 %v1364
        %v2426 = vpop.f32.mrb[0].mxu0
        %v2427 = vadd.f32 0.0, %v2426
        %v2428 = vpop.f32.mrb[0].mxu0
        %v2429 = vpop.f32.mrb[0].mxu0
        %v2430 = vadd.f32 0.0, %v2429
        %v2431 = vpop.f32.mrb[0].mxu0
        %2432 = vmatprep.mubr.bf16.mxu0 0
        %2433 = vmatmul.mubr.bf16.gmra.mrb[0].mxu0 %v2342
        %v2434 = vpop.f32.mrb[0].mxu0
        %v2435 = vadd.f32 0.0, %v2434
        %v2436 = vpop.f32.mrb[0].mxu0
        %v2437 = vpop.f32.mrb[0].mxu0
        %v2438 = vpop.f32.mrb[0].mxu0
        %2439 = vdwg.mxu0
        %v2440 = vadd.f32 %v2320, %v2427
        %v2441 = vadd.f32 %v2321, %v2430
        %v2442 = vadd.f32 %v2322, %v2435
        %s2443 = scalar_lea.vmem [#allocation5], 960
        %v2444 = vld [vmem:[%s2443] sm:$0xf]
        %v2445 = vld [vmem:[%s2443 + $0x4] sm:$0xf]
        %v2446 = vld [vmem:[%s2443 + $0x8] sm:$0xf]
        %v2447 = vld [vmem:[%s2443 + $0xc] sm:$0xf]
        %v2448 = vld [vmem:[%s2443 + $0x10] sm:$0xf]
        %v2449 = vld [vmem:[%s2443 + $0x14] sm:$0xf]
        %v2450 = vld [vmem:[%s2443 + $0x18] sm:$0xf]
        %v2451 = vld [vmem:[%s2443 + $0x1c] sm:$0xf]
        %v2452 = vld [vmem:[%s2443 + $0x20] sm:$0xf]
        %v2453 = vld [vmem:[%s2443 + $0x24] sm:$0xf]
        %v2454 = vld [vmem:[%s2443 + $0x28] sm:$0xf]
        %v2455 = vld [vmem:[%s2443 + $0x2c] sm:$0xf]
        %v2456 = vld [vmem:[%s2443 + $0x30] sm:$0xf]
        %v2457 = vld [vmem:[%s2443 + $0x34] sm:$0xf]
        %v2458 = vld [vmem:[%s2443 + $0x38] sm:$0xf]
        %v2459 = vld [vmem:[%s2443 + $0x3c] sm:$0xf]
        %v2460 = vshrl.u32 %v594, 16
        %v2462 = vrot.slane %v2460, 5
        %v2463 = vrot.slane %v2218, 6
        %v2464 = vor.u32 %v2462, %v2463
        %v2465 = vsel %vm1483, %v1495, %v2464
        %v2483 = vunpack.c.l.b16 %v2444
        %v2484 = vunpack.c.l.b16 %v2445
        %v2485 = vunpack.c.l.b16 %v2446
        %v2486 = vunpack.c.l.b16 %v2447
        %v2487 = vunpack.c.l.b16 %v2448
        %v2488 = vunpack.c.l.b16 %v2449
        %v2489 = vunpack.c.l.b16 %v2450
        %v2490 = vunpack.c.l.b16 %v2451
        %v2491 = vunpack.c.l.b16 %v2452
        %v2492 = vunpack.c.l.b16 %v2453
        %v2493 = vunpack.c.l.b16 %v2454
        %v2494 = vunpack.c.l.b16 %v2455
        %v2495 = vunpack.c.l.b16 %v2456
        %v2496 = vunpack.c.l.b16 %v2457
        %v2497 = vunpack.c.l.b16 %v2458
        %v2498 = vunpack.c.l.b16 %v2459
        %v2499 = vpack.c.b16 %v2484, %v2483
        %v2500 = vpack.c.b16 %v2486, %v2485
        %v2501 = vpack.c.b16 %v2488, %v2487
        %v2502 = vpack.c.b16 %v2490, %v2489
        %v2503 = vpack.c.b16 %v2492, %v2491
        %v2504 = vpack.c.b16 %v2494, %v2493
        %v2505 = vpack.c.b16 %v2496, %v2495
        %v2506 = vpack.c.b16 %v2498, %v2497
        %2515 = vmatprep.subr.bf16.mxu0 0
        %2516 = vmatpush1.bf16.msra.mxu0 %v2499
        %2517 = vmatprep.subr.bf16.mxu0 0
        %2518 = vmatpush1.bf16.msra.mxu0 %v2500
        %2519 = vmatprep.subr.bf16.mxu0 0
        %2520 = vmatpush1.bf16.msra.mxu0 %v2501
        %2521 = vmatprep.subr.bf16.mxu0 0
        %2522 = vmatpush1.bf16.msra.mxu0 %v2502
        %2523 = vmatprep.subr.bf16.mxu0 0
        %2524 = vmatpush1.bf16.msra.mxu0 %v2503
        %2525 = vmatprep.subr.bf16.mxu0 0
        %2526 = vmatpush1.bf16.msra.mxu0 %v2504
        %2527 = vmatprep.subr.bf16.mxu0 0
        %2528 = vmatpush1.bf16.msra.mxu0 %v2505
        %2529 = vmatprep.subr.bf16.mxu0 0
        %2530 = vmatpush1.bf16.msra.mxu0 %v2506
        %2531 = vmatprep.subr.bf16.mxu0 0
        %2532 = vmatpush1.bf16.msra.mxu0 0
        %2533 = vmatprep.subr.bf16.mxu0 0
        %2534 = vmatpush1.bf16.msra.mxu0 0
        %2535 = vmatprep.subr.bf16.mxu0 0
        %2536 = vmatpush1.bf16.msra.mxu0 0
        %2537 = vmatprep.subr.bf16.mxu0 0
        %2538 = vmatpush1.bf16.msra.mxu0 0
        %2539 = vmatprep.subr.bf16.mxu0 0
        %2540 = vmatpush1.bf16.msra.mxu0 0
        %2541 = vmatprep.subr.bf16.mxu0 0
        %2542 = vmatpush1.bf16.msra.mxu0 0
        %2543 = vmatprep.subr.bf16.mxu0 0
        %2544 = vmatpush1.bf16.msra.mxu0 0
        %2545 = vmatprep.subr.bf16.mxu0 0
        %2546 = vmatpush1.bf16.msra.mxu0 0
        %2547 = vmatprep.mubr.bf16.mxu0 0
        %2548 = vmatmul.mubr.bf16.gmra.mrb[0].mxu0 %v1496
        %v2549 = vpop.f32.mrb[0].mxu0
        %v2550 = vadd.f32 0.0, %v2549
        %v2551 = vpop.f32.mrb[0].mxu0
        %v2552 = vpop.f32.mrb[0].mxu0
        %v2553 = vadd.f32 0.0, %v2552
        %v2554 = vpop.f32.mrb[0].mxu0
        %2555 = vmatprep.mubr.bf16.mxu0 0
        %2556 = vmatmul.mubr.bf16.gmra.mrb[0].mxu0 %v2465
        %v2557 = vpop.f32.mrb[0].mxu0
        %v2558 = vadd.f32 0.0, %v2557
        %v2559 = vpop.f32.mrb[0].mxu0
        %v2560 = vpop.f32.mrb[0].mxu0
        %v2561 = vpop.f32.mrb[0].mxu0
        %2562 = vdwg.mxu0
        %v2563 = vadd.f32 %v2440, %v2550
        %v2564 = vadd.f32 %v2441, %v2553
        %v2565 = vadd.f32 %v2442, %v2558
        %v2566 = vld [vmem:[#allocation7] sm:$0x1]
        %v2568 = vlaneseq
        %v2569 = vshrl.u32 %v2568, 7
        %v2570 = vsub.s32 0, %v2569
        %v2571 = vrot.slane %v2566, %v2570
        %v2573 = vadd.f32 %v2563, %v2571
        %v2574 = vadd.f32 %v2564, %v2571
        %v2575 = vadd.f32 %v2565, %v2571
        %vm2576 = vcmp.lt.s32.totalorder %v458, 3
        %vm2577 = vcmp.lt.s32.totalorder %v459, 3
        %vm2578 = vcmp.lt.s32.totalorder %v460, 3
        %v2579 = vsel %vm2576, 1, 0
        %v2580 = vsel %vm2577, 1, 0
        %v2581 = vsel %vm2578, 1, 0
        %vm2582 = vcmp.eq.s32.totalorder %v2579, 1
        %vm2583 = vcmp.eq.s32.totalorder %v2580, 1
        %vm2584 = vcmp.eq.s32.totalorder %v2581, 1
        %v2585 = vsel %vm2582, %v2573, 0.0
        %v2586 = vsel %vm2583, %v2574, 0.0
        %v2587 = vsel %vm2584, %v2575, 0.0
        %v2588 = vadd.f32 %v2585, %v2586
        %v2589 = vadd.f32 %v2588, %v2587
        %v2590 = vrot.slane %v2589, 4
        %v2591 = vadd.f32 %v2589, %v2590
        %v2592 = vrot.slane %v2591, 2
        %v2593 = vadd.f32 %v2591, %v2592
        %v2594 = vrot.slane %v2593, 1
        %v2595 = vadd.f32 %v2593, %v2594
        %2596 = vst [vmem:[%s358] sm:$0x1] %v2595
        %v2597 = vmul.f32 %v2585, %v2585
        %v2598 = vmul.f32 %v2586, %v2586
        %v2599 = vmul.f32 %v2587, %v2587
        %v2600 = vadd.f32 %v2597, %v2598
        %v2601 = vadd.f32 %v2600, %v2599
        %v2602 = vrot.slane %v2601, 4
        %v2603 = vadd.f32 %v2601, %v2602
        %v2604 = vrot.slane %v2603, 2
        %v2605 = vadd.f32 %v2603, %v2604
        %v2606 = vrot.slane %v2605, 1
        %v2607 = vadd.f32 %v2605, %v2606
        %2608 = vst [vmem:[%s364] sm:$0x1] %v2607
        %v2609 = vpack.c.bf16 %v2586, %v2585
        %v2610 = vpack.c.bf16 %v2587, %v2587
        %v2613 = vunpack.c.l.b16 %v2609
        %v2614 = vunpack.c.h.b16 %v2609
        %v2615 = vunpack.c.l.b16 %v2610
        %v2616 = vpack.c.b16 %v2613, %v2613
        %v2617 = vpack.c.b16 %v2614, %v2614
        %v2618 = vpack.c.b16 %v2615, %v2615
        %2622 = vst [vmem:[%s352] sm:$0xf] %v2616
        %2623 = vst [vmem:[%s352 + $0x4] sm:$0xf] %v2617
        %2624 = vst [vmem:[%s352 + $0x8] sm:$0xf] %v2618
        %s2625 = sand.u32 %s148, 1
        %s2626 = scalar_lea.sflag [#allocation4], %s2625
        %s2627 = sand.u32 %s148, 1
        %s2628 = smul.addr %s2627, 12
        %s2629 = scalar_lea.vmem [#allocation11], %s2628
        %s2630 = sand.u32 %s30, 1
        %s2631 = scalar_lea.sflag [#allocation13], %s2630
        %s2632 = sand.u32 %s174, 1
        %s2633 = scalar_lea.vmem [#allocation12], %s2632
        %s2634 = sand.u32 %s30, 1
        %s2635 = scalar_lea.sflag [#allocation13], %s2634
        %s2636 = sand.u32 %s200, 1
        %s2637 = scalar_lea.vmem [#allocation14], %s2636
        // Predicated region
        $region61: #{patch_discriminator_forward.8} parent=39 // pred_check
          %p2638 = pneg %p158
        $region62: #{patch_discriminator_forward.8} parent=39 // pred_check_branch
          %2640 = sbr.rel (%p2638) target = $region64
        $region63: #{patch_discriminator_forward.8} parent=39 // pred_region
          %s2642 = ssub.s32 192, 192
          %2643 = vsyncadd %s2626, %s2642
          %s2644 = smul.addr %s30, 3
          %s2645 = smul.addr %s2644, 64
          %s2646 = scalar_lea.hbm %s5, %s2645
          %s2647 = sshll.u32 %s2629, 4
          %s2648 = int_to_ptr.vmem [resolvable:$true] %s2647
          %2653 = dma.vmem_to_hbm [thread:$0]  %s2648, 192, %s2646, %s2626, 64, 64, 4
        $region64: #{patch_discriminator_forward.8} parent=39 // pred_fallthru
          _
        // Predicated region
        $region65: #{patch_discriminator_forward.8} parent=39 // pred_check
          %p2654 = pneg %p184
        $region66: #{patch_discriminator_forward.8} parent=39 // pred_check_branch
          %2656 = sbr.rel (%p2654) target = $region68
        $region67: #{patch_discriminator_forward.8} parent=39 // pred_region
          %s2658 = ssub.s32 16, 16
          %2659 = vsyncadd %s2631, %s2658
          %s2660 = smul.addr %s30, 16
          %s2661 = scalar_lea.hbm %s6, %s2660
          %s2663 = sshll.u32 %s2633, 4
          %s2664 = int_to_ptr.vmem [resolvable:$true] %s2663
          %2666 = dma.vmem_to_hbm [thread:$0]  %s2664, 16, %s2661, %s2631
        $region68: #{patch_discriminator_forward.8} parent=39 // pred_fallthru
          _
        // Predicated region
        $region69: #{patch_discriminator_forward.8} parent=39 // pred_check
          %p2667 = pneg %p210
        $region70: #{patch_discriminator_forward.8} parent=39 // pred_check_branch
          %2669 = sbr.rel (%p2667) target = $region72
        $region71: #{patch_discriminator_forward.8} parent=39 // pred_region
          %s2671 = ssub.s32 16, 16
          %2672 = vsyncadd %s2635, %s2671
          %s2673 = smul.addr %s30, 16
          %s2674 = scalar_lea.hbm %s7, %s2673
          %s2676 = sshll.u32 %s2637, 4
          %s2677 = int_to_ptr.vmem [resolvable:$true] %s2676
          %2679 = dma.vmem_to_hbm [thread:$0]  %s2677, 16, %s2674, %s2635
        $region72: #{patch_discriminator_forward.8} parent=39 // pred_fallthru
          _
      $region40: #{patch_discriminator_forward.8} parent=5 // pred_fallthru
        _
      %p2680 = scmp.le.s32.totalorder 2, %s25
      // Predicated region
      $region73: #{patch_discriminator_forward.8} parent=5 // pred_check
        %p2681 = pneg %p2680
      $region74: #{patch_discriminator_forward.8} parent=5 // pred_check_branch
        %2683 = sbr.rel (%p2681) target = $region76
      $region75: #{patch_discriminator_forward.8} parent=5 // pred_region
        %s2684 = ssub.s32 %s25, 2
        // Predicated region
        $region77: #{patch_discriminator_forward.8} parent=75 // pred_check
          %p2685 = pneg %p164
        $region78: #{patch_discriminator_forward.8} parent=75 // pred_check_branch
          %2687 = sbr.rel (%p2685) target = $region80
        $region79: #{patch_discriminator_forward.8} parent=75 // pred_region
          %s2688 = sand.u32 %s149, 1
          %s2689 = scalar_lea.sflag [#allocation4], %s2688
          %s2690 = sand.u32 %s149, 1
          %s2691 = smul.addr %s2690, 12
          %s2692 = scalar_lea.vmem [#allocation11], %s2691
          %2693 = dma.done %s2689, 192
        $region80: #{patch_discriminator_forward.8} parent=75 // pred_fallthru
          _
        // Predicated region
        $region81: #{patch_discriminator_forward.8} parent=75 // pred_check
          %p2694 = pneg %p190
        $region82: #{patch_discriminator_forward.8} parent=75 // pred_check_branch
          %2696 = sbr.rel (%p2694) target = $region84
        $region83: #{patch_discriminator_forward.8} parent=75 // pred_region
          %s2697 = sand.u32 %s31, 1
          %s2698 = scalar_lea.sflag [#allocation13], %s2697
          %s2699 = sand.u32 %s175, 1
          %s2700 = scalar_lea.vmem [#allocation12], %s2699
          %2701 = dma.done %s2698, 16
        $region84: #{patch_discriminator_forward.8} parent=75 // pred_fallthru
          _
        // Predicated region
        $region85: #{patch_discriminator_forward.8} parent=75 // pred_check
          %p2702 = pneg %p216
        $region86: #{patch_discriminator_forward.8} parent=75 // pred_check_branch
          %2704 = sbr.rel (%p2702) target = $region88
        $region87: #{patch_discriminator_forward.8} parent=75 // pred_region
          %s2705 = sand.u32 %s31, 1
          %s2706 = scalar_lea.sflag [#allocation13], %s2705
          %s2707 = sand.u32 %s201, 1
          %s2708 = scalar_lea.vmem [#allocation14], %s2707
          %2709 = dma.done %s2706, 16
        $region88: #{patch_discriminator_forward.8} parent=75 // pred_fallthru
          _
      $region76: #{patch_discriminator_forward.8} parent=5 // pred_fallthru
        _
    $region6: #{patch_discriminator_forward.8} parent=1 // loop_footer
      %s29 = sadd.s32 1, %s25
    $region7: #{patch_discriminator_forward.8} parent=1 // loop_footer_branch
      %24 = sbr.rel target = $region3
    $region8: #{patch_discriminator_forward.8} parent=1 // loop_exit
      _
    %2710 = vsyncpa [#allocation3], 1
    %s2711 = scalar_lea.sflag [#allocation3], 1
    %2712 = vsyncpa %s2711, 1
    %2713 = vsyncpa [#allocation6], 1
    %2714 = vsyncpa [#allocation9], 1
    %2715 = vsyncpa [#allocation4], 1
    %s2716 = scalar_lea.sflag [#allocation4], 1
    %2717 = vsyncpa %s2716, 1
    %2718 = vsyncpa [#allocation13], 1
    %s2719 = scalar_lea.sflag [#allocation13], 1
    %2720 = vsyncpa %s2719, 1

</llo_original>
